<compile_context>
chip_gen: v6e
topology: v6e:2x2x1
jax: 0.10.0
libtpu: 0.0.40
codegen_flags: <defaults>
</compile_context>

<pallas_src>
import functools

import numpy as np
import jax
import jax.numpy as jnp
from jax import lax
from jax.experimental import pallas as pl
from jax.experimental.pallas import tpu as pltpu


# ----------------------------- Fused Pallas kernel -------------------------- #

def _fused_kernel(
    # inputs
    x_ref,                                               # (T*B, D)  time-major, flat
    g_wih_f_ref, g_whh_f_ref, g_bih_f_ref, g_bhh_f_ref,  # GRU forward
    g_wih_b_ref, g_whh_b_ref, g_bih_b_ref, g_bhh_b_ref,  # GRU backward
    l1_wih_f_ref, l1_wih_b_ref, l1_whh_ref, l1_b_ref,    # LSTM1 (W_ih split fwd/bwd)
    l2_wih_ref, l2_whh_ref, l2_b_ref,                    # LSTM2
    l3_wih_ref, l3_whh_ref, l3_b_ref,                    # LSTM3
    fc_w_ref, fc_b_ref,                                  # FC
    # output
    out_ref,                                             # (B, input_size)
    # VMEM scratch
    gif_scr, gib_scr,                                    # (T*B, 3*Hg)
    sf_scr, sb_scr,                                      # (T*B, Hg)
    gx1_scr, s1_scr,                                     # (T*B, 4*H1), (T*B, H1)
    gx2_scr, s2_scr,                                     # (T*B, 4*H2), (T*B, H2)
    gx3_scr,                                             # (T*B, 4*H2)
    *, T, B,
):
    f32 = jnp.float32
    Hg = g_whh_f_ref.shape[0]

    x = x_ref[...]                                       # (T*B, D)

    # ---- BiGRU: hoisted input projections (include b_ih; PyTorch gate order
    #      [r, z, n], and 'n' uses r only on the hidden-side pre-activation) ---
    gif_scr[...] = (jnp.dot(x, g_wih_f_ref[...], preferred_element_type=f32)
                    + g_bih_f_ref[...])
    gib_scr[...] = (jnp.dot(x, g_wih_b_ref[...], preferred_element_type=f32)
                    + g_bih_b_ref[...])

    def gru_direction(gi_scr, whh_ref, bhh_ref, seq_scr, reverse):
        whh = whh_ref[...]                                       # (Hg, 3Hg)
        bhh = jnp.broadcast_to(bhh_ref[...], (B, 3 * Hg))        # hoisted broadcast

        def body(i, h):
            t = (T - 1 - i) if reverse else i
            row = pl.multiple_of(t * B, B)
            gi = gi_scr[pl.ds(row, B), :]                        # (B, 3Hg)  incl. b_ih
            gh = jnp.dot(h, whh, preferred_element_type=f32) + bhh
            r = jax.nn.sigmoid(gi[:, 0 * Hg:1 * Hg] + gh[:, 0 * Hg:1 * Hg])
            z = jax.nn.sigmoid(gi[:, 1 * Hg:2 * Hg] + gh[:, 1 * Hg:2 * Hg])
            n = jnp.tanh(gi[:, 2 * Hg:3 * Hg] + r * gh[:, 2 * Hg:3 * Hg])
            h_new = (1.0 - z) * n + z * h
            seq_scr[pl.ds(row, B), :] = h_new
            return h_new

        lax.fori_loop(0, T, body, jnp.zeros((B, Hg), f32), unroll=True)

    gru_direction(gif_scr, g_whh_f_ref, g_bhh_f_ref, sf_scr, reverse=False)
    gru_direction(gib_scr, g_whh_b_ref, g_bhh_b_ref, sb_scr, reverse=True)

    # ---- Stacked LSTMs: hoisted x-projection; only h @ W_hh in the loop ------
    def lstm_layer(gx_scr, whh_ref, seq_scr):
        H = whh_ref.shape[0]
        whh = whh_ref[...]                                       # (H, 4H)

        def body(i, carry):
            h, c = carry
            row = pl.multiple_of(i * B, B)
            g = gx_scr[pl.ds(row, B), :] + jnp.dot(h, whh, preferred_element_type=f32)
            i_g = jax.nn.sigmoid(g[:, 0 * H:1 * H])
            f_g = jax.nn.sigmoid(g[:, 1 * H:2 * H])
            g_g = jnp.tanh(g[:, 2 * H:3 * H])
            o_g = jax.nn.sigmoid(g[:, 3 * H:4 * H])
            c_new = f_g * c + i_g * g_g
            h_new = o_g * jnp.tanh(c_new)
            if seq_scr is not None:                              # trace-time choice
                seq_scr[pl.ds(row, B), :] = h_new
            return (h_new, c_new)

        init = (jnp.zeros((B, H), f32), jnp.zeros((B, H), f32))
        h_last, _ = lax.fori_loop(0, T, body, init, unroll=True)
        return h_last

    # LSTM1: input is [h_fwd ; h_bwd]; split W_ih avoids an in-kernel concat.
    gx1_scr[...] = (
        jnp.dot(sf_scr[...], l1_wih_f_ref[...], preferred_element_type=f32)
        + jnp.dot(sb_scr[...], l1_wih_b_ref[...], preferred_element_type=f32)
        + l1_b_ref[...])
    lstm_layer(gx1_scr, l1_whh_ref, s1_scr)

    # LSTM2
    gx2_scr[...] = (jnp.dot(s1_scr[...], l2_wih_ref[...], preferred_element_type=f32)
                    + l2_b_ref[...])
    lstm_layer(gx2_scr, l2_whh_ref, s2_scr)

    # LSTM3 — only the last hidden state is needed downstream.
    gx3_scr[...] = (jnp.dot(s2_scr[...], l3_wih_ref[...], preferred_element_type=f32)
                    + l3_b_ref[...])
    h_last = lstm_layer(gx3_scr, l3_whh_ref, None)

    # ---- FC fused on the last timestep ---------------------------------------
    out_ref[...] = (jnp.dot(h_last, fc_w_ref[...], preferred_element_type=f32)
                    + fc_b_ref[...])


# ------------------------------ Host-side prep ------------------------------ #

def prepare_params(params):
    """One-time prep: transpose weights, reshape biases, fold LSTM biases,
    split LSTM1's input weight into the GRU-fwd / GRU-bwd halves."""
    g = params["gru"]
    l1, l2, l3, fc = params["lstm1"], params["lstm2"], params["lstm3"], params["fc"]
    Hg = g["whh_f"].shape[1]
    wih1_t = l1["wih"].T                                  # (2Hg, 4H1)
    flat = (
        g["wih_f"].T, g["whh_f"].T, g["bih_f"][None, :], g["bhh_f"][None, :],
        g["wih_b"].T, g["whh_b"].T, g["bih_b"][None, :], g["bhh_b"][None, :],
        wih1_t[:Hg], wih1_t[Hg:], l1["whh"].T, (l1["bih"] + l1["bhh"])[None, :],
        l2["wih"].T, l2["whh"].T, (l2["bih"] + l2["bhh"])[None, :],
        l3["wih"].T, l3["whh"].T, (l3["bih"] + l3["bhh"])[None, :],
        fc["w"].T, fc["b"][None, :],
    )
    return tuple(jnp.asarray(a, jnp.float32) for a in flat)


@jax.jit
def hybrid_forward(x_btd, prepped):
    """x_btd: (B, T, input_size) — batch-first like the PyTorch module."""
    B, T, D = x_btd.shape
    Hg = prepped[1].shape[0]          # GRU hidden
    H1 = prepped[10].shape[0]         # LSTM1 hidden
    H2 = prepped[13].shape[0]         # LSTM2/3 hidden
    TB = T * B

    x_flat = jnp.transpose(x_btd, (1, 0, 2)).reshape(TB, D)   # time-major, flat

    kernel = functools.partial(_fused_kernel, T=T, B=B)
    return pl.pallas_call(
        kernel,
        out_shape=jax.ShapeDtypeStruct((B, D), jnp.float32),
        scratch_shapes=[
            pltpu.VMEM((TB, 3 * Hg), jnp.float32),   # GRU fwd gate-x projection
            pltpu.VMEM((TB, 3 * Hg), jnp.float32),   # GRU bwd gate-x projection
            pltpu.VMEM((TB, Hg), jnp.float32),       # GRU fwd output sequence
            pltpu.VMEM((TB, Hg), jnp.float32),       # GRU bwd output sequence
            pltpu.VMEM((TB, 4 * H1), jnp.float32),   # LSTM1 gate-x projection
            pltpu.VMEM((TB, H1), jnp.float32),       # LSTM1 output sequence
            pltpu.VMEM((TB, 4 * H2), jnp.float32),   # LSTM2 gate-x projection
            pltpu.VMEM((TB, H2), jnp.float32),       # LSTM2 output sequence
            pltpu.VMEM((TB, 4 * H2), jnp.float32),   # LSTM3 gate-x projection
        ],
    )(x_flat, *prepped)


# --------------------------- Pure-JAX reference ----------------------------- #

def _gru_ref(x_btd, wih, whh, bih, bhh, reverse):
    B, T, D = x_btd.shape
    H = whh.shape[1]
    xs = jnp.transpose(x_btd, (1, 0, 2))
    if reverse:
        xs = xs[::-1]

    def step(h, x_t):
        gi = jnp.dot(x_t, wih.T, precision=jax.lax.Precision.HIGHEST) + bih
        gh = jnp.dot(h, whh.T, precision=jax.lax.Precision.HIGHEST) + bhh
        r = jax.nn.sigmoid(gi[:, :H] + gh[:, :H])
        z = jax.nn.sigmoid(gi[:, H:2 * H] + gh[:, H:2 * H])
        n = jnp.tanh(gi[:, 2 * H:] + r * gh[:, 2 * H:])
        h_new = (1.0 - z) * n + z * h
        return h_new, h_new

    _, ys = jax.lax.scan(step, jnp.zeros((B, H), jnp.float32), xs)
    if reverse:
        ys = ys[::-1]
    return jnp.transpose(ys, (1, 0, 2))


def _lstm_ref(x_btd, wih, whh, bih, bhh):
    B, T, D = x_btd.shape
    H = whh.shape[1]
    xs = jnp.transpose(x_btd, (1, 0, 2))

    def step(carry, x_t):
        h, c = carry
        g = (jnp.dot(x_t, wih.T, precision=jax.lax.Precision.HIGHEST) + bih
             + jnp.dot(h, whh.T, precision=jax.lax.Precision.HIGHEST) + bhh)
        i = jax.nn.sigmoid(g[:, :H])
        f = jax.nn.sigmoid(g[:, H:2 * H])
        gg = jnp.tanh(g[:, 2 * H:3 * H])
        o = jax.nn.sigmoid(g[:, 3 * H:])
        c_new = f * c + i * gg
        h_new = o * jnp.tanh(c_new)
        return (h_new, c_new), h_new

    init = (jnp.zeros((B, H), jnp.float32), jnp.zeros((B, H), jnp.float32))
    _, ys = jax.lax.scan(step, init, xs)
    return jnp.transpose(ys, (1, 0, 2))


def ref_forward(x, params):
    g = params["gru"]
    fwd = _gru_ref(x, g["wih_f"], g["whh_f"], g["bih_f"], g["bhh_f"], reverse=False)
    bwd = _gru_ref(x, g["wih_b"], g["whh_b"], g["bih_b"], g["bhh_b"], reverse=True)
    h = jnp.concatenate([fwd, bwd], axis=-1)
    for name in ("lstm1", "lstm2", "lstm3"):
        p = params[name]
        h = _lstm_ref(h, p["wih"], p["whh"], p["bih"], p["bhh"])
    fc = params["fc"]
    return (jnp.dot(h[:, -1, :], fc["w"].T, precision=jax.lax.Precision.HIGHEST)
            + fc["b"])


# ------------------------------ Param setup --------------------------------- #

def _uinit(key, shape, bound):
    return jax.random.uniform(key, shape, jnp.float32, -bound, bound)


def init_params(key, input_size, gru_h, lstm_h1, lstm_h2):
    keys = iter(jax.random.split(key, 32))
    params = {}

    kb = 1.0 / np.sqrt(gru_h)
    params["gru"] = {
        "wih_f": _uinit(next(keys), (3 * gru_h, input_size), kb),
        "whh_f": _uinit(next(keys), (3 * gru_h, gru_h), kb),
        "bih_f": _uinit(next(keys), (3 * gru_h,), kb),
        "bhh_f": _uinit(next(keys), (3 * gru_h,), kb),
        "wih_b": _uinit(next(keys), (3 * gru_h, input_size), kb),
        "whh_b": _uinit(next(keys), (3 * gru_h, gru_h), kb),
        "bih_b": _uinit(next(keys), (3 * gru_h,), kb),
        "bhh_b": _uinit(next(keys), (3 * gru_h,), kb),
    }

    def lstm_p(in_sz, hid):
        kb = 1.0 / np.sqrt(hid)
        return {
            "wih": _uinit(next(keys), (4 * hid, in_sz), kb),
            "whh": _uinit(next(keys), (4 * hid, hid), kb),
            "bih": _uinit(next(keys), (4 * hid,), kb),
            "bhh": _uinit(next(keys), (4 * hid,), kb),
        }

    params["lstm1"] = lstm_p(2 * gru_h, lstm_h1)
    params["lstm2"] = lstm_p(lstm_h1, lstm_h2)
    params["lstm3"] = lstm_p(lstm_h2, lstm_h2)

    kb = 1.0 / np.sqrt(lstm_h2)
    params["fc"] = {
        "w": _uinit(next(keys), (input_size, lstm_h2), kb),
        "b": _uinit(next(keys), (input_size,), kb),
    }
    return params


# ---------------------------------- Main ------------------------------------ #

if __name__ == "__main__":
    INPUT_SIZE = 8
    GRU_HIDDEN = 16
    LSTM_H1 = 32
    LSTM_H2 = 16
    B, T = 2, 8

    key = jax.random.PRNGKey(0)
    k_x, k_p = jax.random.split(key)
    x = jax.random.normal(k_x, (B, T, INPUT_SIZE), jnp.float32)
    params = init_params(k_p, INPUT_SIZE, GRU_HIDDEN, LSTM_H1, LSTM_H2)

    prepped = jax.block_until_ready(prepare_params(params))   # one-time host prep

    out = jax.block_until_ready(hybrid_forward(x, prepped))
    ref = jax.block_until_ready(ref_forward(x, params))

    np.testing.assert_allclose(np.asarray(out), np.asarray(ref), rtol=1e-2, atol=1e-2)
    assert out.shape == (B, INPUT_SIZE)
    print("KERNEL_OK")
</pallas_src>

<mosaic_0001>
module attributes {stable_mosaic.version = 11 : i64} {
  func.func @_fused_kernel(%arg0: memref<16x8xf32, #tpu.memory_space<vmem>>, %arg1: memref<8x48xf32, #tpu.memory_space<vmem>>, %arg2: memref<16x48xf32, #tpu.memory_space<vmem>>, %arg3: memref<1x48xf32, #tpu.memory_space<vmem>>, %arg4: memref<1x48xf32, #tpu.memory_space<vmem>>, %arg5: memref<8x48xf32, #tpu.memory_space<vmem>>, %arg6: memref<16x48xf32, #tpu.memory_space<vmem>>, %arg7: memref<1x48xf32, #tpu.memory_space<vmem>>, %arg8: memref<1x48xf32, #tpu.memory_space<vmem>>, %arg9: memref<16x128xf32, #tpu.memory_space<vmem>>, %arg10: memref<16x128xf32, #tpu.memory_space<vmem>>, %arg11: memref<32x128xf32, #tpu.memory_space<vmem>>, %arg12: memref<1x128xf32, #tpu.memory_space<vmem>>, %arg13: memref<32x64xf32, #tpu.memory_space<vmem>>, %arg14: memref<16x64xf32, #tpu.memory_space<vmem>>, %arg15: memref<1x64xf32, #tpu.memory_space<vmem>>, %arg16: memref<16x64xf32, #tpu.memory_space<vmem>>, %arg17: memref<16x64xf32, #tpu.memory_space<vmem>>, %arg18: memref<1x64xf32, #tpu.memory_space<vmem>>, %arg19: memref<16x8xf32, #tpu.memory_space<vmem>>, %arg20: memref<1x8xf32, #tpu.memory_space<vmem>>, %arg21: memref<2x8xf32, #tpu.memory_space<vmem>>, %arg22: memref<16x48xf32, #tpu.memory_space<vmem>>, %arg23: memref<16x48xf32, #tpu.memory_space<vmem>>, %arg24: memref<16x16xf32, #tpu.memory_space<vmem>>, %arg25: memref<16x16xf32, #tpu.memory_space<vmem>>, %arg26: memref<16x128xf32, #tpu.memory_space<vmem>>, %arg27: memref<16x32xf32, #tpu.memory_space<vmem>>, %arg28: memref<16x64xf32, #tpu.memory_space<vmem>>, %arg29: memref<16x16xf32, #tpu.memory_space<vmem>>, %arg30: memref<16x64xf32, #tpu.memory_space<vmem>>) attributes {dimension_semantics = [], scalar_prefetch = 0 : i64, scratch_operands = 9 : i64, tpu.core_type = #tpu.core_type<tc>} {
    %c0 = arith.constant 0 : index
    %c0_0 = arith.constant 0 : index
    %0 = vector.load %arg0[%c0, %c0_0] : memref<16x8xf32, #tpu.memory_space<vmem>>, vector<16x8xf32>
    %c0_1 = arith.constant 0 : index
    %c0_2 = arith.constant 0 : index
    %1 = vector.load %arg1[%c0_1, %c0_2] : memref<8x48xf32, #tpu.memory_space<vmem>>, vector<8x48xf32>
    %cst = arith.constant dense<0.000000e+00> : vector<16x48xf32>
    %2 = tpu.matmul %0, %1, %cst {dimension_numbers = #tpu.dot_dimension_numbers<[1], [0], [0], [1], [0, 0, 1, 1], [], []>} : vector<16x8xf32>, vector<8x48xf32>, vector<16x48xf32> -> vector<16x48xf32>
    %c0_3 = arith.constant 0 : index
    %c0_4 = arith.constant 0 : index
    %3 = vector.load %arg3[%c0_3, %c0_4] : memref<1x48xf32, #tpu.memory_space<vmem>>, vector<1x48xf32>
    %4 = vector.broadcast %3 : vector<1x48xf32> to vector<16x48xf32>
    %5 = arith.addf %2, %4 : vector<16x48xf32>
    %c0_5 = arith.constant 0 : index
    %c0_6 = arith.constant 0 : index
    %6 = vector.load %arg22[%c0_5, %c0_6] : memref<16x48xf32, #tpu.memory_space<vmem>>, vector<16x48xf32>
    tpu.vector_store %arg22[%c0_5, %c0_6], %5 {strides = array<i32>} : memref<16x48xf32, #tpu.memory_space<vmem>>, vector<16x48xf32>,
    %c0_7 = arith.constant 0 : index
    %c0_8 = arith.constant 0 : index
    %7 = vector.load %arg5[%c0_7, %c0_8] : memref<8x48xf32, #tpu.memory_space<vmem>>, vector<8x48xf32>
    %cst_9 = arith.constant dense<0.000000e+00> : vector<16x48xf32>
    %8 = tpu.matmul %0, %7, %cst_9 {dimension_numbers = #tpu.dot_dimension_numbers<[1], [0], [0], [1], [0, 0, 1, 1], [], []>} : vector<16x8xf32>, vector<8x48xf32>, vector<16x48xf32> -> vector<16x48xf32>
    %c0_10 = arith.constant 0 : index
    %c0_11 = arith.constant 0 : index
    %9 = vector.load %arg7[%c0_10, %c0_11] : memref<1x48xf32, #tpu.memory_space<vmem>>, vector<1x48xf32>
    %10 = vector.broadcast %9 : vector<1x48xf32> to vector<16x48xf32>
    %11 = arith.addf %8, %10 : vector<16x48xf32>
    %c0_12 = arith.constant 0 : index
    %c0_13 = arith.constant 0 : index
    %12 = vector.load %arg23[%c0_12, %c0_13] : memref<16x48xf32, #tpu.memory_space<vmem>>, vector<16x48xf32>
    tpu.vector_store %arg23[%c0_12, %c0_13], %11 {strides = array<i32>} : memref<16x48xf32, #tpu.memory_space<vmem>>, vector<16x48xf32>,
    %c0_14 = arith.constant 0 : index
    %c0_15 = arith.constant 0 : index
    %13 = vector.load %arg2[%c0_14, %c0_15] : memref<16x48xf32, #tpu.memory_space<vmem>>, vector<16x48xf32>
    %c0_16 = arith.constant 0 : index
    %c0_17 = arith.constant 0 : index
    %14 = vector.load %arg4[%c0_16, %c0_17] : memref<1x48xf32, #tpu.memory_space<vmem>>, vector<1x48xf32>
    %15 = vector.shape_cast %14 : vector<1x48xf32> to vector<1x48xf32>
    %16 = vector.broadcast %15 : vector<1x48xf32> to vector<2x48xf32>
    %cst_18 = arith.constant 0.000000e+00 : f32
    %17 = vector.broadcast %cst_18 : f32 to vector<2x16xf32>
    %c0_i32 = arith.constant 0 : i32
    %c2_i32 = arith.constant 2 : i32
    %18 = arith.muli %c0_i32, %c2_i32 : i32
    %19 = tpu.assume_multiple %18, 2 : i32
    %20 = arith.index_cast %19 : i32 to index
    %c0_19 = arith.constant 0 : index
    %21 = vector.load %arg22[%20, %c0_19] : memref<16x48xf32, #tpu.memory_space<vmem>>, vector<2x48xf32>
    %cst_20 = arith.constant dense<0.000000e+00> : vector<2x48xf32>
    %22 = tpu.matmul %17, %13, %cst_20 {dimension_numbers = #tpu.dot_dimension_numbers<[1], [0], [0], [1], [0, 0, 1, 1], [], []>} : vector<2x16xf32>, vector<16x48xf32>, vector<2x48xf32> -> vector<2x48xf32>
    %23 = arith.addf %22, %16 : vector<2x48xf32>
    %24 = vector.extract_strided_slice %21 {offsets = [0, 0], sizes = [2, 16], strides = [1, 1]} : vector<2x48xf32> to vector<2x16xf32>
    %25 = vector.extract_strided_slice %23 {offsets = [0, 0], sizes = [2, 16], strides = [1, 1]} : vector<2x48xf32> to vector<2x16xf32>
    %26 = arith.addf %24, %25 : vector<2x16xf32>
    %27 = arith.negf %26 : vector<2x16xf32>
    %28 = math.exp %27 : vector<2x16xf32>
    %cst_21 = arith.constant 1.000000e+00 : f32
    %29 = vector.broadcast %cst_21 : f32 to vector<2x16xf32>
    %30 = arith.addf %29, %28 : vector<2x16xf32>
    %31 = arith.divf %29, %30 : vector<2x16xf32>
    %32 = vector.extract_strided_slice %21 {offsets = [0, 16], sizes = [2, 16], strides = [1, 1]} : vector<2x48xf32> to vector<2x16xf32>
    %33 = vector.extract_strided_slice %23 {offsets = [0, 16], sizes = [2, 16], strides = [1, 1]} : vector<2x48xf32> to vector<2x16xf32>
    %34 = arith.addf %32, %33 : vector<2x16xf32>
    %35 = arith.negf %34 : vector<2x16xf32>
    %36 = math.exp %35 : vector<2x16xf32>
    %cst_22 = arith.constant 1.000000e+00 : f32
    %37 = vector.broadcast %cst_22 : f32 to vector<2x16xf32>
    %38 = arith.addf %37, %36 : vector<2x16xf32>
    %39 = arith.divf %37, %38 : vector<2x16xf32>
    %40 = vector.extract_strided_slice %21 {offsets = [0, 32], sizes = [2, 16], strides = [1, 1]} : vector<2x48xf32> to vector<2x16xf32>
    %41 = vector.extract_strided_slice %23 {offsets = [0, 32], sizes = [2, 16], strides = [1, 1]} : vector<2x48xf32> to vector<2x16xf32>
    %42 = arith.mulf %31, %41 : vector<2x16xf32>
    %43 = arith.addf %40, %42 : vector<2x16xf32>
    %44 = math.tanh %43 : vector<2x16xf32>
    %cst_23 = arith.constant 1.000000e+00 : f32
    %45 = vector.broadcast %cst_23 : f32 to vector<2x16xf32>
    %46 = arith.subf %45, %39 : vector<2x16xf32>
    %47 = arith.mulf %46, %44 : vector<2x16xf32>
    %48 = arith.mulf %39, %17 : vector<2x16xf32>
    %49 = arith.addf %47, %48 : vector<2x16xf32>
    %50 = arith.index_cast %19 : i32 to index
    %c0_24 = arith.constant 0 : index
    %51 = vector.load %arg24[%50, %c0_24] : memref<16x16xf32, #tpu.memory_space<vmem>>, vector<2x16xf32>
    tpu.vector_store %arg24[%50, %c0_24], %49 {strides = array<i32>} : memref<16x16xf32, #tpu.memory_space<vmem>>, vector<2x16xf32>,
    %c1_i32 = arith.constant 1 : i32
    %c2_i32_25 = arith.constant 2 : i32
    %52 = arith.muli %c1_i32, %c2_i32_25 : i32
    %53 = tpu.assume_multiple %52, 2 : i32
    %54 = arith.index_cast %53 : i32 to index
    %c0_26 = arith.constant 0 : index
    %55 = vector.load %arg22[%54, %c0_26] : memref<16x48xf32, #tpu.memory_space<vmem>>, vector<2x48xf32>
    %cst_27 = arith.constant dense<0.000000e+00> : vector<2x48xf32>
    %56 = tpu.matmul %49, %13, %cst_27 {dimension_numbers = #tpu.dot_dimension_numbers<[1], [0], [0], [1], [0, 0, 1, 1], [], []>} : vector<2x16xf32>, vector<16x48xf32>, vector<2x48xf32> -> vector<2x48xf32>
    %57 = arith.addf %56, %16 : vector<2x48xf32>
    %58 = vector.extract_strided_slice %55 {offsets = [0, 0], sizes = [2, 16], strides = [1, 1]} : vector<2x48xf32> to vector<2x16xf32>
    %59 = vector.extract_strided_slice %57 {offsets = [0, 0], sizes = [2, 16], strides = [1, 1]} : vector<2x48xf32> to vector<2x16xf32>
    %60 = arith.addf %58, %59 : vector<2x16xf32>
    %61 = arith.negf %60 : vector<2x16xf32>
    %62 = math.exp %61 : vector<2x16xf32>
    %cst_28 = arith.constant 1.000000e+00 : f32
    %63 = vector.broadcast %cst_28 : f32 to vector<2x16xf32>
    %64 = arith.addf %63, %62 : vector<2x16xf32>
    %65 = arith.divf %63, %64 : vector<2x16xf32>
    %66 = vector.extract_strided_slice %55 {offsets = [0, 16], sizes = [2, 16], strides = [1, 1]} : vector<2x48xf32> to vector<2x16xf32>
    %67 = vector.extract_strided_slice %57 {offsets = [0, 16], sizes = [2, 16], strides = [1, 1]} : vector<2x48xf32> to vector<2x16xf32>
    %68 = arith.addf %66, %67 : vector<2x16xf32>
    %69 = arith.negf %68 : vector<2x16xf32>
    %70 = math.exp %69 : vector<2x16xf32>
    %cst_29 = arith.constant 1.000000e+00 : f32
    %71 = vector.broadcast %cst_29 : f32 to vector<2x16xf32>
    %72 = arith.addf %71, %70 : vector<2x16xf32>
    %73 = arith.divf %71, %72 : vector<2x16xf32>
    %74 = vector.extract_strided_slice %55 {offsets = [0, 32], sizes = [2, 16], strides = [1, 1]} : vector<2x48xf32> to vector<2x16xf32>
    %75 = vector.extract_strided_slice %57 {offsets = [0, 32], sizes = [2, 16], strides = [1, 1]} : vector<2x48xf32> to vector<2x16xf32>
    %76 = arith.mulf %65, %75 : vector<2x16xf32>
    %77 = arith.addf %74, %76 : vector<2x16xf32>
    %78 = math.tanh %77 : vector<2x16xf32>
    %cst_30 = arith.constant 1.000000e+00 : f32
    %79 = vector.broadcast %cst_30 : f32 to vector<2x16xf32>
    %80 = arith.subf %79, %73 : vector<2x16xf32>
    %81 = arith.mulf %80, %78 : vector<2x16xf32>
    %82 = arith.mulf %73, %49 : vector<2x16xf32>
    %83 = arith.addf %81, %82 : vector<2x16xf32>
    %84 = arith.index_cast %53 : i32 to index
    %c0_31 = arith.constant 0 : index
    %85 = vector.load %arg24[%84, %c0_31] : memref<16x16xf32, #tpu.memory_space<vmem>>, vector<2x16xf32>
    tpu.vector_store %arg24[%84, %c0_31], %83 {strides = array<i32>} : memref<16x16xf32, #tpu.memory_space<vmem>>, vector<2x16xf32>,
    %c2_i32_32 = arith.constant 2 : i32
    %c2_i32_33 = arith.constant 2 : i32
    %86 = arith.muli %c2_i32_32, %c2_i32_33 : i32
    %87 = tpu.assume_multiple %86, 2 : i32
    %88 = arith.index_cast %87 : i32 to index
    %c0_34 = arith.constant 0 : index
    %89 = vector.load %arg22[%88, %c0_34] : memref<16x48xf32, #tpu.memory_space<vmem>>, vector<2x48xf32>
    %cst_35 = arith.constant dense<0.000000e+00> : vector<2x48xf32>
    %90 = tpu.matmul %83, %13, %cst_35 {dimension_numbers = #tpu.dot_dimension_numbers<[1], [0], [0], [1], [0, 0, 1, 1], [], []>} : vector<2x16xf32>, vector<16x48xf32>, vector<2x48xf32> -> vector<2x48xf32>
    %91 = arith.addf %90, %16 : vector<2x48xf32>
    %92 = vector.extract_strided_slice %89 {offsets = [0, 0], sizes = [2, 16], strides = [1, 1]} : vector<2x48xf32> to vector<2x16xf32>
    %93 = vector.extract_strided_slice %91 {offsets = [0, 0], sizes = [2, 16], strides = [1, 1]} : vector<2x48xf32> to vector<2x16xf32>
    %94 = arith.addf %92, %93 : vector<2x16xf32>
    %95 = arith.negf %94 : vector<2x16xf32>
    %96 = math.exp %95 : vector<2x16xf32>
    %cst_36 = arith.constant 1.000000e+00 : f32
    %97 = vector.broadcast %cst_36 : f32 to vector<2x16xf32>
    %98 = arith.addf %97, %96 : vector<2x16xf32>
    %99 = arith.divf %97, %98 : vector<2x16xf32>
    %100 = vector.extract_strided_slice %89 {offsets = [0, 16], sizes = [2, 16], strides = [1, 1]} : vector<2x48xf32> to vector<2x16xf32>
    %101 = vector.extract_strided_slice %91 {offsets = [0, 16], sizes = [2, 16], strides = [1, 1]} : vector<2x48xf32> to vector<2x16xf32>
    %102 = arith.addf %100, %101 : vector<2x16xf32>
    %103 = arith.negf %102 : vector<2x16xf32>
    %104 = math.exp %103 : vector<2x16xf32>
    %cst_37 = arith.constant 1.000000e+00 : f32
    %105 = vector.broadcast %cst_37 : f32 to vector<2x16xf32>
    %106 = arith.addf %105, %104 : vector<2x16xf32>
    %107 = arith.divf %105, %106 : vector<2x16xf32>
    %108 = vector.extract_strided_slice %89 {offsets = [0, 32], sizes = [2, 16], strides = [1, 1]} : vector<2x48xf32> to vector<2x16xf32>
    %109 = vector.extract_strided_slice %91 {offsets = [0, 32], sizes = [2, 16], strides = [1, 1]} : vector<2x48xf32> to vector<2x16xf32>
    %110 = arith.mulf %99, %109 : vector<2x16xf32>
    %111 = arith.addf %108, %110 : vector<2x16xf32>
    %112 = math.tanh %111 : vector<2x16xf32>
    %cst_38 = arith.constant 1.000000e+00 : f32
    %113 = vector.broadcast %cst_38 : f32 to vector<2x16xf32>
    %114 = arith.subf %113, %107 : vector<2x16xf32>
    %115 = arith.mulf %114, %112 : vector<2x16xf32>
    %116 = arith.mulf %107, %83 : vector<2x16xf32>
    %117 = arith.addf %115, %116 : vector<2x16xf32>
    %118 = arith.index_cast %87 : i32 to index
    %c0_39 = arith.constant 0 : index
    %119 = vector.load %arg24[%118, %c0_39] : memref<16x16xf32, #tpu.memory_space<vmem>>, vector<2x16xf32>
    tpu.vector_store %arg24[%118, %c0_39], %117 {strides = array<i32>} : memref<16x16xf32, #tpu.memory_space<vmem>>, vector<2x16xf32>,
    %c3_i32 = arith.constant 3 : i32
    %c2_i32_40 = arith.constant 2 : i32
    %120 = arith.muli %c3_i32, %c2_i32_40 : i32
    %121 = tpu.assume_multiple %120, 2 : i32
    %122 = arith.index_cast %121 : i32 to index
    %c0_41 = arith.constant 0 : index
    %123 = vector.load %arg22[%122, %c0_41] : memref<16x48xf32, #tpu.memory_space<vmem>>, vector<2x48xf32>
    %cst_42 = arith.constant dense<0.000000e+00> : vector<2x48xf32>
    %124 = tpu.matmul %117, %13, %cst_42 {dimension_numbers = #tpu.dot_dimension_numbers<[1], [0], [0], [1], [0, 0, 1, 1], [], []>} : vector<2x16xf32>, vector<16x48xf32>, vector<2x48xf32> -> vector<2x48xf32>
    %125 = arith.addf %124, %16 : vector<2x48xf32>
    %126 = vector.extract_strided_slice %123 {offsets = [0, 0], sizes = [2, 16], strides = [1, 1]} : vector<2x48xf32> to vector<2x16xf32>
    %127 = vector.extract_strided_slice %125 {offsets = [0, 0], sizes = [2, 16], strides = [1, 1]} : vector<2x48xf32> to vector<2x16xf32>
    %128 = arith.addf %126, %127 : vector<2x16xf32>
    %129 = arith.negf %128 : vector<2x16xf32>
    %130 = math.exp %129 : vector<2x16xf32>
    %cst_43 = arith.constant 1.000000e+00 : f32
    %131 = vector.broadcast %cst_43 : f32 to vector<2x16xf32>
    %132 = arith.addf %131, %130 : vector<2x16xf32>
    %133 = arith.divf %131, %132 : vector<2x16xf32>
    %134 = vector.extract_strided_slice %123 {offsets = [0, 16], sizes = [2, 16], strides = [1, 1]} : vector<2x48xf32> to vector<2x16xf32>
    %135 = vector.extract_strided_slice %125 {offsets = [0, 16], sizes = [2, 16], strides = [1, 1]} : vector<2x48xf32> to vector<2x16xf32>
    %136 = arith.addf %134, %135 : vector<2x16xf32>
    %137 = arith.negf %136 : vector<2x16xf32>
    %138 = math.exp %137 : vector<2x16xf32>
    %cst_44 = arith.constant 1.000000e+00 : f32
    %139 = vector.broadcast %cst_44 : f32 to vector<2x16xf32>
    %140 = arith.addf %139, %138 : vector<2x16xf32>
    %141 = arith.divf %139, %140 : vector<2x16xf32>
    %142 = vector.extract_strided_slice %123 {offsets = [0, 32], sizes = [2, 16], strides = [1, 1]} : vector<2x48xf32> to vector<2x16xf32>
    %143 = vector.extract_strided_slice %125 {offsets = [0, 32], sizes = [2, 16], strides = [1, 1]} : vector<2x48xf32> to vector<2x16xf32>
    %144 = arith.mulf %133, %143 : vector<2x16xf32>
    %145 = arith.addf %142, %144 : vector<2x16xf32>
    %146 = math.tanh %145 : vector<2x16xf32>
    %cst_45 = arith.constant 1.000000e+00 : f32
    %147 = vector.broadcast %cst_45 : f32 to vector<2x16xf32>
    %148 = arith.subf %147, %141 : vector<2x16xf32>
    %149 = arith.mulf %148, %146 : vector<2x16xf32>
    %150 = arith.mulf %141, %117 : vector<2x16xf32>
    %151 = arith.addf %149, %150 : vector<2x16xf32>
    %152 = arith.index_cast %121 : i32 to index
    %c0_46 = arith.constant 0 : index
    %153 = vector.load %arg24[%152, %c0_46] : memref<16x16xf32, #tpu.memory_space<vmem>>, vector<2x16xf32>
    tpu.vector_store %arg24[%152, %c0_46], %151 {strides = array<i32>} : memref<16x16xf32, #tpu.memory_space<vmem>>, vector<2x16xf32>,
    %c4_i32 = arith.constant 4 : i32
    %c2_i32_47 = arith.constant 2 : i32
    %154 = arith.muli %c4_i32, %c2_i32_47 : i32
    %155 = tpu.assume_multiple %154, 2 : i32
    %156 = arith.index_cast %155 : i32 to index
    %c0_48 = arith.constant 0 : index
    %157 = vector.load %arg22[%156, %c0_48] : memref<16x48xf32, #tpu.memory_space<vmem>>, vector<2x48xf32>
    %cst_49 = arith.constant dense<0.000000e+00> : vector<2x48xf32>
    %158 = tpu.matmul %151, %13, %cst_49 {dimension_numbers = #tpu.dot_dimension_numbers<[1], [0], [0], [1], [0, 0, 1, 1], [], []>} : vector<2x16xf32>, vector<16x48xf32>, vector<2x48xf32> -> vector<2x48xf32>
    %159 = arith.addf %158, %16 : vector<2x48xf32>
    %160 = vector.extract_strided_slice %157 {offsets = [0, 0], sizes = [2, 16], strides = [1, 1]} : vector<2x48xf32> to vector<2x16xf32>
    %161 = vector.extract_strided_slice %159 {offsets = [0, 0], sizes = [2, 16], strides = [1, 1]} : vector<2x48xf32> to vector<2x16xf32>
    %162 = arith.addf %160, %161 : vector<2x16xf32>
    %163 = arith.negf %162 : vector<2x16xf32>
    %164 = math.exp %163 : vector<2x16xf32>
    %cst_50 = arith.constant 1.000000e+00 : f32
    %165 = vector.broadcast %cst_50 : f32 to vector<2x16xf32>
    %166 = arith.addf %165, %164 : vector<2x16xf32>
    %167 = arith.divf %165, %166 : vector<2x16xf32>
    %168 = vector.extract_strided_slice %157 {offsets = [0, 16], sizes = [2, 16], strides = [1, 1]} : vector<2x48xf32> to vector<2x16xf32>
    %169 = vector.extract_strided_slice %159 {offsets = [0, 16], sizes = [2, 16], strides = [1, 1]} : vector<2x48xf32> to vector<2x16xf32>
    %170 = arith.addf %168, %169 : vector<2x16xf32>
    %171 = arith.negf %170 : vector<2x16xf32>
    %172 = math.exp %171 : vector<2x16xf32>
    %cst_51 = arith.constant 1.000000e+00 : f32
    %173 = vector.broadcast %cst_51 : f32 to vector<2x16xf32>
    %174 = arith.addf %173, %172 : vector<2x16xf32>
    %175 = arith.divf %173, %174 : vector<2x16xf32>
    %176 = vector.extract_strided_slice %157 {offsets = [0, 32], sizes = [2, 16], strides = [1, 1]} : vector<2x48xf32> to vector<2x16xf32>
    %177 = vector.extract_strided_slice %159 {offsets = [0, 32], sizes = [2, 16], strides = [1, 1]} : vector<2x48xf32> to vector<2x16xf32>
    %178 = arith.mulf %167, %177 : vector<2x16xf32>
    %179 = arith.addf %176, %178 : vector<2x16xf32>
    %180 = math.tanh %179 : vector<2x16xf32>
    %cst_52 = arith.constant 1.000000e+00 : f32
    %181 = vector.broadcast %cst_52 : f32 to vector<2x16xf32>
    %182 = arith.subf %181, %175 : vector<2x16xf32>
    %183 = arith.mulf %182, %180 : vector<2x16xf32>
    %184 = arith.mulf %175, %151 : vector<2x16xf32>
    %185 = arith.addf %183, %184 : vector<2x16xf32>
    %186 = arith.index_cast %155 : i32 to index
    %c0_53 = arith.constant 0 : index
    %187 = vector.load %arg24[%186, %c0_53] : memref<16x16xf32, #tpu.memory_space<vmem>>, vector<2x16xf32>
    tpu.vector_store %arg24[%186, %c0_53], %185 {strides = array<i32>} : memref<16x16xf32, #tpu.memory_space<vmem>>, vector<2x16xf32>,
    %c5_i32 = arith.constant 5 : i32
    %c2_i32_54 = arith.constant 2 : i32
    %188 = arith.muli %c5_i32, %c2_i32_54 : i32
    %189 = tpu.assume_multiple %188, 2 : i32
    %190 = arith.index_cast %189 : i32 to index
    %c0_55 = arith.constant 0 : index
    %191 = vector.load %arg22[%190, %c0_55] : memref<16x48xf32, #tpu.memory_space<vmem>>, vector<2x48xf32>
    %cst_56 = arith.constant dense<0.000000e+00> : vector<2x48xf32>
    %192 = tpu.matmul %185, %13, %cst_56 {dimension_numbers = #tpu.dot_dimension_numbers<[1], [0], [0], [1], [0, 0, 1, 1], [], []>} : vector<2x16xf32>, vector<16x48xf32>, vector<2x48xf32> -> vector<2x48xf32>
    %193 = arith.addf %192, %16 : vector<2x48xf32>
    %194 = vector.extract_strided_slice %191 {offsets = [0, 0], sizes = [2, 16], strides = [1, 1]} : vector<2x48xf32> to vector<2x16xf32>
    %195 = vector.extract_strided_slice %193 {offsets = [0, 0], sizes = [2, 16], strides = [1, 1]} : vector<2x48xf32> to vector<2x16xf32>
    %196 = arith.addf %194, %195 : vector<2x16xf32>
    %197 = arith.negf %196 : vector<2x16xf32>
    %198 = math.exp %197 : vector<2x16xf32>
    %cst_57 = arith.constant 1.000000e+00 : f32
    %199 = vector.broadcast %cst_57 : f32 to vector<2x16xf32>
    %200 = arith.addf %199, %198 : vector<2x16xf32>
    %201 = arith.divf %199, %200 : vector<2x16xf32>
    %202 = vector.extract_strided_slice %191 {offsets = [0, 16], sizes = [2, 16], strides = [1, 1]} : vector<2x48xf32> to vector<2x16xf32>
    %203 = vector.extract_strided_slice %193 {offsets = [0, 16], sizes = [2, 16], strides = [1, 1]} : vector<2x48xf32> to vector<2x16xf32>
    %204 = arith.addf %202, %203 : vector<2x16xf32>
    %205 = arith.negf %204 : vector<2x16xf32>
    %206 = math.exp %205 : vector<2x16xf32>
    %cst_58 = arith.constant 1.000000e+00 : f32
    %207 = vector.broadcast %cst_58 : f32 to vector<2x16xf32>
    %208 = arith.addf %207, %206 : vector<2x16xf32>
    %209 = arith.divf %207, %208 : vector<2x16xf32>
    %210 = vector.extract_strided_slice %191 {offsets = [0, 32], sizes = [2, 16], strides = [1, 1]} : vector<2x48xf32> to vector<2x16xf32>
    %211 = vector.extract_strided_slice %193 {offsets = [0, 32], sizes = [2, 16], strides = [1, 1]} : vector<2x48xf32> to vector<2x16xf32>
    %212 = arith.mulf %201, %211 : vector<2x16xf32>
    %213 = arith.addf %210, %212 : vector<2x16xf32>
    %214 = math.tanh %213 : vector<2x16xf32>
    %cst_59 = arith.constant 1.000000e+00 : f32
    %215 = vector.broadcast %cst_59 : f32 to vector<2x16xf32>
    %216 = arith.subf %215, %209 : vector<2x16xf32>
    %217 = arith.mulf %216, %214 : vector<2x16xf32>
    %218 = arith.mulf %209, %185 : vector<2x16xf32>
    %219 = arith.addf %217, %218 : vector<2x16xf32>
    %220 = arith.index_cast %189 : i32 to index
    %c0_60 = arith.constant 0 : index
    %221 = vector.load %arg24[%220, %c0_60] : memref<16x16xf32, #tpu.memory_space<vmem>>, vector<2x16xf32>
    tpu.vector_store %arg24[%220, %c0_60], %219 {strides = array<i32>} : memref<16x16xf32, #tpu.memory_space<vmem>>, vector<2x16xf32>,
    %c6_i32 = arith.constant 6 : i32
    %c2_i32_61 = arith.constant 2 : i32
    %222 = arith.muli %c6_i32, %c2_i32_61 : i32
    %223 = tpu.assume_multiple %222, 2 : i32
    %224 = arith.index_cast %223 : i32 to index
    %c0_62 = arith.constant 0 : index
    %225 = vector.load %arg22[%224, %c0_62] : memref<16x48xf32, #tpu.memory_space<vmem>>, vector<2x48xf32>
    %cst_63 = arith.constant dense<0.000000e+00> : vector<2x48xf32>
    %226 = tpu.matmul %219, %13, %cst_63 {dimension_numbers = #tpu.dot_dimension_numbers<[1], [0], [0], [1], [0, 0, 1, 1], [], []>} : vector<2x16xf32>, vector<16x48xf32>, vector<2x48xf32> -> vector<2x48xf32>
    %227 = arith.addf %226, %16 : vector<2x48xf32>
    %228 = vector.extract_strided_slice %225 {offsets = [0, 0], sizes = [2, 16], strides = [1, 1]} : vector<2x48xf32> to vector<2x16xf32>
    %229 = vector.extract_strided_slice %227 {offsets = [0, 0], sizes = [2, 16], strides = [1, 1]} : vector<2x48xf32> to vector<2x16xf32>
    %230 = arith.addf %228, %229 : vector<2x16xf32>
    %231 = arith.negf %230 : vector<2x16xf32>
    %232 = math.exp %231 : vector<2x16xf32>
    %cst_64 = arith.constant 1.000000e+00 : f32
    %233 = vector.broadcast %cst_64 : f32 to vector<2x16xf32>
    %234 = arith.addf %233, %232 : vector<2x16xf32>
    %235 = arith.divf %233, %234 : vector<2x16xf32>
    %236 = vector.extract_strided_slice %225 {offsets = [0, 16], sizes = [2, 16], strides = [1, 1]} : vector<2x48xf32> to vector<2x16xf32>
    %237 = vector.extract_strided_slice %227 {offsets = [0, 16], sizes = [2, 16], strides = [1, 1]} : vector<2x48xf32> to vector<2x16xf32>
    %238 = arith.addf %236, %237 : vector<2x16xf32>
    %239 = arith.negf %238 : vector<2x16xf32>
    %240 = math.exp %239 : vector<2x16xf32>
    %cst_65 = arith.constant 1.000000e+00 : f32
    %241 = vector.broadcast %cst_65 : f32 to vector<2x16xf32>
    %242 = arith.addf %241, %240 : vector<2x16xf32>
    %243 = arith.divf %241, %242 : vector<2x16xf32>
    %244 = vector.extract_strided_slice %225 {offsets = [0, 32], sizes = [2, 16], strides = [1, 1]} : vector<2x48xf32> to vector<2x16xf32>
    %245 = vector.extract_strided_slice %227 {offsets = [0, 32], sizes = [2, 16], strides = [1, 1]} : vector<2x48xf32> to vector<2x16xf32>
    %246 = arith.mulf %235, %245 : vector<2x16xf32>
    %247 = arith.addf %244, %246 : vector<2x16xf32>
    %248 = math.tanh %247 : vector<2x16xf32>
    %cst_66 = arith.constant 1.000000e+00 : f32
    %249 = vector.broadcast %cst_66 : f32 to vector<2x16xf32>
    %250 = arith.subf %249, %243 : vector<2x16xf32>
    %251 = arith.mulf %250, %248 : vector<2x16xf32>
    %252 = arith.mulf %243, %219 : vector<2x16xf32>
    %253 = arith.addf %251, %252 : vector<2x16xf32>
    %254 = arith.index_cast %223 : i32 to index
    %c0_67 = arith.constant 0 : index
    %255 = vector.load %arg24[%254, %c0_67] : memref<16x16xf32, #tpu.memory_space<vmem>>, vector<2x16xf32>
    tpu.vector_store %arg24[%254, %c0_67], %253 {strides = array<i32>} : memref<16x16xf32, #tpu.memory_space<vmem>>, vector<2x16xf32>,
    %c7_i32 = arith.constant 7 : i32
    %c2_i32_68 = arith.constant 2 : i32
    %256 = arith.muli %c7_i32, %c2_i32_68 : i32
    %257 = tpu.assume_multiple %256, 2 : i32
    %258 = arith.index_cast %257 : i32 to index
    %c0_69 = arith.constant 0 : index
    %259 = vector.load %arg22[%258, %c0_69] : memref<16x48xf32, #tpu.memory_space<vmem>>, vector<2x48xf32>
    %cst_70 = arith.constant dense<0.000000e+00> : vector<2x48xf32>
    %260 = tpu.matmul %253, %13, %cst_70 {dimension_numbers = #tpu.dot_dimension_numbers<[1], [0], [0], [1], [0, 0, 1, 1], [], []>} : vector<2x16xf32>, vector<16x48xf32>, vector<2x48xf32> -> vector<2x48xf32>
    %261 = arith.addf %260, %16 : vector<2x48xf32>
    %262 = vector.extract_strided_slice %259 {offsets = [0, 0], sizes = [2, 16], strides = [1, 1]} : vector<2x48xf32> to vector<2x16xf32>
    %263 = vector.extract_strided_slice %261 {offsets = [0, 0], sizes = [2, 16], strides = [1, 1]} : vector<2x48xf32> to vector<2x16xf32>
    %264 = arith.addf %262, %263 : vector<2x16xf32>
    %265 = arith.negf %264 : vector<2x16xf32>
    %266 = math.exp %265 : vector<2x16xf32>
    %cst_71 = arith.constant 1.000000e+00 : f32
    %267 = vector.broadcast %cst_71 : f32 to vector<2x16xf32>
    %268 = arith.addf %267, %266 : vector<2x16xf32>
    %269 = arith.divf %267, %268 : vector<2x16xf32>
    %270 = vector.extract_strided_slice %259 {offsets = [0, 16], sizes = [2, 16], strides = [1, 1]} : vector<2x48xf32> to vector<2x16xf32>
    %271 = vector.extract_strided_slice %261 {offsets = [0, 16], sizes = [2, 16], strides = [1, 1]} : vector<2x48xf32> to vector<2x16xf32>
    %272 = arith.addf %270, %271 : vector<2x16xf32>
    %273 = arith.negf %272 : vector<2x16xf32>
    %274 = math.exp %273 : vector<2x16xf32>
    %cst_72 = arith.constant 1.000000e+00 : f32
    %275 = vector.broadcast %cst_72 : f32 to vector<2x16xf32>
    %276 = arith.addf %275, %274 : vector<2x16xf32>
    %277 = arith.divf %275, %276 : vector<2x16xf32>
    %278 = vector.extract_strided_slice %259 {offsets = [0, 32], sizes = [2, 16], strides = [1, 1]} : vector<2x48xf32> to vector<2x16xf32>
    %279 = vector.extract_strided_slice %261 {offsets = [0, 32], sizes = [2, 16], strides = [1, 1]} : vector<2x48xf32> to vector<2x16xf32>
    %280 = arith.mulf %269, %279 : vector<2x16xf32>
    %281 = arith.addf %278, %280 : vector<2x16xf32>
    %282 = math.tanh %281 : vector<2x16xf32>
    %cst_73 = arith.constant 1.000000e+00 : f32
    %283 = vector.broadcast %cst_73 : f32 to vector<2x16xf32>
    %284 = arith.subf %283, %277 : vector<2x16xf32>
    %285 = arith.mulf %284, %282 : vector<2x16xf32>
    %286 = arith.mulf %277, %253 : vector<2x16xf32>
    %287 = arith.addf %285, %286 : vector<2x16xf32>
    %288 = arith.index_cast %257 : i32 to index
    %c0_74 = arith.constant 0 : index
    %289 = vector.load %arg24[%288, %c0_74] : memref<16x16xf32, #tpu.memory_space<vmem>>, vector<2x16xf32>
    tpu.vector_store %arg24[%288, %c0_74], %287 {strides = array<i32>} : memref<16x16xf32, #tpu.memory_space<vmem>>, vector<2x16xf32>,
    %c8_i32 = arith.constant 8 : i32
    %c0_75 = arith.constant 0 : index
    %c0_76 = arith.constant 0 : index
    %290 = vector.load %arg6[%c0_75, %c0_76] : memref<16x48xf32, #tpu.memory_space<vmem>>, vector<16x48xf32>
    %c0_77 = arith.constant 0 : index
    %c0_78 = arith.constant 0 : index
    %291 = vector.load %arg8[%c0_77, %c0_78] : memref<1x48xf32, #tpu.memory_space<vmem>>, vector<1x48xf32>
    %292 = vector.shape_cast %291 : vector<1x48xf32> to vector<1x48xf32>
    %293 = vector.broadcast %292 : vector<1x48xf32> to vector<2x48xf32>
    %cst_79 = arith.constant 0.000000e+00 : f32
    %294 = vector.broadcast %cst_79 : f32 to vector<2x16xf32>
    %c0_i32_80 = arith.constant 0 : i32
    %c7_i32_81 = arith.constant 7 : i32
    %295 = arith.subi %c7_i32_81, %c0_i32_80 : i32
    %c2_i32_82 = arith.constant 2 : i32
    %296 = arith.muli %295, %c2_i32_82 : i32
    %297 = tpu.assume_multiple %296, 2 : i32
    %298 = arith.index_cast %297 : i32 to index
    %c0_83 = arith.constant 0 : index
    %299 = vector.load %arg23[%298, %c0_83] : memref<16x48xf32, #tpu.memory_space<vmem>>, vector<2x48xf32>
    %cst_84 = arith.constant dense<0.000000e+00> : vector<2x48xf32>
    %300 = tpu.matmul %294, %290, %cst_84 {dimension_numbers = #tpu.dot_dimension_numbers<[1], [0], [0], [1], [0, 0, 1, 1], [], []>} : vector<2x16xf32>, vector<16x48xf32>, vector<2x48xf32> -> vector<2x48xf32>
    %301 = arith.addf %300, %293 : vector<2x48xf32>
    %302 = vector.extract_strided_slice %299 {offsets = [0, 0], sizes = [2, 16], strides = [1, 1]} : vector<2x48xf32> to vector<2x16xf32>
    %303 = vector.extract_strided_slice %301 {offsets = [0, 0], sizes = [2, 16], strides = [1, 1]} : vector<2x48xf32> to vector<2x16xf32>
    %304 = arith.addf %302, %303 : vector<2x16xf32>
    %305 = arith.negf %304 : vector<2x16xf32>
    %306 = math.exp %305 : vector<2x16xf32>
    %cst_85 = arith.constant 1.000000e+00 : f32
    %307 = vector.broadcast %cst_85 : f32 to vector<2x16xf32>
    %308 = arith.addf %307, %306 : vector<2x16xf32>
    %309 = arith.divf %307, %308 : vector<2x16xf32>
    %310 = vector.extract_strided_slice %299 {offsets = [0, 16], sizes = [2, 16], strides = [1, 1]} : vector<2x48xf32> to vector<2x16xf32>
    %311 = vector.extract_strided_slice %301 {offsets = [0, 16], sizes = [2, 16], strides = [1, 1]} : vector<2x48xf32> to vector<2x16xf32>
    %312 = arith.addf %310, %311 : vector<2x16xf32>
    %313 = arith.negf %312 : vector<2x16xf32>
    %314 = math.exp %313 : vector<2x16xf32>
    %cst_86 = arith.constant 1.000000e+00 : f32
    %315 = vector.broadcast %cst_86 : f32 to vector<2x16xf32>
    %316 = arith.addf %315, %314 : vector<2x16xf32>
    %317 = arith.divf %315, %316 : vector<2x16xf32>
    %318 = vector.extract_strided_slice %299 {offsets = [0, 32], sizes = [2, 16], strides = [1, 1]} : vector<2x48xf32> to vector<2x16xf32>
    %319 = vector.extract_strided_slice %301 {offsets = [0, 32], sizes = [2, 16], strides = [1, 1]} : vector<2x48xf32> to vector<2x16xf32>
    %320 = arith.mulf %309, %319 : vector<2x16xf32>
    %321 = arith.addf %318, %320 : vector<2x16xf32>
    %322 = math.tanh %321 : vector<2x16xf32>
    %cst_87 = arith.constant 1.000000e+00 : f32
    %323 = vector.broadcast %cst_87 : f32 to vector<2x16xf32>
    %324 = arith.subf %323, %317 : vector<2x16xf32>
    %325 = arith.mulf %324, %322 : vector<2x16xf32>
    %326 = arith.mulf %317, %294 : vector<2x16xf32>
    %327 = arith.addf %325, %326 : vector<2x16xf32>
    %328 = arith.index_cast %297 : i32 to index
    %c0_88 = arith.constant 0 : index
    %329 = vector.load %arg25[%328, %c0_88] : memref<16x16xf32, #tpu.memory_space<vmem>>, vector<2x16xf32>
    tpu.vector_store %arg25[%328, %c0_88], %327 {strides = array<i32>} : memref<16x16xf32, #tpu.memory_space<vmem>>, vector<2x16xf32>,
    %c1_i32_89 = arith.constant 1 : i32
    %c7_i32_90 = arith.constant 7 : i32
    %330 = arith.subi %c7_i32_90, %c1_i32_89 : i32
    %c2_i32_91 = arith.constant 2 : i32
    %331 = arith.muli %330, %c2_i32_91 : i32
    %332 = tpu.assume_multiple %331, 2 : i32
    %333 = arith.index_cast %332 : i32 to index
    %c0_92 = arith.constant 0 : index
    %334 = vector.load %arg23[%333, %c0_92] : memref<16x48xf32, #tpu.memory_space<vmem>>, vector<2x48xf32>
    %cst_93 = arith.constant dense<0.000000e+00> : vector<2x48xf32>
    %335 = tpu.matmul %327, %290, %cst_93 {dimension_numbers = #tpu.dot_dimension_numbers<[1], [0], [0], [1], [0, 0, 1, 1], [], []>} : vector<2x16xf32>, vector<16x48xf32>, vector<2x48xf32> -> vector<2x48xf32>
    %336 = arith.addf %335, %293 : vector<2x48xf32>
    %337 = vector.extract_strided_slice %334 {offsets = [0, 0], sizes = [2, 16], strides = [1, 1]} : vector<2x48xf32> to vector<2x16xf32>
    %338 = vector.extract_strided_slice %336 {offsets = [0, 0], sizes = [2, 16], strides = [1, 1]} : vector<2x48xf32> to vector<2x16xf32>
    %339 = arith.addf %337, %338 : vector<2x16xf32>
    %340 = arith.negf %339 : vector<2x16xf32>
    %341 = math.exp %340 : vector<2x16xf32>
    %cst_94 = arith.constant 1.000000e+00 : f32
    %342 = vector.broadcast %cst_94 : f32 to vector<2x16xf32>
    %343 = arith.addf %342, %341 : vector<2x16xf32>
    %344 = arith.divf %342, %343 : vector<2x16xf32>
    %345 = vector.extract_strided_slice %334 {offsets = [0, 16], sizes = [2, 16], strides = [1, 1]} : vector<2x48xf32> to vector<2x16xf32>
    %346 = vector.extract_strided_slice %336 {offsets = [0, 16], sizes = [2, 16], strides = [1, 1]} : vector<2x48xf32> to vector<2x16xf32>
    %347 = arith.addf %345, %346 : vector<2x16xf32>
    %348 = arith.negf %347 : vector<2x16xf32>
    %349 = math.exp %348 : vector<2x16xf32>
    %cst_95 = arith.constant 1.000000e+00 : f32
    %350 = vector.broadcast %cst_95 : f32 to vector<2x16xf32>
    %351 = arith.addf %350, %349 : vector<2x16xf32>
    %352 = arith.divf %350, %351 : vector<2x16xf32>
    %353 = vector.extract_strided_slice %334 {offsets = [0, 32], sizes = [2, 16], strides = [1, 1]} : vector<2x48xf32> to vector<2x16xf32>
    %354 = vector.extract_strided_slice %336 {offsets = [0, 32], sizes = [2, 16], strides = [1, 1]} : vector<2x48xf32> to vector<2x16xf32>
    %355 = arith.mulf %344, %354 : vector<2x16xf32>
    %356 = arith.addf %353, %355 : vector<2x16xf32>
    %357 = math.tanh %356 : vector<2x16xf32>
    %cst_96 = arith.constant 1.000000e+00 : f32
    %358 = vector.broadcast %cst_96 : f32 to vector<2x16xf32>
    %359 = arith.subf %358, %352 : vector<2x16xf32>
    %360 = arith.mulf %359, %357 : vector<2x16xf32>
    %361 = arith.mulf %352, %327 : vector<2x16xf32>
    %362 = arith.addf %360, %361 : vector<2x16xf32>
    %363 = arith.index_cast %332 : i32 to index
    %c0_97 = arith.constant 0 : index
    %364 = vector.load %arg25[%363, %c0_97] : memref<16x16xf32, #tpu.memory_space<vmem>>, vector<2x16xf32>
    tpu.vector_store %arg25[%363, %c0_97], %362 {strides = array<i32>} : memref<16x16xf32, #tpu.memory_space<vmem>>, vector<2x16xf32>,
    %c2_i32_98 = arith.constant 2 : i32
    %c7_i32_99 = arith.constant 7 : i32
    %365 = arith.subi %c7_i32_99, %c2_i32_98 : i32
    %c2_i32_100 = arith.constant 2 : i32
    %366 = arith.muli %365, %c2_i32_100 : i32
    %367 = tpu.assume_multiple %366, 2 : i32
    %368 = arith.index_cast %367 : i32 to index
    %c0_101 = arith.constant 0 : index
    %369 = vector.load %arg23[%368, %c0_101] : memref<16x48xf32, #tpu.memory_space<vmem>>, vector<2x48xf32>
    %cst_102 = arith.constant dense<0.000000e+00> : vector<2x48xf32>
    %370 = tpu.matmul %362, %290, %cst_102 {dimension_numbers = #tpu.dot_dimension_numbers<[1], [0], [0], [1], [0, 0, 1, 1], [], []>} : vector<2x16xf32>, vector<16x48xf32>, vector<2x48xf32> -> vector<2x48xf32>
    %371 = arith.addf %370, %293 : vector<2x48xf32>
    %372 = vector.extract_strided_slice %369 {offsets = [0, 0], sizes = [2, 16], strides = [1, 1]} : vector<2x48xf32> to vector<2x16xf32>
    %373 = vector.extract_strided_slice %371 {offsets = [0, 0], sizes = [2, 16], strides = [1, 1]} : vector<2x48xf32> to vector<2x16xf32>
    %374 = arith.addf %372, %373 : vector<2x16xf32>
    %375 = arith.negf %374 : vector<2x16xf32>
    %376 = math.exp %375 : vector<2x16xf32>
    %cst_103 = arith.constant 1.000000e+00 : f32
    %377 = vector.broadcast %cst_103 : f32 to vector<2x16xf32>
    %378 = arith.addf %377, %376 : vector<2x16xf32>
    %379 = arith.divf %377, %378 : vector<2x16xf32>
    %380 = vector.extract_strided_slice %369 {offsets = [0, 16], sizes = [2, 16], strides = [1, 1]} : vector<2x48xf32> to vector<2x16xf32>
    %381 = vector.extract_strided_slice %371 {offsets = [0, 16], sizes = [2, 16], strides = [1, 1]} : vector<2x48xf32> to vector<2x16xf32>
    %382 = arith.addf %380, %381 : vector<2x16xf32>
    %383 = arith.negf %382 : vector<2x16xf32>
    %384 = math.exp %383 : vector<2x16xf32>
    %cst_104 = arith.constant 1.000000e+00 : f32
    %385 = vector.broadcast %cst_104 : f32 to vector<2x16xf32>
    %386 = arith.addf %385, %384 : vector<2x16xf32>
    %387 = arith.divf %385, %386 : vector<2x16xf32>
    %388 = vector.extract_strided_slice %369 {offsets = [0, 32], sizes = [2, 16], strides = [1, 1]} : vector<2x48xf32> to vector<2x16xf32>
    %389 = vector.extract_strided_slice %371 {offsets = [0, 32], sizes = [2, 16], strides = [1, 1]} : vector<2x48xf32> to vector<2x16xf32>
    %390 = arith.mulf %379, %389 : vector<2x16xf32>
    %391 = arith.addf %388, %390 : vector<2x16xf32>
    %392 = math.tanh %391 : vector<2x16xf32>
    %cst_105 = arith.constant 1.000000e+00 : f32
    %393 = vector.broadcast %cst_105 : f32 to vector<2x16xf32>
    %394 = arith.subf %393, %387 : vector<2x16xf32>
    %395 = arith.mulf %394, %392 : vector<2x16xf32>
    %396 = arith.mulf %387, %362 : vector<2x16xf32>
    %397 = arith.addf %395, %396 : vector<2x16xf32>
    %398 = arith.index_cast %367 : i32 to index
    %c0_106 = arith.constant 0 : index
    %399 = vector.load %arg25[%398, %c0_106] : memref<16x16xf32, #tpu.memory_space<vmem>>, vector<2x16xf32>
    tpu.vector_store %arg25[%398, %c0_106], %397 {strides = array<i32>} : memref<16x16xf32, #tpu.memory_space<vmem>>, vector<2x16xf32>,
    %c3_i32_107 = arith.constant 3 : i32
    %c7_i32_108 = arith.constant 7 : i32
    %400 = arith.subi %c7_i32_108, %c3_i32_107 : i32
    %c2_i32_109 = arith.constant 2 : i32
    %401 = arith.muli %400, %c2_i32_109 : i32
    %402 = tpu.assume_multiple %401, 2 : i32
    %403 = arith.index_cast %402 : i32 to index
    %c0_110 = arith.constant 0 : index
    %404 = vector.load %arg23[%403, %c0_110] : memref<16x48xf32, #tpu.memory_space<vmem>>, vector<2x48xf32>
    %cst_111 = arith.constant dense<0.000000e+00> : vector<2x48xf32>
    %405 = tpu.matmul %397, %290, %cst_111 {dimension_numbers = #tpu.dot_dimension_numbers<[1], [0], [0], [1], [0, 0, 1, 1], [], []>} : vector<2x16xf32>, vector<16x48xf32>, vector<2x48xf32> -> vector<2x48xf32>
    %406 = arith.addf %405, %293 : vector<2x48xf32>
    %407 = vector.extract_strided_slice %404 {offsets = [0, 0], sizes = [2, 16], strides = [1, 1]} : vector<2x48xf32> to vector<2x16xf32>
    %408 = vector.extract_strided_slice %406 {offsets = [0, 0], sizes = [2, 16], strides = [1, 1]} : vector<2x48xf32> to vector<2x16xf32>
    %409 = arith.addf %407, %408 : vector<2x16xf32>
    %410 = arith.negf %409 : vector<2x16xf32>
    %411 = math.exp %410 : vector<2x16xf32>
    %cst_112 = arith.constant 1.000000e+00 : f32
    %412 = vector.broadcast %cst_112 : f32 to vector<2x16xf32>
    %413 = arith.addf %412, %411 : vector<2x16xf32>
    %414 = arith.divf %412, %413 : vector<2x16xf32>
    %415 = vector.extract_strided_slice %404 {offsets = [0, 16], sizes = [2, 16], strides = [1, 1]} : vector<2x48xf32> to vector<2x16xf32>
    %416 = vector.extract_strided_slice %406 {offsets = [0, 16], sizes = [2, 16], strides = [1, 1]} : vector<2x48xf32> to vector<2x16xf32>
    %417 = arith.addf %415, %416 : vector<2x16xf32>
    %418 = arith.negf %417 : vector<2x16xf32>
    %419 = math.exp %418 : vector<2x16xf32>
    %cst_113 = arith.constant 1.000000e+00 : f32
    %420 = vector.broadcast %cst_113 : f32 to vector<2x16xf32>
    %421 = arith.addf %420, %419 : vector<2x16xf32>
    %422 = arith.divf %420, %421 : vector<2x16xf32>
    %423 = vector.extract_strided_slice %404 {offsets = [0, 32], sizes = [2, 16], strides = [1, 1]} : vector<2x48xf32> to vector<2x16xf32>
    %424 = vector.extract_strided_slice %406 {offsets = [0, 32], sizes = [2, 16], strides = [1, 1]} : vector<2x48xf32> to vector<2x16xf32>
    %425 = arith.mulf %414, %424 : vector<2x16xf32>
    %426 = arith.addf %423, %425 : vector<2x16xf32>
    %427 = math.tanh %426 : vector<2x16xf32>
    %cst_114 = arith.constant 1.000000e+00 : f32
    %428 = vector.broadcast %cst_114 : f32 to vector<2x16xf32>
    %429 = arith.subf %428, %422 : vector<2x16xf32>
    %430 = arith.mulf %429, %427 : vector<2x16xf32>
    %431 = arith.mulf %422, %397 : vector<2x16xf32>
    %432 = arith.addf %430, %431 : vector<2x16xf32>
    %433 = arith.index_cast %402 : i32 to index
    %c0_115 = arith.constant 0 : index
    %434 = vector.load %arg25[%433, %c0_115] : memref<16x16xf32, #tpu.memory_space<vmem>>, vector<2x16xf32>
    tpu.vector_store %arg25[%433, %c0_115], %432 {strides = array<i32>} : memref<16x16xf32, #tpu.memory_space<vmem>>, vector<2x16xf32>,
    %c4_i32_116 = arith.constant 4 : i32
    %c7_i32_117 = arith.constant 7 : i32
    %435 = arith.subi %c7_i32_117, %c4_i32_116 : i32
    %c2_i32_118 = arith.constant 2 : i32
    %436 = arith.muli %435, %c2_i32_118 : i32
    %437 = tpu.assume_multiple %436, 2 : i32
    %438 = arith.index_cast %437 : i32 to index
    %c0_119 = arith.constant 0 : index
    %439 = vector.load %arg23[%438, %c0_119] : memref<16x48xf32, #tpu.memory_space<vmem>>, vector<2x48xf32>
    %cst_120 = arith.constant dense<0.000000e+00> : vector<2x48xf32>
    %440 = tpu.matmul %432, %290, %cst_120 {dimension_numbers = #tpu.dot_dimension_numbers<[1], [0], [0], [1], [0, 0, 1, 1], [], []>} : vector<2x16xf32>, vector<16x48xf32>, vector<2x48xf32> -> vector<2x48xf32>
    %441 = arith.addf %440, %293 : vector<2x48xf32>
    %442 = vector.extract_strided_slice %439 {offsets = [0, 0], sizes = [2, 16], strides = [1, 1]} : vector<2x48xf32> to vector<2x16xf32>
    %443 = vector.extract_strided_slice %441 {offsets = [0, 0], sizes = [2, 16], strides = [1, 1]} : vector<2x48xf32> to vector<2x16xf32>
    %444 = arith.addf %442, %443 : vector<2x16xf32>
    %445 = arith.negf %444 : vector<2x16xf32>
    %446 = math.exp %445 : vector<2x16xf32>
    %cst_121 = arith.constant 1.000000e+00 : f32
    %447 = vector.broadcast %cst_121 : f32 to vector<2x16xf32>
    %448 = arith.addf %447, %446 : vector<2x16xf32>
    %449 = arith.divf %447, %448 : vector<2x16xf32>
    %450 = vector.extract_strided_slice %439 {offsets = [0, 16], sizes = [2, 16], strides = [1, 1]} : vector<2x48xf32> to vector<2x16xf32>
    %451 = vector.extract_strided_slice %441 {offsets = [0, 16], sizes = [2, 16], strides = [1, 1]} : vector<2x48xf32> to vector<2x16xf32>
    %452 = arith.addf %450, %451 : vector<2x16xf32>
    %453 = arith.negf %452 : vector<2x16xf32>
    %454 = math.exp %453 : vector<2x16xf32>
    %cst_122 = arith.constant 1.000000e+00 : f32
    %455 = vector.broadcast %cst_122 : f32 to vector<2x16xf32>
    %456 = arith.addf %455, %454 : vector<2x16xf32>
    %457 = arith.divf %455, %456 : vector<2x16xf32>
    %458 = vector.extract_strided_slice %439 {offsets = [0, 32], sizes = [2, 16], strides = [1, 1]} : vector<2x48xf32> to vector<2x16xf32>
    %459 = vector.extract_strided_slice %441 {offsets = [0, 32], sizes = [2, 16], strides = [1, 1]} : vector<2x48xf32> to vector<2x16xf32>
    %460 = arith.mulf %449, %459 : vector<2x16xf32>
    %461 = arith.addf %458, %460 : vector<2x16xf32>
    %462 = math.tanh %461 : vector<2x16xf32>
    %cst_123 = arith.constant 1.000000e+00 : f32
    %463 = vector.broadcast %cst_123 : f32 to vector<2x16xf32>
    %464 = arith.subf %463, %457 : vector<2x16xf32>
    %465 = arith.mulf %464, %462 : vector<2x16xf32>
    %466 = arith.mulf %457, %432 : vector<2x16xf32>
    %467 = arith.addf %465, %466 : vector<2x16xf32>
    %468 = arith.index_cast %437 : i32 to index
    %c0_124 = arith.constant 0 : index
    %469 = vector.load %arg25[%468, %c0_124] : memref<16x16xf32, #tpu.memory_space<vmem>>, vector<2x16xf32>
    tpu.vector_store %arg25[%468, %c0_124], %467 {strides = array<i32>} : memref<16x16xf32, #tpu.memory_space<vmem>>, vector<2x16xf32>,
    %c5_i32_125 = arith.constant 5 : i32
    %c7_i32_126 = arith.constant 7 : i32
    %470 = arith.subi %c7_i32_126, %c5_i32_125 : i32
    %c2_i32_127 = arith.constant 2 : i32
    %471 = arith.muli %470, %c2_i32_127 : i32
    %472 = tpu.assume_multiple %471, 2 : i32
    %473 = arith.index_cast %472 : i32 to index
    %c0_128 = arith.constant 0 : index
    %474 = vector.load %arg23[%473, %c0_128] : memref<16x48xf32, #tpu.memory_space<vmem>>, vector<2x48xf32>
    %cst_129 = arith.constant dense<0.000000e+00> : vector<2x48xf32>
    %475 = tpu.matmul %467, %290, %cst_129 {dimension_numbers = #tpu.dot_dimension_numbers<[1], [0], [0], [1], [0, 0, 1, 1], [], []>} : vector<2x16xf32>, vector<16x48xf32>, vector<2x48xf32> -> vector<2x48xf32>
    %476 = arith.addf %475, %293 : vector<2x48xf32>
    %477 = vector.extract_strided_slice %474 {offsets = [0, 0], sizes = [2, 16], strides = [1, 1]} : vector<2x48xf32> to vector<2x16xf32>
    %478 = vector.extract_strided_slice %476 {offsets = [0, 0], sizes = [2, 16], strides = [1, 1]} : vector<2x48xf32> to vector<2x16xf32>
    %479 = arith.addf %477, %478 : vector<2x16xf32>
    %480 = arith.negf %479 : vector<2x16xf32>
    %481 = math.exp %480 : vector<2x16xf32>
    %cst_130 = arith.constant 1.000000e+00 : f32
    %482 = vector.broadcast %cst_130 : f32 to vector<2x16xf32>
    %483 = arith.addf %482, %481 : vector<2x16xf32>
    %484 = arith.divf %482, %483 : vector<2x16xf32>
    %485 = vector.extract_strided_slice %474 {offsets = [0, 16], sizes = [2, 16], strides = [1, 1]} : vector<2x48xf32> to vector<2x16xf32>
    %486 = vector.extract_strided_slice %476 {offsets = [0, 16], sizes = [2, 16], strides = [1, 1]} : vector<2x48xf32> to vector<2x16xf32>
    %487 = arith.addf %485, %486 : vector<2x16xf32>
    %488 = arith.negf %487 : vector<2x16xf32>
    %489 = math.exp %488 : vector<2x16xf32>
    %cst_131 = arith.constant 1.000000e+00 : f32
    %490 = vector.broadcast %cst_131 : f32 to vector<2x16xf32>
    %491 = arith.addf %490, %489 : vector<2x16xf32>
    %492 = arith.divf %490, %491 : vector<2x16xf32>
    %493 = vector.extract_strided_slice %474 {offsets = [0, 32], sizes = [2, 16], strides = [1, 1]} : vector<2x48xf32> to vector<2x16xf32>
    %494 = vector.extract_strided_slice %476 {offsets = [0, 32], sizes = [2, 16], strides = [1, 1]} : vector<2x48xf32> to vector<2x16xf32>
    %495 = arith.mulf %484, %494 : vector<2x16xf32>
    %496 = arith.addf %493, %495 : vector<2x16xf32>
    %497 = math.tanh %496 : vector<2x16xf32>
    %cst_132 = arith.constant 1.000000e+00 : f32
    %498 = vector.broadcast %cst_132 : f32 to vector<2x16xf32>
    %499 = arith.subf %498, %492 : vector<2x16xf32>
    %500 = arith.mulf %499, %497 : vector<2x16xf32>
    %501 = arith.mulf %492, %467 : vector<2x16xf32>
    %502 = arith.addf %500, %501 : vector<2x16xf32>
    %503 = arith.index_cast %472 : i32 to index
    %c0_133 = arith.constant 0 : index
    %504 = vector.load %arg25[%503, %c0_133] : memref<16x16xf32, #tpu.memory_space<vmem>>, vector<2x16xf32>
    tpu.vector_store %arg25[%503, %c0_133], %502 {strides = array<i32>} : memref<16x16xf32, #tpu.memory_space<vmem>>, vector<2x16xf32>,
    %c6_i32_134 = arith.constant 6 : i32
    %c7_i32_135 = arith.constant 7 : i32
    %505 = arith.subi %c7_i32_135, %c6_i32_134 : i32
    %c2_i32_136 = arith.constant 2 : i32
    %506 = arith.muli %505, %c2_i32_136 : i32
    %507 = tpu.assume_multiple %506, 2 : i32
    %508 = arith.index_cast %507 : i32 to index
    %c0_137 = arith.constant 0 : index
    %509 = vector.load %arg23[%508, %c0_137] : memref<16x48xf32, #tpu.memory_space<vmem>>, vector<2x48xf32>
    %cst_138 = arith.constant dense<0.000000e+00> : vector<2x48xf32>
    %510 = tpu.matmul %502, %290, %cst_138 {dimension_numbers = #tpu.dot_dimension_numbers<[1], [0], [0], [1], [0, 0, 1, 1], [], []>} : vector<2x16xf32>, vector<16x48xf32>, vector<2x48xf32> -> vector<2x48xf32>
    %511 = arith.addf %510, %293 : vector<2x48xf32>
    %512 = vector.extract_strided_slice %509 {offsets = [0, 0], sizes = [2, 16], strides = [1, 1]} : vector<2x48xf32> to vector<2x16xf32>
    %513 = vector.extract_strided_slice %511 {offsets = [0, 0], sizes = [2, 16], strides = [1, 1]} : vector<2x48xf32> to vector<2x16xf32>
    %514 = arith.addf %512, %513 : vector<2x16xf32>
    %515 = arith.negf %514 : vector<2x16xf32>
    %516 = math.exp %515 : vector<2x16xf32>
    %cst_139 = arith.constant 1.000000e+00 : f32
    %517 = vector.broadcast %cst_139 : f32 to vector<2x16xf32>
    %518 = arith.addf %517, %516 : vector<2x16xf32>
    %519 = arith.divf %517, %518 : vector<2x16xf32>
    %520 = vector.extract_strided_slice %509 {offsets = [0, 16], sizes = [2, 16], strides = [1, 1]} : vector<2x48xf32> to vector<2x16xf32>
    %521 = vector.extract_strided_slice %511 {offsets = [0, 16], sizes = [2, 16], strides = [1, 1]} : vector<2x48xf32> to vector<2x16xf32>
    %522 = arith.addf %520, %521 : vector<2x16xf32>
    %523 = arith.negf %522 : vector<2x16xf32>
    %524 = math.exp %523 : vector<2x16xf32>
    %cst_140 = arith.constant 1.000000e+00 : f32
    %525 = vector.broadcast %cst_140 : f32 to vector<2x16xf32>
    %526 = arith.addf %525, %524 : vector<2x16xf32>
    %527 = arith.divf %525, %526 : vector<2x16xf32>
    %528 = vector.extract_strided_slice %509 {offsets = [0, 32], sizes = [2, 16], strides = [1, 1]} : vector<2x48xf32> to vector<2x16xf32>
    %529 = vector.extract_strided_slice %511 {offsets = [0, 32], sizes = [2, 16], strides = [1, 1]} : vector<2x48xf32> to vector<2x16xf32>
    %530 = arith.mulf %519, %529 : vector<2x16xf32>
    %531 = arith.addf %528, %530 : vector<2x16xf32>
    %532 = math.tanh %531 : vector<2x16xf32>
    %cst_141 = arith.constant 1.000000e+00 : f32
    %533 = vector.broadcast %cst_141 : f32 to vector<2x16xf32>
    %534 = arith.subf %533, %527 : vector<2x16xf32>
    %535 = arith.mulf %534, %532 : vector<2x16xf32>
    %536 = arith.mulf %527, %502 : vector<2x16xf32>
    %537 = arith.addf %535, %536 : vector<2x16xf32>
    %538 = arith.index_cast %507 : i32 to index
    %c0_142 = arith.constant 0 : index
    %539 = vector.load %arg25[%538, %c0_142] : memref<16x16xf32, #tpu.memory_space<vmem>>, vector<2x16xf32>
    tpu.vector_store %arg25[%538, %c0_142], %537 {strides = array<i32>} : memref<16x16xf32, #tpu.memory_space<vmem>>, vector<2x16xf32>,
    %c7_i32_143 = arith.constant 7 : i32
    %c7_i32_144 = arith.constant 7 : i32
    %540 = arith.subi %c7_i32_144, %c7_i32_143 : i32
    %c2_i32_145 = arith.constant 2 : i32
    %541 = arith.muli %540, %c2_i32_145 : i32
    %542 = tpu.assume_multiple %541, 2 : i32
    %543 = arith.index_cast %542 : i32 to index
    %c0_146 = arith.constant 0 : index
    %544 = vector.load %arg23[%543, %c0_146] : memref<16x48xf32, #tpu.memory_space<vmem>>, vector<2x48xf32>
    %cst_147 = arith.constant dense<0.000000e+00> : vector<2x48xf32>
    %545 = tpu.matmul %537, %290, %cst_147 {dimension_numbers = #tpu.dot_dimension_numbers<[1], [0], [0], [1], [0, 0, 1, 1], [], []>} : vector<2x16xf32>, vector<16x48xf32>, vector<2x48xf32> -> vector<2x48xf32>
    %546 = arith.addf %545, %293 : vector<2x48xf32>
    %547 = vector.extract_strided_slice %544 {offsets = [0, 0], sizes = [2, 16], strides = [1, 1]} : vector<2x48xf32> to vector<2x16xf32>
    %548 = vector.extract_strided_slice %546 {offsets = [0, 0], sizes = [2, 16], strides = [1, 1]} : vector<2x48xf32> to vector<2x16xf32>
    %549 = arith.addf %547, %548 : vector<2x16xf32>
    %550 = arith.negf %549 : vector<2x16xf32>
    %551 = math.exp %550 : vector<2x16xf32>
    %cst_148 = arith.constant 1.000000e+00 : f32
    %552 = vector.broadcast %cst_148 : f32 to vector<2x16xf32>
    %553 = arith.addf %552, %551 : vector<2x16xf32>
    %554 = arith.divf %552, %553 : vector<2x16xf32>
    %555 = vector.extract_strided_slice %544 {offsets = [0, 16], sizes = [2, 16], strides = [1, 1]} : vector<2x48xf32> to vector<2x16xf32>
    %556 = vector.extract_strided_slice %546 {offsets = [0, 16], sizes = [2, 16], strides = [1, 1]} : vector<2x48xf32> to vector<2x16xf32>
    %557 = arith.addf %555, %556 : vector<2x16xf32>
    %558 = arith.negf %557 : vector<2x16xf32>
    %559 = math.exp %558 : vector<2x16xf32>
    %cst_149 = arith.constant 1.000000e+00 : f32
    %560 = vector.broadcast %cst_149 : f32 to vector<2x16xf32>
    %561 = arith.addf %560, %559 : vector<2x16xf32>
    %562 = arith.divf %560, %561 : vector<2x16xf32>
    %563 = vector.extract_strided_slice %544 {offsets = [0, 32], sizes = [2, 16], strides = [1, 1]} : vector<2x48xf32> to vector<2x16xf32>
    %564 = vector.extract_strided_slice %546 {offsets = [0, 32], sizes = [2, 16], strides = [1, 1]} : vector<2x48xf32> to vector<2x16xf32>
    %565 = arith.mulf %554, %564 : vector<2x16xf32>
    %566 = arith.addf %563, %565 : vector<2x16xf32>
    %567 = math.tanh %566 : vector<2x16xf32>
    %cst_150 = arith.constant 1.000000e+00 : f32
    %568 = vector.broadcast %cst_150 : f32 to vector<2x16xf32>
    %569 = arith.subf %568, %562 : vector<2x16xf32>
    %570 = arith.mulf %569, %567 : vector<2x16xf32>
    %571 = arith.mulf %562, %537 : vector<2x16xf32>
    %572 = arith.addf %570, %571 : vector<2x16xf32>
    %573 = arith.index_cast %542 : i32 to index
    %c0_151 = arith.constant 0 : index
    %574 = vector.load %arg25[%573, %c0_151] : memref<16x16xf32, #tpu.memory_space<vmem>>, vector<2x16xf32>
    tpu.vector_store %arg25[%573, %c0_151], %572 {strides = array<i32>} : memref<16x16xf32, #tpu.memory_space<vmem>>, vector<2x16xf32>,
    %c8_i32_152 = arith.constant 8 : i32
    %c0_153 = arith.constant 0 : index
    %c0_154 = arith.constant 0 : index
    %575 = vector.load %arg24[%c0_153, %c0_154] : memref<16x16xf32, #tpu.memory_space<vmem>>, vector<16x16xf32>
    %c0_155 = arith.constant 0 : index
    %c0_156 = arith.constant 0 : index
    %576 = vector.load %arg9[%c0_155, %c0_156] : memref<16x128xf32, #tpu.memory_space<vmem>>, vector<16x128xf32>
    %cst_157 = arith.constant dense<0.000000e+00> : vector<16x128xf32>
    %577 = tpu.matmul %575, %576, %cst_157 {dimension_numbers = #tpu.dot_dimension_numbers<[1], [0], [0], [1], [0, 0, 1, 1], [], []>} : vector<16x16xf32>, vector<16x128xf32>, vector<16x128xf32> -> vector<16x128xf32>
    %c0_158 = arith.constant 0 : index
    %c0_159 = arith.constant 0 : index
    %578 = vector.load %arg25[%c0_158, %c0_159] : memref<16x16xf32, #tpu.memory_space<vmem>>, vector<16x16xf32>
    %c0_160 = arith.constant 0 : index
    %c0_161 = arith.constant 0 : index
    %579 = vector.load %arg10[%c0_160, %c0_161] : memref<16x128xf32, #tpu.memory_space<vmem>>, vector<16x128xf32>
    %cst_162 = arith.constant dense<0.000000e+00> : vector<16x128xf32>
    %580 = tpu.matmul %578, %579, %cst_162 {dimension_numbers = #tpu.dot_dimension_numbers<[1], [0], [0], [1], [0, 0, 1, 1], [], []>} : vector<16x16xf32>, vector<16x128xf32>, vector<16x128xf32> -> vector<16x128xf32>
    %581 = arith.addf %577, %580 : vector<16x128xf32>
    %c0_163 = arith.constant 0 : index
    %c0_164 = arith.constant 0 : index
    %582 = vector.load %arg12[%c0_163, %c0_164] : memref<1x128xf32, #tpu.memory_space<vmem>>, vector<1x128xf32>
    %583 = vector.broadcast %582 : vector<1x128xf32> to vector<16x128xf32>
    %584 = arith.addf %581, %583 : vector<16x128xf32>
    %c0_165 = arith.constant 0 : index
    %c0_166 = arith.constant 0 : index
    %585 = vector.load %arg26[%c0_165, %c0_166] : memref<16x128xf32, #tpu.memory_space<vmem>>, vector<16x128xf32>
    tpu.vector_store %arg26[%c0_165, %c0_166], %584 {strides = array<i32>} : memref<16x128xf32, #tpu.memory_space<vmem>>, vector<16x128xf32>,
    %c0_167 = arith.constant 0 : index
    %c0_168 = arith.constant 0 : index
    %586 = vector.load %arg11[%c0_167, %c0_168] : memref<32x128xf32, #tpu.memory_space<vmem>>, vector<32x128xf32>
    %cst_169 = arith.constant 0.000000e+00 : f32
    %587 = vector.broadcast %cst_169 : f32 to vector<2x32xf32>
    %cst_170 = arith.constant 0.000000e+00 : f32
    %588 = vector.broadcast %cst_170 : f32 to vector<2x32xf32>
    %c0_i32_171 = arith.constant 0 : i32
    %c2_i32_172 = arith.constant 2 : i32
    %589 = arith.muli %c0_i32_171, %c2_i32_172 : i32
    %590 = tpu.assume_multiple %589, 2 : i32
    %591 = arith.index_cast %590 : i32 to index
    %c0_173 = arith.constant 0 : index
    %592 = vector.load %arg26[%591, %c0_173] : memref<16x128xf32, #tpu.memory_space<vmem>>, vector<2x128xf32>
    %cst_174 = arith.constant dense<0.000000e+00> : vector<2x128xf32>
    %593 = tpu.matmul %587, %586, %cst_174 {dimension_numbers = #tpu.dot_dimension_numbers<[1], [0], [0], [1], [0, 0, 1, 1], [], []>} : vector<2x32xf32>, vector<32x128xf32>, vector<2x128xf32> -> vector<2x128xf32>
    %594 = arith.addf %592, %593 : vector<2x128xf32>
    %595 = vector.extract_strided_slice %594 {offsets = [0, 0], sizes = [2, 32], strides = [1, 1]} : vector<2x128xf32> to vector<2x32xf32>
    %596 = arith.negf %595 : vector<2x32xf32>
    %597 = math.exp %596 : vector<2x32xf32>
    %cst_175 = arith.constant 1.000000e+00 : f32
    %598 = vector.broadcast %cst_175 : f32 to vector<2x32xf32>
    %599 = arith.addf %598, %597 : vector<2x32xf32>
    %600 = arith.divf %598, %599 : vector<2x32xf32>
    %601 = vector.extract_strided_slice %594 {offsets = [0, 32], sizes = [2, 32], strides = [1, 1]} : vector<2x128xf32> to vector<2x32xf32>
    %602 = arith.negf %601 : vector<2x32xf32>
    %603 = math.exp %602 : vector<2x32xf32>
    %cst_176 = arith.constant 1.000000e+00 : f32
    %604 = vector.broadcast %cst_176 : f32 to vector<2x32xf32>
    %605 = arith.addf %604, %603 : vector<2x32xf32>
    %606 = arith.divf %604, %605 : vector<2x32xf32>
    %607 = vector.extract_strided_slice %594 {offsets = [0, 64], sizes = [2, 32], strides = [1, 1]} : vector<2x128xf32> to vector<2x32xf32>
    %608 = math.tanh %607 : vector<2x32xf32>
    %609 = vector.extract_strided_slice %594 {offsets = [0, 96], sizes = [2, 32], strides = [1, 1]} : vector<2x128xf32> to vector<2x32xf32>
    %610 = arith.negf %609 : vector<2x32xf32>
    %611 = math.exp %610 : vector<2x32xf32>
    %cst_177 = arith.constant 1.000000e+00 : f32
    %612 = vector.broadcast %cst_177 : f32 to vector<2x32xf32>
    %613 = arith.addf %612, %611 : vector<2x32xf32>
    %614 = arith.divf %612, %613 : vector<2x32xf32>
    %615 = arith.mulf %606, %588 : vector<2x32xf32>
    %616 = arith.mulf %600, %608 : vector<2x32xf32>
    %617 = arith.addf %615, %616 : vector<2x32xf32>
    %618 = math.tanh %617 : vector<2x32xf32>
    %619 = arith.mulf %614, %618 : vector<2x32xf32>
    %620 = arith.index_cast %590 : i32 to index
    %c0_178 = arith.constant 0 : index
    %621 = vector.load %arg27[%620, %c0_178] : memref<16x32xf32, #tpu.memory_space<vmem>>, vector<2x32xf32>
    tpu.vector_store %arg27[%620, %c0_178], %619 {strides = array<i32>} : memref<16x32xf32, #tpu.memory_space<vmem>>, vector<2x32xf32>,
    %c1_i32_179 = arith.constant 1 : i32
    %c2_i32_180 = arith.constant 2 : i32
    %622 = arith.muli %c1_i32_179, %c2_i32_180 : i32
    %623 = tpu.assume_multiple %622, 2 : i32
    %624 = arith.index_cast %623 : i32 to index
    %c0_181 = arith.constant 0 : index
    %625 = vector.load %arg26[%624, %c0_181] : memref<16x128xf32, #tpu.memory_space<vmem>>, vector<2x128xf32>
    %cst_182 = arith.constant dense<0.000000e+00> : vector<2x128xf32>
    %626 = tpu.matmul %619, %586, %cst_182 {dimension_numbers = #tpu.dot_dimension_numbers<[1], [0], [0], [1], [0, 0, 1, 1], [], []>} : vector<2x32xf32>, vector<32x128xf32>, vector<2x128xf32> -> vector<2x128xf32>
    %627 = arith.addf %625, %626 : vector<2x128xf32>
    %628 = vector.extract_strided_slice %627 {offsets = [0, 0], sizes = [2, 32], strides = [1, 1]} : vector<2x128xf32> to vector<2x32xf32>
    %629 = arith.negf %628 : vector<2x32xf32>
    %630 = math.exp %629 : vector<2x32xf32>
    %cst_183 = arith.constant 1.000000e+00 : f32
    %631 = vector.broadcast %cst_183 : f32 to vector<2x32xf32>
    %632 = arith.addf %631, %630 : vector<2x32xf32>
    %633 = arith.divf %631, %632 : vector<2x32xf32>
    %634 = vector.extract_strided_slice %627 {offsets = [0, 32], sizes = [2, 32], strides = [1, 1]} : vector<2x128xf32> to vector<2x32xf32>
    %635 = arith.negf %634 : vector<2x32xf32>
    %636 = math.exp %635 : vector<2x32xf32>
    %cst_184 = arith.constant 1.000000e+00 : f32
    %637 = vector.broadcast %cst_184 : f32 to vector<2x32xf32>
    %638 = arith.addf %637, %636 : vector<2x32xf32>
    %639 = arith.divf %637, %638 : vector<2x32xf32>
    %640 = vector.extract_strided_slice %627 {offsets = [0, 64], sizes = [2, 32], strides = [1, 1]} : vector<2x128xf32> to vector<2x32xf32>
    %641 = math.tanh %640 : vector<2x32xf32>
    %642 = vector.extract_strided_slice %627 {offsets = [0, 96], sizes = [2, 32], strides = [1, 1]} : vector<2x128xf32> to vector<2x32xf32>
    %643 = arith.negf %642 : vector<2x32xf32>
    %644 = math.exp %643 : vector<2x32xf32>
    %cst_185 = arith.constant 1.000000e+00 : f32
    %645 = vector.broadcast %cst_185 : f32 to vector<2x32xf32>
    %646 = arith.addf %645, %644 : vector<2x32xf32>
    %647 = arith.divf %645, %646 : vector<2x32xf32>
    %648 = arith.mulf %639, %617 : vector<2x32xf32>
    %649 = arith.mulf %633, %641 : vector<2x32xf32>
    %650 = arith.addf %648, %649 : vector<2x32xf32>
    %651 = math.tanh %650 : vector<2x32xf32>
    %652 = arith.mulf %647, %651 : vector<2x32xf32>
    %653 = arith.index_cast %623 : i32 to index
    %c0_186 = arith.constant 0 : index
    %654 = vector.load %arg27[%653, %c0_186] : memref<16x32xf32, #tpu.memory_space<vmem>>, vector<2x32xf32>
    tpu.vector_store %arg27[%653, %c0_186], %652 {strides = array<i32>} : memref<16x32xf32, #tpu.memory_space<vmem>>, vector<2x32xf32>,
    %c2_i32_187 = arith.constant 2 : i32
    %c2_i32_188 = arith.constant 2 : i32
    %655 = arith.muli %c2_i32_187, %c2_i32_188 : i32
    %656 = tpu.assume_multiple %655, 2 : i32
    %657 = arith.index_cast %656 : i32 to index
    %c0_189 = arith.constant 0 : index
    %658 = vector.load %arg26[%657, %c0_189] : memref<16x128xf32, #tpu.memory_space<vmem>>, vector<2x128xf32>
    %cst_190 = arith.constant dense<0.000000e+00> : vector<2x128xf32>
    %659 = tpu.matmul %652, %586, %cst_190 {dimension_numbers = #tpu.dot_dimension_numbers<[1], [0], [0], [1], [0, 0, 1, 1], [], []>} : vector<2x32xf32>, vector<32x128xf32>, vector<2x128xf32> -> vector<2x128xf32>
    %660 = arith.addf %658, %659 : vector<2x128xf32>
    %661 = vector.extract_strided_slice %660 {offsets = [0, 0], sizes = [2, 32], strides = [1, 1]} : vector<2x128xf32> to vector<2x32xf32>
    %662 = arith.negf %661 : vector<2x32xf32>
    %663 = math.exp %662 : vector<2x32xf32>
    %cst_191 = arith.constant 1.000000e+00 : f32
    %664 = vector.broadcast %cst_191 : f32 to vector<2x32xf32>
    %665 = arith.addf %664, %663 : vector<2x32xf32>
    %666 = arith.divf %664, %665 : vector<2x32xf32>
    %667 = vector.extract_strided_slice %660 {offsets = [0, 32], sizes = [2, 32], strides = [1, 1]} : vector<2x128xf32> to vector<2x32xf32>
    %668 = arith.negf %667 : vector<2x32xf32>
    %669 = math.exp %668 : vector<2x32xf32>
    %cst_192 = arith.constant 1.000000e+00 : f32
    %670 = vector.broadcast %cst_192 : f32 to vector<2x32xf32>
    %671 = arith.addf %670, %669 : vector<2x32xf32>
    %672 = arith.divf %670, %671 : vector<2x32xf32>
    %673 = vector.extract_strided_slice %660 {offsets = [0, 64], sizes = [2, 32], strides = [1, 1]} : vector<2x128xf32> to vector<2x32xf32>
    %674 = math.tanh %673 : vector<2x32xf32>
    %675 = vector.extract_strided_slice %660 {offsets = [0, 96], sizes = [2, 32], strides = [1, 1]} : vector<2x128xf32> to vector<2x32xf32>
    %676 = arith.negf %675 : vector<2x32xf32>
    %677 = math.exp %676 : vector<2x32xf32>
    %cst_193 = arith.constant 1.000000e+00 : f32
    %678 = vector.broadcast %cst_193 : f32 to vector<2x32xf32>
    %679 = arith.addf %678, %677 : vector<2x32xf32>
    %680 = arith.divf %678, %679 : vector<2x32xf32>
    %681 = arith.mulf %672, %650 : vector<2x32xf32>
    %682 = arith.mulf %666, %674 : vector<2x32xf32>
    %683 = arith.addf %681, %682 : vector<2x32xf32>
    %684 = math.tanh %683 : vector<2x32xf32>
    %685 = arith.mulf %680, %684 : vector<2x32xf32>
    %686 = arith.index_cast %656 : i32 to index
    %c0_194 = arith.constant 0 : index
    %687 = vector.load %arg27[%686, %c0_194] : memref<16x32xf32, #tpu.memory_space<vmem>>, vector<2x32xf32>
    tpu.vector_store %arg27[%686, %c0_194], %685 {strides = array<i32>} : memref<16x32xf32, #tpu.memory_space<vmem>>, vector<2x32xf32>,
    %c3_i32_195 = arith.constant 3 : i32
    %c2_i32_196 = arith.constant 2 : i32
    %688 = arith.muli %c3_i32_195, %c2_i32_196 : i32
    %689 = tpu.assume_multiple %688, 2 : i32
    %690 = arith.index_cast %689 : i32 to index
    %c0_197 = arith.constant 0 : index
    %691 = vector.load %arg26[%690, %c0_197] : memref<16x128xf32, #tpu.memory_space<vmem>>, vector<2x128xf32>
    %cst_198 = arith.constant dense<0.000000e+00> : vector<2x128xf32>
    %692 = tpu.matmul %685, %586, %cst_198 {dimension_numbers = #tpu.dot_dimension_numbers<[1], [0], [0], [1], [0, 0, 1, 1], [], []>} : vector<2x32xf32>, vector<32x128xf32>, vector<2x128xf32> -> vector<2x128xf32>
    %693 = arith.addf %691, %692 : vector<2x128xf32>
    %694 = vector.extract_strided_slice %693 {offsets = [0, 0], sizes = [2, 32], strides = [1, 1]} : vector<2x128xf32> to vector<2x32xf32>
    %695 = arith.negf %694 : vector<2x32xf32>
    %696 = math.exp %695 : vector<2x32xf32>
    %cst_199 = arith.constant 1.000000e+00 : f32
    %697 = vector.broadcast %cst_199 : f32 to vector<2x32xf32>
    %698 = arith.addf %697, %696 : vector<2x32xf32>
    %699 = arith.divf %697, %698 : vector<2x32xf32>
    %700 = vector.extract_strided_slice %693 {offsets = [0, 32], sizes = [2, 32], strides = [1, 1]} : vector<2x128xf32> to vector<2x32xf32>
    %701 = arith.negf %700 : vector<2x32xf32>
    %702 = math.exp %701 : vector<2x32xf32>
    %cst_200 = arith.constant 1.000000e+00 : f32
    %703 = vector.broadcast %cst_200 : f32 to vector<2x32xf32>
    %704 = arith.addf %703, %702 : vector<2x32xf32>
    %705 = arith.divf %703, %704 : vector<2x32xf32>
    %706 = vector.extract_strided_slice %693 {offsets = [0, 64], sizes = [2, 32], strides = [1, 1]} : vector<2x128xf32> to vector<2x32xf32>
    %707 = math.tanh %706 : vector<2x32xf32>
    %708 = vector.extract_strided_slice %693 {offsets = [0, 96], sizes = [2, 32], strides = [1, 1]} : vector<2x128xf32> to vector<2x32xf32>
    %709 = arith.negf %708 : vector<2x32xf32>
    %710 = math.exp %709 : vector<2x32xf32>
    %cst_201 = arith.constant 1.000000e+00 : f32
    %711 = vector.broadcast %cst_201 : f32 to vector<2x32xf32>
    %712 = arith.addf %711, %710 : vector<2x32xf32>
    %713 = arith.divf %711, %712 : vector<2x32xf32>
    %714 = arith.mulf %705, %683 : vector<2x32xf32>
    %715 = arith.mulf %699, %707 : vector<2x32xf32>
    %716 = arith.addf %714, %715 : vector<2x32xf32>
    %717 = math.tanh %716 : vector<2x32xf32>
    %718 = arith.mulf %713, %717 : vector<2x32xf32>
    %719 = arith.index_cast %689 : i32 to index
    %c0_202 = arith.constant 0 : index
    %720 = vector.load %arg27[%719, %c0_202] : memref<16x32xf32, #tpu.memory_space<vmem>>, vector<2x32xf32>
    tpu.vector_store %arg27[%719, %c0_202], %718 {strides = array<i32>} : memref<16x32xf32, #tpu.memory_space<vmem>>, vector<2x32xf32>,
    %c4_i32_203 = arith.constant 4 : i32
    %c2_i32_204 = arith.constant 2 : i32
    %721 = arith.muli %c4_i32_203, %c2_i32_204 : i32
    %722 = tpu.assume_multiple %721, 2 : i32
    %723 = arith.index_cast %722 : i32 to index
    %c0_205 = arith.constant 0 : index
    %724 = vector.load %arg26[%723, %c0_205] : memref<16x128xf32, #tpu.memory_space<vmem>>, vector<2x128xf32>
    %cst_206 = arith.constant dense<0.000000e+00> : vector<2x128xf32>
    %725 = tpu.matmul %718, %586, %cst_206 {dimension_numbers = #tpu.dot_dimension_numbers<[1], [0], [0], [1], [0, 0, 1, 1], [], []>} : vector<2x32xf32>, vector<32x128xf32>, vector<2x128xf32> -> vector<2x128xf32>
    %726 = arith.addf %724, %725 : vector<2x128xf32>
    %727 = vector.extract_strided_slice %726 {offsets = [0, 0], sizes = [2, 32], strides = [1, 1]} : vector<2x128xf32> to vector<2x32xf32>
    %728 = arith.negf %727 : vector<2x32xf32>
    %729 = math.exp %728 : vector<2x32xf32>
    %cst_207 = arith.constant 1.000000e+00 : f32
    %730 = vector.broadcast %cst_207 : f32 to vector<2x32xf32>
    %731 = arith.addf %730, %729 : vector<2x32xf32>
    %732 = arith.divf %730, %731 : vector<2x32xf32>
    %733 = vector.extract_strided_slice %726 {offsets = [0, 32], sizes = [2, 32], strides = [1, 1]} : vector<2x128xf32> to vector<2x32xf32>
    %734 = arith.negf %733 : vector<2x32xf32>
    %735 = math.exp %734 : vector<2x32xf32>
    %cst_208 = arith.constant 1.000000e+00 : f32
    %736 = vector.broadcast %cst_208 : f32 to vector<2x32xf32>
    %737 = arith.addf %736, %735 : vector<2x32xf32>
    %738 = arith.divf %736, %737 : vector<2x32xf32>
    %739 = vector.extract_strided_slice %726 {offsets = [0, 64], sizes = [2, 32], strides = [1, 1]} : vector<2x128xf32> to vector<2x32xf32>
    %740 = math.tanh %739 : vector<2x32xf32>
    %741 = vector.extract_strided_slice %726 {offsets = [0, 96], sizes = [2, 32], strides = [1, 1]} : vector<2x128xf32> to vector<2x32xf32>
    %742 = arith.negf %741 : vector<2x32xf32>
    %743 = math.exp %742 : vector<2x32xf32>
    %cst_209 = arith.constant 1.000000e+00 : f32
    %744 = vector.broadcast %cst_209 : f32 to vector<2x32xf32>
    %745 = arith.addf %744, %743 : vector<2x32xf32>
    %746 = arith.divf %744, %745 : vector<2x32xf32>
    %747 = arith.mulf %738, %716 : vector<2x32xf32>
    %748 = arith.mulf %732, %740 : vector<2x32xf32>
    %749 = arith.addf %747, %748 : vector<2x32xf32>
    %750 = math.tanh %749 : vector<2x32xf32>
    %751 = arith.mulf %746, %750 : vector<2x32xf32>
    %752 = arith.index_cast %722 : i32 to index
    %c0_210 = arith.constant 0 : index
    %753 = vector.load %arg27[%752, %c0_210] : memref<16x32xf32, #tpu.memory_space<vmem>>, vector<2x32xf32>
    tpu.vector_store %arg27[%752, %c0_210], %751 {strides = array<i32>} : memref<16x32xf32, #tpu.memory_space<vmem>>, vector<2x32xf32>,
    %c5_i32_211 = arith.constant 5 : i32
    %c2_i32_212 = arith.constant 2 : i32
    %754 = arith.muli %c5_i32_211, %c2_i32_212 : i32
    %755 = tpu.assume_multiple %754, 2 : i32
    %756 = arith.index_cast %755 : i32 to index
    %c0_213 = arith.constant 0 : index
    %757 = vector.load %arg26[%756, %c0_213] : memref<16x128xf32, #tpu.memory_space<vmem>>, vector<2x128xf32>
    %cst_214 = arith.constant dense<0.000000e+00> : vector<2x128xf32>
    %758 = tpu.matmul %751, %586, %cst_214 {dimension_numbers = #tpu.dot_dimension_numbers<[1], [0], [0], [1], [0, 0, 1, 1], [], []>} : vector<2x32xf32>, vector<32x128xf32>, vector<2x128xf32> -> vector<2x128xf32>
    %759 = arith.addf %757, %758 : vector<2x128xf32>
    %760 = vector.extract_strided_slice %759 {offsets = [0, 0], sizes = [2, 32], strides = [1, 1]} : vector<2x128xf32> to vector<2x32xf32>
    %761 = arith.negf %760 : vector<2x32xf32>
    %762 = math.exp %761 : vector<2x32xf32>
    %cst_215 = arith.constant 1.000000e+00 : f32
    %763 = vector.broadcast %cst_215 : f32 to vector<2x32xf32>
    %764 = arith.addf %763, %762 : vector<2x32xf32>
    %765 = arith.divf %763, %764 : vector<2x32xf32>
    %766 = vector.extract_strided_slice %759 {offsets = [0, 32], sizes = [2, 32], strides = [1, 1]} : vector<2x128xf32> to vector<2x32xf32>
    %767 = arith.negf %766 : vector<2x32xf32>
    %768 = math.exp %767 : vector<2x32xf32>
    %cst_216 = arith.constant 1.000000e+00 : f32
    %769 = vector.broadcast %cst_216 : f32 to vector<2x32xf32>
    %770 = arith.addf %769, %768 : vector<2x32xf32>
    %771 = arith.divf %769, %770 : vector<2x32xf32>
    %772 = vector.extract_strided_slice %759 {offsets = [0, 64], sizes = [2, 32], strides = [1, 1]} : vector<2x128xf32> to vector<2x32xf32>
    %773 = math.tanh %772 : vector<2x32xf32>
    %774 = vector.extract_strided_slice %759 {offsets = [0, 96], sizes = [2, 32], strides = [1, 1]} : vector<2x128xf32> to vector<2x32xf32>
    %775 = arith.negf %774 : vector<2x32xf32>
    %776 = math.exp %775 : vector<2x32xf32>
    %cst_217 = arith.constant 1.000000e+00 : f32
    %777 = vector.broadcast %cst_217 : f32 to vector<2x32xf32>
    %778 = arith.addf %777, %776 : vector<2x32xf32>
    %779 = arith.divf %777, %778 : vector<2x32xf32>
    %780 = arith.mulf %771, %749 : vector<2x32xf32>
    %781 = arith.mulf %765, %773 : vector<2x32xf32>
    %782 = arith.addf %780, %781 : vector<2x32xf32>
    %783 = math.tanh %782 : vector<2x32xf32>
    %784 = arith.mulf %779, %783 : vector<2x32xf32>
    %785 = arith.index_cast %755 : i32 to index
    %c0_218 = arith.constant 0 : index
    %786 = vector.load %arg27[%785, %c0_218] : memref<16x32xf32, #tpu.memory_space<vmem>>, vector<2x32xf32>
    tpu.vector_store %arg27[%785, %c0_218], %784 {strides = array<i32>} : memref<16x32xf32, #tpu.memory_space<vmem>>, vector<2x32xf32>,
    %c6_i32_219 = arith.constant 6 : i32
    %c2_i32_220 = arith.constant 2 : i32
    %787 = arith.muli %c6_i32_219, %c2_i32_220 : i32
    %788 = tpu.assume_multiple %787, 2 : i32
    %789 = arith.index_cast %788 : i32 to index
    %c0_221 = arith.constant 0 : index
    %790 = vector.load %arg26[%789, %c0_221] : memref<16x128xf32, #tpu.memory_space<vmem>>, vector<2x128xf32>
    %cst_222 = arith.constant dense<0.000000e+00> : vector<2x128xf32>
    %791 = tpu.matmul %784, %586, %cst_222 {dimension_numbers = #tpu.dot_dimension_numbers<[1], [0], [0], [1], [0, 0, 1, 1], [], []>} : vector<2x32xf32>, vector<32x128xf32>, vector<2x128xf32> -> vector<2x128xf32>
    %792 = arith.addf %790, %791 : vector<2x128xf32>
    %793 = vector.extract_strided_slice %792 {offsets = [0, 0], sizes = [2, 32], strides = [1, 1]} : vector<2x128xf32> to vector<2x32xf32>
    %794 = arith.negf %793 : vector<2x32xf32>
    %795 = math.exp %794 : vector<2x32xf32>
    %cst_223 = arith.constant 1.000000e+00 : f32
    %796 = vector.broadcast %cst_223 : f32 to vector<2x32xf32>
    %797 = arith.addf %796, %795 : vector<2x32xf32>
    %798 = arith.divf %796, %797 : vector<2x32xf32>
    %799 = vector.extract_strided_slice %792 {offsets = [0, 32], sizes = [2, 32], strides = [1, 1]} : vector<2x128xf32> to vector<2x32xf32>
    %800 = arith.negf %799 : vector<2x32xf32>
    %801 = math.exp %800 : vector<2x32xf32>
    %cst_224 = arith.constant 1.000000e+00 : f32
    %802 = vector.broadcast %cst_224 : f32 to vector<2x32xf32>
    %803 = arith.addf %802, %801 : vector<2x32xf32>
    %804 = arith.divf %802, %803 : vector<2x32xf32>
    %805 = vector.extract_strided_slice %792 {offsets = [0, 64], sizes = [2, 32], strides = [1, 1]} : vector<2x128xf32> to vector<2x32xf32>
    %806 = math.tanh %805 : vector<2x32xf32>
    %807 = vector.extract_strided_slice %792 {offsets = [0, 96], sizes = [2, 32], strides = [1, 1]} : vector<2x128xf32> to vector<2x32xf32>
    %808 = arith.negf %807 : vector<2x32xf32>
    %809 = math.exp %808 : vector<2x32xf32>
    %cst_225 = arith.constant 1.000000e+00 : f32
    %810 = vector.broadcast %cst_225 : f32 to vector<2x32xf32>
    %811 = arith.addf %810, %809 : vector<2x32xf32>
    %812 = arith.divf %810, %811 : vector<2x32xf32>
    %813 = arith.mulf %804, %782 : vector<2x32xf32>
    %814 = arith.mulf %798, %806 : vector<2x32xf32>
    %815 = arith.addf %813, %814 : vector<2x32xf32>
    %816 = math.tanh %815 : vector<2x32xf32>
    %817 = arith.mulf %812, %816 : vector<2x32xf32>
    %818 = arith.index_cast %788 : i32 to index
    %c0_226 = arith.constant 0 : index
    %819 = vector.load %arg27[%818, %c0_226] : memref<16x32xf32, #tpu.memory_space<vmem>>, vector<2x32xf32>
    tpu.vector_store %arg27[%818, %c0_226], %817 {strides = array<i32>} : memref<16x32xf32, #tpu.memory_space<vmem>>, vector<2x32xf32>,
    %c7_i32_227 = arith.constant 7 : i32
    %c2_i32_228 = arith.constant 2 : i32
    %820 = arith.muli %c7_i32_227, %c2_i32_228 : i32
    %821 = tpu.assume_multiple %820, 2 : i32
    %822 = arith.index_cast %821 : i32 to index
    %c0_229 = arith.constant 0 : index
    %823 = vector.load %arg26[%822, %c0_229] : memref<16x128xf32, #tpu.memory_space<vmem>>, vector<2x128xf32>
    %cst_230 = arith.constant dense<0.000000e+00> : vector<2x128xf32>
    %824 = tpu.matmul %817, %586, %cst_230 {dimension_numbers = #tpu.dot_dimension_numbers<[1], [0], [0], [1], [0, 0, 1, 1], [], []>} : vector<2x32xf32>, vector<32x128xf32>, vector<2x128xf32> -> vector<2x128xf32>
    %825 = arith.addf %823, %824 : vector<2x128xf32>
    %826 = vector.extract_strided_slice %825 {offsets = [0, 0], sizes = [2, 32], strides = [1, 1]} : vector<2x128xf32> to vector<2x32xf32>
    %827 = arith.negf %826 : vector<2x32xf32>
    %828 = math.exp %827 : vector<2x32xf32>
    %cst_231 = arith.constant 1.000000e+00 : f32
    %829 = vector.broadcast %cst_231 : f32 to vector<2x32xf32>
    %830 = arith.addf %829, %828 : vector<2x32xf32>
    %831 = arith.divf %829, %830 : vector<2x32xf32>
    %832 = vector.extract_strided_slice %825 {offsets = [0, 32], sizes = [2, 32], strides = [1, 1]} : vector<2x128xf32> to vector<2x32xf32>
    %833 = arith.negf %832 : vector<2x32xf32>
    %834 = math.exp %833 : vector<2x32xf32>
    %cst_232 = arith.constant 1.000000e+00 : f32
    %835 = vector.broadcast %cst_232 : f32 to vector<2x32xf32>
    %836 = arith.addf %835, %834 : vector<2x32xf32>
    %837 = arith.divf %835, %836 : vector<2x32xf32>
    %838 = vector.extract_strided_slice %825 {offsets = [0, 64], sizes = [2, 32], strides = [1, 1]} : vector<2x128xf32> to vector<2x32xf32>
    %839 = math.tanh %838 : vector<2x32xf32>
    %840 = vector.extract_strided_slice %825 {offsets = [0, 96], sizes = [2, 32], strides = [1, 1]} : vector<2x128xf32> to vector<2x32xf32>
    %841 = arith.negf %840 : vector<2x32xf32>
    %842 = math.exp %841 : vector<2x32xf32>
    %cst_233 = arith.constant 1.000000e+00 : f32
    %843 = vector.broadcast %cst_233 : f32 to vector<2x32xf32>
    %844 = arith.addf %843, %842 : vector<2x32xf32>
    %845 = arith.divf %843, %844 : vector<2x32xf32>
    %846 = arith.mulf %837, %815 : vector<2x32xf32>
    %847 = arith.mulf %831, %839 : vector<2x32xf32>
    %848 = arith.addf %846, %847 : vector<2x32xf32>
    %849 = math.tanh %848 : vector<2x32xf32>
    %850 = arith.mulf %845, %849 : vector<2x32xf32>
    %851 = arith.index_cast %821 : i32 to index
    %c0_234 = arith.constant 0 : index
    %852 = vector.load %arg27[%851, %c0_234] : memref<16x32xf32, #tpu.memory_space<vmem>>, vector<2x32xf32>
    tpu.vector_store %arg27[%851, %c0_234], %850 {strides = array<i32>} : memref<16x32xf32, #tpu.memory_space<vmem>>, vector<2x32xf32>,
    %c8_i32_235 = arith.constant 8 : i32
    %c0_236 = arith.constant 0 : index
    %c0_237 = arith.constant 0 : index
    %853 = vector.load %arg27[%c0_236, %c0_237] : memref<16x32xf32, #tpu.memory_space<vmem>>, vector<16x32xf32>
    %c0_238 = arith.constant 0 : index
    %c0_239 = arith.constant 0 : index
    %854 = vector.load %arg13[%c0_238, %c0_239] : memref<32x64xf32, #tpu.memory_space<vmem>>, vector<32x64xf32>
    %cst_240 = arith.constant dense<0.000000e+00> : vector<16x64xf32>
    %855 = tpu.matmul %853, %854, %cst_240 {dimension_numbers = #tpu.dot_dimension_numbers<[1], [0], [0], [1], [0, 0, 1, 1], [], []>} : vector<16x32xf32>, vector<32x64xf32>, vector<16x64xf32> -> vector<16x64xf32>
    %c0_241 = arith.constant 0 : index
    %c0_242 = arith.constant 0 : index
    %856 = vector.load %arg15[%c0_241, %c0_242] : memref<1x64xf32, #tpu.memory_space<vmem>>, vector<1x64xf32>
    %857 = vector.broadcast %856 : vector<1x64xf32> to vector<16x64xf32>
    %858 = arith.addf %855, %857 : vector<16x64xf32>
    %c0_243 = arith.constant 0 : index
    %c0_244 = arith.constant 0 : index
    %859 = vector.load %arg28[%c0_243, %c0_244] : memref<16x64xf32, #tpu.memory_space<vmem>>, vector<16x64xf32>
    tpu.vector_store %arg28[%c0_243, %c0_244], %858 {strides = array<i32>} : memref<16x64xf32, #tpu.memory_space<vmem>>, vector<16x64xf32>,
    %c0_245 = arith.constant 0 : index
    %c0_246 = arith.constant 0 : index
    %860 = vector.load %arg14[%c0_245, %c0_246] : memref<16x64xf32, #tpu.memory_space<vmem>>, vector<16x64xf32>
    %cst_247 = arith.constant 0.000000e+00 : f32
    %861 = vector.broadcast %cst_247 : f32 to vector<2x16xf32>
    %cst_248 = arith.constant 0.000000e+00 : f32
    %862 = vector.broadcast %cst_248 : f32 to vector<2x16xf32>
    %c0_i32_249 = arith.constant 0 : i32
    %c2_i32_250 = arith.constant 2 : i32
    %863 = arith.muli %c0_i32_249, %c2_i32_250 : i32
    %864 = tpu.assume_multiple %863, 2 : i32
    %865 = arith.index_cast %864 : i32 to index
    %c0_251 = arith.constant 0 : index
    %866 = vector.load %arg28[%865, %c0_251] : memref<16x64xf32, #tpu.memory_space<vmem>>, vector<2x64xf32>
    %cst_252 = arith.constant dense<0.000000e+00> : vector<2x64xf32>
    %867 = tpu.matmul %861, %860, %cst_252 {dimension_numbers = #tpu.dot_dimension_numbers<[1], [0], [0], [1], [0, 0, 1, 1], [], []>} : vector<2x16xf32>, vector<16x64xf32>, vector<2x64xf32> -> vector<2x64xf32>
    %868 = arith.addf %866, %867 : vector<2x64xf32>
    %869 = vector.extract_strided_slice %868 {offsets = [0, 0], sizes = [2, 16], strides = [1, 1]} : vector<2x64xf32> to vector<2x16xf32>
    %870 = arith.negf %869 : vector<2x16xf32>
    %871 = math.exp %870 : vector<2x16xf32>
    %cst_253 = arith.constant 1.000000e+00 : f32
    %872 = vector.broadcast %cst_253 : f32 to vector<2x16xf32>
    %873 = arith.addf %872, %871 : vector<2x16xf32>
    %874 = arith.divf %872, %873 : vector<2x16xf32>
    %875 = vector.extract_strided_slice %868 {offsets = [0, 16], sizes = [2, 16], strides = [1, 1]} : vector<2x64xf32> to vector<2x16xf32>
    %876 = arith.negf %875 : vector<2x16xf32>
    %877 = math.exp %876 : vector<2x16xf32>
    %cst_254 = arith.constant 1.000000e+00 : f32
    %878 = vector.broadcast %cst_254 : f32 to vector<2x16xf32>
    %879 = arith.addf %878, %877 : vector<2x16xf32>
    %880 = arith.divf %878, %879 : vector<2x16xf32>
    %881 = vector.extract_strided_slice %868 {offsets = [0, 32], sizes = [2, 16], strides = [1, 1]} : vector<2x64xf32> to vector<2x16xf32>
    %882 = math.tanh %881 : vector<2x16xf32>
    %883 = vector.extract_strided_slice %868 {offsets = [0, 48], sizes = [2, 16], strides = [1, 1]} : vector<2x64xf32> to vector<2x16xf32>
    %884 = arith.negf %883 : vector<2x16xf32>
    %885 = math.exp %884 : vector<2x16xf32>
    %cst_255 = arith.constant 1.000000e+00 : f32
    %886 = vector.broadcast %cst_255 : f32 to vector<2x16xf32>
    %887 = arith.addf %886, %885 : vector<2x16xf32>
    %888 = arith.divf %886, %887 : vector<2x16xf32>
    %889 = arith.mulf %880, %862 : vector<2x16xf32>
    %890 = arith.mulf %874, %882 : vector<2x16xf32>
    %891 = arith.addf %889, %890 : vector<2x16xf32>
    %892 = math.tanh %891 : vector<2x16xf32>
    %893 = arith.mulf %888, %892 : vector<2x16xf32>
    %894 = arith.index_cast %864 : i32 to index
    %c0_256 = arith.constant 0 : index
    %895 = vector.load %arg29[%894, %c0_256] : memref<16x16xf32, #tpu.memory_space<vmem>>, vector<2x16xf32>
    tpu.vector_store %arg29[%894, %c0_256], %893 {strides = array<i32>} : memref<16x16xf32, #tpu.memory_space<vmem>>, vector<2x16xf32>,
    %c1_i32_257 = arith.constant 1 : i32
    %c2_i32_258 = arith.constant 2 : i32
    %896 = arith.muli %c1_i32_257, %c2_i32_258 : i32
    %897 = tpu.assume_multiple %896, 2 : i32
    %898 = arith.index_cast %897 : i32 to index
    %c0_259 = arith.constant 0 : index
    %899 = vector.load %arg28[%898, %c0_259] : memref<16x64xf32, #tpu.memory_space<vmem>>, vector<2x64xf32>
    %cst_260 = arith.constant dense<0.000000e+00> : vector<2x64xf32>
    %900 = tpu.matmul %893, %860, %cst_260 {dimension_numbers = #tpu.dot_dimension_numbers<[1], [0], [0], [1], [0, 0, 1, 1], [], []>} : vector<2x16xf32>, vector<16x64xf32>, vector<2x64xf32> -> vector<2x64xf32>
    %901 = arith.addf %899, %900 : vector<2x64xf32>
    %902 = vector.extract_strided_slice %901 {offsets = [0, 0], sizes = [2, 16], strides = [1, 1]} : vector<2x64xf32> to vector<2x16xf32>
    %903 = arith.negf %902 : vector<2x16xf32>
    %904 = math.exp %903 : vector<2x16xf32>
    %cst_261 = arith.constant 1.000000e+00 : f32
    %905 = vector.broadcast %cst_261 : f32 to vector<2x16xf32>
    %906 = arith.addf %905, %904 : vector<2x16xf32>
    %907 = arith.divf %905, %906 : vector<2x16xf32>
    %908 = vector.extract_strided_slice %901 {offsets = [0, 16], sizes = [2, 16], strides = [1, 1]} : vector<2x64xf32> to vector<2x16xf32>
    %909 = arith.negf %908 : vector<2x16xf32>
    %910 = math.exp %909 : vector<2x16xf32>
    %cst_262 = arith.constant 1.000000e+00 : f32
    %911 = vector.broadcast %cst_262 : f32 to vector<2x16xf32>
    %912 = arith.addf %911, %910 : vector<2x16xf32>
    %913 = arith.divf %911, %912 : vector<2x16xf32>
    %914 = vector.extract_strided_slice %901 {offsets = [0, 32], sizes = [2, 16], strides = [1, 1]} : vector<2x64xf32> to vector<2x16xf32>
    %915 = math.tanh %914 : vector<2x16xf32>
    %916 = vector.extract_strided_slice %901 {offsets = [0, 48], sizes = [2, 16], strides = [1, 1]} : vector<2x64xf32> to vector<2x16xf32>
    %917 = arith.negf %916 : vector<2x16xf32>
    %918 = math.exp %917 : vector<2x16xf32>
    %cst_263 = arith.constant 1.000000e+00 : f32
    %919 = vector.broadcast %cst_263 : f32 to vector<2x16xf32>
    %920 = arith.addf %919, %918 : vector<2x16xf32>
    %921 = arith.divf %919, %920 : vector<2x16xf32>
    %922 = arith.mulf %913, %891 : vector<2x16xf32>
    %923 = arith.mulf %907, %915 : vector<2x16xf32>
    %924 = arith.addf %922, %923 : vector<2x16xf32>
    %925 = math.tanh %924 : vector<2x16xf32>
    %926 = arith.mulf %921, %925 : vector<2x16xf32>
    %927 = arith.index_cast %897 : i32 to index
    %c0_264 = arith.constant 0 : index
    %928 = vector.load %arg29[%927, %c0_264] : memref<16x16xf32, #tpu.memory_space<vmem>>, vector<2x16xf32>
    tpu.vector_store %arg29[%927, %c0_264], %926 {strides = array<i32>} : memref<16x16xf32, #tpu.memory_space<vmem>>, vector<2x16xf32>,
    %c2_i32_265 = arith.constant 2 : i32
    %c2_i32_266 = arith.constant 2 : i32
    %929 = arith.muli %c2_i32_265, %c2_i32_266 : i32
    %930 = tpu.assume_multiple %929, 2 : i32
    %931 = arith.index_cast %930 : i32 to index
    %c0_267 = arith.constant 0 : index
    %932 = vector.load %arg28[%931, %c0_267] : memref<16x64xf32, #tpu.memory_space<vmem>>, vector<2x64xf32>
    %cst_268 = arith.constant dense<0.000000e+00> : vector<2x64xf32>
    %933 = tpu.matmul %926, %860, %cst_268 {dimension_numbers = #tpu.dot_dimension_numbers<[1], [0], [0], [1], [0, 0, 1, 1], [], []>} : vector<2x16xf32>, vector<16x64xf32>, vector<2x64xf32> -> vector<2x64xf32>
    %934 = arith.addf %932, %933 : vector<2x64xf32>
    %935 = vector.extract_strided_slice %934 {offsets = [0, 0], sizes = [2, 16], strides = [1, 1]} : vector<2x64xf32> to vector<2x16xf32>
    %936 = arith.negf %935 : vector<2x16xf32>
    %937 = math.exp %936 : vector<2x16xf32>
    %cst_269 = arith.constant 1.000000e+00 : f32
    %938 = vector.broadcast %cst_269 : f32 to vector<2x16xf32>
    %939 = arith.addf %938, %937 : vector<2x16xf32>
    %940 = arith.divf %938, %939 : vector<2x16xf32>
    %941 = vector.extract_strided_slice %934 {offsets = [0, 16], sizes = [2, 16], strides = [1, 1]} : vector<2x64xf32> to vector<2x16xf32>
    %942 = arith.negf %941 : vector<2x16xf32>
    %943 = math.exp %942 : vector<2x16xf32>
    %cst_270 = arith.constant 1.000000e+00 : f32
    %944 = vector.broadcast %cst_270 : f32 to vector<2x16xf32>
    %945 = arith.addf %944, %943 : vector<2x16xf32>
    %946 = arith.divf %944, %945 : vector<2x16xf32>
    %947 = vector.extract_strided_slice %934 {offsets = [0, 32], sizes = [2, 16], strides = [1, 1]} : vector<2x64xf32> to vector<2x16xf32>
    %948 = math.tanh %947 : vector<2x16xf32>
    %949 = vector.extract_strided_slice %934 {offsets = [0, 48], sizes = [2, 16], strides = [1, 1]} : vector<2x64xf32> to vector<2x16xf32>
    %950 = arith.negf %949 : vector<2x16xf32>
    %951 = math.exp %950 : vector<2x16xf32>
    %cst_271 = arith.constant 1.000000e+00 : f32
    %952 = vector.broadcast %cst_271 : f32 to vector<2x16xf32>
    %953 = arith.addf %952, %951 : vector<2x16xf32>
    %954 = arith.divf %952, %953 : vector<2x16xf32>
    %955 = arith.mulf %946, %924 : vector<2x16xf32>
    %956 = arith.mulf %940, %948 : vector<2x16xf32>
    %957 = arith.addf %955, %956 : vector<2x16xf32>
    %958 = math.tanh %957 : vector<2x16xf32>
    %959 = arith.mulf %954, %958 : vector<2x16xf32>
    %960 = arith.index_cast %930 : i32 to index
    %c0_272 = arith.constant 0 : index
    %961 = vector.load %arg29[%960, %c0_272] : memref<16x16xf32, #tpu.memory_space<vmem>>, vector<2x16xf32>
    tpu.vector_store %arg29[%960, %c0_272], %959 {strides = array<i32>} : memref<16x16xf32, #tpu.memory_space<vmem>>, vector<2x16xf32>,
    %c3_i32_273 = arith.constant 3 : i32
    %c2_i32_274 = arith.constant 2 : i32
    %962 = arith.muli %c3_i32_273, %c2_i32_274 : i32
    %963 = tpu.assume_multiple %962, 2 : i32
    %964 = arith.index_cast %963 : i32 to index
    %c0_275 = arith.constant 0 : index
    %965 = vector.load %arg28[%964, %c0_275] : memref<16x64xf32, #tpu.memory_space<vmem>>, vector<2x64xf32>
    %cst_276 = arith.constant dense<0.000000e+00> : vector<2x64xf32>
    %966 = tpu.matmul %959, %860, %cst_276 {dimension_numbers = #tpu.dot_dimension_numbers<[1], [0], [0], [1], [0, 0, 1, 1], [], []>} : vector<2x16xf32>, vector<16x64xf32>, vector<2x64xf32> -> vector<2x64xf32>
    %967 = arith.addf %965, %966 : vector<2x64xf32>
    %968 = vector.extract_strided_slice %967 {offsets = [0, 0], sizes = [2, 16], strides = [1, 1]} : vector<2x64xf32> to vector<2x16xf32>
    %969 = arith.negf %968 : vector<2x16xf32>
    %970 = math.exp %969 : vector<2x16xf32>
    %cst_277 = arith.constant 1.000000e+00 : f32
    %971 = vector.broadcast %cst_277 : f32 to vector<2x16xf32>
    %972 = arith.addf %971, %970 : vector<2x16xf32>
    %973 = arith.divf %971, %972 : vector<2x16xf32>
    %974 = vector.extract_strided_slice %967 {offsets = [0, 16], sizes = [2, 16], strides = [1, 1]} : vector<2x64xf32> to vector<2x16xf32>
    %975 = arith.negf %974 : vector<2x16xf32>
    %976 = math.exp %975 : vector<2x16xf32>
    %cst_278 = arith.constant 1.000000e+00 : f32
    %977 = vector.broadcast %cst_278 : f32 to vector<2x16xf32>
    %978 = arith.addf %977, %976 : vector<2x16xf32>
    %979 = arith.divf %977, %978 : vector<2x16xf32>
    %980 = vector.extract_strided_slice %967 {offsets = [0, 32], sizes = [2, 16], strides = [1, 1]} : vector<2x64xf32> to vector<2x16xf32>
    %981 = math.tanh %980 : vector<2x16xf32>
    %982 = vector.extract_strided_slice %967 {offsets = [0, 48], sizes = [2, 16], strides = [1, 1]} : vector<2x64xf32> to vector<2x16xf32>
    %983 = arith.negf %982 : vector<2x16xf32>
    %984 = math.exp %983 : vector<2x16xf32>
    %cst_279 = arith.constant 1.000000e+00 : f32
    %985 = vector.broadcast %cst_279 : f32 to vector<2x16xf32>
    %986 = arith.addf %985, %984 : vector<2x16xf32>
    %987 = arith.divf %985, %986 : vector<2x16xf32>
    %988 = arith.mulf %979, %957 : vector<2x16xf32>
    %989 = arith.mulf %973, %981 : vector<2x16xf32>
    %990 = arith.addf %988, %989 : vector<2x16xf32>
    %991 = math.tanh %990 : vector<2x16xf32>
    %992 = arith.mulf %987, %991 : vector<2x16xf32>
    %993 = arith.index_cast %963 : i32 to index
    %c0_280 = arith.constant 0 : index
    %994 = vector.load %arg29[%993, %c0_280] : memref<16x16xf32, #tpu.memory_space<vmem>>, vector<2x16xf32>
    tpu.vector_store %arg29[%993, %c0_280], %992 {strides = array<i32>} : memref<16x16xf32, #tpu.memory_space<vmem>>, vector<2x16xf32>,
    %c4_i32_281 = arith.constant 4 : i32
    %c2_i32_282 = arith.constant 2 : i32
    %995 = arith.muli %c4_i32_281, %c2_i32_282 : i32
    %996 = tpu.assume_multiple %995, 2 : i32
    %997 = arith.index_cast %996 : i32 to index
    %c0_283 = arith.constant 0 : index
    %998 = vector.load %arg28[%997, %c0_283] : memref<16x64xf32, #tpu.memory_space<vmem>>, vector<2x64xf32>
    %cst_284 = arith.constant dense<0.000000e+00> : vector<2x64xf32>
    %999 = tpu.matmul %992, %860, %cst_284 {dimension_numbers = #tpu.dot_dimension_numbers<[1], [0], [0], [1], [0, 0, 1, 1], [], []>} : vector<2x16xf32>, vector<16x64xf32>, vector<2x64xf32> -> vector<2x64xf32>
    %1000 = arith.addf %998, %999 : vector<2x64xf32>
    %1001 = vector.extract_strided_slice %1000 {offsets = [0, 0], sizes = [2, 16], strides = [1, 1]} : vector<2x64xf32> to vector<2x16xf32>
    %1002 = arith.negf %1001 : vector<2x16xf32>
    %1003 = math.exp %1002 : vector<2x16xf32>
    %cst_285 = arith.constant 1.000000e+00 : f32
    %1004 = vector.broadcast %cst_285 : f32 to vector<2x16xf32>
    %1005 = arith.addf %1004, %1003 : vector<2x16xf32>
    %1006 = arith.divf %1004, %1005 : vector<2x16xf32>
    %1007 = vector.extract_strided_slice %1000 {offsets = [0, 16], sizes = [2, 16], strides = [1, 1]} : vector<2x64xf32> to vector<2x16xf32>
    %1008 = arith.negf %1007 : vector<2x16xf32>
    %1009 = math.exp %1008 : vector<2x16xf32>
    %cst_286 = arith.constant 1.000000e+00 : f32
    %1010 = vector.broadcast %cst_286 : f32 to vector<2x16xf32>
    %1011 = arith.addf %1010, %1009 : vector<2x16xf32>
    %1012 = arith.divf %1010, %1011 : vector<2x16xf32>
    %1013 = vector.extract_strided_slice %1000 {offsets = [0, 32], sizes = [2, 16], strides = [1, 1]} : vector<2x64xf32> to vector<2x16xf32>
    %1014 = math.tanh %1013 : vector<2x16xf32>
    %1015 = vector.extract_strided_slice %1000 {offsets = [0, 48], sizes = [2, 16], strides = [1, 1]} : vector<2x64xf32> to vector<2x16xf32>
    %1016 = arith.negf %1015 : vector<2x16xf32>
    %1017 = math.exp %1016 : vector<2x16xf32>
    %cst_287 = arith.constant 1.000000e+00 : f32
    %1018 = vector.broadcast %cst_287 : f32 to vector<2x16xf32>
    %1019 = arith.addf %1018, %1017 : vector<2x16xf32>
    %1020 = arith.divf %1018, %1019 : vector<2x16xf32>
    %1021 = arith.mulf %1012, %990 : vector<2x16xf32>
    %1022 = arith.mulf %1006, %1014 : vector<2x16xf32>
    %1023 = arith.addf %1021, %1022 : vector<2x16xf32>
    %1024 = math.tanh %1023 : vector<2x16xf32>
    %1025 = arith.mulf %1020, %1024 : vector<2x16xf32>
    %1026 = arith.index_cast %996 : i32 to index
    %c0_288 = arith.constant 0 : index
    %1027 = vector.load %arg29[%1026, %c0_288] : memref<16x16xf32, #tpu.memory_space<vmem>>, vector<2x16xf32>
    tpu.vector_store %arg29[%1026, %c0_288], %1025 {strides = array<i32>} : memref<16x16xf32, #tpu.memory_space<vmem>>, vector<2x16xf32>,
    %c5_i32_289 = arith.constant 5 : i32
    %c2_i32_290 = arith.constant 2 : i32
    %1028 = arith.muli %c5_i32_289, %c2_i32_290 : i32
    %1029 = tpu.assume_multiple %1028, 2 : i32
    %1030 = arith.index_cast %1029 : i32 to index
    %c0_291 = arith.constant 0 : index
    %1031 = vector.load %arg28[%1030, %c0_291] : memref<16x64xf32, #tpu.memory_space<vmem>>, vector<2x64xf32>
    %cst_292 = arith.constant dense<0.000000e+00> : vector<2x64xf32>
    %1032 = tpu.matmul %1025, %860, %cst_292 {dimension_numbers = #tpu.dot_dimension_numbers<[1], [0], [0], [1], [0, 0, 1, 1], [], []>} : vector<2x16xf32>, vector<16x64xf32>, vector<2x64xf32> -> vector<2x64xf32>
    %1033 = arith.addf %1031, %1032 : vector<2x64xf32>
    %1034 = vector.extract_strided_slice %1033 {offsets = [0, 0], sizes = [2, 16], strides = [1, 1]} : vector<2x64xf32> to vector<2x16xf32>
    %1035 = arith.negf %1034 : vector<2x16xf32>
    %1036 = math.exp %1035 : vector<2x16xf32>
    %cst_293 = arith.constant 1.000000e+00 : f32
    %1037 = vector.broadcast %cst_293 : f32 to vector<2x16xf32>
    %1038 = arith.addf %1037, %1036 : vector<2x16xf32>
    %1039 = arith.divf %1037, %1038 : vector<2x16xf32>
    %1040 = vector.extract_strided_slice %1033 {offsets = [0, 16], sizes = [2, 16], strides = [1, 1]} : vector<2x64xf32> to vector<2x16xf32>
    %1041 = arith.negf %1040 : vector<2x16xf32>
    %1042 = math.exp %1041 : vector<2x16xf32>
    %cst_294 = arith.constant 1.000000e+00 : f32
    %1043 = vector.broadcast %cst_294 : f32 to vector<2x16xf32>
    %1044 = arith.addf %1043, %1042 : vector<2x16xf32>
    %1045 = arith.divf %1043, %1044 : vector<2x16xf32>
    %1046 = vector.extract_strided_slice %1033 {offsets = [0, 32], sizes = [2, 16], strides = [1, 1]} : vector<2x64xf32> to vector<2x16xf32>
    %1047 = math.tanh %1046 : vector<2x16xf32>
    %1048 = vector.extract_strided_slice %1033 {offsets = [0, 48], sizes = [2, 16], strides = [1, 1]} : vector<2x64xf32> to vector<2x16xf32>
    %1049 = arith.negf %1048 : vector<2x16xf32>
    %1050 = math.exp %1049 : vector<2x16xf32>
    %cst_295 = arith.constant 1.000000e+00 : f32
    %1051 = vector.broadcast %cst_295 : f32 to vector<2x16xf32>
    %1052 = arith.addf %1051, %1050 : vector<2x16xf32>
    %1053 = arith.divf %1051, %1052 : vector<2x16xf32>
    %1054 = arith.mulf %1045, %1023 : vector<2x16xf32>
    %1055 = arith.mulf %1039, %1047 : vector<2x16xf32>
    %1056 = arith.addf %1054, %1055 : vector<2x16xf32>
    %1057 = math.tanh %1056 : vector<2x16xf32>
    %1058 = arith.mulf %1053, %1057 : vector<2x16xf32>
    %1059 = arith.index_cast %1029 : i32 to index
    %c0_296 = arith.constant 0 : index
    %1060 = vector.load %arg29[%1059, %c0_296] : memref<16x16xf32, #tpu.memory_space<vmem>>, vector<2x16xf32>
    tpu.vector_store %arg29[%1059, %c0_296], %1058 {strides = array<i32>} : memref<16x16xf32, #tpu.memory_space<vmem>>, vector<2x16xf32>,
    %c6_i32_297 = arith.constant 6 : i32
    %c2_i32_298 = arith.constant 2 : i32
    %1061 = arith.muli %c6_i32_297, %c2_i32_298 : i32
    %1062 = tpu.assume_multiple %1061, 2 : i32
    %1063 = arith.index_cast %1062 : i32 to index
    %c0_299 = arith.constant 0 : index
    %1064 = vector.load %arg28[%1063, %c0_299] : memref<16x64xf32, #tpu.memory_space<vmem>>, vector<2x64xf32>
    %cst_300 = arith.constant dense<0.000000e+00> : vector<2x64xf32>
    %1065 = tpu.matmul %1058, %860, %cst_300 {dimension_numbers = #tpu.dot_dimension_numbers<[1], [0], [0], [1], [0, 0, 1, 1], [], []>} : vector<2x16xf32>, vector<16x64xf32>, vector<2x64xf32> -> vector<2x64xf32>
    %1066 = arith.addf %1064, %1065 : vector<2x64xf32>
    %1067 = vector.extract_strided_slice %1066 {offsets = [0, 0], sizes = [2, 16], strides = [1, 1]} : vector<2x64xf32> to vector<2x16xf32>
    %1068 = arith.negf %1067 : vector<2x16xf32>
    %1069 = math.exp %1068 : vector<2x16xf32>
    %cst_301 = arith.constant 1.000000e+00 : f32
    %1070 = vector.broadcast %cst_301 : f32 to vector<2x16xf32>
    %1071 = arith.addf %1070, %1069 : vector<2x16xf32>
    %1072 = arith.divf %1070, %1071 : vector<2x16xf32>
    %1073 = vector.extract_strided_slice %1066 {offsets = [0, 16], sizes = [2, 16], strides = [1, 1]} : vector<2x64xf32> to vector<2x16xf32>
    %1074 = arith.negf %1073 : vector<2x16xf32>
    %1075 = math.exp %1074 : vector<2x16xf32>
    %cst_302 = arith.constant 1.000000e+00 : f32
    %1076 = vector.broadcast %cst_302 : f32 to vector<2x16xf32>
    %1077 = arith.addf %1076, %1075 : vector<2x16xf32>
    %1078 = arith.divf %1076, %1077 : vector<2x16xf32>
    %1079 = vector.extract_strided_slice %1066 {offsets = [0, 32], sizes = [2, 16], strides = [1, 1]} : vector<2x64xf32> to vector<2x16xf32>
    %1080 = math.tanh %1079 : vector<2x16xf32>
    %1081 = vector.extract_strided_slice %1066 {offsets = [0, 48], sizes = [2, 16], strides = [1, 1]} : vector<2x64xf32> to vector<2x16xf32>
    %1082 = arith.negf %1081 : vector<2x16xf32>
    %1083 = math.exp %1082 : vector<2x16xf32>
    %cst_303 = arith.constant 1.000000e+00 : f32
    %1084 = vector.broadcast %cst_303 : f32 to vector<2x16xf32>
    %1085 = arith.addf %1084, %1083 : vector<2x16xf32>
    %1086 = arith.divf %1084, %1085 : vector<2x16xf32>
    %1087 = arith.mulf %1078, %1056 : vector<2x16xf32>
    %1088 = arith.mulf %1072, %1080 : vector<2x16xf32>
    %1089 = arith.addf %1087, %1088 : vector<2x16xf32>
    %1090 = math.tanh %1089 : vector<2x16xf32>
    %1091 = arith.mulf %1086, %1090 : vector<2x16xf32>
    %1092 = arith.index_cast %1062 : i32 to index
    %c0_304 = arith.constant 0 : index
    %1093 = vector.load %arg29[%1092, %c0_304] : memref<16x16xf32, #tpu.memory_space<vmem>>, vector<2x16xf32>
    tpu.vector_store %arg29[%1092, %c0_304], %1091 {strides = array<i32>} : memref<16x16xf32, #tpu.memory_space<vmem>>, vector<2x16xf32>,
    %c7_i32_305 = arith.constant 7 : i32
    %c2_i32_306 = arith.constant 2 : i32
    %1094 = arith.muli %c7_i32_305, %c2_i32_306 : i32
    %1095 = tpu.assume_multiple %1094, 2 : i32
    %1096 = arith.index_cast %1095 : i32 to index
    %c0_307 = arith.constant 0 : index
    %1097 = vector.load %arg28[%1096, %c0_307] : memref<16x64xf32, #tpu.memory_space<vmem>>, vector<2x64xf32>
    %cst_308 = arith.constant dense<0.000000e+00> : vector<2x64xf32>
    %1098 = tpu.matmul %1091, %860, %cst_308 {dimension_numbers = #tpu.dot_dimension_numbers<[1], [0], [0], [1], [0, 0, 1, 1], [], []>} : vector<2x16xf32>, vector<16x64xf32>, vector<2x64xf32> -> vector<2x64xf32>
    %1099 = arith.addf %1097, %1098 : vector<2x64xf32>
    %1100 = vector.extract_strided_slice %1099 {offsets = [0, 0], sizes = [2, 16], strides = [1, 1]} : vector<2x64xf32> to vector<2x16xf32>
    %1101 = arith.negf %1100 : vector<2x16xf32>
    %1102 = math.exp %1101 : vector<2x16xf32>
    %cst_309 = arith.constant 1.000000e+00 : f32
    %1103 = vector.broadcast %cst_309 : f32 to vector<2x16xf32>
    %1104 = arith.addf %1103, %1102 : vector<2x16xf32>
    %1105 = arith.divf %1103, %1104 : vector<2x16xf32>
    %1106 = vector.extract_strided_slice %1099 {offsets = [0, 16], sizes = [2, 16], strides = [1, 1]} : vector<2x64xf32> to vector<2x16xf32>
    %1107 = arith.negf %1106 : vector<2x16xf32>
    %1108 = math.exp %1107 : vector<2x16xf32>
    %cst_310 = arith.constant 1.000000e+00 : f32
    %1109 = vector.broadcast %cst_310 : f32 to vector<2x16xf32>
    %1110 = arith.addf %1109, %1108 : vector<2x16xf32>
    %1111 = arith.divf %1109, %1110 : vector<2x16xf32>
    %1112 = vector.extract_strided_slice %1099 {offsets = [0, 32], sizes = [2, 16], strides = [1, 1]} : vector<2x64xf32> to vector<2x16xf32>
    %1113 = math.tanh %1112 : vector<2x16xf32>
    %1114 = vector.extract_strided_slice %1099 {offsets = [0, 48], sizes = [2, 16], strides = [1, 1]} : vector<2x64xf32> to vector<2x16xf32>
    %1115 = arith.negf %1114 : vector<2x16xf32>
    %1116 = math.exp %1115 : vector<2x16xf32>
    %cst_311 = arith.constant 1.000000e+00 : f32
    %1117 = vector.broadcast %cst_311 : f32 to vector<2x16xf32>
    %1118 = arith.addf %1117, %1116 : vector<2x16xf32>
    %1119 = arith.divf %1117, %1118 : vector<2x16xf32>
    %1120 = arith.mulf %1111, %1089 : vector<2x16xf32>
    %1121 = arith.mulf %1105, %1113 : vector<2x16xf32>
    %1122 = arith.addf %1120, %1121 : vector<2x16xf32>
    %1123 = math.tanh %1122 : vector<2x16xf32>
    %1124 = arith.mulf %1119, %1123 : vector<2x16xf32>
    %1125 = arith.index_cast %1095 : i32 to index
    %c0_312 = arith.constant 0 : index
    %1126 = vector.load %arg29[%1125, %c0_312] : memref<16x16xf32, #tpu.memory_space<vmem>>, vector<2x16xf32>
    tpu.vector_store %arg29[%1125, %c0_312], %1124 {strides = array<i32>} : memref<16x16xf32, #tpu.memory_space<vmem>>, vector<2x16xf32>,
    %c8_i32_313 = arith.constant 8 : i32
    %c0_314 = arith.constant 0 : index
    %c0_315 = arith.constant 0 : index
    %1127 = vector.load %arg29[%c0_314, %c0_315] : memref<16x16xf32, #tpu.memory_space<vmem>>, vector<16x16xf32>
    %c0_316 = arith.constant 0 : index
    %c0_317 = arith.constant 0 : index
    %1128 = vector.load %arg16[%c0_316, %c0_317] : memref<16x64xf32, #tpu.memory_space<vmem>>, vector<16x64xf32>
    %cst_318 = arith.constant dense<0.000000e+00> : vector<16x64xf32>
    %1129 = tpu.matmul %1127, %1128, %cst_318 {dimension_numbers = #tpu.dot_dimension_numbers<[1], [0], [0], [1], [0, 0, 1, 1], [], []>} : vector<16x16xf32>, vector<16x64xf32>, vector<16x64xf32> -> vector<16x64xf32>
    %c0_319 = arith.constant 0 : index
    %c0_320 = arith.constant 0 : index
    %1130 = vector.load %arg18[%c0_319, %c0_320] : memref<1x64xf32, #tpu.memory_space<vmem>>, vector<1x64xf32>
    %1131 = vector.broadcast %1130 : vector<1x64xf32> to vector<16x64xf32>
    %1132 = arith.addf %1129, %1131 : vector<16x64xf32>
    %c0_321 = arith.constant 0 : index
    %c0_322 = arith.constant 0 : index
    %1133 = vector.load %arg30[%c0_321, %c0_322] : memref<16x64xf32, #tpu.memory_space<vmem>>, vector<16x64xf32>
    tpu.vector_store %arg30[%c0_321, %c0_322], %1132 {strides = array<i32>} : memref<16x64xf32, #tpu.memory_space<vmem>>, vector<16x64xf32>,
    %c0_323 = arith.constant 0 : index
    %c0_324 = arith.constant 0 : index
    %1134 = vector.load %arg17[%c0_323, %c0_324] : memref<16x64xf32, #tpu.memory_space<vmem>>, vector<16x64xf32>
    %cst_325 = arith.constant 0.000000e+00 : f32
    %1135 = vector.broadcast %cst_325 : f32 to vector<2x16xf32>
    %cst_326 = arith.constant 0.000000e+00 : f32
    %1136 = vector.broadcast %cst_326 : f32 to vector<2x16xf32>
    %c0_i32_327 = arith.constant 0 : i32
    %c2_i32_328 = arith.constant 2 : i32
    %1137 = arith.muli %c0_i32_327, %c2_i32_328 : i32
    %1138 = tpu.assume_multiple %1137, 2 : i32
    %1139 = arith.index_cast %1138 : i32 to index
    %c0_329 = arith.constant 0 : index
    %1140 = vector.load %arg30[%1139, %c0_329] : memref<16x64xf32, #tpu.memory_space<vmem>>, vector<2x64xf32>
    %cst_330 = arith.constant dense<0.000000e+00> : vector<2x64xf32>
    %1141 = tpu.matmul %1135, %1134, %cst_330 {dimension_numbers = #tpu.dot_dimension_numbers<[1], [0], [0], [1], [0, 0, 1, 1], [], []>} : vector<2x16xf32>, vector<16x64xf32>, vector<2x64xf32> -> vector<2x64xf32>
    %1142 = arith.addf %1140, %1141 : vector<2x64xf32>
    %1143 = vector.extract_strided_slice %1142 {offsets = [0, 0], sizes = [2, 16], strides = [1, 1]} : vector<2x64xf32> to vector<2x16xf32>
    %1144 = arith.negf %1143 : vector<2x16xf32>
    %1145 = math.exp %1144 : vector<2x16xf32>
    %cst_331 = arith.constant 1.000000e+00 : f32
    %1146 = vector.broadcast %cst_331 : f32 to vector<2x16xf32>
    %1147 = arith.addf %1146, %1145 : vector<2x16xf32>
    %1148 = arith.divf %1146, %1147 : vector<2x16xf32>
    %1149 = vector.extract_strided_slice %1142 {offsets = [0, 16], sizes = [2, 16], strides = [1, 1]} : vector<2x64xf32> to vector<2x16xf32>
    %1150 = arith.negf %1149 : vector<2x16xf32>
    %1151 = math.exp %1150 : vector<2x16xf32>
    %cst_332 = arith.constant 1.000000e+00 : f32
    %1152 = vector.broadcast %cst_332 : f32 to vector<2x16xf32>
    %1153 = arith.addf %1152, %1151 : vector<2x16xf32>
    %1154 = arith.divf %1152, %1153 : vector<2x16xf32>
    %1155 = vector.extract_strided_slice %1142 {offsets = [0, 32], sizes = [2, 16], strides = [1, 1]} : vector<2x64xf32> to vector<2x16xf32>
    %1156 = math.tanh %1155 : vector<2x16xf32>
    %1157 = vector.extract_strided_slice %1142 {offsets = [0, 48], sizes = [2, 16], strides = [1, 1]} : vector<2x64xf32> to vector<2x16xf32>
    %1158 = arith.negf %1157 : vector<2x16xf32>
    %1159 = math.exp %1158 : vector<2x16xf32>
    %cst_333 = arith.constant 1.000000e+00 : f32
    %1160 = vector.broadcast %cst_333 : f32 to vector<2x16xf32>
    %1161 = arith.addf %1160, %1159 : vector<2x16xf32>
    %1162 = arith.divf %1160, %1161 : vector<2x16xf32>
    %1163 = arith.mulf %1154, %1136 : vector<2x16xf32>
    %1164 = arith.mulf %1148, %1156 : vector<2x16xf32>
    %1165 = arith.addf %1163, %1164 : vector<2x16xf32>
    %1166 = math.tanh %1165 : vector<2x16xf32>
    %1167 = arith.mulf %1162, %1166 : vector<2x16xf32>
    %c1_i32_334 = arith.constant 1 : i32
    %c2_i32_335 = arith.constant 2 : i32
    %1168 = arith.muli %c1_i32_334, %c2_i32_335 : i32
    %1169 = tpu.assume_multiple %1168, 2 : i32
    %1170 = arith.index_cast %1169 : i32 to index
    %c0_336 = arith.constant 0 : index
    %1171 = vector.load %arg30[%1170, %c0_336] : memref<16x64xf32, #tpu.memory_space<vmem>>, vector<2x64xf32>
    %cst_337 = arith.constant dense<0.000000e+00> : vector<2x64xf32>
    %1172 = tpu.matmul %1167, %1134, %cst_337 {dimension_numbers = #tpu.dot_dimension_numbers<[1], [0], [0], [1], [0, 0, 1, 1], [], []>} : vector<2x16xf32>, vector<16x64xf32>, vector<2x64xf32> -> vector<2x64xf32>
    %1173 = arith.addf %1171, %1172 : vector<2x64xf32>
    %1174 = vector.extract_strided_slice %1173 {offsets = [0, 0], sizes = [2, 16], strides = [1, 1]} : vector<2x64xf32> to vector<2x16xf32>
    %1175 = arith.negf %1174 : vector<2x16xf32>
    %1176 = math.exp %1175 : vector<2x16xf32>
    %cst_338 = arith.constant 1.000000e+00 : f32
    %1177 = vector.broadcast %cst_338 : f32 to vector<2x16xf32>
    %1178 = arith.addf %1177, %1176 : vector<2x16xf32>
    %1179 = arith.divf %1177, %1178 : vector<2x16xf32>
    %1180 = vector.extract_strided_slice %1173 {offsets = [0, 16], sizes = [2, 16], strides = [1, 1]} : vector<2x64xf32> to vector<2x16xf32>
    %1181 = arith.negf %1180 : vector<2x16xf32>
    %1182 = math.exp %1181 : vector<2x16xf32>
    %cst_339 = arith.constant 1.000000e+00 : f32
    %1183 = vector.broadcast %cst_339 : f32 to vector<2x16xf32>
    %1184 = arith.addf %1183, %1182 : vector<2x16xf32>
    %1185 = arith.divf %1183, %1184 : vector<2x16xf32>
    %1186 = vector.extract_strided_slice %1173 {offsets = [0, 32], sizes = [2, 16], strides = [1, 1]} : vector<2x64xf32> to vector<2x16xf32>
    %1187 = math.tanh %1186 : vector<2x16xf32>
    %1188 = vector.extract_strided_slice %1173 {offsets = [0, 48], sizes = [2, 16], strides = [1, 1]} : vector<2x64xf32> to vector<2x16xf32>
    %1189 = arith.negf %1188 : vector<2x16xf32>
    %1190 = math.exp %1189 : vector<2x16xf32>
    %cst_340 = arith.constant 1.000000e+00 : f32
    %1191 = vector.broadcast %cst_340 : f32 to vector<2x16xf32>
    %1192 = arith.addf %1191, %1190 : vector<2x16xf32>
    %1193 = arith.divf %1191, %1192 : vector<2x16xf32>
    %1194 = arith.mulf %1185, %1165 : vector<2x16xf32>
    %1195 = arith.mulf %1179, %1187 : vector<2x16xf32>
    %1196 = arith.addf %1194, %1195 : vector<2x16xf32>
    %1197 = math.tanh %1196 : vector<2x16xf32>
    %1198 = arith.mulf %1193, %1197 : vector<2x16xf32>
    %c2_i32_341 = arith.constant 2 : i32
    %c2_i32_342 = arith.constant 2 : i32
    %1199 = arith.muli %c2_i32_341, %c2_i32_342 : i32
    %1200 = tpu.assume_multiple %1199, 2 : i32
    %1201 = arith.index_cast %1200 : i32 to index
    %c0_343 = arith.constant 0 : index
    %1202 = vector.load %arg30[%1201, %c0_343] : memref<16x64xf32, #tpu.memory_space<vmem>>, vector<2x64xf32>
    %cst_344 = arith.constant dense<0.000000e+00> : vector<2x64xf32>
    %1203 = tpu.matmul %1198, %1134, %cst_344 {dimension_numbers = #tpu.dot_dimension_numbers<[1], [0], [0], [1], [0, 0, 1, 1], [], []>} : vector<2x16xf32>, vector<16x64xf32>, vector<2x64xf32> -> vector<2x64xf32>
    %1204 = arith.addf %1202, %1203 : vector<2x64xf32>
    %1205 = vector.extract_strided_slice %1204 {offsets = [0, 0], sizes = [2, 16], strides = [1, 1]} : vector<2x64xf32> to vector<2x16xf32>
    %1206 = arith.negf %1205 : vector<2x16xf32>
    %1207 = math.exp %1206 : vector<2x16xf32>
    %cst_345 = arith.constant 1.000000e+00 : f32
    %1208 = vector.broadcast %cst_345 : f32 to vector<2x16xf32>
    %1209 = arith.addf %1208, %1207 : vector<2x16xf32>
    %1210 = arith.divf %1208, %1209 : vector<2x16xf32>
    %1211 = vector.extract_strided_slice %1204 {offsets = [0, 16], sizes = [2, 16], strides = [1, 1]} : vector<2x64xf32> to vector<2x16xf32>
    %1212 = arith.negf %1211 : vector<2x16xf32>
    %1213 = math.exp %1212 : vector<2x16xf32>
    %cst_346 = arith.constant 1.000000e+00 : f32
    %1214 = vector.broadcast %cst_346 : f32 to vector<2x16xf32>
    %1215 = arith.addf %1214, %1213 : vector<2x16xf32>
    %1216 = arith.divf %1214, %1215 : vector<2x16xf32>
    %1217 = vector.extract_strided_slice %1204 {offsets = [0, 32], sizes = [2, 16], strides = [1, 1]} : vector<2x64xf32> to vector<2x16xf32>
    %1218 = math.tanh %1217 : vector<2x16xf32>
    %1219 = vector.extract_strided_slice %1204 {offsets = [0, 48], sizes = [2, 16], strides = [1, 1]} : vector<2x64xf32> to vector<2x16xf32>
    %1220 = arith.negf %1219 : vector<2x16xf32>
    %1221 = math.exp %1220 : vector<2x16xf32>
    %cst_347 = arith.constant 1.000000e+00 : f32
    %1222 = vector.broadcast %cst_347 : f32 to vector<2x16xf32>
    %1223 = arith.addf %1222, %1221 : vector<2x16xf32>
    %1224 = arith.divf %1222, %1223 : vector<2x16xf32>
    %1225 = arith.mulf %1216, %1196 : vector<2x16xf32>
    %1226 = arith.mulf %1210, %1218 : vector<2x16xf32>
    %1227 = arith.addf %1225, %1226 : vector<2x16xf32>
    %1228 = math.tanh %1227 : vector<2x16xf32>
    %1229 = arith.mulf %1224, %1228 : vector<2x16xf32>
    %c3_i32_348 = arith.constant 3 : i32
    %c2_i32_349 = arith.constant 2 : i32
    %1230 = arith.muli %c3_i32_348, %c2_i32_349 : i32
    %1231 = tpu.assume_multiple %1230, 2 : i32
    %1232 = arith.index_cast %1231 : i32 to index
    %c0_350 = arith.constant 0 : index
    %1233 = vector.load %arg30[%1232, %c0_350] : memref<16x64xf32, #tpu.memory_space<vmem>>, vector<2x64xf32>
    %cst_351 = arith.constant dense<0.000000e+00> : vector<2x64xf32>
    %1234 = tpu.matmul %1229, %1134, %cst_351 {dimension_numbers = #tpu.dot_dimension_numbers<[1], [0], [0], [1], [0, 0, 1, 1], [], []>} : vector<2x16xf32>, vector<16x64xf32>, vector<2x64xf32> -> vector<2x64xf32>
    %1235 = arith.addf %1233, %1234 : vector<2x64xf32>
    %1236 = vector.extract_strided_slice %1235 {offsets = [0, 0], sizes = [2, 16], strides = [1, 1]} : vector<2x64xf32> to vector<2x16xf32>
    %1237 = arith.negf %1236 : vector<2x16xf32>
    %1238 = math.exp %1237 : vector<2x16xf32>
    %cst_352 = arith.constant 1.000000e+00 : f32
    %1239 = vector.broadcast %cst_352 : f32 to vector<2x16xf32>
    %1240 = arith.addf %1239, %1238 : vector<2x16xf32>
    %1241 = arith.divf %1239, %1240 : vector<2x16xf32>
    %1242 = vector.extract_strided_slice %1235 {offsets = [0, 16], sizes = [2, 16], strides = [1, 1]} : vector<2x64xf32> to vector<2x16xf32>
    %1243 = arith.negf %1242 : vector<2x16xf32>
    %1244 = math.exp %1243 : vector<2x16xf32>
    %cst_353 = arith.constant 1.000000e+00 : f32
    %1245 = vector.broadcast %cst_353 : f32 to vector<2x16xf32>
    %1246 = arith.addf %1245, %1244 : vector<2x16xf32>
    %1247 = arith.divf %1245, %1246 : vector<2x16xf32>
    %1248 = vector.extract_strided_slice %1235 {offsets = [0, 32], sizes = [2, 16], strides = [1, 1]} : vector<2x64xf32> to vector<2x16xf32>
    %1249 = math.tanh %1248 : vector<2x16xf32>
    %1250 = vector.extract_strided_slice %1235 {offsets = [0, 48], sizes = [2, 16], strides = [1, 1]} : vector<2x64xf32> to vector<2x16xf32>
    %1251 = arith.negf %1250 : vector<2x16xf32>
    %1252 = math.exp %1251 : vector<2x16xf32>
    %cst_354 = arith.constant 1.000000e+00 : f32
    %1253 = vector.broadcast %cst_354 : f32 to vector<2x16xf32>
    %1254 = arith.addf %1253, %1252 : vector<2x16xf32>
    %1255 = arith.divf %1253, %1254 : vector<2x16xf32>
    %1256 = arith.mulf %1247, %1227 : vector<2x16xf32>
    %1257 = arith.mulf %1241, %1249 : vector<2x16xf32>
    %1258 = arith.addf %1256, %1257 : vector<2x16xf32>
    %1259 = math.tanh %1258 : vector<2x16xf32>
    %1260 = arith.mulf %1255, %1259 : vector<2x16xf32>
    %c4_i32_355 = arith.constant 4 : i32
    %c2_i32_356 = arith.constant 2 : i32
    %1261 = arith.muli %c4_i32_355, %c2_i32_356 : i32
    %1262 = tpu.assume_multiple %1261, 2 : i32
    %1263 = arith.index_cast %1262 : i32 to index
    %c0_357 = arith.constant 0 : index
    %1264 = vector.load %arg30[%1263, %c0_357] : memref<16x64xf32, #tpu.memory_space<vmem>>, vector<2x64xf32>
    %cst_358 = arith.constant dense<0.000000e+00> : vector<2x64xf32>
    %1265 = tpu.matmul %1260, %1134, %cst_358 {dimension_numbers = #tpu.dot_dimension_numbers<[1], [0], [0], [1], [0, 0, 1, 1], [], []>} : vector<2x16xf32>, vector<16x64xf32>, vector<2x64xf32> -> vector<2x64xf32>
    %1266 = arith.addf %1264, %1265 : vector<2x64xf32>
    %1267 = vector.extract_strided_slice %1266 {offsets = [0, 0], sizes = [2, 16], strides = [1, 1]} : vector<2x64xf32> to vector<2x16xf32>
    %1268 = arith.negf %1267 : vector<2x16xf32>
    %1269 = math.exp %1268 : vector<2x16xf32>
    %cst_359 = arith.constant 1.000000e+00 : f32
    %1270 = vector.broadcast %cst_359 : f32 to vector<2x16xf32>
    %1271 = arith.addf %1270, %1269 : vector<2x16xf32>
    %1272 = arith.divf %1270, %1271 : vector<2x16xf32>
    %1273 = vector.extract_strided_slice %1266 {offsets = [0, 16], sizes = [2, 16], strides = [1, 1]} : vector<2x64xf32> to vector<2x16xf32>
    %1274 = arith.negf %1273 : vector<2x16xf32>
    %1275 = math.exp %1274 : vector<2x16xf32>
    %cst_360 = arith.constant 1.000000e+00 : f32
    %1276 = vector.broadcast %cst_360 : f32 to vector<2x16xf32>
    %1277 = arith.addf %1276, %1275 : vector<2x16xf32>
    %1278 = arith.divf %1276, %1277 : vector<2x16xf32>
    %1279 = vector.extract_strided_slice %1266 {offsets = [0, 32], sizes = [2, 16], strides = [1, 1]} : vector<2x64xf32> to vector<2x16xf32>
    %1280 = math.tanh %1279 : vector<2x16xf32>
    %1281 = vector.extract_strided_slice %1266 {offsets = [0, 48], sizes = [2, 16], strides = [1, 1]} : vector<2x64xf32> to vector<2x16xf32>
    %1282 = arith.negf %1281 : vector<2x16xf32>
    %1283 = math.exp %1282 : vector<2x16xf32>
    %cst_361 = arith.constant 1.000000e+00 : f32
    %1284 = vector.broadcast %cst_361 : f32 to vector<2x16xf32>
    %1285 = arith.addf %1284, %1283 : vector<2x16xf32>
    %1286 = arith.divf %1284, %1285 : vector<2x16xf32>
    %1287 = arith.mulf %1278, %1258 : vector<2x16xf32>
    %1288 = arith.mulf %1272, %1280 : vector<2x16xf32>
    %1289 = arith.addf %1287, %1288 : vector<2x16xf32>
    %1290 = math.tanh %1289 : vector<2x16xf32>
    %1291 = arith.mulf %1286, %1290 : vector<2x16xf32>
    %c5_i32_362 = arith.constant 5 : i32
    %c2_i32_363 = arith.constant 2 : i32
    %1292 = arith.muli %c5_i32_362, %c2_i32_363 : i32
    %1293 = tpu.assume_multiple %1292, 2 : i32
    %1294 = arith.index_cast %1293 : i32 to index
    %c0_364 = arith.constant 0 : index
    %1295 = vector.load %arg30[%1294, %c0_364] : memref<16x64xf32, #tpu.memory_space<vmem>>, vector<2x64xf32>
    %cst_365 = arith.constant dense<0.000000e+00> : vector<2x64xf32>
    %1296 = tpu.matmul %1291, %1134, %cst_365 {dimension_numbers = #tpu.dot_dimension_numbers<[1], [0], [0], [1], [0, 0, 1, 1], [], []>} : vector<2x16xf32>, vector<16x64xf32>, vector<2x64xf32> -> vector<2x64xf32>
    %1297 = arith.addf %1295, %1296 : vector<2x64xf32>
    %1298 = vector.extract_strided_slice %1297 {offsets = [0, 0], sizes = [2, 16], strides = [1, 1]} : vector<2x64xf32> to vector<2x16xf32>
    %1299 = arith.negf %1298 : vector<2x16xf32>
    %1300 = math.exp %1299 : vector<2x16xf32>
    %cst_366 = arith.constant 1.000000e+00 : f32
    %1301 = vector.broadcast %cst_366 : f32 to vector<2x16xf32>
    %1302 = arith.addf %1301, %1300 : vector<2x16xf32>
    %1303 = arith.divf %1301, %1302 : vector<2x16xf32>
    %1304 = vector.extract_strided_slice %1297 {offsets = [0, 16], sizes = [2, 16], strides = [1, 1]} : vector<2x64xf32> to vector<2x16xf32>
    %1305 = arith.negf %1304 : vector<2x16xf32>
    %1306 = math.exp %1305 : vector<2x16xf32>
    %cst_367 = arith.constant 1.000000e+00 : f32
    %1307 = vector.broadcast %cst_367 : f32 to vector<2x16xf32>
    %1308 = arith.addf %1307, %1306 : vector<2x16xf32>
    %1309 = arith.divf %1307, %1308 : vector<2x16xf32>
    %1310 = vector.extract_strided_slice %1297 {offsets = [0, 32], sizes = [2, 16], strides = [1, 1]} : vector<2x64xf32> to vector<2x16xf32>
    %1311 = math.tanh %1310 : vector<2x16xf32>
    %1312 = vector.extract_strided_slice %1297 {offsets = [0, 48], sizes = [2, 16], strides = [1, 1]} : vector<2x64xf32> to vector<2x16xf32>
    %1313 = arith.negf %1312 : vector<2x16xf32>
    %1314 = math.exp %1313 : vector<2x16xf32>
    %cst_368 = arith.constant 1.000000e+00 : f32
    %1315 = vector.broadcast %cst_368 : f32 to vector<2x16xf32>
    %1316 = arith.addf %1315, %1314 : vector<2x16xf32>
    %1317 = arith.divf %1315, %1316 : vector<2x16xf32>
    %1318 = arith.mulf %1309, %1289 : vector<2x16xf32>
    %1319 = arith.mulf %1303, %1311 : vector<2x16xf32>
    %1320 = arith.addf %1318, %1319 : vector<2x16xf32>
    %1321 = math.tanh %1320 : vector<2x16xf32>
    %1322 = arith.mulf %1317, %1321 : vector<2x16xf32>
    %c6_i32_369 = arith.constant 6 : i32
    %c2_i32_370 = arith.constant 2 : i32
    %1323 = arith.muli %c6_i32_369, %c2_i32_370 : i32
    %1324 = tpu.assume_multiple %1323, 2 : i32
    %1325 = arith.index_cast %1324 : i32 to index
    %c0_371 = arith.constant 0 : index
    %1326 = vector.load %arg30[%1325, %c0_371] : memref<16x64xf32, #tpu.memory_space<vmem>>, vector<2x64xf32>
    %cst_372 = arith.constant dense<0.000000e+00> : vector<2x64xf32>
    %1327 = tpu.matmul %1322, %1134, %cst_372 {dimension_numbers = #tpu.dot_dimension_numbers<[1], [0], [0], [1], [0, 0, 1, 1], [], []>} : vector<2x16xf32>, vector<16x64xf32>, vector<2x64xf32> -> vector<2x64xf32>
    %1328 = arith.addf %1326, %1327 : vector<2x64xf32>
    %1329 = vector.extract_strided_slice %1328 {offsets = [0, 0], sizes = [2, 16], strides = [1, 1]} : vector<2x64xf32> to vector<2x16xf32>
    %1330 = arith.negf %1329 : vector<2x16xf32>
    %1331 = math.exp %1330 : vector<2x16xf32>
    %cst_373 = arith.constant 1.000000e+00 : f32
    %1332 = vector.broadcast %cst_373 : f32 to vector<2x16xf32>
    %1333 = arith.addf %1332, %1331 : vector<2x16xf32>
    %1334 = arith.divf %1332, %1333 : vector<2x16xf32>
    %1335 = vector.extract_strided_slice %1328 {offsets = [0, 16], sizes = [2, 16], strides = [1, 1]} : vector<2x64xf32> to vector<2x16xf32>
    %1336 = arith.negf %1335 : vector<2x16xf32>
    %1337 = math.exp %1336 : vector<2x16xf32>
    %cst_374 = arith.constant 1.000000e+00 : f32
    %1338 = vector.broadcast %cst_374 : f32 to vector<2x16xf32>
    %1339 = arith.addf %1338, %1337 : vector<2x16xf32>
    %1340 = arith.divf %1338, %1339 : vector<2x16xf32>
    %1341 = vector.extract_strided_slice %1328 {offsets = [0, 32], sizes = [2, 16], strides = [1, 1]} : vector<2x64xf32> to vector<2x16xf32>
    %1342 = math.tanh %1341 : vector<2x16xf32>
    %1343 = vector.extract_strided_slice %1328 {offsets = [0, 48], sizes = [2, 16], strides = [1, 1]} : vector<2x64xf32> to vector<2x16xf32>
    %1344 = arith.negf %1343 : vector<2x16xf32>
    %1345 = math.exp %1344 : vector<2x16xf32>
    %cst_375 = arith.constant 1.000000e+00 : f32
    %1346 = vector.broadcast %cst_375 : f32 to vector<2x16xf32>
    %1347 = arith.addf %1346, %1345 : vector<2x16xf32>
    %1348 = arith.divf %1346, %1347 : vector<2x16xf32>
    %1349 = arith.mulf %1340, %1320 : vector<2x16xf32>
    %1350 = arith.mulf %1334, %1342 : vector<2x16xf32>
    %1351 = arith.addf %1349, %1350 : vector<2x16xf32>
    %1352 = math.tanh %1351 : vector<2x16xf32>
    %1353 = arith.mulf %1348, %1352 : vector<2x16xf32>
    %c7_i32_376 = arith.constant 7 : i32
    %c2_i32_377 = arith.constant 2 : i32
    %1354 = arith.muli %c7_i32_376, %c2_i32_377 : i32
    %1355 = tpu.assume_multiple %1354, 2 : i32
    %1356 = arith.index_cast %1355 : i32 to index
    %c0_378 = arith.constant 0 : index
    %1357 = vector.load %arg30[%1356, %c0_378] : memref<16x64xf32, #tpu.memory_space<vmem>>, vector<2x64xf32>
    %cst_379 = arith.constant dense<0.000000e+00> : vector<2x64xf32>
    %1358 = tpu.matmul %1353, %1134, %cst_379 {dimension_numbers = #tpu.dot_dimension_numbers<[1], [0], [0], [1], [0, 0, 1, 1], [], []>} : vector<2x16xf32>, vector<16x64xf32>, vector<2x64xf32> -> vector<2x64xf32>
    %1359 = arith.addf %1357, %1358 : vector<2x64xf32>
    %1360 = vector.extract_strided_slice %1359 {offsets = [0, 0], sizes = [2, 16], strides = [1, 1]} : vector<2x64xf32> to vector<2x16xf32>
    %1361 = arith.negf %1360 : vector<2x16xf32>
    %1362 = math.exp %1361 : vector<2x16xf32>
    %cst_380 = arith.constant 1.000000e+00 : f32
    %1363 = vector.broadcast %cst_380 : f32 to vector<2x16xf32>
    %1364 = arith.addf %1363, %1362 : vector<2x16xf32>
    %1365 = arith.divf %1363, %1364 : vector<2x16xf32>
    %1366 = vector.extract_strided_slice %1359 {offsets = [0, 16], sizes = [2, 16], strides = [1, 1]} : vector<2x64xf32> to vector<2x16xf32>
    %1367 = arith.negf %1366 : vector<2x16xf32>
    %1368 = math.exp %1367 : vector<2x16xf32>
    %cst_381 = arith.constant 1.000000e+00 : f32
    %1369 = vector.broadcast %cst_381 : f32 to vector<2x16xf32>
    %1370 = arith.addf %1369, %1368 : vector<2x16xf32>
    %1371 = arith.divf %1369, %1370 : vector<2x16xf32>
    %1372 = vector.extract_strided_slice %1359 {offsets = [0, 32], sizes = [2, 16], strides = [1, 1]} : vector<2x64xf32> to vector<2x16xf32>
    %1373 = math.tanh %1372 : vector<2x16xf32>
    %1374 = vector.extract_strided_slice %1359 {offsets = [0, 48], sizes = [2, 16], strides = [1, 1]} : vector<2x64xf32> to vector<2x16xf32>
    %1375 = arith.negf %1374 : vector<2x16xf32>
    %1376 = math.exp %1375 : vector<2x16xf32>
    %cst_382 = arith.constant 1.000000e+00 : f32
    %1377 = vector.broadcast %cst_382 : f32 to vector<2x16xf32>
    %1378 = arith.addf %1377, %1376 : vector<2x16xf32>
    %1379 = arith.divf %1377, %1378 : vector<2x16xf32>
    %1380 = arith.mulf %1371, %1351 : vector<2x16xf32>
    %1381 = arith.mulf %1365, %1373 : vector<2x16xf32>
    %1382 = arith.addf %1380, %1381 : vector<2x16xf32>
    %1383 = math.tanh %1382 : vector<2x16xf32>
    %1384 = arith.mulf %1379, %1383 : vector<2x16xf32>
    %c8_i32_383 = arith.constant 8 : i32
    %c0_384 = arith.constant 0 : index
    %c0_385 = arith.constant 0 : index
    %1385 = vector.load %arg19[%c0_384, %c0_385] : memref<16x8xf32, #tpu.memory_space<vmem>>, vector<16x8xf32>
    %cst_386 = arith.constant dense<0.000000e+00> : vector<2x8xf32>
    %1386 = tpu.matmul %1384, %1385, %cst_386 {dimension_numbers = #tpu.dot_dimension_numbers<[1], [0], [0], [1], [0, 0, 1, 1], [], []>} : vector<2x16xf32>, vector<16x8xf32>, vector<2x8xf32> -> vector<2x8xf32>
    %c0_387 = arith.constant 0 : index
    %c0_388 = arith.constant 0 : index
    %1387 = vector.load %arg20[%c0_387, %c0_388] : memref<1x8xf32, #tpu.memory_space<vmem>>, vector<1x8xf32>
    %1388 = vector.broadcast %1387 : vector<1x8xf32> to vector<2x8xf32>
    %1389 = arith.addf %1386, %1388 : vector<2x8xf32>
    %c0_389 = arith.constant 0 : index
    %c0_390 = arith.constant 0 : index
    %1390 = vector.load %arg21[%c0_389, %c0_390] : memref<2x8xf32, #tpu.memory_space<vmem>>, vector<2x8xf32>
    tpu.vector_store %arg21[%c0_389, %c0_390], %1389 {strides = array<i32>} : memref<2x8xf32, #tpu.memory_space<vmem>>, vector<2x8xf32>,
    return
  }
}

</mosaic_0001>

<llo_original>
// kernel: hybrid_forward.1
$region0: #{hybrid_forward.1}
  #allocation0 [shape = 'u32[]', space=smem, size = 0x4, offset = 0x4, fixed_abs, tag = 'smem constant byte address 0x4 - core index']
  #allocation1 [shape = 'u32[144,128]{1,0:T(1,128)}', space=vmem, size = 0x12000, scoped, tag = 'internal scratch']
  #allocation2 [shape = 'f32[16,48]{1,0:T(8,128)}', space=vmem, size = 0x2000, scoped, tag = 'scratch operand']
  #allocation3 [shape = 'f32[16,48]{1,0:T(8,128)}', space=vmem, size = 0x2000, scoped, tag = 'scratch operand']
  #allocation4 [shape = 'f32[16,16]{1,0:T(8,128)}', space=vmem, size = 0x2000, scoped, tag = 'scratch operand']
  #allocation5 [shape = 'f32[16,16]{1,0:T(8,128)}', space=vmem, size = 0x2000, scoped, tag = 'scratch operand']
  #allocation6 [shape = 'f32[16,128]{1,0:T(8,128)}', space=vmem, size = 0x2000, scoped, tag = 'scratch operand']
  #allocation7 [shape = 'f32[16,32]{1,0:T(8,128)}', space=vmem, size = 0x2000, scoped, tag = 'scratch operand']
  #allocation8 [shape = 'f32[16,64]{1,0:T(8,128)}', space=vmem, size = 0x2000, scoped, tag = 'scratch operand']
  #allocation9 [shape = 'f32[16,16]{1,0:T(8,128)}', space=vmem, size = 0x2000, scoped, tag = 'scratch operand']
  #allocation10 [shape = 'f32[16,64]{1,0:T(8,128)}', space=vmem, size = 0x2000, scoped, tag = 'scratch operand']
  %s0 = inlined_call_operand.vmem [shape: f32[16,8], index: 0, kind: input, shape index: {}]
  %s1 = inlined_call_operand.hbm [shape: f32[8,48], index: 1, kind: input, shape index: {}]
  %s2 = inlined_call_operand.hbm [shape: f32[16,48], index: 2, kind: input, shape index: {}]
  %s3 = inlined_call_operand.hbm [shape: f32[1,48], index: 3, kind: input, shape index: {}]
  %s4 = inlined_call_operand.hbm [shape: f32[1,48], index: 4, kind: input, shape index: {}]
  %s5 = inlined_call_operand.hbm [shape: f32[8,48], index: 5, kind: input, shape index: {}]
  %s6 = inlined_call_operand.hbm [shape: f32[16,48], index: 6, kind: input, shape index: {}]
  %s7 = inlined_call_operand.hbm [shape: f32[1,48], index: 7, kind: input, shape index: {}]
  %s8 = inlined_call_operand.hbm [shape: f32[1,48], index: 8, kind: input, shape index: {}]
  %s9 = inlined_call_operand.hbm [shape: f32[16,128], index: 9, kind: input, shape index: {}]
  %s10 = inlined_call_operand.hbm [shape: f32[16,128], index: 10, kind: input, shape index: {}]
  %s11 = inlined_call_operand.vmem [shape: f32[32,128], index: 11, kind: input, shape index: {}]
  %s12 = inlined_call_operand.hbm [shape: f32[1,128], index: 12, kind: input, shape index: {}]
  %s13 = inlined_call_operand.vmem [shape: f32[32,64], index: 13, kind: input, shape index: {}]
  %s14 = inlined_call_operand.vmem [shape: f32[16,64], index: 14, kind: input, shape index: {}]
  %s15 = inlined_call_operand.hbm [shape: f32[1,64], index: 15, kind: input, shape index: {}]
  %s16 = inlined_call_operand.hbm [shape: f32[16,64], index: 16, kind: input, shape index: {}]
  %s17 = inlined_call_operand.hbm [shape: f32[16,64], index: 17, kind: input, shape index: {}]
  %s18 = inlined_call_operand.vmem [shape: f32[1,64], index: 18, kind: input, shape index: {}]
  %s19 = inlined_call_operand.vmem [shape: f32[16,8], index: 19, kind: input, shape index: {}]
  %s20 = inlined_call_operand.vmem [shape: f32[1,8], index: 20, kind: input, shape index: {}]
  %s21 = inlined_call_operand.hbm [shape: f32[2,8], index: 21, kind: output, shape index: {}]
  %s22 = sld [smem:[#allocation0]]
  $region150: #{hybrid_forward.1} parent=0
    _
  %s24 = ssub.s32 1, %s22
  %s25 = scalar_select 0, %s24, %s22
  $region1: #{hybrid_forward.1} parent=0
    #allocation11 [shape = 'u8[4096]{0}', space=vmem, size = 0x1000, scoped, tag = 'input window, operand 1, single buffered']
    #allocation12 [shape = 's32[1]{0}', space=sflag, size = 0x4, scoped, tag = 'scoped memory for hybrid_forward.1']
    #allocation13 [shape = 's32[1]{0}', space=sflag, size = 0x4, scoped, tag = 'scoped memory for hybrid_forward.1']
    #allocation14 [shape = 'u8[8192]{0}', space=vmem, size = 0x2000, scoped, tag = 'input window, operand 2, single buffered']
    #allocation15 [shape = 's32[1]{0}', space=sflag, size = 0x4, scoped, tag = 'scoped memory for hybrid_forward.1']
    #allocation16 [shape = 'u8[512]{0}', space=vmem, size = 0x400, scoped, tag = 'input window, operand 3, single buffered']
    #allocation17 [shape = 'u8[512]{0}', space=vmem, size = 0x400, scoped, tag = 'input window, operand 4, single buffered']
    #allocation18 [shape = 's32[1]{0}', space=sflag, size = 0x4, scoped, tag = 'scoped memory for hybrid_forward.1']
    #allocation19 [shape = 'u8[4096]{0}', space=vmem, size = 0x1000, scoped, tag = 'input window, operand 5, single buffered']
    #allocation20 [shape = 'u8[8192]{0}', space=vmem, size = 0x2000, scoped, tag = 'input window, operand 6, single buffered']
    #allocation21 [shape = 's32[1]{0}', space=sflag, size = 0x4, scoped, tag = 'scoped memory for hybrid_forward.1']
    #allocation22 [shape = 'u8[512]{0}', space=vmem, size = 0x400, scoped, tag = 'input window, operand 7, single buffered']
    #allocation23 [shape = 'u8[512]{0}', space=vmem, size = 0x400, scoped, tag = 'input window, operand 8, single buffered']
    #allocation24 [shape = 's32[1]{0}', space=sflag, size = 0x4, scoped, tag = 'scoped memory for hybrid_forward.1']
    #allocation25 [shape = 'u8[8192]{0}', space=vmem, size = 0x2000, scoped, tag = 'input window, operand 9, single buffered']
    #allocation26 [shape = 'u8[8192]{0}', space=vmem, size = 0x2000, scoped, tag = 'input window, operand 10, single buffered']
    #allocation27 [shape = 's32[1]{0}', space=sflag, size = 0x4, scoped, tag = 'scoped memory for hybrid_forward.1']
    #allocation28 [shape = 'u8[512]{0}', space=vmem, size = 0x400, scoped, tag = 'input window, operand 12, single buffered']
    #allocation29 [shape = 'u8[512]{0}', space=vmem, size = 0x400, scoped, tag = 'input window, operand 15, single buffered']
    #allocation30 [shape = 's32[1]{0}', space=sflag, size = 0x4, scoped, tag = 'scoped memory for hybrid_forward.1']
    #allocation31 [shape = 'u8[8192]{0}', space=vmem, size = 0x2000, scoped, tag = 'input window, operand 16, single buffered']
    #allocation32 [shape = 'u8[8192]{0}', space=vmem, size = 0x2000, scoped, tag = 'input window, operand 17, single buffered']
    #allocation33 [shape = 's32[1]{0}', space=sflag, size = 0x4, scoped, tag = 'scoped memory for hybrid_forward.1']
    #allocation34 [shape = 'u8[1024]{0}', space=vmem, size = 0x400, scoped, tag = 'output window, operand 0, single buffered']
    %26 = vsyncpa [#allocation12], 0
    %27 = vsyncpa [#allocation15], 0
    %28 = vsyncpa [#allocation18], 0
    %29 = vsyncpa [#allocation21], 0
    %30 = vsyncpa [#allocation24], 0
    %31 = vsyncpa [#allocation27], 0
    %32 = vsyncpa [#allocation30], 0
    %33 = vsyncpa [#allocation33], 0
    %34 = vsyncpa [#allocation13], 0
    // Predicated region
    $region2: #{hybrid_forward.1} parent=1 // pred_check
      _
    $region3: #{hybrid_forward.1} parent=1 // pred_check_branch
      %36 = sbr.rel (0) target = $region5
    $region4: #{hybrid_forward.1} parent=1 // pred_region
      _
    $region5: #{hybrid_forward.1} parent=1 // pred_fallthru
      _
    // Predicated region
    $region6: #{hybrid_forward.1} parent=1 // pred_check
      _
    $region7: #{hybrid_forward.1} parent=1 // pred_check_branch
      %38 = sbr.rel (0) target = $region9
    $region8: #{hybrid_forward.1} parent=1 // pred_region
      %s40 = ssub.s32 128, 128
      %41 = vsyncadd [#allocation12], %s40
      %s43 = sshll.u32 [#allocation11], 4
      %s44 = int_to_ptr.vmem [resolvable:$true] %s43
      %46 = dma.hbm_to_vmem [thread:$0]  %s1, 128, %s44, [#allocation12]
    $region9: #{hybrid_forward.1} parent=1 // pred_fallthru
      _
    // Predicated region
    $region10: #{hybrid_forward.1} parent=1 // pred_check
      _
    $region11: #{hybrid_forward.1} parent=1 // pred_check_branch
      %48 = sbr.rel (0) target = $region13
    $region12: #{hybrid_forward.1} parent=1 // pred_region
      %s50 = ssub.s32 256, 256
      %51 = vsyncadd [#allocation15], %s50
      %s52 = sshll.u32 [#allocation14], 4
      %s53 = int_to_ptr.vmem [resolvable:$true] %s52
      %58 = dma.hbm_to_vmem [thread:$0]  %s2, 256, %s53, [#allocation15], 128, 128, 8
    $region13: #{hybrid_forward.1} parent=1 // pred_fallthru
      _
    // Predicated region
    $region14: #{hybrid_forward.1} parent=1 // pred_check
      _
    $region15: #{hybrid_forward.1} parent=1 // pred_check_branch
      %60 = sbr.rel (0) target = $region17
    $region16: #{hybrid_forward.1} parent=1 // pred_region
      %s62 = ssub.s32 16, 16
      %63 = vsyncadd [#allocation15], %s62
      %s65 = sshll.u32 [#allocation16], 4
      %s66 = int_to_ptr.vmem [resolvable:$true] %s65
      %68 = dma.hbm_to_vmem [thread:$0]  %s3, 16, %s66, [#allocation15]
    $region17: #{hybrid_forward.1} parent=1 // pred_fallthru
      _
    // Predicated region
    $region18: #{hybrid_forward.1} parent=1 // pred_check
      _
    $region19: #{hybrid_forward.1} parent=1 // pred_check_branch
      %70 = sbr.rel (0) target = $region21
    $region20: #{hybrid_forward.1} parent=1 // pred_region
      %s72 = ssub.s32 16, 16
      %73 = vsyncadd [#allocation18], %s72
      %s75 = sshll.u32 [#allocation17], 4
      %s76 = int_to_ptr.vmem [resolvable:$true] %s75
      %78 = dma.hbm_to_vmem [thread:$0]  %s4, 16, %s76, [#allocation18]
    $region21: #{hybrid_forward.1} parent=1 // pred_fallthru
      _
    // Predicated region
    $region22: #{hybrid_forward.1} parent=1 // pred_check
      _
    $region23: #{hybrid_forward.1} parent=1 // pred_check_branch
      %80 = sbr.rel (0) target = $region25
    $region24: #{hybrid_forward.1} parent=1 // pred_region
      %s82 = ssub.s32 128, 128
      %83 = vsyncadd [#allocation18], %s82
      %s85 = sshll.u32 [#allocation19], 4
      %s86 = int_to_ptr.vmem [resolvable:$true] %s85
      %88 = dma.hbm_to_vmem [thread:$0]  %s5, 128, %s86, [#allocation18]
    $region25: #{hybrid_forward.1} parent=1 // pred_fallthru
      _
    // Predicated region
    $region26: #{hybrid_forward.1} parent=1 // pred_check
      _
    $region27: #{hybrid_forward.1} parent=1 // pred_check_branch
      %90 = sbr.rel (0) target = $region29
    $region28: #{hybrid_forward.1} parent=1 // pred_region
      %s92 = ssub.s32 256, 256
      %93 = vsyncadd [#allocation21], %s92
      %s94 = sshll.u32 [#allocation20], 4
      %s95 = int_to_ptr.vmem [resolvable:$true] %s94
      %100 = dma.hbm_to_vmem [thread:$0]  %s6, 256, %s95, [#allocation21], 128, 128, 8
    $region29: #{hybrid_forward.1} parent=1 // pred_fallthru
      _
    // Predicated region
    $region30: #{hybrid_forward.1} parent=1 // pred_check
      _
    $region31: #{hybrid_forward.1} parent=1 // pred_check_branch
      %102 = sbr.rel (0) target = $region33
    $region32: #{hybrid_forward.1} parent=1 // pred_region
      %s104 = ssub.s32 16, 16
      %105 = vsyncadd [#allocation21], %s104
      %s107 = sshll.u32 [#allocation22], 4
      %s108 = int_to_ptr.vmem [resolvable:$true] %s107
      %110 = dma.hbm_to_vmem [thread:$0]  %s7, 16, %s108, [#allocation21]
    $region33: #{hybrid_forward.1} parent=1 // pred_fallthru
      _
    // Predicated region
    $region34: #{hybrid_forward.1} parent=1 // pred_check
      _
    $region35: #{hybrid_forward.1} parent=1 // pred_check_branch
      %112 = sbr.rel (0) target = $region37
    $region36: #{hybrid_forward.1} parent=1 // pred_region
      %s114 = ssub.s32 16, 16
      %115 = vsyncadd [#allocation24], %s114
      %s117 = sshll.u32 [#allocation23], 4
      %s118 = int_to_ptr.vmem [resolvable:$true] %s117
      %120 = dma.hbm_to_vmem [thread:$0]  %s8, 16, %s118, [#allocation24]
    $region37: #{hybrid_forward.1} parent=1 // pred_fallthru
      _
    // Predicated region
    $region38: #{hybrid_forward.1} parent=1 // pred_check
      _
    $region39: #{hybrid_forward.1} parent=1 // pred_check_branch
      %122 = sbr.rel (0) target = $region41
    $region40: #{hybrid_forward.1} parent=1 // pred_region
      %s124 = ssub.s32 256, 256
      %125 = vsyncadd [#allocation24], %s124
      %s126 = sshll.u32 [#allocation25], 4
      %s127 = int_to_ptr.vmem [resolvable:$true] %s126
      %132 = dma.hbm_to_vmem [thread:$0]  %s9, 256, %s127, [#allocation24], 128, 128, 8
    $region41: #{hybrid_forward.1} parent=1 // pred_fallthru
      _
    // Predicated region
    $region42: #{hybrid_forward.1} parent=1 // pred_check
      _
    $region43: #{hybrid_forward.1} parent=1 // pred_check_branch
      %134 = sbr.rel (0) target = $region45
    $region44: #{hybrid_forward.1} parent=1 // pred_region
      %s136 = ssub.s32 256, 256
      %137 = vsyncadd [#allocation27], %s136
      %s138 = sshll.u32 [#allocation26], 4
      %s139 = int_to_ptr.vmem [resolvable:$true] %s138
      %144 = dma.hbm_to_vmem [thread:$0]  %s10, 256, %s139, [#allocation27], 128, 128, 8
    $region45: #{hybrid_forward.1} parent=1 // pred_fallthru
      _
    // Predicated region
    $region46: #{hybrid_forward.1} parent=1 // pred_check
      _
    $region47: #{hybrid_forward.1} parent=1 // pred_check_branch
      %146 = sbr.rel (0) target = $region49
    $region48: #{hybrid_forward.1} parent=1 // pred_region
      _
    $region49: #{hybrid_forward.1} parent=1 // pred_fallthru
      _
    // Predicated region
    $region50: #{hybrid_forward.1} parent=1 // pred_check
      _
    $region51: #{hybrid_forward.1} parent=1 // pred_check_branch
      %148 = sbr.rel (0) target = $region53
    $region52: #{hybrid_forward.1} parent=1 // pred_region
      %s150 = ssub.s32 16, 16
      %151 = vsyncadd [#allocation27], %s150
      %s153 = sshll.u32 [#allocation28], 4
      %s154 = int_to_ptr.vmem [resolvable:$true] %s153
      %156 = dma.hbm_to_vmem [thread:$0]  %s12, 16, %s154, [#allocation27]
    $region53: #{hybrid_forward.1} parent=1 // pred_fallthru
      _
    // Predicated region
    $region54: #{hybrid_forward.1} parent=1 // pred_check
      _
    $region55: #{hybrid_forward.1} parent=1 // pred_check_branch
      %158 = sbr.rel (0) target = $region57
    $region56: #{hybrid_forward.1} parent=1 // pred_region
      _
    $region57: #{hybrid_forward.1} parent=1 // pred_fallthru
      _
    // Predicated region
    $region58: #{hybrid_forward.1} parent=1 // pred_check
      _
    $region59: #{hybrid_forward.1} parent=1 // pred_check_branch
      %160 = sbr.rel (0) target = $region61
    $region60: #{hybrid_forward.1} parent=1 // pred_region
      _
    $region61: #{hybrid_forward.1} parent=1 // pred_fallthru
      _
    // Predicated region
    $region62: #{hybrid_forward.1} parent=1 // pred_check
      _
    $region63: #{hybrid_forward.1} parent=1 // pred_check_branch
      %162 = sbr.rel (0) target = $region65
    $region64: #{hybrid_forward.1} parent=1 // pred_region
      %s164 = ssub.s32 16, 16
      %165 = vsyncadd [#allocation30], %s164
      %s167 = sshll.u32 [#allocation29], 4
      %s168 = int_to_ptr.vmem [resolvable:$true] %s167
      %170 = dma.hbm_to_vmem [thread:$0]  %s15, 16, %s168, [#allocation30]
    $region65: #{hybrid_forward.1} parent=1 // pred_fallthru
      _
    // Predicated region
    $region66: #{hybrid_forward.1} parent=1 // pred_check
      _
    $region67: #{hybrid_forward.1} parent=1 // pred_check_branch
      %172 = sbr.rel (0) target = $region69
    $region68: #{hybrid_forward.1} parent=1 // pred_region
      %s174 = ssub.s32 256, 256
      %175 = vsyncadd [#allocation30], %s174
      %s176 = sshll.u32 [#allocation31], 4
      %s177 = int_to_ptr.vmem [resolvable:$true] %s176
      %182 = dma.hbm_to_vmem [thread:$0]  %s16, 256, %s177, [#allocation30], 128, 128, 8
    $region69: #{hybrid_forward.1} parent=1 // pred_fallthru
      _
    // Predicated region
    $region70: #{hybrid_forward.1} parent=1 // pred_check
      _
    $region71: #{hybrid_forward.1} parent=1 // pred_check_branch
      %184 = sbr.rel (0) target = $region73
    $region72: #{hybrid_forward.1} parent=1 // pred_region
      %s186 = ssub.s32 256, 256
      %187 = vsyncadd [#allocation33], %s186
      %s188 = sshll.u32 [#allocation32], 4
      %s189 = int_to_ptr.vmem [resolvable:$true] %s188
      %194 = dma.hbm_to_vmem [thread:$0]  %s17, 256, %s189, [#allocation33], 128, 128, 8
    $region73: #{hybrid_forward.1} parent=1 // pred_fallthru
      _
    // Predicated region
    $region74: #{hybrid_forward.1} parent=1 // pred_check
      _
    $region75: #{hybrid_forward.1} parent=1 // pred_check_branch
      %196 = sbr.rel (0) target = $region77
    $region76: #{hybrid_forward.1} parent=1 // pred_region
      _
    $region77: #{hybrid_forward.1} parent=1 // pred_fallthru
      _
    // Predicated region
    $region78: #{hybrid_forward.1} parent=1 // pred_check
      _
    $region79: #{hybrid_forward.1} parent=1 // pred_check_branch
      %198 = sbr.rel (0) target = $region81
    $region80: #{hybrid_forward.1} parent=1 // pred_region
      _
    $region81: #{hybrid_forward.1} parent=1 // pred_fallthru
      _
    // Predicated region
    $region82: #{hybrid_forward.1} parent=1 // pred_check
      _
    $region83: #{hybrid_forward.1} parent=1 // pred_check_branch
      %200 = sbr.rel (0) target = $region85
    $region84: #{hybrid_forward.1} parent=1 // pred_region
      _
    $region85: #{hybrid_forward.1} parent=1 // pred_fallthru
      _
    // Predicated region
    $region86: #{hybrid_forward.1} parent=1 // pred_check
      _
    $region87: #{hybrid_forward.1} parent=1 // pred_check_branch
      %202 = sbr.rel (0) target = $region89
    $region88: #{hybrid_forward.1} parent=1 // pred_region
      %203 = dma.done [#allocation12], 128
    $region89: #{hybrid_forward.1} parent=1 // pred_fallthru
      _
    // Predicated region
    $region90: #{hybrid_forward.1} parent=1 // pred_check
      _
    $region91: #{hybrid_forward.1} parent=1 // pred_check_branch
      %205 = sbr.rel (0) target = $region93
    $region92: #{hybrid_forward.1} parent=1 // pred_region
      %206 = dma.done [#allocation15], 256
    $region93: #{hybrid_forward.1} parent=1 // pred_fallthru
      _
    // Predicated region
    $region94: #{hybrid_forward.1} parent=1 // pred_check
      _
    $region95: #{hybrid_forward.1} parent=1 // pred_check_branch
      %208 = sbr.rel (0) target = $region97
    $region96: #{hybrid_forward.1} parent=1 // pred_region
      %209 = dma.done [#allocation15], 16
    $region97: #{hybrid_forward.1} parent=1 // pred_fallthru
      _
    // Predicated region
    $region98: #{hybrid_forward.1} parent=1 // pred_check
      _
    $region99: #{hybrid_forward.1} parent=1 // pred_check_branch
      %211 = sbr.rel (0) target = $region101
    $region100: #{hybrid_forward.1} parent=1 // pred_region
      %212 = dma.done [#allocation18], 16
    $region101: #{hybrid_forward.1} parent=1 // pred_fallthru
      _
    // Predicated region
    $region102: #{hybrid_forward.1} parent=1 // pred_check
      _
    $region103: #{hybrid_forward.1} parent=1 // pred_check_branch
      %214 = sbr.rel (0) target = $region105
    $region104: #{hybrid_forward.1} parent=1 // pred_region
      %215 = dma.done [#allocation18], 128
    $region105: #{hybrid_forward.1} parent=1 // pred_fallthru
      _
    // Predicated region
    $region106: #{hybrid_forward.1} parent=1 // pred_check
      _
    $region107: #{hybrid_forward.1} parent=1 // pred_check_branch
      %217 = sbr.rel (0) target = $region109
    $region108: #{hybrid_forward.1} parent=1 // pred_region
      %218 = dma.done [#allocation21], 256
    $region109: #{hybrid_forward.1} parent=1 // pred_fallthru
      _
    // Predicated region
    $region110: #{hybrid_forward.1} parent=1 // pred_check
      _
    $region111: #{hybrid_forward.1} parent=1 // pred_check_branch
      %220 = sbr.rel (0) target = $region113
    $region112: #{hybrid_forward.1} parent=1 // pred_region
      %221 = dma.done [#allocation21], 16
    $region113: #{hybrid_forward.1} parent=1 // pred_fallthru
      _
    // Predicated region
    $region114: #{hybrid_forward.1} parent=1 // pred_check
      _
    $region115: #{hybrid_forward.1} parent=1 // pred_check_branch
      %223 = sbr.rel (0) target = $region117
    $region116: #{hybrid_forward.1} parent=1 // pred_region
      %224 = dma.done [#allocation24], 16
    $region117: #{hybrid_forward.1} parent=1 // pred_fallthru
      _
    // Predicated region
    $region118: #{hybrid_forward.1} parent=1 // pred_check
      _
    $region119: #{hybrid_forward.1} parent=1 // pred_check_branch
      %226 = sbr.rel (0) target = $region121
    $region120: #{hybrid_forward.1} parent=1 // pred_region
      %227 = dma.done [#allocation24], 256
    $region121: #{hybrid_forward.1} parent=1 // pred_fallthru
      _
    // Predicated region
    $region122: #{hybrid_forward.1} parent=1 // pred_check
      _
    $region123: #{hybrid_forward.1} parent=1 // pred_check_branch
      %229 = sbr.rel (0) target = $region125
    $region124: #{hybrid_forward.1} parent=1 // pred_region
      %230 = dma.done [#allocation27], 256
    $region125: #{hybrid_forward.1} parent=1 // pred_fallthru
      _
    // Predicated region
    $region126: #{hybrid_forward.1} parent=1 // pred_check
      _
    $region127: #{hybrid_forward.1} parent=1 // pred_check_branch
      %232 = sbr.rel (0) target = $region129
    $region128: #{hybrid_forward.1} parent=1 // pred_region
      %233 = dma.done [#allocation27], 16
    $region129: #{hybrid_forward.1} parent=1 // pred_fallthru
      _
    // Predicated region
    $region130: #{hybrid_forward.1} parent=1 // pred_check
      _
    $region131: #{hybrid_forward.1} parent=1 // pred_check_branch
      %235 = sbr.rel (0) target = $region133
    $region132: #{hybrid_forward.1} parent=1 // pred_region
      %236 = dma.done [#allocation30], 16
    $region133: #{hybrid_forward.1} parent=1 // pred_fallthru
      _
    // Predicated region
    $region134: #{hybrid_forward.1} parent=1 // pred_check
      _
    $region135: #{hybrid_forward.1} parent=1 // pred_check_branch
      %238 = sbr.rel (0) target = $region137
    $region136: #{hybrid_forward.1} parent=1 // pred_region
      %239 = dma.done [#allocation30], 256
    $region137: #{hybrid_forward.1} parent=1 // pred_fallthru
      _
    // Predicated region
    $region138: #{hybrid_forward.1} parent=1 // pred_check
      _
    $region139: #{hybrid_forward.1} parent=1 // pred_check_branch
      %241 = sbr.rel (0) target = $region141
    $region140: #{hybrid_forward.1} parent=1 // pred_region
      %242 = dma.done [#allocation33], 256
    $region141: #{hybrid_forward.1} parent=1 // pred_fallthru
      _
    %v243 = vld [vmem:[%s0] sm:$0xff]
    %v244 = vld [vmem:[%s0 + $0x8] sm:$0xff]
    %v245 = vld [vmem:[#allocation11] sm:$0xff]
    %v246 = vld [vmem:[#allocation16] sm:$0x1]
    %v248 = vlaneseq
    %v249 = vshrl.u32 %v248, 7
    %v250 = vsub.s32 0, %v249
    %v251 = vrot.slane %v246, %v250
    %vm253 = vcmask 64512
    %v255 = vsel %vm253, %v243, 0
    %v258 = vsel %vm253, %v244, 0
    %260 = vmatprep.subr.mxu0 0.0
    %261 = vmatpush1.msra.mxu0 0.0
    %262 = vmatprep.subr.mxu0 0.0
    %263 = vmatpush1.msra.mxu0 0.0
    %264 = vmatprep.subr.mxu0 0.0
    %265 = vmatpush1.msra.mxu0 0.0
    %266 = vmatprep.subr.mxu0 0.0
    %267 = vmatpush1.msra.mxu0 0.0
    %268 = vmatprep.subr.mxu0 0.0
    %269 = vmatpush1.msra.mxu0 0.0
    %270 = vmatprep.subr.mxu0 0.0
    %271 = vmatpush1.msra.mxu0 0.0
    %272 = vmatprep.subr.mxu0 0.0
    %273 = vmatpush1.msra.mxu0 0.0
    %274 = vmatprep.subr.mxu0 0.0
    %275 = vmatpush1.msra.mxu0 0.0
    %276 = vmatprep.subr.mxu0 0.0
    %277 = vmatpush1.msra.mxu0 0.0
    %278 = vmatprep.subr.mxu0 0.0
    %279 = vmatpush1.msra.mxu0 0.0
    %280 = vmatprep.subr.mxu0 0.0
    %281 = vmatpush1.msra.mxu0 0.0
    %282 = vmatprep.subr.mxu0 0.0
    %283 = vmatpush1.msra.mxu0 0.0
    %284 = vmatprep.subr.mxu0 0.0
    %285 = vmatpush1.msra.mxu0 0.0
    %286 = vmatprep.subr.mxu0 0.0
    %287 = vmatpush1.msra.mxu0 0.0
    %288 = vmatprep.subr.mxu0 0.0
    %289 = vmatpush1.msra.mxu0 0.0
    %290 = vmatprep.subr.mxu0 0.0
    %291 = vmatpush1.msra.mxu0 %v245
    %292 = vmatprep.subr.mxu0 0.0
    %293 = vmatpush2.msra.mxu0 0.0
    %294 = vmatprep.subr.mxu0 0.0
    %295 = vmatpush2.msra.mxu0 0.0
    %296 = vmatprep.subr.mxu0 0.0
    %297 = vmatpush2.msra.mxu0 0.0
    %298 = vmatprep.subr.mxu0 0.0
    %299 = vmatpush2.msra.mxu0 0.0
    %300 = vmatprep.subr.mxu0 0.0
    %301 = vmatpush2.msra.mxu0 0.0
    %302 = vmatprep.subr.mxu0 0.0
    %303 = vmatpush2.msra.mxu0 0.0
    %304 = vmatprep.subr.mxu0 0.0
    %305 = vmatpush2.msra.mxu0 0.0
    %306 = vmatprep.subr.mxu0 0.0
    %307 = vmatpush2.msra.mxu0 0.0
    %308 = vmatprep.subr.mxu0 0.0
    %309 = vmatpush2.msra.mxu0 0.0
    %310 = vmatprep.subr.mxu0 0.0
    %311 = vmatpush2.msra.mxu0 0.0
    %312 = vmatprep.subr.mxu0 0.0
    %313 = vmatpush2.msra.mxu0 0.0
    %314 = vmatprep.subr.mxu0 0.0
    %315 = vmatpush2.msra.mxu0 0.0
    %316 = vmatprep.subr.mxu0 0.0
    %317 = vmatpush2.msra.mxu0 0.0
    %318 = vmatprep.subr.mxu0 0.0
    %319 = vmatpush2.msra.mxu0 0.0
    %320 = vmatprep.subr.mxu0 0.0
    %321 = vmatpush2.msra.mxu0 0.0
    %322 = vmatprep.subr.mxu0 0.0
    %323 = vmatpush2.msra.mxu0 0.0
    %324 = vmatprep.mubr.f32.mxu0 0.0
    %325 = vmatmul.mubr.f32.gmra.mxu0 %v255
    %v326 = vpop.f32.mrf.mxu0
    %v327 = vadd.f32 %v251, %v326
    %v328 = vpop.f32.mrf.mxu0
    %329 = vmatprep.mubr.f32.mxu0 0.0
    %330 = vmatmul.mubr.f32.gmra.mxu0 %v258
    %v331 = vpop.f32.mrf.mxu0
    %v332 = vadd.f32 %v251, %v331
    %v333 = vpop.f32.mrf.mxu0
    %334 = vdwg.mxu0
    %vm335 = vcmask 392192
    %336 = vst.msk [vmem:[#allocation2] sm:$0xff] %vm335, %v327
    %337 = vst.msk [vmem:[#allocation2 + $0x8] sm:$0xff] %vm335, %v332
    %v338 = vld [vmem:[#allocation19] sm:$0xff]
    %v339 = vld [vmem:[#allocation22] sm:$0x1]
    %v341 = vlaneseq
    %v342 = vshrl.u32 %v341, 7
    %v343 = vsub.s32 0, %v342
    %v344 = vrot.slane %v339, %v343
    %346 = vmatprep.subr.mxu0 0.0
    %347 = vmatpush1.msra.mxu0 0.0
    %348 = vmatprep.subr.mxu0 0.0
    %349 = vmatpush1.msra.mxu0 0.0
    %350 = vmatprep.subr.mxu0 0.0
    %351 = vmatpush1.msra.mxu0 0.0
    %352 = vmatprep.subr.mxu0 0.0
    %353 = vmatpush1.msra.mxu0 0.0
    %354 = vmatprep.subr.mxu0 0.0
    %355 = vmatpush1.msra.mxu0 0.0
    %356 = vmatprep.subr.mxu0 0.0
    %357 = vmatpush1.msra.mxu0 0.0
    %358 = vmatprep.subr.mxu0 0.0
    %359 = vmatpush1.msra.mxu0 0.0
    %360 = vmatprep.subr.mxu0 0.0
    %361 = vmatpush1.msra.mxu0 0.0
    %362 = vmatprep.subr.mxu0 0.0
    %363 = vmatpush1.msra.mxu0 0.0
    %364 = vmatprep.subr.mxu0 0.0
    %365 = vmatpush1.msra.mxu0 0.0
    %366 = vmatprep.subr.mxu0 0.0
    %367 = vmatpush1.msra.mxu0 0.0
    %368 = vmatprep.subr.mxu0 0.0
    %369 = vmatpush1.msra.mxu0 0.0
    %370 = vmatprep.subr.mxu0 0.0
    %371 = vmatpush1.msra.mxu0 0.0
    %372 = vmatprep.subr.mxu0 0.0
    %373 = vmatpush1.msra.mxu0 0.0
    %374 = vmatprep.subr.mxu0 0.0
    %375 = vmatpush1.msra.mxu0 0.0
    %376 = vmatprep.subr.mxu0 0.0
    %377 = vmatpush1.msra.mxu0 %v338
    %378 = vmatprep.subr.mxu0 0.0
    %379 = vmatpush2.msra.mxu0 0.0
    %380 = vmatprep.subr.mxu0 0.0
    %381 = vmatpush2.msra.mxu0 0.0
    %382 = vmatprep.subr.mxu0 0.0
    %383 = vmatpush2.msra.mxu0 0.0
    %384 = vmatprep.subr.mxu0 0.0
    %385 = vmatpush2.msra.mxu0 0.0
    %386 = vmatprep.subr.mxu0 0.0
    %387 = vmatpush2.msra.mxu0 0.0
    %388 = vmatprep.subr.mxu0 0.0
    %389 = vmatpush2.msra.mxu0 0.0
    %390 = vmatprep.subr.mxu0 0.0
    %391 = vmatpush2.msra.mxu0 0.0
    %392 = vmatprep.subr.mxu0 0.0
    %393 = vmatpush2.msra.mxu0 0.0
    %394 = vmatprep.subr.mxu0 0.0
    %395 = vmatpush2.msra.mxu0 0.0
    %396 = vmatprep.subr.mxu0 0.0
    %397 = vmatpush2.msra.mxu0 0.0
    %398 = vmatprep.subr.mxu0 0.0
    %399 = vmatpush2.msra.mxu0 0.0
    %400 = vmatprep.subr.mxu0 0.0
    %401 = vmatpush2.msra.mxu0 0.0
    %402 = vmatprep.subr.mxu0 0.0
    %403 = vmatpush2.msra.mxu0 0.0
    %404 = vmatprep.subr.mxu0 0.0
    %405 = vmatpush2.msra.mxu0 0.0
    %406 = vmatprep.subr.mxu0 0.0
    %407 = vmatpush2.msra.mxu0 0.0
    %408 = vmatprep.subr.mxu0 0.0
    %409 = vmatpush2.msra.mxu0 0.0
    %410 = vmatprep.mubr.f32.mxu0 0.0
    %411 = vmatmul.mubr.f32.gmra.mxu0 %v255
    %v412 = vpop.f32.mrf.mxu0
    %v413 = vadd.f32 %v344, %v412
    %v414 = vpop.f32.mrf.mxu0
    %415 = vmatprep.mubr.f32.mxu0 0.0
    %416 = vmatmul.mubr.f32.gmra.mxu0 %v258
    %v417 = vpop.f32.mrf.mxu0
    %v418 = vadd.f32 %v344, %v417
    %v419 = vpop.f32.mrf.mxu0
    %420 = vdwg.mxu0
    %421 = vst.msk [vmem:[#allocation3] sm:$0xff] %vm335, %v413
    %422 = vst.msk [vmem:[#allocation3 + $0x8] sm:$0xff] %vm335, %v418
    %v423 = vld [vmem:[#allocation14] sm:$0xff]
    %v424 = vld [vmem:[#allocation14 + $0x8] sm:$0xff]
    %v425 = vld [vmem:[#allocation17] sm:$0x1]
    %v427 = vlaneseq
    %v428 = vshrl.u32 %v427, 7
    %v429 = vsub.s32 0, %v428
    %v430 = vrot.slane %v425, %v429
    %v432 = vld [vmem:[#allocation2] sm:$0x3]
    %vm433 = vcmask 130048
    %v435 = vsel %vm433, 0.0, 0
    %437 = vmatprep.subr.mxu0 0.0
    %438 = vmatpush1.msra.mxu0 0.0
    %439 = vmatprep.subr.mxu0 0.0
    %440 = vmatpush1.msra.mxu0 0.0
    %441 = vmatprep.subr.mxu0 0.0
    %442 = vmatpush1.msra.mxu0 0.0
    %443 = vmatprep.subr.mxu0 0.0
    %444 = vmatpush1.msra.mxu0 0.0
    %445 = vmatprep.subr.mxu0 0.0
    %446 = vmatpush1.msra.mxu0 0.0
    %447 = vmatprep.subr.mxu0 0.0
    %448 = vmatpush1.msra.mxu0 0.0
    %449 = vmatprep.subr.mxu0 0.0
    %450 = vmatpush1.msra.mxu0 0.0
    %451 = vmatprep.subr.mxu0 0.0
    %452 = vmatpush1.msra.mxu0 0.0
    %453 = vmatprep.subr.mxu0 0.0
    %454 = vmatpush1.msra.mxu0 0.0
    %455 = vmatprep.subr.mxu0 0.0
    %456 = vmatpush1.msra.mxu0 0.0
    %457 = vmatprep.subr.mxu0 0.0
    %458 = vmatpush1.msra.mxu0 0.0
    %459 = vmatprep.subr.mxu0 0.0
    %460 = vmatpush1.msra.mxu0 0.0
    %461 = vmatprep.subr.mxu0 0.0
    %462 = vmatpush1.msra.mxu0 0.0
    %463 = vmatprep.subr.mxu0 0.0
    %464 = vmatpush1.msra.mxu0 0.0
    %465 = vmatprep.subr.mxu0 0.0
    %466 = vmatpush1.msra.mxu0 %v424
    %467 = vmatprep.subr.mxu0 0.0
    %468 = vmatpush1.msra.mxu0 %v423
    %469 = vmatprep.subr.mxu0 0.0
    %470 = vmatpush2.msra.mxu0 0.0
    %471 = vmatprep.subr.mxu0 0.0
    %472 = vmatpush2.msra.mxu0 0.0
    %473 = vmatprep.subr.mxu0 0.0
    %474 = vmatpush2.msra.mxu0 0.0
    %475 = vmatprep.subr.mxu0 0.0
    %476 = vmatpush2.msra.mxu0 0.0
    %477 = vmatprep.subr.mxu0 0.0
    %478 = vmatpush2.msra.mxu0 0.0
    %479 = vmatprep.subr.mxu0 0.0
    %480 = vmatpush2.msra.mxu0 0.0
    %481 = vmatprep.subr.mxu0 0.0
    %482 = vmatpush2.msra.mxu0 0.0
    %483 = vmatprep.subr.mxu0 0.0
    %484 = vmatpush2.msra.mxu0 0.0
    %485 = vmatprep.subr.mxu0 0.0
    %486 = vmatpush2.msra.mxu0 0.0
    %487 = vmatprep.subr.mxu0 0.0
    %488 = vmatpush2.msra.mxu0 0.0
    %489 = vmatprep.subr.mxu0 0.0
    %490 = vmatpush2.msra.mxu0 0.0
    %491 = vmatprep.subr.mxu0 0.0
    %492 = vmatpush2.msra.mxu0 0.0
    %493 = vmatprep.subr.mxu0 0.0
    %494 = vmatpush2.msra.mxu0 0.0
    %495 = vmatprep.subr.mxu0 0.0
    %496 = vmatpush2.msra.mxu0 0.0
    %497 = vmatprep.subr.mxu0 0.0
    %498 = vmatpush2.msra.mxu0 0.0
    %499 = vmatprep.subr.mxu0 0.0
    %500 = vmatpush2.msra.mxu0 0.0
    %501 = vmatprep.mubr.f32.mxu0 0.0
    %502 = vmatmul.mubr.f32.gmra.mxu0 %v435
    %v503 = vpop.f32.mrf.mxu0
    %v504 = vadd.f32 %v430, %v503
    %v505 = vpop.f32.mrf.mxu0
    %506 = vdwg.mxu0
    %v507 = vadd.f32 %v432, %v504
    %v508 = vxor.u32 %v507, 2147483648
    %v509 = vmul.f32 %v508, 1.442695
    %v510 = vpow.pop %v509
    %v511 = vadd.f32 %v510, 1.0
    %v512 = vrcp.pop %v511
    %v513 = vmul.f32 1.0, %v512
    %515 = vrot.lane.b32.xlu0 %v504, 96
    %v516 = vpop.permute.xlu0 %515
    %v518 = vmul.f32 %v513, %v516
    %520 = vrot.lane.b32.xlu0 %v518, 32
    %v521 = vpop.permute.xlu0 %520
    %v523 = vadd.f32 %v432, %v521
    %v524 = vtanh.pop %v523
    %v525 = vsub.f32 1.0, %v513
    %527 = vrot.lane.b32.xlu0 %v524, 112
    %v528 = vpop.permute.xlu0 %527
    %v530 = vmul.f32 %v525, %v528
    %v531 = vmul.f32 %v513, 0.0
    %v532 = vadd.f32 %v530, %v531
    %534 = vrot.lane.b32.xlu0 %v532, 112
    %v535 = vpop.permute.xlu0 %534
    %vm537 = vcmask 123904
    %538 = vst.msk [vmem:[#allocation4] sm:$0x3] %vm537, %v535
    %s539 = scalar_lea.vmem [#allocation2], 2
    %v540 = vld [vmem:[%s539] sm:$0x3]
    %v541 = vsel %vm433, %v535, 0
    %543 = vmatprep.subr.mxu0 0.0
    %544 = vmatpush1.msra.mxu0 0.0
    %545 = vmatprep.subr.mxu0 0.0
    %546 = vmatpush1.msra.mxu0 0.0
    %547 = vmatprep.subr.mxu0 0.0
    %548 = vmatpush1.msra.mxu0 0.0
    %549 = vmatprep.subr.mxu0 0.0
    %550 = vmatpush1.msra.mxu0 0.0
    %551 = vmatprep.subr.mxu0 0.0
    %552 = vmatpush1.msra.mxu0 0.0
    %553 = vmatprep.subr.mxu0 0.0
    %554 = vmatpush1.msra.mxu0 0.0
    %555 = vmatprep.subr.mxu0 0.0
    %556 = vmatpush1.msra.mxu0 0.0
    %557 = vmatprep.subr.mxu0 0.0
    %558 = vmatpush1.msra.mxu0 0.0
    %559 = vmatprep.subr.mxu0 0.0
    %560 = vmatpush1.msra.mxu0 0.0
    %561 = vmatprep.subr.mxu0 0.0
    %562 = vmatpush1.msra.mxu0 0.0
    %563 = vmatprep.subr.mxu0 0.0
    %564 = vmatpush1.msra.mxu0 0.0
    %565 = vmatprep.subr.mxu0 0.0
    %566 = vmatpush1.msra.mxu0 0.0
    %567 = vmatprep.subr.mxu0 0.0
    %568 = vmatpush1.msra.mxu0 0.0
    %569 = vmatprep.subr.mxu0 0.0
    %570 = vmatpush1.msra.mxu0 0.0
    %571 = vmatprep.subr.mxu0 0.0
    %572 = vmatpush1.msra.mxu0 %v424
    %573 = vmatprep.subr.mxu0 0.0
    %574 = vmatpush1.msra.mxu0 %v423
    %575 = vmatprep.subr.mxu0 0.0
    %576 = vmatpush2.msra.mxu0 0.0
    %577 = vmatprep.subr.mxu0 0.0
    %578 = vmatpush2.msra.mxu0 0.0
    %579 = vmatprep.subr.mxu0 0.0
    %580 = vmatpush2.msra.mxu0 0.0
    %581 = vmatprep.subr.mxu0 0.0
    %582 = vmatpush2.msra.mxu0 0.0
    %583 = vmatprep.subr.mxu0 0.0
    %584 = vmatpush2.msra.mxu0 0.0
    %585 = vmatprep.subr.mxu0 0.0
    %586 = vmatpush2.msra.mxu0 0.0
    %587 = vmatprep.subr.mxu0 0.0
    %588 = vmatpush2.msra.mxu0 0.0
    %589 = vmatprep.subr.mxu0 0.0
    %590 = vmatpush2.msra.mxu0 0.0
    %591 = vmatprep.subr.mxu0 0.0
    %592 = vmatpush2.msra.mxu0 0.0
    %593 = vmatprep.subr.mxu0 0.0
    %594 = vmatpush2.msra.mxu0 0.0
    %595 = vmatprep.subr.mxu0 0.0
    %596 = vmatpush2.msra.mxu0 0.0
    %597 = vmatprep.subr.mxu0 0.0
    %598 = vmatpush2.msra.mxu0 0.0
    %599 = vmatprep.subr.mxu0 0.0
    %600 = vmatpush2.msra.mxu0 0.0
    %601 = vmatprep.subr.mxu0 0.0
    %602 = vmatpush2.msra.mxu0 0.0
    %603 = vmatprep.subr.mxu0 0.0
    %604 = vmatpush2.msra.mxu0 0.0
    %605 = vmatprep.subr.mxu0 0.0
    %606 = vmatpush2.msra.mxu0 0.0
    %607 = vmatprep.mubr.f32.mxu0 0.0
    %608 = vmatmul.mubr.f32.gmra.mxu0 %v541
    %v609 = vpop.f32.mrf.mxu0
    %v610 = vadd.f32 %v430, %v609
    %v611 = vpop.f32.mrf.mxu0
    %612 = vdwg.mxu0
    %v613 = vadd.f32 %v540, %v610
    %v614 = vxor.u32 %v613, 2147483648
    %v615 = vmul.f32 %v614, 1.442695
    %v616 = vpow.pop %v615
    %v617 = vadd.f32 %v616, 1.0
    %v618 = vrcp.pop %v617
    %v619 = vmul.f32 1.0, %v618
    %621 = vrot.lane.b32.xlu0 %v610, 96
    %v622 = vpop.permute.xlu0 %621
    %v624 = vmul.f32 %v619, %v622
    %626 = vrot.lane.b32.xlu0 %v624, 32
    %v627 = vpop.permute.xlu0 %626
    %v629 = vadd.f32 %v540, %v627
    %v630 = vtanh.pop %v629
    %v631 = vsub.f32 1.0, %v619
    %633 = vrot.lane.b32.xlu0 %v630, 112
    %v634 = vpop.permute.xlu0 %633
    %v636 = vmul.f32 %v631, %v634
    %v637 = vmul.f32 %v619, %v532
    %v638 = vadd.f32 %v636, %v637
    %640 = vrot.lane.b32.xlu0 %v638, 112
    %v641 = vpop.permute.xlu0 %640
    %s643 = scalar_lea.vmem [#allocation4], 2
    %644 = vst.msk [vmem:[%s643] sm:$0x3] %vm537, %v641
    %s645 = scalar_lea.vmem [#allocation2], 4
    %v646 = vld [vmem:[%s645] sm:$0x3]
    %v647 = vsel %vm433, %v641, 0
    %649 = vmatprep.subr.mxu0 0.0
    %650 = vmatpush1.msra.mxu0 0.0
    %651 = vmatprep.subr.mxu0 0.0
    %652 = vmatpush1.msra.mxu0 0.0
    %653 = vmatprep.subr.mxu0 0.0
    %654 = vmatpush1.msra.mxu0 0.0
    %655 = vmatprep.subr.mxu0 0.0
    %656 = vmatpush1.msra.mxu0 0.0
    %657 = vmatprep.subr.mxu0 0.0
    %658 = vmatpush1.msra.mxu0 0.0
    %659 = vmatprep.subr.mxu0 0.0
    %660 = vmatpush1.msra.mxu0 0.0
    %661 = vmatprep.subr.mxu0 0.0
    %662 = vmatpush1.msra.mxu0 0.0
    %663 = vmatprep.subr.mxu0 0.0
    %664 = vmatpush1.msra.mxu0 0.0
    %665 = vmatprep.subr.mxu0 0.0
    %666 = vmatpush1.msra.mxu0 0.0
    %667 = vmatprep.subr.mxu0 0.0
    %668 = vmatpush1.msra.mxu0 0.0
    %669 = vmatprep.subr.mxu0 0.0
    %670 = vmatpush1.msra.mxu0 0.0
    %671 = vmatprep.subr.mxu0 0.0
    %672 = vmatpush1.msra.mxu0 0.0
    %673 = vmatprep.subr.mxu0 0.0
    %674 = vmatpush1.msra.mxu0 0.0
    %675 = vmatprep.subr.mxu0 0.0
    %676 = vmatpush1.msra.mxu0 0.0
    %677 = vmatprep.subr.mxu0 0.0
    %678 = vmatpush1.msra.mxu0 %v424
    %679 = vmatprep.subr.mxu0 0.0
    %680 = vmatpush1.msra.mxu0 %v423
    %681 = vmatprep.subr.mxu0 0.0
    %682 = vmatpush2.msra.mxu0 0.0
    %683 = vmatprep.subr.mxu0 0.0
    %684 = vmatpush2.msra.mxu0 0.0
    %685 = vmatprep.subr.mxu0 0.0
    %686 = vmatpush2.msra.mxu0 0.0
    %687 = vmatprep.subr.mxu0 0.0
    %688 = vmatpush2.msra.mxu0 0.0
    %689 = vmatprep.subr.mxu0 0.0
    %690 = vmatpush2.msra.mxu0 0.0
    %691 = vmatprep.subr.mxu0 0.0
    %692 = vmatpush2.msra.mxu0 0.0
    %693 = vmatprep.subr.mxu0 0.0
    %694 = vmatpush2.msra.mxu0 0.0
    %695 = vmatprep.subr.mxu0 0.0
    %696 = vmatpush2.msra.mxu0 0.0
    %697 = vmatprep.subr.mxu0 0.0
    %698 = vmatpush2.msra.mxu0 0.0
    %699 = vmatprep.subr.mxu0 0.0
    %700 = vmatpush2.msra.mxu0 0.0
    %701 = vmatprep.subr.mxu0 0.0
    %702 = vmatpush2.msra.mxu0 0.0
    %703 = vmatprep.subr.mxu0 0.0
    %704 = vmatpush2.msra.mxu0 0.0
    %705 = vmatprep.subr.mxu0 0.0
    %706 = vmatpush2.msra.mxu0 0.0
    %707 = vmatprep.subr.mxu0 0.0
    %708 = vmatpush2.msra.mxu0 0.0
    %709 = vmatprep.subr.mxu0 0.0
    %710 = vmatpush2.msra.mxu0 0.0
    %711 = vmatprep.subr.mxu0 0.0
    %712 = vmatpush2.msra.mxu0 0.0
    %713 = vmatprep.mubr.f32.mxu0 0.0
    %714 = vmatmul.mubr.f32.gmra.mxu0 %v647
    %v715 = vpop.f32.mrf.mxu0
    %v716 = vadd.f32 %v430, %v715
    %v717 = vpop.f32.mrf.mxu0
    %718 = vdwg.mxu0
    %v719 = vadd.f32 %v646, %v716
    %v720 = vxor.u32 %v719, 2147483648
    %v721 = vmul.f32 %v720, 1.442695
    %v722 = vpow.pop %v721
    %v723 = vadd.f32 %v722, 1.0
    %v724 = vrcp.pop %v723
    %v725 = vmul.f32 1.0, %v724
    %727 = vrot.lane.b32.xlu0 %v716, 96
    %v728 = vpop.permute.xlu0 %727
    %v730 = vmul.f32 %v725, %v728
    %732 = vrot.lane.b32.xlu0 %v730, 32
    %v733 = vpop.permute.xlu0 %732
    %v735 = vadd.f32 %v646, %v733
    %v736 = vtanh.pop %v735
    %v737 = vsub.f32 1.0, %v725
    %739 = vrot.lane.b32.xlu0 %v736, 112
    %v740 = vpop.permute.xlu0 %739
    %v742 = vmul.f32 %v737, %v740
    %v743 = vmul.f32 %v725, %v638
    %v744 = vadd.f32 %v742, %v743
    %746 = vrot.lane.b32.xlu0 %v744, 112
    %v747 = vpop.permute.xlu0 %746
    %s749 = scalar_lea.vmem [#allocation4], 4
    %750 = vst.msk [vmem:[%s749] sm:$0x3] %vm537, %v747
    %s751 = scalar_lea.vmem [#allocation2], 6
    %v752 = vld [vmem:[%s751] sm:$0x3]
    %v753 = vsel %vm433, %v747, 0
    %755 = vmatprep.subr.mxu0 0.0
    %756 = vmatpush1.msra.mxu0 0.0
    %757 = vmatprep.subr.mxu0 0.0
    %758 = vmatpush1.msra.mxu0 0.0
    %759 = vmatprep.subr.mxu0 0.0
    %760 = vmatpush1.msra.mxu0 0.0
    %761 = vmatprep.subr.mxu0 0.0
    %762 = vmatpush1.msra.mxu0 0.0
    %763 = vmatprep.subr.mxu0 0.0
    %764 = vmatpush1.msra.mxu0 0.0
    %765 = vmatprep.subr.mxu0 0.0
    %766 = vmatpush1.msra.mxu0 0.0
    %767 = vmatprep.subr.mxu0 0.0
    %768 = vmatpush1.msra.mxu0 0.0
    %769 = vmatprep.subr.mxu0 0.0
    %770 = vmatpush1.msra.mxu0 0.0
    %771 = vmatprep.subr.mxu0 0.0
    %772 = vmatpush1.msra.mxu0 0.0
    %773 = vmatprep.subr.mxu0 0.0
    %774 = vmatpush1.msra.mxu0 0.0
    %775 = vmatprep.subr.mxu0 0.0
    %776 = vmatpush1.msra.mxu0 0.0
    %777 = vmatprep.subr.mxu0 0.0
    %778 = vmatpush1.msra.mxu0 0.0
    %779 = vmatprep.subr.mxu0 0.0
    %780 = vmatpush1.msra.mxu0 0.0
    %781 = vmatprep.subr.mxu0 0.0
    %782 = vmatpush1.msra.mxu0 0.0
    %783 = vmatprep.subr.mxu0 0.0
    %784 = vmatpush1.msra.mxu0 %v424
    %785 = vmatprep.subr.mxu0 0.0
    %786 = vmatpush1.msra.mxu0 %v423
    %787 = vmatprep.subr.mxu0 0.0
    %788 = vmatpush2.msra.mxu0 0.0
    %789 = vmatprep.subr.mxu0 0.0
    %790 = vmatpush2.msra.mxu0 0.0
    %791 = vmatprep.subr.mxu0 0.0
    %792 = vmatpush2.msra.mxu0 0.0
    %793 = vmatprep.subr.mxu0 0.0
    %794 = vmatpush2.msra.mxu0 0.0
    %795 = vmatprep.subr.mxu0 0.0
    %796 = vmatpush2.msra.mxu0 0.0
    %797 = vmatprep.subr.mxu0 0.0
    %798 = vmatpush2.msra.mxu0 0.0
    %799 = vmatprep.subr.mxu0 0.0
    %800 = vmatpush2.msra.mxu0 0.0
    %801 = vmatprep.subr.mxu0 0.0
    %802 = vmatpush2.msra.mxu0 0.0
    %803 = vmatprep.subr.mxu0 0.0
    %804 = vmatpush2.msra.mxu0 0.0
    %805 = vmatprep.subr.mxu0 0.0
    %806 = vmatpush2.msra.mxu0 0.0
    %807 = vmatprep.subr.mxu0 0.0
    %808 = vmatpush2.msra.mxu0 0.0
    %809 = vmatprep.subr.mxu0 0.0
    %810 = vmatpush2.msra.mxu0 0.0
    %811 = vmatprep.subr.mxu0 0.0
    %812 = vmatpush2.msra.mxu0 0.0
    %813 = vmatprep.subr.mxu0 0.0
    %814 = vmatpush2.msra.mxu0 0.0
    %815 = vmatprep.subr.mxu0 0.0
    %816 = vmatpush2.msra.mxu0 0.0
    %817 = vmatprep.subr.mxu0 0.0
    %818 = vmatpush2.msra.mxu0 0.0
    %819 = vmatprep.mubr.f32.mxu0 0.0
    %820 = vmatmul.mubr.f32.gmra.mxu0 %v753
    %v821 = vpop.f32.mrf.mxu0
    %v822 = vadd.f32 %v430, %v821
    %v823 = vpop.f32.mrf.mxu0
    %824 = vdwg.mxu0
    %v825 = vadd.f32 %v752, %v822
    %v826 = vxor.u32 %v825, 2147483648
    %v827 = vmul.f32 %v826, 1.442695
    %v828 = vpow.pop %v827
    %v829 = vadd.f32 %v828, 1.0
    %v830 = vrcp.pop %v829
    %v831 = vmul.f32 1.0, %v830
    %833 = vrot.lane.b32.xlu0 %v822, 96
    %v834 = vpop.permute.xlu0 %833
    %v836 = vmul.f32 %v831, %v834
    %838 = vrot.lane.b32.xlu0 %v836, 32
    %v839 = vpop.permute.xlu0 %838
    %v841 = vadd.f32 %v752, %v839
    %v842 = vtanh.pop %v841
    %v843 = vsub.f32 1.0, %v831
    %845 = vrot.lane.b32.xlu0 %v842, 112
    %v846 = vpop.permute.xlu0 %845
    %v848 = vmul.f32 %v843, %v846
    %v849 = vmul.f32 %v831, %v744
    %v850 = vadd.f32 %v848, %v849
    %852 = vrot.lane.b32.xlu0 %v850, 112
    %v853 = vpop.permute.xlu0 %852
    %s855 = scalar_lea.vmem [#allocation4], 6
    %856 = vst.msk [vmem:[%s855] sm:$0x3] %vm537, %v853
    %s857 = scalar_lea.vmem [#allocation2], 8
    %v858 = vld [vmem:[%s857] sm:$0x3]
    %v859 = vsel %vm433, %v853, 0
    %861 = vmatprep.subr.mxu0 0.0
    %862 = vmatpush1.msra.mxu0 0.0
    %863 = vmatprep.subr.mxu0 0.0
    %864 = vmatpush1.msra.mxu0 0.0
    %865 = vmatprep.subr.mxu0 0.0
    %866 = vmatpush1.msra.mxu0 0.0
    %867 = vmatprep.subr.mxu0 0.0
    %868 = vmatpush1.msra.mxu0 0.0
    %869 = vmatprep.subr.mxu0 0.0
    %870 = vmatpush1.msra.mxu0 0.0
    %871 = vmatprep.subr.mxu0 0.0
    %872 = vmatpush1.msra.mxu0 0.0
    %873 = vmatprep.subr.mxu0 0.0
    %874 = vmatpush1.msra.mxu0 0.0
    %875 = vmatprep.subr.mxu0 0.0
    %876 = vmatpush1.msra.mxu0 0.0
    %877 = vmatprep.subr.mxu0 0.0
    %878 = vmatpush1.msra.mxu0 0.0
    %879 = vmatprep.subr.mxu0 0.0
    %880 = vmatpush1.msra.mxu0 0.0
    %881 = vmatprep.subr.mxu0 0.0
    %882 = vmatpush1.msra.mxu0 0.0
    %883 = vmatprep.subr.mxu0 0.0
    %884 = vmatpush1.msra.mxu0 0.0
    %885 = vmatprep.subr.mxu0 0.0
    %886 = vmatpush1.msra.mxu0 0.0
    %887 = vmatprep.subr.mxu0 0.0
    %888 = vmatpush1.msra.mxu0 0.0
    %889 = vmatprep.subr.mxu0 0.0
    %890 = vmatpush1.msra.mxu0 %v424
    %891 = vmatprep.subr.mxu0 0.0
    %892 = vmatpush1.msra.mxu0 %v423
    %893 = vmatprep.subr.mxu0 0.0
    %894 = vmatpush2.msra.mxu0 0.0
    %895 = vmatprep.subr.mxu0 0.0
    %896 = vmatpush2.msra.mxu0 0.0
    %897 = vmatprep.subr.mxu0 0.0
    %898 = vmatpush2.msra.mxu0 0.0
    %899 = vmatprep.subr.mxu0 0.0
    %900 = vmatpush2.msra.mxu0 0.0
    %901 = vmatprep.subr.mxu0 0.0
    %902 = vmatpush2.msra.mxu0 0.0
    %903 = vmatprep.subr.mxu0 0.0
    %904 = vmatpush2.msra.mxu0 0.0
    %905 = vmatprep.subr.mxu0 0.0
    %906 = vmatpush2.msra.mxu0 0.0
    %907 = vmatprep.subr.mxu0 0.0
    %908 = vmatpush2.msra.mxu0 0.0
    %909 = vmatprep.subr.mxu0 0.0
    %910 = vmatpush2.msra.mxu0 0.0
    %911 = vmatprep.subr.mxu0 0.0
    %912 = vmatpush2.msra.mxu0 0.0
    %913 = vmatprep.subr.mxu0 0.0
    %914 = vmatpush2.msra.mxu0 0.0
    %915 = vmatprep.subr.mxu0 0.0
    %916 = vmatpush2.msra.mxu0 0.0
    %917 = vmatprep.subr.mxu0 0.0
    %918 = vmatpush2.msra.mxu0 0.0
    %919 = vmatprep.subr.mxu0 0.0
    %920 = vmatpush2.msra.mxu0 0.0
    %921 = vmatprep.subr.mxu0 0.0
    %922 = vmatpush2.msra.mxu0 0.0
    %923 = vmatprep.subr.mxu0 0.0
    %924 = vmatpush2.msra.mxu0 0.0
    %925 = vmatprep.mubr.f32.mxu0 0.0
    %926 = vmatmul.mubr.f32.gmra.mxu0 %v859
    %v927 = vpop.f32.mrf.mxu0
    %v928 = vadd.f32 %v430, %v927
    %v929 = vpop.f32.mrf.mxu0
    %930 = vdwg.mxu0
    %v931 = vadd.f32 %v858, %v928
    %v932 = vxor.u32 %v931, 2147483648
    %v933 = vmul.f32 %v932, 1.442695
    %v934 = vpow.pop %v933
    %v935 = vadd.f32 %v934, 1.0
    %v936 = vrcp.pop %v935
    %v937 = vmul.f32 1.0, %v936
    %939 = vrot.lane.b32.xlu0 %v928, 96
    %v940 = vpop.permute.xlu0 %939
    %v942 = vmul.f32 %v937, %v940
    %944 = vrot.lane.b32.xlu0 %v942, 32
    %v945 = vpop.permute.xlu0 %944
    %v947 = vadd.f32 %v858, %v945
    %v948 = vtanh.pop %v947
    %v949 = vsub.f32 1.0, %v937
    %951 = vrot.lane.b32.xlu0 %v948, 112
    %v952 = vpop.permute.xlu0 %951
    %v954 = vmul.f32 %v949, %v952
    %v955 = vmul.f32 %v937, %v850
    %v956 = vadd.f32 %v954, %v955
    %958 = vrot.lane.b32.xlu0 %v956, 112
    %v959 = vpop.permute.xlu0 %958
    %s961 = scalar_lea.vmem [#allocation4], 8
    %962 = vst.msk [vmem:[%s961] sm:$0x3] %vm537, %v959
    %s963 = scalar_lea.vmem [#allocation2], 10
    %v964 = vld [vmem:[%s963] sm:$0x3]
    %v965 = vsel %vm433, %v959, 0
    %967 = vmatprep.subr.mxu0 0.0
    %968 = vmatpush1.msra.mxu0 0.0
    %969 = vmatprep.subr.mxu0 0.0
    %970 = vmatpush1.msra.mxu0 0.0
    %971 = vmatprep.subr.mxu0 0.0
    %972 = vmatpush1.msra.mxu0 0.0
    %973 = vmatprep.subr.mxu0 0.0
    %974 = vmatpush1.msra.mxu0 0.0
    %975 = vmatprep.subr.mxu0 0.0
    %976 = vmatpush1.msra.mxu0 0.0
    %977 = vmatprep.subr.mxu0 0.0
    %978 = vmatpush1.msra.mxu0 0.0
    %979 = vmatprep.subr.mxu0 0.0
    %980 = vmatpush1.msra.mxu0 0.0
    %981 = vmatprep.subr.mxu0 0.0
    %982 = vmatpush1.msra.mxu0 0.0
    %983 = vmatprep.subr.mxu0 0.0
    %984 = vmatpush1.msra.mxu0 0.0
    %985 = vmatprep.subr.mxu0 0.0
    %986 = vmatpush1.msra.mxu0 0.0
    %987 = vmatprep.subr.mxu0 0.0
    %988 = vmatpush1.msra.mxu0 0.0
    %989 = vmatprep.subr.mxu0 0.0
    %990 = vmatpush1.msra.mxu0 0.0
    %991 = vmatprep.subr.mxu0 0.0
    %992 = vmatpush1.msra.mxu0 0.0
    %993 = vmatprep.subr.mxu0 0.0
    %994 = vmatpush1.msra.mxu0 0.0
    %995 = vmatprep.subr.mxu0 0.0
    %996 = vmatpush1.msra.mxu0 %v424
    %997 = vmatprep.subr.mxu0 0.0
    %998 = vmatpush1.msra.mxu0 %v423
    %999 = vmatprep.subr.mxu0 0.0
    %1000 = vmatpush2.msra.mxu0 0.0
    %1001 = vmatprep.subr.mxu0 0.0
    %1002 = vmatpush2.msra.mxu0 0.0
    %1003 = vmatprep.subr.mxu0 0.0
    %1004 = vmatpush2.msra.mxu0 0.0
    %1005 = vmatprep.subr.mxu0 0.0
    %1006 = vmatpush2.msra.mxu0 0.0
    %1007 = vmatprep.subr.mxu0 0.0
    %1008 = vmatpush2.msra.mxu0 0.0
    %1009 = vmatprep.subr.mxu0 0.0
    %1010 = vmatpush2.msra.mxu0 0.0
    %1011 = vmatprep.subr.mxu0 0.0
    %1012 = vmatpush2.msra.mxu0 0.0
    %1013 = vmatprep.subr.mxu0 0.0
    %1014 = vmatpush2.msra.mxu0 0.0
    %1015 = vmatprep.subr.mxu0 0.0
    %1016 = vmatpush2.msra.mxu0 0.0
    %1017 = vmatprep.subr.mxu0 0.0
    %1018 = vmatpush2.msra.mxu0 0.0
    %1019 = vmatprep.subr.mxu0 0.0
    %1020 = vmatpush2.msra.mxu0 0.0
    %1021 = vmatprep.subr.mxu0 0.0
    %1022 = vmatpush2.msra.mxu0 0.0
    %1023 = vmatprep.subr.mxu0 0.0
    %1024 = vmatpush2.msra.mxu0 0.0
    %1025 = vmatprep.subr.mxu0 0.0
    %1026 = vmatpush2.msra.mxu0 0.0
    %1027 = vmatprep.subr.mxu0 0.0
    %1028 = vmatpush2.msra.mxu0 0.0
    %1029 = vmatprep.subr.mxu0 0.0
    %1030 = vmatpush2.msra.mxu0 0.0
    %1031 = vmatprep.mubr.f32.mxu0 0.0
    %1032 = vmatmul.mubr.f32.gmra.mxu0 %v965
    %v1033 = vpop.f32.mrf.mxu0
    %v1034 = vadd.f32 %v430, %v1033
    %v1035 = vpop.f32.mrf.mxu0
    %1036 = vdwg.mxu0
    %v1037 = vadd.f32 %v964, %v1034
    %v1038 = vxor.u32 %v1037, 2147483648
    %v1039 = vmul.f32 %v1038, 1.442695
    %v1040 = vpow.pop %v1039
    %v1041 = vadd.f32 %v1040, 1.0
    %v1042 = vrcp.pop %v1041
    %v1043 = vmul.f32 1.0, %v1042
    %1045 = vrot.lane.b32.xlu0 %v1034, 96
    %v1046 = vpop.permute.xlu0 %1045
    %v1048 = vmul.f32 %v1043, %v1046
    %1050 = vrot.lane.b32.xlu0 %v1048, 32
    %v1051 = vpop.permute.xlu0 %1050
    %v1053 = vadd.f32 %v964, %v1051
    %v1054 = vtanh.pop %v1053
    %v1055 = vsub.f32 1.0, %v1043
    %1057 = vrot.lane.b32.xlu0 %v1054, 112
    %v1058 = vpop.permute.xlu0 %1057
    %v1060 = vmul.f32 %v1055, %v1058
    %v1061 = vmul.f32 %v1043, %v956
    %v1062 = vadd.f32 %v1060, %v1061
    %1064 = vrot.lane.b32.xlu0 %v1062, 112
    %v1065 = vpop.permute.xlu0 %1064
    %s1067 = scalar_lea.vmem [#allocation4], 10
    %1068 = vst.msk [vmem:[%s1067] sm:$0x3] %vm537, %v1065
    %s1069 = scalar_lea.vmem [#allocation2], 12
    %v1070 = vld [vmem:[%s1069] sm:$0x3]
    %v1071 = vsel %vm433, %v1065, 0
    %1073 = vmatprep.subr.mxu0 0.0
    %1074 = vmatpush1.msra.mxu0 0.0
    %1075 = vmatprep.subr.mxu0 0.0
    %1076 = vmatpush1.msra.mxu0 0.0
    %1077 = vmatprep.subr.mxu0 0.0
    %1078 = vmatpush1.msra.mxu0 0.0
    %1079 = vmatprep.subr.mxu0 0.0
    %1080 = vmatpush1.msra.mxu0 0.0
    %1081 = vmatprep.subr.mxu0 0.0
    %1082 = vmatpush1.msra.mxu0 0.0
    %1083 = vmatprep.subr.mxu0 0.0
    %1084 = vmatpush1.msra.mxu0 0.0
    %1085 = vmatprep.subr.mxu0 0.0
    %1086 = vmatpush1.msra.mxu0 0.0
    %1087 = vmatprep.subr.mxu0 0.0
    %1088 = vmatpush1.msra.mxu0 0.0
    %1089 = vmatprep.subr.mxu0 0.0
    %1090 = vmatpush1.msra.mxu0 0.0
    %1091 = vmatprep.subr.mxu0 0.0
    %1092 = vmatpush1.msra.mxu0 0.0
    %1093 = vmatprep.subr.mxu0 0.0
    %1094 = vmatpush1.msra.mxu0 0.0
    %1095 = vmatprep.subr.mxu0 0.0
    %1096 = vmatpush1.msra.mxu0 0.0
    %1097 = vmatprep.subr.mxu0 0.0
    %1098 = vmatpush1.msra.mxu0 0.0
    %1099 = vmatprep.subr.mxu0 0.0
    %1100 = vmatpush1.msra.mxu0 0.0
    %1101 = vmatprep.subr.mxu0 0.0
    %1102 = vmatpush1.msra.mxu0 %v424
    %1103 = vmatprep.subr.mxu0 0.0
    %1104 = vmatpush1.msra.mxu0 %v423
    %1105 = vmatprep.subr.mxu0 0.0
    %1106 = vmatpush2.msra.mxu0 0.0
    %1107 = vmatprep.subr.mxu0 0.0
    %1108 = vmatpush2.msra.mxu0 0.0
    %1109 = vmatprep.subr.mxu0 0.0
    %1110 = vmatpush2.msra.mxu0 0.0
    %1111 = vmatprep.subr.mxu0 0.0
    %1112 = vmatpush2.msra.mxu0 0.0
    %1113 = vmatprep.subr.mxu0 0.0
    %1114 = vmatpush2.msra.mxu0 0.0
    %1115 = vmatprep.subr.mxu0 0.0
    %1116 = vmatpush2.msra.mxu0 0.0
    %1117 = vmatprep.subr.mxu0 0.0
    %1118 = vmatpush2.msra.mxu0 0.0
    %1119 = vmatprep.subr.mxu0 0.0
    %1120 = vmatpush2.msra.mxu0 0.0
    %1121 = vmatprep.subr.mxu0 0.0
    %1122 = vmatpush2.msra.mxu0 0.0
    %1123 = vmatprep.subr.mxu0 0.0
    %1124 = vmatpush2.msra.mxu0 0.0
    %1125 = vmatprep.subr.mxu0 0.0
    %1126 = vmatpush2.msra.mxu0 0.0
    %1127 = vmatprep.subr.mxu0 0.0
    %1128 = vmatpush2.msra.mxu0 0.0
    %1129 = vmatprep.subr.mxu0 0.0
    %1130 = vmatpush2.msra.mxu0 0.0
    %1131 = vmatprep.subr.mxu0 0.0
    %1132 = vmatpush2.msra.mxu0 0.0
    %1133 = vmatprep.subr.mxu0 0.0
    %1134 = vmatpush2.msra.mxu0 0.0
    %1135 = vmatprep.subr.mxu0 0.0
    %1136 = vmatpush2.msra.mxu0 0.0
    %1137 = vmatprep.mubr.f32.mxu0 0.0
    %1138 = vmatmul.mubr.f32.gmra.mxu0 %v1071
    %v1139 = vpop.f32.mrf.mxu0
    %v1140 = vadd.f32 %v430, %v1139
    %v1141 = vpop.f32.mrf.mxu0
    %1142 = vdwg.mxu0
    %v1143 = vadd.f32 %v1070, %v1140
    %v1144 = vxor.u32 %v1143, 2147483648
    %v1145 = vmul.f32 %v1144, 1.442695
    %v1146 = vpow.pop %v1145
    %v1147 = vadd.f32 %v1146, 1.0
    %v1148 = vrcp.pop %v1147
    %v1149 = vmul.f32 1.0, %v1148
    %1151 = vrot.lane.b32.xlu0 %v1140, 96
    %v1152 = vpop.permute.xlu0 %1151
    %v1154 = vmul.f32 %v1149, %v1152
    %1156 = vrot.lane.b32.xlu0 %v1154, 32
    %v1157 = vpop.permute.xlu0 %1156
    %v1159 = vadd.f32 %v1070, %v1157
    %v1160 = vtanh.pop %v1159
    %v1161 = vsub.f32 1.0, %v1149
    %1163 = vrot.lane.b32.xlu0 %v1160, 112
    %v1164 = vpop.permute.xlu0 %1163
    %v1166 = vmul.f32 %v1161, %v1164
    %v1167 = vmul.f32 %v1149, %v1062
    %v1168 = vadd.f32 %v1166, %v1167
    %1170 = vrot.lane.b32.xlu0 %v1168, 112
    %v1171 = vpop.permute.xlu0 %1170
    %s1173 = scalar_lea.vmem [#allocation4], 12
    %1174 = vst.msk [vmem:[%s1173] sm:$0x3] %vm537, %v1171
    %s1175 = scalar_lea.vmem [#allocation2], 14
    %v1176 = vld [vmem:[%s1175] sm:$0x3]
    %v1177 = vsel %vm433, %v1171, 0
    %1179 = vmatprep.subr.mxu0 0.0
    %1180 = vmatpush1.msra.mxu0 0.0
    %1181 = vmatprep.subr.mxu0 0.0
    %1182 = vmatpush1.msra.mxu0 0.0
    %1183 = vmatprep.subr.mxu0 0.0
    %1184 = vmatpush1.msra.mxu0 0.0
    %1185 = vmatprep.subr.mxu0 0.0
    %1186 = vmatpush1.msra.mxu0 0.0
    %1187 = vmatprep.subr.mxu0 0.0
    %1188 = vmatpush1.msra.mxu0 0.0
    %1189 = vmatprep.subr.mxu0 0.0
    %1190 = vmatpush1.msra.mxu0 0.0
    %1191 = vmatprep.subr.mxu0 0.0
    %1192 = vmatpush1.msra.mxu0 0.0
    %1193 = vmatprep.subr.mxu0 0.0
    %1194 = vmatpush1.msra.mxu0 0.0
    %1195 = vmatprep.subr.mxu0 0.0
    %1196 = vmatpush1.msra.mxu0 0.0
    %1197 = vmatprep.subr.mxu0 0.0
    %1198 = vmatpush1.msra.mxu0 0.0
    %1199 = vmatprep.subr.mxu0 0.0
    %1200 = vmatpush1.msra.mxu0 0.0
    %1201 = vmatprep.subr.mxu0 0.0
    %1202 = vmatpush1.msra.mxu0 0.0
    %1203 = vmatprep.subr.mxu0 0.0
    %1204 = vmatpush1.msra.mxu0 0.0
    %1205 = vmatprep.subr.mxu0 0.0
    %1206 = vmatpush1.msra.mxu0 0.0
    %1207 = vmatprep.subr.mxu0 0.0
    %1208 = vmatpush1.msra.mxu0 %v424
    %1209 = vmatprep.subr.mxu0 0.0
    %1210 = vmatpush1.msra.mxu0 %v423
    %1211 = vmatprep.subr.mxu0 0.0
    %1212 = vmatpush2.msra.mxu0 0.0
    %1213 = vmatprep.subr.mxu0 0.0
    %1214 = vmatpush2.msra.mxu0 0.0
    %1215 = vmatprep.subr.mxu0 0.0
    %1216 = vmatpush2.msra.mxu0 0.0
    %1217 = vmatprep.subr.mxu0 0.0
    %1218 = vmatpush2.msra.mxu0 0.0
    %1219 = vmatprep.subr.mxu0 0.0
    %1220 = vmatpush2.msra.mxu0 0.0
    %1221 = vmatprep.subr.mxu0 0.0
    %1222 = vmatpush2.msra.mxu0 0.0
    %1223 = vmatprep.subr.mxu0 0.0
    %1224 = vmatpush2.msra.mxu0 0.0
    %1225 = vmatprep.subr.mxu0 0.0
    %1226 = vmatpush2.msra.mxu0 0.0
    %1227 = vmatprep.subr.mxu0 0.0
    %1228 = vmatpush2.msra.mxu0 0.0
    %1229 = vmatprep.subr.mxu0 0.0
    %1230 = vmatpush2.msra.mxu0 0.0
    %1231 = vmatprep.subr.mxu0 0.0
    %1232 = vmatpush2.msra.mxu0 0.0
    %1233 = vmatprep.subr.mxu0 0.0
    %1234 = vmatpush2.msra.mxu0 0.0
    %1235 = vmatprep.subr.mxu0 0.0
    %1236 = vmatpush2.msra.mxu0 0.0
    %1237 = vmatprep.subr.mxu0 0.0
    %1238 = vmatpush2.msra.mxu0 0.0
    %1239 = vmatprep.subr.mxu0 0.0
    %1240 = vmatpush2.msra.mxu0 0.0
    %1241 = vmatprep.subr.mxu0 0.0
    %1242 = vmatpush2.msra.mxu0 0.0
    %1243 = vmatprep.mubr.f32.mxu0 0.0
    %1244 = vmatmul.mubr.f32.gmra.mxu0 %v1177
    %v1245 = vpop.f32.mrf.mxu0
    %v1246 = vadd.f32 %v430, %v1245
    %v1247 = vpop.f32.mrf.mxu0
    %1248 = vdwg.mxu0
    %v1249 = vadd.f32 %v1176, %v1246
    %v1250 = vxor.u32 %v1249, 2147483648
    %v1251 = vmul.f32 %v1250, 1.442695
    %v1252 = vpow.pop %v1251
    %v1253 = vadd.f32 %v1252, 1.0
    %v1254 = vrcp.pop %v1253
    %v1255 = vmul.f32 1.0, %v1254
    %1257 = vrot.lane.b32.xlu0 %v1246, 96
    %v1258 = vpop.permute.xlu0 %1257
    %v1260 = vmul.f32 %v1255, %v1258
    %1262 = vrot.lane.b32.xlu0 %v1260, 32
    %v1263 = vpop.permute.xlu0 %1262
    %v1265 = vadd.f32 %v1176, %v1263
    %v1266 = vtanh.pop %v1265
    %v1267 = vsub.f32 1.0, %v1255
    %1269 = vrot.lane.b32.xlu0 %v1266, 112
    %v1270 = vpop.permute.xlu0 %1269
    %v1272 = vmul.f32 %v1267, %v1270
    %v1273 = vmul.f32 %v1255, %v1168
    %v1274 = vadd.f32 %v1272, %v1273
    %1276 = vrot.lane.b32.xlu0 %v1274, 112
    %v1277 = vpop.permute.xlu0 %1276
    %s1279 = scalar_lea.vmem [#allocation4], 14
    %1280 = vst.msk [vmem:[%s1279] sm:$0x3] %vm537, %v1277
    %v1281 = vld [vmem:[#allocation20] sm:$0xff]
    %v1282 = vld [vmem:[#allocation20 + $0x8] sm:$0xff]
    %v1283 = vld [vmem:[#allocation23] sm:$0x1]
    %v1285 = vlaneseq
    %v1286 = vshrl.u32 %v1285, 7
    %v1287 = vsub.s32 0, %v1286
    %v1288 = vrot.slane %v1283, %v1287
    %s1290 = scalar_lea.vmem [#allocation3], 14
    %v1291 = vld [vmem:[%s1290] sm:$0x3]
    %1292 = vmatprep.subr.mxu0 0.0
    %1293 = vmatpush1.msra.mxu0 0.0
    %1294 = vmatprep.subr.mxu0 0.0
    %1295 = vmatpush1.msra.mxu0 0.0
    %1296 = vmatprep.subr.mxu0 0.0
    %1297 = vmatpush1.msra.mxu0 0.0
    %1298 = vmatprep.subr.mxu0 0.0
    %1299 = vmatpush1.msra.mxu0 0.0
    %1300 = vmatprep.subr.mxu0 0.0
    %1301 = vmatpush1.msra.mxu0 0.0
    %1302 = vmatprep.subr.mxu0 0.0
    %1303 = vmatpush1.msra.mxu0 0.0
    %1304 = vmatprep.subr.mxu0 0.0
    %1305 = vmatpush1.msra.mxu0 0.0
    %1306 = vmatprep.subr.mxu0 0.0
    %1307 = vmatpush1.msra.mxu0 0.0
    %1308 = vmatprep.subr.mxu0 0.0
    %1309 = vmatpush1.msra.mxu0 0.0
    %1310 = vmatprep.subr.mxu0 0.0
    %1311 = vmatpush1.msra.mxu0 0.0
    %1312 = vmatprep.subr.mxu0 0.0
    %1313 = vmatpush1.msra.mxu0 0.0
    %1314 = vmatprep.subr.mxu0 0.0
    %1315 = vmatpush1.msra.mxu0 0.0
    %1316 = vmatprep.subr.mxu0 0.0
    %1317 = vmatpush1.msra.mxu0 0.0
    %1318 = vmatprep.subr.mxu0 0.0
    %1319 = vmatpush1.msra.mxu0 0.0
    %1320 = vmatprep.subr.mxu0 0.0
    %1321 = vmatpush1.msra.mxu0 %v1282
    %1322 = vmatprep.subr.mxu0 0.0
    %1323 = vmatpush1.msra.mxu0 %v1281
    %1324 = vmatprep.subr.mxu0 0.0
    %1325 = vmatpush2.msra.mxu0 0.0
    %1326 = vmatprep.subr.mxu0 0.0
    %1327 = vmatpush2.msra.mxu0 0.0
    %1328 = vmatprep.subr.mxu0 0.0
    %1329 = vmatpush2.msra.mxu0 0.0
    %1330 = vmatprep.subr.mxu0 0.0
    %1331 = vmatpush2.msra.mxu0 0.0
    %1332 = vmatprep.subr.mxu0 0.0
    %1333 = vmatpush2.msra.mxu0 0.0
    %1334 = vmatprep.subr.mxu0 0.0
    %1335 = vmatpush2.msra.mxu0 0.0
    %1336 = vmatprep.subr.mxu0 0.0
    %1337 = vmatpush2.msra.mxu0 0.0
    %1338 = vmatprep.subr.mxu0 0.0
    %1339 = vmatpush2.msra.mxu0 0.0
    %1340 = vmatprep.subr.mxu0 0.0
    %1341 = vmatpush2.msra.mxu0 0.0
    %1342 = vmatprep.subr.mxu0 0.0
    %1343 = vmatpush2.msra.mxu0 0.0
    %1344 = vmatprep.subr.mxu0 0.0
    %1345 = vmatpush2.msra.mxu0 0.0
    %1346 = vmatprep.subr.mxu0 0.0
    %1347 = vmatpush2.msra.mxu0 0.0
    %1348 = vmatprep.subr.mxu0 0.0
    %1349 = vmatpush2.msra.mxu0 0.0
    %1350 = vmatprep.subr.mxu0 0.0
    %1351 = vmatpush2.msra.mxu0 0.0
    %1352 = vmatprep.subr.mxu0 0.0
    %1353 = vmatpush2.msra.mxu0 0.0
    %1354 = vmatprep.subr.mxu0 0.0
    %1355 = vmatpush2.msra.mxu0 0.0
    %1356 = vmatprep.mubr.f32.mxu0 0.0
    %1357 = vmatmul.mubr.f32.gmra.mxu0 %v435
    %v1358 = vpop.f32.mrf.mxu0
    %v1359 = vadd.f32 %v1288, %v1358
    %v1360 = vpop.f32.mrf.mxu0
    %1361 = vdwg.mxu0
    %v1362 = vadd.f32 %v1291, %v1359
    %v1363 = vxor.u32 %v1362, 2147483648
    %v1364 = vmul.f32 %v1363, 1.442695
    %v1365 = vpow.pop %v1364
    %v1366 = vadd.f32 %v1365, 1.0
    %v1367 = vrcp.pop %v1366
    %v1368 = vmul.f32 1.0, %v1367
    %1370 = vrot.lane.b32.xlu0 %v1359, 96
    %v1371 = vpop.permute.xlu0 %1370
    %v1373 = vmul.f32 %v1368, %v1371
    %1375 = vrot.lane.b32.xlu0 %v1373, 32
    %v1376 = vpop.permute.xlu0 %1375
    %v1378 = vadd.f32 %v1291, %v1376
    %v1379 = vtanh.pop %v1378
    %v1380 = vsub.f32 1.0, %v1368
    %1382 = vrot.lane.b32.xlu0 %v1379, 112
    %v1383 = vpop.permute.xlu0 %1382
    %v1385 = vmul.f32 %v1380, %v1383
    %v1386 = vmul.f32 %v1368, 0.0
    %v1387 = vadd.f32 %v1385, %v1386
    %1389 = vrot.lane.b32.xlu0 %v1387, 112
    %v1390 = vpop.permute.xlu0 %1389
    %s1392 = scalar_lea.vmem [#allocation5], 14
    %1393 = vst.msk [vmem:[%s1392] sm:$0x3] %vm537, %v1390
    %s1394 = scalar_lea.vmem [#allocation3], 12
    %v1395 = vld [vmem:[%s1394] sm:$0x3]
    %v1396 = vsel %vm433, %v1390, 0
    %1398 = vmatprep.subr.mxu0 0.0
    %1399 = vmatpush1.msra.mxu0 0.0
    %1400 = vmatprep.subr.mxu0 0.0
    %1401 = vmatpush1.msra.mxu0 0.0
    %1402 = vmatprep.subr.mxu0 0.0
    %1403 = vmatpush1.msra.mxu0 0.0
    %1404 = vmatprep.subr.mxu0 0.0
    %1405 = vmatpush1.msra.mxu0 0.0
    %1406 = vmatprep.subr.mxu0 0.0
    %1407 = vmatpush1.msra.mxu0 0.0
    %1408 = vmatprep.subr.mxu0 0.0
    %1409 = vmatpush1.msra.mxu0 0.0
    %1410 = vmatprep.subr.mxu0 0.0
    %1411 = vmatpush1.msra.mxu0 0.0
    %1412 = vmatprep.subr.mxu0 0.0
    %1413 = vmatpush1.msra.mxu0 0.0
    %1414 = vmatprep.subr.mxu0 0.0
    %1415 = vmatpush1.msra.mxu0 0.0
    %1416 = vmatprep.subr.mxu0 0.0
    %1417 = vmatpush1.msra.mxu0 0.0
    %1418 = vmatprep.subr.mxu0 0.0
    %1419 = vmatpush1.msra.mxu0 0.0
    %1420 = vmatprep.subr.mxu0 0.0
    %1421 = vmatpush1.msra.mxu0 0.0
    %1422 = vmatprep.subr.mxu0 0.0
    %1423 = vmatpush1.msra.mxu0 0.0
    %1424 = vmatprep.subr.mxu0 0.0
    %1425 = vmatpush1.msra.mxu0 0.0
    %1426 = vmatprep.subr.mxu0 0.0
    %1427 = vmatpush1.msra.mxu0 %v1282
    %1428 = vmatprep.subr.mxu0 0.0
    %1429 = vmatpush1.msra.mxu0 %v1281
    %1430 = vmatprep.subr.mxu0 0.0
    %1431 = vmatpush2.msra.mxu0 0.0
    %1432 = vmatprep.subr.mxu0 0.0
    %1433 = vmatpush2.msra.mxu0 0.0
    %1434 = vmatprep.subr.mxu0 0.0
    %1435 = vmatpush2.msra.mxu0 0.0
    %1436 = vmatprep.subr.mxu0 0.0
    %1437 = vmatpush2.msra.mxu0 0.0
    %1438 = vmatprep.subr.mxu0 0.0
    %1439 = vmatpush2.msra.mxu0 0.0
    %1440 = vmatprep.subr.mxu0 0.0
    %1441 = vmatpush2.msra.mxu0 0.0
    %1442 = vmatprep.subr.mxu0 0.0
    %1443 = vmatpush2.msra.mxu0 0.0
    %1444 = vmatprep.subr.mxu0 0.0
    %1445 = vmatpush2.msra.mxu0 0.0
    %1446 = vmatprep.subr.mxu0 0.0
    %1447 = vmatpush2.msra.mxu0 0.0
    %1448 = vmatprep.subr.mxu0 0.0
    %1449 = vmatpush2.msra.mxu0 0.0
    %1450 = vmatprep.subr.mxu0 0.0
    %1451 = vmatpush2.msra.mxu0 0.0
    %1452 = vmatprep.subr.mxu0 0.0
    %1453 = vmatpush2.msra.mxu0 0.0
    %1454 = vmatprep.subr.mxu0 0.0
    %1455 = vmatpush2.msra.mxu0 0.0
    %1456 = vmatprep.subr.mxu0 0.0
    %1457 = vmatpush2.msra.mxu0 0.0
    %1458 = vmatprep.subr.mxu0 0.0
    %1459 = vmatpush2.msra.mxu0 0.0
    %1460 = vmatprep.subr.mxu0 0.0
    %1461 = vmatpush2.msra.mxu0 0.0
    %1462 = vmatprep.mubr.f32.mxu0 0.0
    %1463 = vmatmul.mubr.f32.gmra.mxu0 %v1396
    %v1464 = vpop.f32.mrf.mxu0
    %v1465 = vadd.f32 %v1288, %v1464
    %v1466 = vpop.f32.mrf.mxu0
    %1467 = vdwg.mxu0
    %v1468 = vadd.f32 %v1395, %v1465
    %v1469 = vxor.u32 %v1468, 2147483648
    %v1470 = vmul.f32 %v1469, 1.442695
    %v1471 = vpow.pop %v1470
    %v1472 = vadd.f32 %v1471, 1.0
    %v1473 = vrcp.pop %v1472
    %v1474 = vmul.f32 1.0, %v1473
    %1476 = vrot.lane.b32.xlu0 %v1465, 96
    %v1477 = vpop.permute.xlu0 %1476
    %v1479 = vmul.f32 %v1474, %v1477
    %1481 = vrot.lane.b32.xlu0 %v1479, 32
    %v1482 = vpop.permute.xlu0 %1481
    %v1484 = vadd.f32 %v1395, %v1482
    %v1485 = vtanh.pop %v1484
    %v1486 = vsub.f32 1.0, %v1474
    %1488 = vrot.lane.b32.xlu0 %v1485, 112
    %v1489 = vpop.permute.xlu0 %1488
    %v1491 = vmul.f32 %v1486, %v1489
    %v1492 = vmul.f32 %v1474, %v1387
    %v1493 = vadd.f32 %v1491, %v1492
    %1495 = vrot.lane.b32.xlu0 %v1493, 112
    %v1496 = vpop.permute.xlu0 %1495
    %s1498 = scalar_lea.vmem [#allocation5], 12
    %1499 = vst.msk [vmem:[%s1498] sm:$0x3] %vm537, %v1496
    %s1500 = scalar_lea.vmem [#allocation3], 10
    %v1501 = vld [vmem:[%s1500] sm:$0x3]
    %v1502 = vsel %vm433, %v1496, 0
    %1504 = vmatprep.subr.mxu0 0.0
    %1505 = vmatpush1.msra.mxu0 0.0
    %1506 = vmatprep.subr.mxu0 0.0
    %1507 = vmatpush1.msra.mxu0 0.0
    %1508 = vmatprep.subr.mxu0 0.0
    %1509 = vmatpush1.msra.mxu0 0.0
    %1510 = vmatprep.subr.mxu0 0.0
    %1511 = vmatpush1.msra.mxu0 0.0
    %1512 = vmatprep.subr.mxu0 0.0
    %1513 = vmatpush1.msra.mxu0 0.0
    %1514 = vmatprep.subr.mxu0 0.0
    %1515 = vmatpush1.msra.mxu0 0.0
    %1516 = vmatprep.subr.mxu0 0.0
    %1517 = vmatpush1.msra.mxu0 0.0
    %1518 = vmatprep.subr.mxu0 0.0
    %1519 = vmatpush1.msra.mxu0 0.0
    %1520 = vmatprep.subr.mxu0 0.0
    %1521 = vmatpush1.msra.mxu0 0.0
    %1522 = vmatprep.subr.mxu0 0.0
    %1523 = vmatpush1.msra.mxu0 0.0
    %1524 = vmatprep.subr.mxu0 0.0
    %1525 = vmatpush1.msra.mxu0 0.0
    %1526 = vmatprep.subr.mxu0 0.0
    %1527 = vmatpush1.msra.mxu0 0.0
    %1528 = vmatprep.subr.mxu0 0.0
    %1529 = vmatpush1.msra.mxu0 0.0
    %1530 = vmatprep.subr.mxu0 0.0
    %1531 = vmatpush1.msra.mxu0 0.0
    %1532 = vmatprep.subr.mxu0 0.0
    %1533 = vmatpush1.msra.mxu0 %v1282
    %1534 = vmatprep.subr.mxu0 0.0
    %1535 = vmatpush1.msra.mxu0 %v1281
    %1536 = vmatprep.subr.mxu0 0.0
    %1537 = vmatpush2.msra.mxu0 0.0
    %1538 = vmatprep.subr.mxu0 0.0
    %1539 = vmatpush2.msra.mxu0 0.0
    %1540 = vmatprep.subr.mxu0 0.0
    %1541 = vmatpush2.msra.mxu0 0.0
    %1542 = vmatprep.subr.mxu0 0.0
    %1543 = vmatpush2.msra.mxu0 0.0
    %1544 = vmatprep.subr.mxu0 0.0
    %1545 = vmatpush2.msra.mxu0 0.0
    %1546 = vmatprep.subr.mxu0 0.0
    %1547 = vmatpush2.msra.mxu0 0.0
    %1548 = vmatprep.subr.mxu0 0.0
    %1549 = vmatpush2.msra.mxu0 0.0
    %1550 = vmatprep.subr.mxu0 0.0
    %1551 = vmatpush2.msra.mxu0 0.0
    %1552 = vmatprep.subr.mxu0 0.0
    %1553 = vmatpush2.msra.mxu0 0.0
    %1554 = vmatprep.subr.mxu0 0.0
    %1555 = vmatpush2.msra.mxu0 0.0
    %1556 = vmatprep.subr.mxu0 0.0
    %1557 = vmatpush2.msra.mxu0 0.0
    %1558 = vmatprep.subr.mxu0 0.0
    %1559 = vmatpush2.msra.mxu0 0.0
    %1560 = vmatprep.subr.mxu0 0.0
    %1561 = vmatpush2.msra.mxu0 0.0
    %1562 = vmatprep.subr.mxu0 0.0
    %1563 = vmatpush2.msra.mxu0 0.0
    %1564 = vmatprep.subr.mxu0 0.0
    %1565 = vmatpush2.msra.mxu0 0.0
    %1566 = vmatprep.subr.mxu0 0.0
    %1567 = vmatpush2.msra.mxu0 0.0
    %1568 = vmatprep.mubr.f32.mxu0 0.0
    %1569 = vmatmul.mubr.f32.gmra.mxu0 %v1502
    %v1570 = vpop.f32.mrf.mxu0
    %v1571 = vadd.f32 %v1288, %v1570
    %v1572 = vpop.f32.mrf.mxu0
    %1573 = vdwg.mxu0
    %v1574 = vadd.f32 %v1501, %v1571
    %v1575 = vxor.u32 %v1574, 2147483648
    %v1576 = vmul.f32 %v1575, 1.442695
    %v1577 = vpow.pop %v1576
    %v1578 = vadd.f32 %v1577, 1.0
    %v1579 = vrcp.pop %v1578
    %v1580 = vmul.f32 1.0, %v1579
    %1582 = vrot.lane.b32.xlu0 %v1571, 96
    %v1583 = vpop.permute.xlu0 %1582
    %v1585 = vmul.f32 %v1580, %v1583
    %1587 = vrot.lane.b32.xlu0 %v1585, 32
    %v1588 = vpop.permute.xlu0 %1587
    %v1590 = vadd.f32 %v1501, %v1588
    %v1591 = vtanh.pop %v1590
    %v1592 = vsub.f32 1.0, %v1580
    %1594 = vrot.lane.b32.xlu0 %v1591, 112
    %v1595 = vpop.permute.xlu0 %1594
    %v1597 = vmul.f32 %v1592, %v1595
    %v1598 = vmul.f32 %v1580, %v1493
    %v1599 = vadd.f32 %v1597, %v1598
    %1601 = vrot.lane.b32.xlu0 %v1599, 112
    %v1602 = vpop.permute.xlu0 %1601
    %s1604 = scalar_lea.vmem [#allocation5], 10
    %1605 = vst.msk [vmem:[%s1604] sm:$0x3] %vm537, %v1602
    %s1606 = scalar_lea.vmem [#allocation3], 8
    %v1607 = vld [vmem:[%s1606] sm:$0x3]
    %v1608 = vsel %vm433, %v1602, 0
    %1610 = vmatprep.subr.mxu0 0.0
    %1611 = vmatpush1.msra.mxu0 0.0
    %1612 = vmatprep.subr.mxu0 0.0
    %1613 = vmatpush1.msra.mxu0 0.0
    %1614 = vmatprep.subr.mxu0 0.0
    %1615 = vmatpush1.msra.mxu0 0.0
    %1616 = vmatprep.subr.mxu0 0.0
    %1617 = vmatpush1.msra.mxu0 0.0
    %1618 = vmatprep.subr.mxu0 0.0
    %1619 = vmatpush1.msra.mxu0 0.0
    %1620 = vmatprep.subr.mxu0 0.0
    %1621 = vmatpush1.msra.mxu0 0.0
    %1622 = vmatprep.subr.mxu0 0.0
    %1623 = vmatpush1.msra.mxu0 0.0
    %1624 = vmatprep.subr.mxu0 0.0
    %1625 = vmatpush1.msra.mxu0 0.0
    %1626 = vmatprep.subr.mxu0 0.0
    %1627 = vmatpush1.msra.mxu0 0.0
    %1628 = vmatprep.subr.mxu0 0.0
    %1629 = vmatpush1.msra.mxu0 0.0
    %1630 = vmatprep.subr.mxu0 0.0
    %1631 = vmatpush1.msra.mxu0 0.0
    %1632 = vmatprep.subr.mxu0 0.0
    %1633 = vmatpush1.msra.mxu0 0.0
    %1634 = vmatprep.subr.mxu0 0.0
    %1635 = vmatpush1.msra.mxu0 0.0
    %1636 = vmatprep.subr.mxu0 0.0
    %1637 = vmatpush1.msra.mxu0 0.0
    %1638 = vmatprep.subr.mxu0 0.0
    %1639 = vmatpush1.msra.mxu0 %v1282
    %1640 = vmatprep.subr.mxu0 0.0
    %1641 = vmatpush1.msra.mxu0 %v1281
    %1642 = vmatprep.subr.mxu0 0.0
    %1643 = vmatpush2.msra.mxu0 0.0
    %1644 = vmatprep.subr.mxu0 0.0
    %1645 = vmatpush2.msra.mxu0 0.0
    %1646 = vmatprep.subr.mxu0 0.0
    %1647 = vmatpush2.msra.mxu0 0.0
    %1648 = vmatprep.subr.mxu0 0.0
    %1649 = vmatpush2.msra.mxu0 0.0
    %1650 = vmatprep.subr.mxu0 0.0
    %1651 = vmatpush2.msra.mxu0 0.0
    %1652 = vmatprep.subr.mxu0 0.0
    %1653 = vmatpush2.msra.mxu0 0.0
    %1654 = vmatprep.subr.mxu0 0.0
    %1655 = vmatpush2.msra.mxu0 0.0
    %1656 = vmatprep.subr.mxu0 0.0
    %1657 = vmatpush2.msra.mxu0 0.0
    %1658 = vmatprep.subr.mxu0 0.0
    %1659 = vmatpush2.msra.mxu0 0.0
    %1660 = vmatprep.subr.mxu0 0.0
    %1661 = vmatpush2.msra.mxu0 0.0
    %1662 = vmatprep.subr.mxu0 0.0
    %1663 = vmatpush2.msra.mxu0 0.0
    %1664 = vmatprep.subr.mxu0 0.0
    %1665 = vmatpush2.msra.mxu0 0.0
    %1666 = vmatprep.subr.mxu0 0.0
    %1667 = vmatpush2.msra.mxu0 0.0
    %1668 = vmatprep.subr.mxu0 0.0
    %1669 = vmatpush2.msra.mxu0 0.0
    %1670 = vmatprep.subr.mxu0 0.0
    %1671 = vmatpush2.msra.mxu0 0.0
    %1672 = vmatprep.subr.mxu0 0.0
    %1673 = vmatpush2.msra.mxu0 0.0
    %1674 = vmatprep.mubr.f32.mxu0 0.0
    %1675 = vmatmul.mubr.f32.gmra.mxu0 %v1608
    %v1676 = vpop.f32.mrf.mxu0
    %v1677 = vadd.f32 %v1288, %v1676
    %v1678 = vpop.f32.mrf.mxu0
    %1679 = vdwg.mxu0
    %v1680 = vadd.f32 %v1607, %v1677
    %v1681 = vxor.u32 %v1680, 2147483648
    %v1682 = vmul.f32 %v1681, 1.442695
    %v1683 = vpow.pop %v1682
    %v1684 = vadd.f32 %v1683, 1.0
    %v1685 = vrcp.pop %v1684
    %v1686 = vmul.f32 1.0, %v1685
    %1688 = vrot.lane.b32.xlu0 %v1677, 96
    %v1689 = vpop.permute.xlu0 %1688
    %v1691 = vmul.f32 %v1686, %v1689
    %1693 = vrot.lane.b32.xlu0 %v1691, 32
    %v1694 = vpop.permute.xlu0 %1693
    %v1696 = vadd.f32 %v1607, %v1694
    %v1697 = vtanh.pop %v1696
    %v1698 = vsub.f32 1.0, %v1686
    %1700 = vrot.lane.b32.xlu0 %v1697, 112
    %v1701 = vpop.permute.xlu0 %1700
    %v1703 = vmul.f32 %v1698, %v1701
    %v1704 = vmul.f32 %v1686, %v1599
    %v1705 = vadd.f32 %v1703, %v1704
    %1707 = vrot.lane.b32.xlu0 %v1705, 112
    %v1708 = vpop.permute.xlu0 %1707
    %s1710 = scalar_lea.vmem [#allocation5], 8
    %1711 = vst.msk [vmem:[%s1710] sm:$0x3] %vm537, %v1708
    %s1712 = scalar_lea.vmem [#allocation3], 6
    %v1713 = vld [vmem:[%s1712] sm:$0x3]
    %v1714 = vsel %vm433, %v1708, 0
    %1716 = vmatprep.subr.mxu0 0.0
    %1717 = vmatpush1.msra.mxu0 0.0
    %1718 = vmatprep.subr.mxu0 0.0
    %1719 = vmatpush1.msra.mxu0 0.0
    %1720 = vmatprep.subr.mxu0 0.0
    %1721 = vmatpush1.msra.mxu0 0.0
    %1722 = vmatprep.subr.mxu0 0.0
    %1723 = vmatpush1.msra.mxu0 0.0
    %1724 = vmatprep.subr.mxu0 0.0
    %1725 = vmatpush1.msra.mxu0 0.0
    %1726 = vmatprep.subr.mxu0 0.0
    %1727 = vmatpush1.msra.mxu0 0.0
    %1728 = vmatprep.subr.mxu0 0.0
    %1729 = vmatpush1.msra.mxu0 0.0
    %1730 = vmatprep.subr.mxu0 0.0
    %1731 = vmatpush1.msra.mxu0 0.0
    %1732 = vmatprep.subr.mxu0 0.0
    %1733 = vmatpush1.msra.mxu0 0.0
    %1734 = vmatprep.subr.mxu0 0.0
    %1735 = vmatpush1.msra.mxu0 0.0
    %1736 = vmatprep.subr.mxu0 0.0
    %1737 = vmatpush1.msra.mxu0 0.0
    %1738 = vmatprep.subr.mxu0 0.0
    %1739 = vmatpush1.msra.mxu0 0.0
    %1740 = vmatprep.subr.mxu0 0.0
    %1741 = vmatpush1.msra.mxu0 0.0
    %1742 = vmatprep.subr.mxu0 0.0
    %1743 = vmatpush1.msra.mxu0 0.0
    %1744 = vmatprep.subr.mxu0 0.0
    %1745 = vmatpush1.msra.mxu0 %v1282
    %1746 = vmatprep.subr.mxu0 0.0
    %1747 = vmatpush1.msra.mxu0 %v1281
    %1748 = vmatprep.subr.mxu0 0.0
    %1749 = vmatpush2.msra.mxu0 0.0
    %1750 = vmatprep.subr.mxu0 0.0
    %1751 = vmatpush2.msra.mxu0 0.0
    %1752 = vmatprep.subr.mxu0 0.0
    %1753 = vmatpush2.msra.mxu0 0.0
    %1754 = vmatprep.subr.mxu0 0.0
    %1755 = vmatpush2.msra.mxu0 0.0
    %1756 = vmatprep.subr.mxu0 0.0
    %1757 = vmatpush2.msra.mxu0 0.0
    %1758 = vmatprep.subr.mxu0 0.0
    %1759 = vmatpush2.msra.mxu0 0.0
    %1760 = vmatprep.subr.mxu0 0.0
    %1761 = vmatpush2.msra.mxu0 0.0
    %1762 = vmatprep.subr.mxu0 0.0
    %1763 = vmatpush2.msra.mxu0 0.0
    %1764 = vmatprep.subr.mxu0 0.0
    %1765 = vmatpush2.msra.mxu0 0.0
    %1766 = vmatprep.subr.mxu0 0.0
    %1767 = vmatpush2.msra.mxu0 0.0
    %1768 = vmatprep.subr.mxu0 0.0
    %1769 = vmatpush2.msra.mxu0 0.0
    %1770 = vmatprep.subr.mxu0 0.0
    %1771 = vmatpush2.msra.mxu0 0.0
    %1772 = vmatprep.subr.mxu0 0.0
    %1773 = vmatpush2.msra.mxu0 0.0
    %1774 = vmatprep.subr.mxu0 0.0
    %1775 = vmatpush2.msra.mxu0 0.0
    %1776 = vmatprep.subr.mxu0 0.0
    %1777 = vmatpush2.msra.mxu0 0.0
    %1778 = vmatprep.subr.mxu0 0.0
    %1779 = vmatpush2.msra.mxu0 0.0
    %1780 = vmatprep.mubr.f32.mxu0 0.0
    %1781 = vmatmul.mubr.f32.gmra.mxu0 %v1714
    %v1782 = vpop.f32.mrf.mxu0
    %v1783 = vadd.f32 %v1288, %v1782
    %v1784 = vpop.f32.mrf.mxu0
    %1785 = vdwg.mxu0
    %v1786 = vadd.f32 %v1713, %v1783
    %v1787 = vxor.u32 %v1786, 2147483648
    %v1788 = vmul.f32 %v1787, 1.442695
    %v1789 = vpow.pop %v1788
    %v1790 = vadd.f32 %v1789, 1.0
    %v1791 = vrcp.pop %v1790
    %v1792 = vmul.f32 1.0, %v1791
    %1794 = vrot.lane.b32.xlu0 %v1783, 96
    %v1795 = vpop.permute.xlu0 %1794
    %v1797 = vmul.f32 %v1792, %v1795
    %1799 = vrot.lane.b32.xlu0 %v1797, 32
    %v1800 = vpop.permute.xlu0 %1799
    %v1802 = vadd.f32 %v1713, %v1800
    %v1803 = vtanh.pop %v1802
    %v1804 = vsub.f32 1.0, %v1792
    %1806 = vrot.lane.b32.xlu0 %v1803, 112
    %v1807 = vpop.permute.xlu0 %1806
    %v1809 = vmul.f32 %v1804, %v1807
    %v1810 = vmul.f32 %v1792, %v1705
    %v1811 = vadd.f32 %v1809, %v1810
    %1813 = vrot.lane.b32.xlu0 %v1811, 112
    %v1814 = vpop.permute.xlu0 %1813
    %s1816 = scalar_lea.vmem [#allocation5], 6
    %1817 = vst.msk [vmem:[%s1816] sm:$0x3] %vm537, %v1814
    %s1818 = scalar_lea.vmem [#allocation3], 4
    %v1819 = vld [vmem:[%s1818] sm:$0x3]
    %v1820 = vsel %vm433, %v1814, 0
    %1822 = vmatprep.subr.mxu0 0.0
    %1823 = vmatpush1.msra.mxu0 0.0
    %1824 = vmatprep.subr.mxu0 0.0
    %1825 = vmatpush1.msra.mxu0 0.0
    %1826 = vmatprep.subr.mxu0 0.0
    %1827 = vmatpush1.msra.mxu0 0.0
    %1828 = vmatprep.subr.mxu0 0.0
    %1829 = vmatpush1.msra.mxu0 0.0
    %1830 = vmatprep.subr.mxu0 0.0
    %1831 = vmatpush1.msra.mxu0 0.0
    %1832 = vmatprep.subr.mxu0 0.0
    %1833 = vmatpush1.msra.mxu0 0.0
    %1834 = vmatprep.subr.mxu0 0.0
    %1835 = vmatpush1.msra.mxu0 0.0
    %1836 = vmatprep.subr.mxu0 0.0
    %1837 = vmatpush1.msra.mxu0 0.0
    %1838 = vmatprep.subr.mxu0 0.0
    %1839 = vmatpush1.msra.mxu0 0.0
    %1840 = vmatprep.subr.mxu0 0.0
    %1841 = vmatpush1.msra.mxu0 0.0
    %1842 = vmatprep.subr.mxu0 0.0
    %1843 = vmatpush1.msra.mxu0 0.0
    %1844 = vmatprep.subr.mxu0 0.0
    %1845 = vmatpush1.msra.mxu0 0.0
    %1846 = vmatprep.subr.mxu0 0.0
    %1847 = vmatpush1.msra.mxu0 0.0
    %1848 = vmatprep.subr.mxu0 0.0
    %1849 = vmatpush1.msra.mxu0 0.0
    %1850 = vmatprep.subr.mxu0 0.0
    %1851 = vmatpush1.msra.mxu0 %v1282
    %1852 = vmatprep.subr.mxu0 0.0
    %1853 = vmatpush1.msra.mxu0 %v1281
    %1854 = vmatprep.subr.mxu0 0.0
    %1855 = vmatpush2.msra.mxu0 0.0
    %1856 = vmatprep.subr.mxu0 0.0
    %1857 = vmatpush2.msra.mxu0 0.0
    %1858 = vmatprep.subr.mxu0 0.0
    %1859 = vmatpush2.msra.mxu0 0.0
    %1860 = vmatprep.subr.mxu0 0.0
    %1861 = vmatpush2.msra.mxu0 0.0
    %1862 = vmatprep.subr.mxu0 0.0
    %1863 = vmatpush2.msra.mxu0 0.0
    %1864 = vmatprep.subr.mxu0 0.0
    %1865 = vmatpush2.msra.mxu0 0.0
    %1866 = vmatprep.subr.mxu0 0.0
    %1867 = vmatpush2.msra.mxu0 0.0
    %1868 = vmatprep.subr.mxu0 0.0
    %1869 = vmatpush2.msra.mxu0 0.0
    %1870 = vmatprep.subr.mxu0 0.0
    %1871 = vmatpush2.msra.mxu0 0.0
    %1872 = vmatprep.subr.mxu0 0.0
    %1873 = vmatpush2.msra.mxu0 0.0
    %1874 = vmatprep.subr.mxu0 0.0
    %1875 = vmatpush2.msra.mxu0 0.0
    %1876 = vmatprep.subr.mxu0 0.0
    %1877 = vmatpush2.msra.mxu0 0.0
    %1878 = vmatprep.subr.mxu0 0.0
    %1879 = vmatpush2.msra.mxu0 0.0
    %1880 = vmatprep.subr.mxu0 0.0
    %1881 = vmatpush2.msra.mxu0 0.0
    %1882 = vmatprep.subr.mxu0 0.0
    %1883 = vmatpush2.msra.mxu0 0.0
    %1884 = vmatprep.subr.mxu0 0.0
    %1885 = vmatpush2.msra.mxu0 0.0
    %1886 = vmatprep.mubr.f32.mxu0 0.0
    %1887 = vmatmul.mubr.f32.gmra.mxu0 %v1820
    %v1888 = vpop.f32.mrf.mxu0
    %v1889 = vadd.f32 %v1288, %v1888
    %v1890 = vpop.f32.mrf.mxu0
    %1891 = vdwg.mxu0
    %v1892 = vadd.f32 %v1819, %v1889
    %v1893 = vxor.u32 %v1892, 2147483648
    %v1894 = vmul.f32 %v1893, 1.442695
    %v1895 = vpow.pop %v1894
    %v1896 = vadd.f32 %v1895, 1.0
    %v1897 = vrcp.pop %v1896
    %v1898 = vmul.f32 1.0, %v1897
    %1900 = vrot.lane.b32.xlu0 %v1889, 96
    %v1901 = vpop.permute.xlu0 %1900
    %v1903 = vmul.f32 %v1898, %v1901
    %1905 = vrot.lane.b32.xlu0 %v1903, 32
    %v1906 = vpop.permute.xlu0 %1905
    %v1908 = vadd.f32 %v1819, %v1906
    %v1909 = vtanh.pop %v1908
    %v1910 = vsub.f32 1.0, %v1898
    %1912 = vrot.lane.b32.xlu0 %v1909, 112
    %v1913 = vpop.permute.xlu0 %1912
    %v1915 = vmul.f32 %v1910, %v1913
    %v1916 = vmul.f32 %v1898, %v1811
    %v1917 = vadd.f32 %v1915, %v1916
    %1919 = vrot.lane.b32.xlu0 %v1917, 112
    %v1920 = vpop.permute.xlu0 %1919
    %s1922 = scalar_lea.vmem [#allocation5], 4
    %1923 = vst.msk [vmem:[%s1922] sm:$0x3] %vm537, %v1920
    %s1924 = scalar_lea.vmem [#allocation3], 2
    %v1925 = vld [vmem:[%s1924] sm:$0x3]
    %v1926 = vsel %vm433, %v1920, 0
    %1928 = vmatprep.subr.mxu0 0.0
    %1929 = vmatpush1.msra.mxu0 0.0
    %1930 = vmatprep.subr.mxu0 0.0
    %1931 = vmatpush1.msra.mxu0 0.0
    %1932 = vmatprep.subr.mxu0 0.0
    %1933 = vmatpush1.msra.mxu0 0.0
    %1934 = vmatprep.subr.mxu0 0.0
    %1935 = vmatpush1.msra.mxu0 0.0
    %1936 = vmatprep.subr.mxu0 0.0
    %1937 = vmatpush1.msra.mxu0 0.0
    %1938 = vmatprep.subr.mxu0 0.0
    %1939 = vmatpush1.msra.mxu0 0.0
    %1940 = vmatprep.subr.mxu0 0.0
    %1941 = vmatpush1.msra.mxu0 0.0
    %1942 = vmatprep.subr.mxu0 0.0
    %1943 = vmatpush1.msra.mxu0 0.0
    %1944 = vmatprep.subr.mxu0 0.0
    %1945 = vmatpush1.msra.mxu0 0.0
    %1946 = vmatprep.subr.mxu0 0.0
    %1947 = vmatpush1.msra.mxu0 0.0
    %1948 = vmatprep.subr.mxu0 0.0
    %1949 = vmatpush1.msra.mxu0 0.0
    %1950 = vmatprep.subr.mxu0 0.0
    %1951 = vmatpush1.msra.mxu0 0.0
    %1952 = vmatprep.subr.mxu0 0.0
    %1953 = vmatpush1.msra.mxu0 0.0
    %1954 = vmatprep.subr.mxu0 0.0
    %1955 = vmatpush1.msra.mxu0 0.0
    %1956 = vmatprep.subr.mxu0 0.0
    %1957 = vmatpush1.msra.mxu0 %v1282
    %1958 = vmatprep.subr.mxu0 0.0
    %1959 = vmatpush1.msra.mxu0 %v1281
    %1960 = vmatprep.subr.mxu0 0.0
    %1961 = vmatpush2.msra.mxu0 0.0
    %1962 = vmatprep.subr.mxu0 0.0
    %1963 = vmatpush2.msra.mxu0 0.0
    %1964 = vmatprep.subr.mxu0 0.0
    %1965 = vmatpush2.msra.mxu0 0.0
    %1966 = vmatprep.subr.mxu0 0.0
    %1967 = vmatpush2.msra.mxu0 0.0
    %1968 = vmatprep.subr.mxu0 0.0
    %1969 = vmatpush2.msra.mxu0 0.0
    %1970 = vmatprep.subr.mxu0 0.0
    %1971 = vmatpush2.msra.mxu0 0.0
    %1972 = vmatprep.subr.mxu0 0.0
    %1973 = vmatpush2.msra.mxu0 0.0
    %1974 = vmatprep.subr.mxu0 0.0
    %1975 = vmatpush2.msra.mxu0 0.0
    %1976 = vmatprep.subr.mxu0 0.0
    %1977 = vmatpush2.msra.mxu0 0.0
    %1978 = vmatprep.subr.mxu0 0.0
    %1979 = vmatpush2.msra.mxu0 0.0
    %1980 = vmatprep.subr.mxu0 0.0
    %1981 = vmatpush2.msra.mxu0 0.0
    %1982 = vmatprep.subr.mxu0 0.0
    %1983 = vmatpush2.msra.mxu0 0.0
    %1984 = vmatprep.subr.mxu0 0.0
    %1985 = vmatpush2.msra.mxu0 0.0
    %1986 = vmatprep.subr.mxu0 0.0
    %1987 = vmatpush2.msra.mxu0 0.0
    %1988 = vmatprep.subr.mxu0 0.0
    %1989 = vmatpush2.msra.mxu0 0.0
    %1990 = vmatprep.subr.mxu0 0.0
    %1991 = vmatpush2.msra.mxu0 0.0
    %1992 = vmatprep.mubr.f32.mxu0 0.0
    %1993 = vmatmul.mubr.f32.gmra.mxu0 %v1926
    %v1994 = vpop.f32.mrf.mxu0
    %v1995 = vadd.f32 %v1288, %v1994
    %v1996 = vpop.f32.mrf.mxu0
    %1997 = vdwg.mxu0
    %v1998 = vadd.f32 %v1925, %v1995
    %v1999 = vxor.u32 %v1998, 2147483648
    %v2000 = vmul.f32 %v1999, 1.442695
    %v2001 = vpow.pop %v2000
    %v2002 = vadd.f32 %v2001, 1.0
    %v2003 = vrcp.pop %v2002
    %v2004 = vmul.f32 1.0, %v2003
    %2006 = vrot.lane.b32.xlu0 %v1995, 96
    %v2007 = vpop.permute.xlu0 %2006
    %v2009 = vmul.f32 %v2004, %v2007
    %2011 = vrot.lane.b32.xlu0 %v2009, 32
    %v2012 = vpop.permute.xlu0 %2011
    %v2014 = vadd.f32 %v1925, %v2012
    %v2015 = vtanh.pop %v2014
    %v2016 = vsub.f32 1.0, %v2004
    %2018 = vrot.lane.b32.xlu0 %v2015, 112
    %v2019 = vpop.permute.xlu0 %2018
    %v2021 = vmul.f32 %v2016, %v2019
    %v2022 = vmul.f32 %v2004, %v1917
    %v2023 = vadd.f32 %v2021, %v2022
    %2025 = vrot.lane.b32.xlu0 %v2023, 112
    %v2026 = vpop.permute.xlu0 %2025
    %s2028 = scalar_lea.vmem [#allocation5], 2
    %2029 = vst.msk [vmem:[%s2028] sm:$0x3] %vm537, %v2026
    %v2030 = vld [vmem:[#allocation3] sm:$0x3]
    %v2031 = vsel %vm433, %v2026, 0
    %2033 = vmatprep.subr.mxu0 0.0
    %2034 = vmatpush1.msra.mxu0 0.0
    %2035 = vmatprep.subr.mxu0 0.0
    %2036 = vmatpush1.msra.mxu0 0.0
    %2037 = vmatprep.subr.mxu0 0.0
    %2038 = vmatpush1.msra.mxu0 0.0
    %2039 = vmatprep.subr.mxu0 0.0
    %2040 = vmatpush1.msra.mxu0 0.0
    %2041 = vmatprep.subr.mxu0 0.0
    %2042 = vmatpush1.msra.mxu0 0.0
    %2043 = vmatprep.subr.mxu0 0.0
    %2044 = vmatpush1.msra.mxu0 0.0
    %2045 = vmatprep.subr.mxu0 0.0
    %2046 = vmatpush1.msra.mxu0 0.0
    %2047 = vmatprep.subr.mxu0 0.0
    %2048 = vmatpush1.msra.mxu0 0.0
    %2049 = vmatprep.subr.mxu0 0.0
    %2050 = vmatpush1.msra.mxu0 0.0
    %2051 = vmatprep.subr.mxu0 0.0
    %2052 = vmatpush1.msra.mxu0 0.0
    %2053 = vmatprep.subr.mxu0 0.0
    %2054 = vmatpush1.msra.mxu0 0.0
    %2055 = vmatprep.subr.mxu0 0.0
    %2056 = vmatpush1.msra.mxu0 0.0
    %2057 = vmatprep.subr.mxu0 0.0
    %2058 = vmatpush1.msra.mxu0 0.0
    %2059 = vmatprep.subr.mxu0 0.0
    %2060 = vmatpush1.msra.mxu0 0.0
    %2061 = vmatprep.subr.mxu0 0.0
    %2062 = vmatpush1.msra.mxu0 %v1282
    %2063 = vmatprep.subr.mxu0 0.0
    %2064 = vmatpush1.msra.mxu0 %v1281
    %2065 = vmatprep.subr.mxu0 0.0
    %2066 = vmatpush2.msra.mxu0 0.0
    %2067 = vmatprep.subr.mxu0 0.0
    %2068 = vmatpush2.msra.mxu0 0.0
    %2069 = vmatprep.subr.mxu0 0.0
    %2070 = vmatpush2.msra.mxu0 0.0
    %2071 = vmatprep.subr.mxu0 0.0
    %2072 = vmatpush2.msra.mxu0 0.0
    %2073 = vmatprep.subr.mxu0 0.0
    %2074 = vmatpush2.msra.mxu0 0.0
    %2075 = vmatprep.subr.mxu0 0.0
    %2076 = vmatpush2.msra.mxu0 0.0
    %2077 = vmatprep.subr.mxu0 0.0
    %2078 = vmatpush2.msra.mxu0 0.0
    %2079 = vmatprep.subr.mxu0 0.0
    %2080 = vmatpush2.msra.mxu0 0.0
    %2081 = vmatprep.subr.mxu0 0.0
    %2082 = vmatpush2.msra.mxu0 0.0
    %2083 = vmatprep.subr.mxu0 0.0
    %2084 = vmatpush2.msra.mxu0 0.0
    %2085 = vmatprep.subr.mxu0 0.0
    %2086 = vmatpush2.msra.mxu0 0.0
    %2087 = vmatprep.subr.mxu0 0.0
    %2088 = vmatpush2.msra.mxu0 0.0
    %2089 = vmatprep.subr.mxu0 0.0
    %2090 = vmatpush2.msra.mxu0 0.0
    %2091 = vmatprep.subr.mxu0 0.0
    %2092 = vmatpush2.msra.mxu0 0.0
    %2093 = vmatprep.subr.mxu0 0.0
    %2094 = vmatpush2.msra.mxu0 0.0
    %2095 = vmatprep.subr.mxu0 0.0
    %2096 = vmatpush2.msra.mxu0 0.0
    %2097 = vmatprep.mubr.f32.mxu0 0.0
    %2098 = vmatmul.mubr.f32.gmra.mxu0 %v2031
    %v2099 = vpop.f32.mrf.mxu0
    %v2100 = vadd.f32 %v1288, %v2099
    %v2101 = vpop.f32.mrf.mxu0
    %2102 = vdwg.mxu0
    %v2103 = vadd.f32 %v2030, %v2100
    %v2104 = vxor.u32 %v2103, 2147483648
    %v2105 = vmul.f32 %v2104, 1.442695
    %v2106 = vpow.pop %v2105
    %v2107 = vadd.f32 %v2106, 1.0
    %v2108 = vrcp.pop %v2107
    %v2109 = vmul.f32 1.0, %v2108
    %2111 = vrot.lane.b32.xlu0 %v2100, 96
    %v2112 = vpop.permute.xlu0 %2111
    %v2114 = vmul.f32 %v2109, %v2112
    %2116 = vrot.lane.b32.xlu0 %v2114, 32
    %v2117 = vpop.permute.xlu0 %2116
    %v2119 = vadd.f32 %v2030, %v2117
    %v2120 = vtanh.pop %v2119
    %v2121 = vsub.f32 1.0, %v2109
    %2123 = vrot.lane.b32.xlu0 %v2120, 112
    %v2124 = vpop.permute.xlu0 %2123
    %v2126 = vmul.f32 %v2121, %v2124
    %v2127 = vmul.f32 %v2109, %v2023
    %v2128 = vadd.f32 %v2126, %v2127
    %2130 = vrot.lane.b32.xlu0 %v2128, 112
    %v2131 = vpop.permute.xlu0 %2130
    %2133 = vst.msk [vmem:[#allocation5] sm:$0x3] %vm537, %v2131
    %v2134 = vld [vmem:[#allocation4] sm:$0xff]
    %v2135 = vld [vmem:[#allocation4 + $0x8] sm:$0xff]
    %v2136 = vld [vmem:[#allocation25] sm:$0xff]
    %v2137 = vld [vmem:[#allocation25 + $0x8] sm:$0xff]
    %v2138 = vld [vmem:[#allocation5] sm:$0xff]
    %v2139 = vld [vmem:[#allocation5 + $0x8] sm:$0xff]
    %v2140 = vld [vmem:[#allocation26] sm:$0xff]
    %v2141 = vld [vmem:[#allocation26 + $0x8] sm:$0xff]
    %v2143 = vsel %vm433, %v2138, 0
    %v2146 = vsel %vm433, %v2139, 0
    %2148 = vmatprep.subr.mxu0 0.0
    %2149 = vmatpush1.msra.mxu0 0.0
    %2150 = vmatprep.subr.mxu0 0.0
    %2151 = vmatpush1.msra.mxu0 0.0
    %2152 = vmatprep.subr.mxu0 0.0
    %2153 = vmatpush1.msra.mxu0 0.0
    %2154 = vmatprep.subr.mxu0 0.0
    %2155 = vmatpush1.msra.mxu0 0.0
    %2156 = vmatprep.subr.mxu0 0.0
    %2157 = vmatpush1.msra.mxu0 0.0
    %2158 = vmatprep.subr.mxu0 0.0
    %2159 = vmatpush1.msra.mxu0 0.0
    %2160 = vmatprep.subr.mxu0 0.0
    %2161 = vmatpush1.msra.mxu0 0.0
    %2162 = vmatprep.subr.mxu0 0.0
    %2163 = vmatpush1.msra.mxu0 0.0
    %2164 = vmatprep.subr.mxu0 0.0
    %2165 = vmatpush1.msra.mxu0 0.0
    %2166 = vmatprep.subr.mxu0 0.0
    %2167 = vmatpush1.msra.mxu0 0.0
    %2168 = vmatprep.subr.mxu0 0.0
    %2169 = vmatpush1.msra.mxu0 0.0
    %2170 = vmatprep.subr.mxu0 0.0
    %2171 = vmatpush1.msra.mxu0 0.0
    %2172 = vmatprep.subr.mxu0 0.0
    %2173 = vmatpush1.msra.mxu0 0.0
    %2174 = vmatprep.subr.mxu0 0.0
    %2175 = vmatpush1.msra.mxu0 0.0
    %2176 = vmatprep.subr.mxu0 0.0
    %2177 = vmatpush1.msra.mxu0 %v2141
    %2178 = vmatprep.subr.mxu0 0.0
    %2179 = vmatpush1.msra.mxu0 %v2140
    %2180 = vmatprep.subr.mxu0 0.0
    %2181 = vmatpush2.msra.mxu0 0.0
    %2182 = vmatprep.subr.mxu0 0.0
    %2183 = vmatpush2.msra.mxu0 0.0
    %2184 = vmatprep.subr.mxu0 0.0
    %2185 = vmatpush2.msra.mxu0 0.0
    %2186 = vmatprep.subr.mxu0 0.0
    %2187 = vmatpush2.msra.mxu0 0.0
    %2188 = vmatprep.subr.mxu0 0.0
    %2189 = vmatpush2.msra.mxu0 0.0
    %2190 = vmatprep.subr.mxu0 0.0
    %2191 = vmatpush2.msra.mxu0 0.0
    %2192 = vmatprep.subr.mxu0 0.0
    %2193 = vmatpush2.msra.mxu0 0.0
    %2194 = vmatprep.subr.mxu0 0.0
    %2195 = vmatpush2.msra.mxu0 0.0
    %2196 = vmatprep.subr.mxu0 0.0
    %2197 = vmatpush2.msra.mxu0 0.0
    %2198 = vmatprep.subr.mxu0 0.0
    %2199 = vmatpush2.msra.mxu0 0.0
    %2200 = vmatprep.subr.mxu0 0.0
    %2201 = vmatpush2.msra.mxu0 0.0
    %2202 = vmatprep.subr.mxu0 0.0
    %2203 = vmatpush2.msra.mxu0 0.0
    %2204 = vmatprep.subr.mxu0 0.0
    %2205 = vmatpush2.msra.mxu0 0.0
    %2206 = vmatprep.subr.mxu0 0.0
    %2207 = vmatpush2.msra.mxu0 0.0
    %2208 = vmatprep.subr.mxu0 0.0
    %2209 = vmatpush2.msra.mxu0 0.0
    %2210 = vmatprep.subr.mxu0 0.0
    %2211 = vmatpush2.msra.mxu0 0.0
    %2212 = vmatprep.mubr.f32.mxu0 0.0
    %2213 = vmatmul.mubr.f32.gmra.mxu0 %v2143
    %v2214 = vpop.f32.mrf.mxu0
    %v2215 = vadd.f32 0.0, %v2214
    %v2216 = vpop.f32.mrf.mxu0
    %2217 = vmatprep.mubr.f32.mxu0 0.0
    %2218 = vmatmul.mubr.f32.gmra.mxu0 %v2146
    %v2219 = vpop.f32.mrf.mxu0
    %v2220 = vadd.f32 0.0, %v2219
    %v2221 = vpop.f32.mrf.mxu0
    %2222 = vdwg.mxu0
    %v2224 = vsel %vm433, %v2134, 0
    %v2227 = vsel %vm433, %v2135, 0
    %2229 = vmatprep.subr.mxu0 0.0
    %2230 = vmatpush1.msra.mxu0 0.0
    %2231 = vmatprep.subr.mxu0 0.0
    %2232 = vmatpush1.msra.mxu0 0.0
    %2233 = vmatprep.subr.mxu0 0.0
    %2234 = vmatpush1.msra.mxu0 0.0
    %2235 = vmatprep.subr.mxu0 0.0
    %2236 = vmatpush1.msra.mxu0 0.0
    %2237 = vmatprep.subr.mxu0 0.0
    %2238 = vmatpush1.msra.mxu0 0.0
    %2239 = vmatprep.subr.mxu0 0.0
    %2240 = vmatpush1.msra.mxu0 0.0
    %2241 = vmatprep.subr.mxu0 0.0
    %2242 = vmatpush1.msra.mxu0 0.0
    %2243 = vmatprep.subr.mxu0 0.0
    %2244 = vmatpush1.msra.mxu0 0.0
    %2245 = vmatprep.subr.mxu0 0.0
    %2246 = vmatpush1.msra.mxu0 0.0
    %2247 = vmatprep.subr.mxu0 0.0
    %2248 = vmatpush1.msra.mxu0 0.0
    %2249 = vmatprep.subr.mxu0 0.0
    %2250 = vmatpush1.msra.mxu0 0.0
    %2251 = vmatprep.subr.mxu0 0.0
    %2252 = vmatpush1.msra.mxu0 0.0
    %2253 = vmatprep.subr.mxu0 0.0
    %2254 = vmatpush1.msra.mxu0 0.0
    %2255 = vmatprep.subr.mxu0 0.0
    %2256 = vmatpush1.msra.mxu0 0.0
    %2257 = vmatprep.subr.mxu0 0.0
    %2258 = vmatpush1.msra.mxu0 %v2137
    %2259 = vmatprep.subr.mxu0 0.0
    %2260 = vmatpush1.msra.mxu0 %v2136
    %2261 = vmatprep.subr.mxu0 0.0
    %2262 = vmatpush2.msra.mxu0 0.0
    %2263 = vmatprep.subr.mxu0 0.0
    %2264 = vmatpush2.msra.mxu0 0.0
    %2265 = vmatprep.subr.mxu0 0.0
    %2266 = vmatpush2.msra.mxu0 0.0
    %2267 = vmatprep.subr.mxu0 0.0
    %2268 = vmatpush2.msra.mxu0 0.0
    %2269 = vmatprep.subr.mxu0 0.0
    %2270 = vmatpush2.msra.mxu0 0.0
    %2271 = vmatprep.subr.mxu0 0.0
    %2272 = vmatpush2.msra.mxu0 0.0
    %2273 = vmatprep.subr.mxu0 0.0
    %2274 = vmatpush2.msra.mxu0 0.0
    %2275 = vmatprep.subr.mxu0 0.0
    %2276 = vmatpush2.msra.mxu0 0.0
    %2277 = vmatprep.subr.mxu0 0.0
    %2278 = vmatpush2.msra.mxu0 0.0
    %2279 = vmatprep.subr.mxu0 0.0
    %2280 = vmatpush2.msra.mxu0 0.0
    %2281 = vmatprep.subr.mxu0 0.0
    %2282 = vmatpush2.msra.mxu0 0.0
    %2283 = vmatprep.subr.mxu0 0.0
    %2284 = vmatpush2.msra.mxu0 0.0
    %2285 = vmatprep.subr.mxu0 0.0
    %2286 = vmatpush2.msra.mxu0 0.0
    %2287 = vmatprep.subr.mxu0 0.0
    %2288 = vmatpush2.msra.mxu0 0.0
    %2289 = vmatprep.subr.mxu0 0.0
    %2290 = vmatpush2.msra.mxu0 0.0
    %2291 = vmatprep.subr.mxu0 0.0
    %2292 = vmatpush2.msra.mxu0 0.0
    %2293 = vmatprep.mubr.f32.mxu0 0.0
    %2294 = vmatmul.mubr.f32.gmra.mxu0 %v2224
    %v2295 = vpop.f32.mrf.mxu0
    %v2296 = vadd.f32 %v2215, %v2295
    %v2297 = vpop.f32.mrf.mxu0
    %2298 = vmatprep.mubr.f32.mxu0 0.0
    %2299 = vmatmul.mubr.f32.gmra.mxu0 %v2227
    %v2300 = vpop.f32.mrf.mxu0
    %v2301 = vadd.f32 %v2220, %v2300
    %v2302 = vpop.f32.mrf.mxu0
    %2303 = vdwg.mxu0
    %v2304 = vld [vmem:[#allocation28] sm:$0x1]
    %v2306 = vlaneseq
    %v2307 = vshrl.u32 %v2306, 7
    %v2308 = vsub.s32 0, %v2307
    %v2309 = vrot.slane %v2304, %v2308
    %v2311 = vadd.f32 %v2296, %v2309
    %v2312 = vadd.f32 %v2301, %v2309
    %2313 = vst [vmem:[#allocation6] sm:$0xff] %v2311
    %2314 = vst [vmem:[#allocation6 + $0x8] sm:$0xff] %v2312
    %v2315 = vld [vmem:[%s11] sm:$0xff]
    %v2316 = vld [vmem:[%s11 + $0x8] sm:$0xff]
    %v2317 = vld [vmem:[%s11 + $0x10] sm:$0xff]
    %v2318 = vld [vmem:[%s11 + $0x18] sm:$0xff]
    %v2319 = vld [vmem:[#allocation6] sm:$0x3]
    %vm2320 = vcmask 261120
    %v2321 = vsel %vm2320, 0.0, 0
    %2323 = vmatprep.subr.mxu0 0.0
    %2324 = vmatpush1.msra.mxu0 0.0
    %2325 = vmatprep.subr.mxu0 0.0
    %2326 = vmatpush1.msra.mxu0 0.0
    %2327 = vmatprep.subr.mxu0 0.0
    %2328 = vmatpush1.msra.mxu0 0.0
    %2329 = vmatprep.subr.mxu0 0.0
    %2330 = vmatpush1.msra.mxu0 0.0
    %2331 = vmatprep.subr.mxu0 0.0
    %2332 = vmatpush1.msra.mxu0 0.0
    %2333 = vmatprep.subr.mxu0 0.0
    %2334 = vmatpush1.msra.mxu0 0.0
    %2335 = vmatprep.subr.mxu0 0.0
    %2336 = vmatpush1.msra.mxu0 0.0
    %2337 = vmatprep.subr.mxu0 0.0
    %2338 = vmatpush1.msra.mxu0 0.0
    %2339 = vmatprep.subr.mxu0 0.0
    %2340 = vmatpush1.msra.mxu0 0.0
    %2341 = vmatprep.subr.mxu0 0.0
    %2342 = vmatpush1.msra.mxu0 0.0
    %2343 = vmatprep.subr.mxu0 0.0
    %2344 = vmatpush1.msra.mxu0 0.0
    %2345 = vmatprep.subr.mxu0 0.0
    %2346 = vmatpush1.msra.mxu0 0.0
    %2347 = vmatprep.subr.mxu0 0.0
    %2348 = vmatpush1.msra.mxu0 %v2318
    %2349 = vmatprep.subr.mxu0 0.0
    %2350 = vmatpush1.msra.mxu0 %v2317
    %2351 = vmatprep.subr.mxu0 0.0
    %2352 = vmatpush1.msra.mxu0 %v2316
    %2353 = vmatprep.subr.mxu0 0.0
    %2354 = vmatpush1.msra.mxu0 %v2315
    %2355 = vmatprep.subr.mxu0 0.0
    %2356 = vmatpush2.msra.mxu0 0.0
    %2357 = vmatprep.subr.mxu0 0.0
    %2358 = vmatpush2.msra.mxu0 0.0
    %2359 = vmatprep.subr.mxu0 0.0
    %2360 = vmatpush2.msra.mxu0 0.0
    %2361 = vmatprep.subr.mxu0 0.0
    %2362 = vmatpush2.msra.mxu0 0.0
    %2363 = vmatprep.subr.mxu0 0.0
    %2364 = vmatpush2.msra.mxu0 0.0
    %2365 = vmatprep.subr.mxu0 0.0
    %2366 = vmatpush2.msra.mxu0 0.0
    %2367 = vmatprep.subr.mxu0 0.0
    %2368 = vmatpush2.msra.mxu0 0.0
    %2369 = vmatprep.subr.mxu0 0.0
    %2370 = vmatpush2.msra.mxu0 0.0
    %2371 = vmatprep.subr.mxu0 0.0
    %2372 = vmatpush2.msra.mxu0 0.0
    %2373 = vmatprep.subr.mxu0 0.0
    %2374 = vmatpush2.msra.mxu0 0.0
    %2375 = vmatprep.subr.mxu0 0.0
    %2376 = vmatpush2.msra.mxu0 0.0
    %2377 = vmatprep.subr.mxu0 0.0
    %2378 = vmatpush2.msra.mxu0 0.0
    %2379 = vmatprep.subr.mxu0 0.0
    %2380 = vmatpush2.msra.mxu0 0.0
    %2381 = vmatprep.subr.mxu0 0.0
    %2382 = vmatpush2.msra.mxu0 0.0
    %2383 = vmatprep.subr.mxu0 0.0
    %2384 = vmatpush2.msra.mxu0 0.0
    %2385 = vmatprep.subr.mxu0 0.0
    %2386 = vmatpush2.msra.mxu0 0.0
    %2387 = vmatprep.mubr.f32.mxu0 0.0
    %2388 = vmatmul.mubr.f32.gmra.mxu0 %v2321
    %v2389 = vpop.f32.mrf.mxu0
    %v2390 = vadd.f32 0.0, %v2389
    %v2391 = vpop.f32.mrf.mxu0
    %2392 = vdwg.mxu0
    %v2393 = vadd.f32 %v2319, %v2390
    %v2394 = vxor.u32 %v2393, 2147483648
    %v2395 = vmul.f32 %v2394, 1.442695
    %v2396 = vpow.pop %v2395
    %v2397 = vadd.f32 %v2396, 1.0
    %v2398 = vrcp.pop %v2397
    %v2399 = vmul.f32 1.0, %v2398
    %v2400 = vtanh.pop %v2393
    %v2401 = vmul.f32 %v2399, 0.0
    %2403 = vrot.lane.b32.xlu0 %v2400, 64
    %v2404 = vpop.permute.xlu0 %2403
    %v2406 = vmul.f32 %v2399, %v2404
    %2408 = vrot.lane.b32.xlu0 %v2406, 32
    %v2409 = vpop.permute.xlu0 %2408
    %v2411 = vadd.f32 %v2401, %v2409
    %v2412 = vtanh.pop %v2411
    %2414 = vrot.lane.b32.xlu0 %v2412, 64
    %v2415 = vpop.permute.xlu0 %2414
    %v2417 = vmul.f32 %v2399, %v2415
    %2419 = vrot.lane.b32.xlu0 %v2417, 32
    %v2420 = vpop.permute.xlu0 %2419
    %vm2422 = vcmask 254976
    %2423 = vst.msk [vmem:[#allocation7] sm:$0x3] %vm2422, %v2420
    %s2424 = scalar_lea.vmem [#allocation6], 2
    %v2425 = vld [vmem:[%s2424] sm:$0x3]
    %v2426 = vsel %vm2320, %v2420, 0
    %2428 = vmatprep.subr.mxu0 0.0
    %2429 = vmatpush1.msra.mxu0 0.0
    %2430 = vmatprep.subr.mxu0 0.0
    %2431 = vmatpush1.msra.mxu0 0.0
    %2432 = vmatprep.subr.mxu0 0.0
    %2433 = vmatpush1.msra.mxu0 0.0
    %2434 = vmatprep.subr.mxu0 0.0
    %2435 = vmatpush1.msra.mxu0 0.0
    %2436 = vmatprep.subr.mxu0 0.0
    %2437 = vmatpush1.msra.mxu0 0.0
    %2438 = vmatprep.subr.mxu0 0.0
    %2439 = vmatpush1.msra.mxu0 0.0
    %2440 = vmatprep.subr.mxu0 0.0
    %2441 = vmatpush1.msra.mxu0 0.0
    %2442 = vmatprep.subr.mxu0 0.0
    %2443 = vmatpush1.msra.mxu0 0.0
    %2444 = vmatprep.subr.mxu0 0.0
    %2445 = vmatpush1.msra.mxu0 0.0
    %2446 = vmatprep.subr.mxu0 0.0
    %2447 = vmatpush1.msra.mxu0 0.0
    %2448 = vmatprep.subr.mxu0 0.0
    %2449 = vmatpush1.msra.mxu0 0.0
    %2450 = vmatprep.subr.mxu0 0.0
    %2451 = vmatpush1.msra.mxu0 0.0
    %2452 = vmatprep.subr.mxu0 0.0
    %2453 = vmatpush1.msra.mxu0 %v2318
    %2454 = vmatprep.subr.mxu0 0.0
    %2455 = vmatpush1.msra.mxu0 %v2317
    %2456 = vmatprep.subr.mxu0 0.0
    %2457 = vmatpush1.msra.mxu0 %v2316
    %2458 = vmatprep.subr.mxu0 0.0
    %2459 = vmatpush1.msra.mxu0 %v2315
    %2460 = vmatprep.subr.mxu0 0.0
    %2461 = vmatpush2.msra.mxu0 0.0
    %2462 = vmatprep.subr.mxu0 0.0
    %2463 = vmatpush2.msra.mxu0 0.0
    %2464 = vmatprep.subr.mxu0 0.0
    %2465 = vmatpush2.msra.mxu0 0.0
    %2466 = vmatprep.subr.mxu0 0.0
    %2467 = vmatpush2.msra.mxu0 0.0
    %2468 = vmatprep.subr.mxu0 0.0
    %2469 = vmatpush2.msra.mxu0 0.0
    %2470 = vmatprep.subr.mxu0 0.0
    %2471 = vmatpush2.msra.mxu0 0.0
    %2472 = vmatprep.subr.mxu0 0.0
    %2473 = vmatpush2.msra.mxu0 0.0
    %2474 = vmatprep.subr.mxu0 0.0
    %2475 = vmatpush2.msra.mxu0 0.0
    %2476 = vmatprep.subr.mxu0 0.0
    %2477 = vmatpush2.msra.mxu0 0.0
    %2478 = vmatprep.subr.mxu0 0.0
    %2479 = vmatpush2.msra.mxu0 0.0
    %2480 = vmatprep.subr.mxu0 0.0
    %2481 = vmatpush2.msra.mxu0 0.0
    %2482 = vmatprep.subr.mxu0 0.0
    %2483 = vmatpush2.msra.mxu0 0.0
    %2484 = vmatprep.subr.mxu0 0.0
    %2485 = vmatpush2.msra.mxu0 0.0
    %2486 = vmatprep.subr.mxu0 0.0
    %2487 = vmatpush2.msra.mxu0 0.0
    %2488 = vmatprep.subr.mxu0 0.0
    %2489 = vmatpush2.msra.mxu0 0.0
    %2490 = vmatprep.subr.mxu0 0.0
    %2491 = vmatpush2.msra.mxu0 0.0
    %2492 = vmatprep.mubr.f32.mxu0 0.0
    %2493 = vmatmul.mubr.f32.gmra.mxu0 %v2426
    %v2494 = vpop.f32.mrf.mxu0
    %v2495 = vadd.f32 0.0, %v2494
    %v2496 = vpop.f32.mrf.mxu0
    %2497 = vdwg.mxu0
    %v2498 = vadd.f32 %v2425, %v2495
    %v2499 = vxor.u32 %v2498, 2147483648
    %v2500 = vmul.f32 %v2499, 1.442695
    %v2501 = vpow.pop %v2500
    %v2502 = vadd.f32 %v2501, 1.0
    %v2503 = vrcp.pop %v2502
    %v2504 = vmul.f32 1.0, %v2503
    %v2505 = vtanh.pop %v2498
    %v2506 = vmul.f32 %v2504, %v2411
    %2508 = vrot.lane.b32.xlu0 %v2505, 64
    %v2509 = vpop.permute.xlu0 %2508
    %v2511 = vmul.f32 %v2504, %v2509
    %2513 = vrot.lane.b32.xlu0 %v2511, 32
    %v2514 = vpop.permute.xlu0 %2513
    %v2516 = vadd.f32 %v2506, %v2514
    %v2517 = vtanh.pop %v2516
    %2519 = vrot.lane.b32.xlu0 %v2517, 64
    %v2520 = vpop.permute.xlu0 %2519
    %v2522 = vmul.f32 %v2504, %v2520
    %2524 = vrot.lane.b32.xlu0 %v2522, 32
    %v2525 = vpop.permute.xlu0 %2524
    %s2527 = scalar_lea.vmem [#allocation7], 2
    %2528 = vst.msk [vmem:[%s2527] sm:$0x3] %vm2422, %v2525
    %s2529 = scalar_lea.vmem [#allocation6], 4
    %v2530 = vld [vmem:[%s2529] sm:$0x3]
    %v2531 = vsel %vm2320, %v2525, 0
    %2533 = vmatprep.subr.mxu0 0.0
    %2534 = vmatpush1.msra.mxu0 0.0
    %2535 = vmatprep.subr.mxu0 0.0
    %2536 = vmatpush1.msra.mxu0 0.0
    %2537 = vmatprep.subr.mxu0 0.0
    %2538 = vmatpush1.msra.mxu0 0.0
    %2539 = vmatprep.subr.mxu0 0.0
    %2540 = vmatpush1.msra.mxu0 0.0
    %2541 = vmatprep.subr.mxu0 0.0
    %2542 = vmatpush1.msra.mxu0 0.0
    %2543 = vmatprep.subr.mxu0 0.0
    %2544 = vmatpush1.msra.mxu0 0.0
    %2545 = vmatprep.subr.mxu0 0.0
    %2546 = vmatpush1.msra.mxu0 0.0
    %2547 = vmatprep.subr.mxu0 0.0
    %2548 = vmatpush1.msra.mxu0 0.0
    %2549 = vmatprep.subr.mxu0 0.0
    %2550 = vmatpush1.msra.mxu0 0.0
    %2551 = vmatprep.subr.mxu0 0.0
    %2552 = vmatpush1.msra.mxu0 0.0
    %2553 = vmatprep.subr.mxu0 0.0
    %2554 = vmatpush1.msra.mxu0 0.0
    %2555 = vmatprep.subr.mxu0 0.0
    %2556 = vmatpush1.msra.mxu0 0.0
    %2557 = vmatprep.subr.mxu0 0.0
    %2558 = vmatpush1.msra.mxu0 %v2318
    %2559 = vmatprep.subr.mxu0 0.0
    %2560 = vmatpush1.msra.mxu0 %v2317
    %2561 = vmatprep.subr.mxu0 0.0
    %2562 = vmatpush1.msra.mxu0 %v2316
    %2563 = vmatprep.subr.mxu0 0.0
    %2564 = vmatpush1.msra.mxu0 %v2315
    %2565 = vmatprep.subr.mxu0 0.0
    %2566 = vmatpush2.msra.mxu0 0.0
    %2567 = vmatprep.subr.mxu0 0.0
    %2568 = vmatpush2.msra.mxu0 0.0
    %2569 = vmatprep.subr.mxu0 0.0
    %2570 = vmatpush2.msra.mxu0 0.0
    %2571 = vmatprep.subr.mxu0 0.0
    %2572 = vmatpush2.msra.mxu0 0.0
    %2573 = vmatprep.subr.mxu0 0.0
    %2574 = vmatpush2.msra.mxu0 0.0
    %2575 = vmatprep.subr.mxu0 0.0
    %2576 = vmatpush2.msra.mxu0 0.0
    %2577 = vmatprep.subr.mxu0 0.0
    %2578 = vmatpush2.msra.mxu0 0.0
    %2579 = vmatprep.subr.mxu0 0.0
    %2580 = vmatpush2.msra.mxu0 0.0
    %2581 = vmatprep.subr.mxu0 0.0
    %2582 = vmatpush2.msra.mxu0 0.0
    %2583 = vmatprep.subr.mxu0 0.0
    %2584 = vmatpush2.msra.mxu0 0.0
    %2585 = vmatprep.subr.mxu0 0.0
    %2586 = vmatpush2.msra.mxu0 0.0
    %2587 = vmatprep.subr.mxu0 0.0
    %2588 = vmatpush2.msra.mxu0 0.0
    %2589 = vmatprep.subr.mxu0 0.0
    %2590 = vmatpush2.msra.mxu0 0.0
    %2591 = vmatprep.subr.mxu0 0.0
    %2592 = vmatpush2.msra.mxu0 0.0
    %2593 = vmatprep.subr.mxu0 0.0
    %2594 = vmatpush2.msra.mxu0 0.0
    %2595 = vmatprep.subr.mxu0 0.0
    %2596 = vmatpush2.msra.mxu0 0.0
    %2597 = vmatprep.mubr.f32.mxu0 0.0
    %2598 = vmatmul.mubr.f32.gmra.mxu0 %v2531
    %v2599 = vpop.f32.mrf.mxu0
    %v2600 = vadd.f32 0.0, %v2599
    %v2601 = vpop.f32.mrf.mxu0
    %2602 = vdwg.mxu0
    %v2603 = vadd.f32 %v2530, %v2600
    %v2604 = vxor.u32 %v2603, 2147483648
    %v2605 = vmul.f32 %v2604, 1.442695
    %v2606 = vpow.pop %v2605
    %v2607 = vadd.f32 %v2606, 1.0
    %v2608 = vrcp.pop %v2607
    %v2609 = vmul.f32 1.0, %v2608
    %v2610 = vtanh.pop %v2603
    %v2611 = vmul.f32 %v2609, %v2516
    %2613 = vrot.lane.b32.xlu0 %v2610, 64
    %v2614 = vpop.permute.xlu0 %2613
    %v2616 = vmul.f32 %v2609, %v2614
    %2618 = vrot.lane.b32.xlu0 %v2616, 32
    %v2619 = vpop.permute.xlu0 %2618
    %v2621 = vadd.f32 %v2611, %v2619
    %v2622 = vtanh.pop %v2621
    %2624 = vrot.lane.b32.xlu0 %v2622, 64
    %v2625 = vpop.permute.xlu0 %2624
    %v2627 = vmul.f32 %v2609, %v2625
    %2629 = vrot.lane.b32.xlu0 %v2627, 32
    %v2630 = vpop.permute.xlu0 %2629
    %s2632 = scalar_lea.vmem [#allocation7], 4
    %2633 = vst.msk [vmem:[%s2632] sm:$0x3] %vm2422, %v2630
    %s2634 = scalar_lea.vmem [#allocation6], 6
    %v2635 = vld [vmem:[%s2634] sm:$0x3]
    %v2636 = vsel %vm2320, %v2630, 0
    %2638 = vmatprep.subr.mxu0 0.0
    %2639 = vmatpush1.msra.mxu0 0.0
    %2640 = vmatprep.subr.mxu0 0.0
    %2641 = vmatpush1.msra.mxu0 0.0
    %2642 = vmatprep.subr.mxu0 0.0
    %2643 = vmatpush1.msra.mxu0 0.0
    %2644 = vmatprep.subr.mxu0 0.0
    %2645 = vmatpush1.msra.mxu0 0.0
    %2646 = vmatprep.subr.mxu0 0.0
    %2647 = vmatpush1.msra.mxu0 0.0
    %2648 = vmatprep.subr.mxu0 0.0
    %2649 = vmatpush1.msra.mxu0 0.0
    %2650 = vmatprep.subr.mxu0 0.0
    %2651 = vmatpush1.msra.mxu0 0.0
    %2652 = vmatprep.subr.mxu0 0.0
    %2653 = vmatpush1.msra.mxu0 0.0
    %2654 = vmatprep.subr.mxu0 0.0
    %2655 = vmatpush1.msra.mxu0 0.0
    %2656 = vmatprep.subr.mxu0 0.0
    %2657 = vmatpush1.msra.mxu0 0.0
    %2658 = vmatprep.subr.mxu0 0.0
    %2659 = vmatpush1.msra.mxu0 0.0
    %2660 = vmatprep.subr.mxu0 0.0
    %2661 = vmatpush1.msra.mxu0 0.0
    %2662 = vmatprep.subr.mxu0 0.0
    %2663 = vmatpush1.msra.mxu0 %v2318
    %2664 = vmatprep.subr.mxu0 0.0
    %2665 = vmatpush1.msra.mxu0 %v2317
    %2666 = vmatprep.subr.mxu0 0.0
    %2667 = vmatpush1.msra.mxu0 %v2316
    %2668 = vmatprep.subr.mxu0 0.0
    %2669 = vmatpush1.msra.mxu0 %v2315
    %2670 = vmatprep.subr.mxu0 0.0
    %2671 = vmatpush2.msra.mxu0 0.0
    %2672 = vmatprep.subr.mxu0 0.0
    %2673 = vmatpush2.msra.mxu0 0.0
    %2674 = vmatprep.subr.mxu0 0.0
    %2675 = vmatpush2.msra.mxu0 0.0
    %2676 = vmatprep.subr.mxu0 0.0
    %2677 = vmatpush2.msra.mxu0 0.0
    %2678 = vmatprep.subr.mxu0 0.0
    %2679 = vmatpush2.msra.mxu0 0.0
    %2680 = vmatprep.subr.mxu0 0.0
    %2681 = vmatpush2.msra.mxu0 0.0
    %2682 = vmatprep.subr.mxu0 0.0
    %2683 = vmatpush2.msra.mxu0 0.0
    %2684 = vmatprep.subr.mxu0 0.0
    %2685 = vmatpush2.msra.mxu0 0.0
    %2686 = vmatprep.subr.mxu0 0.0
    %2687 = vmatpush2.msra.mxu0 0.0
    %2688 = vmatprep.subr.mxu0 0.0
    %2689 = vmatpush2.msra.mxu0 0.0
    %2690 = vmatprep.subr.mxu0 0.0
    %2691 = vmatpush2.msra.mxu0 0.0
    %2692 = vmatprep.subr.mxu0 0.0
    %2693 = vmatpush2.msra.mxu0 0.0
    %2694 = vmatprep.subr.mxu0 0.0
    %2695 = vmatpush2.msra.mxu0 0.0
    %2696 = vmatprep.subr.mxu0 0.0
    %2697 = vmatpush2.msra.mxu0 0.0
    %2698 = vmatprep.subr.mxu0 0.0
    %2699 = vmatpush2.msra.mxu0 0.0
    %2700 = vmatprep.subr.mxu0 0.0
    %2701 = vmatpush2.msra.mxu0 0.0
    %2702 = vmatprep.mubr.f32.mxu0 0.0
    %2703 = vmatmul.mubr.f32.gmra.mxu0 %v2636
    %v2704 = vpop.f32.mrf.mxu0
    %v2705 = vadd.f32 0.0, %v2704
    %v2706 = vpop.f32.mrf.mxu0
    %2707 = vdwg.mxu0
    %v2708 = vadd.f32 %v2635, %v2705
    %v2709 = vxor.u32 %v2708, 2147483648
    %v2710 = vmul.f32 %v2709, 1.442695
    %v2711 = vpow.pop %v2710
    %v2712 = vadd.f32 %v2711, 1.0
    %v2713 = vrcp.pop %v2712
    %v2714 = vmul.f32 1.0, %v2713
    %v2715 = vtanh.pop %v2708
    %v2716 = vmul.f32 %v2714, %v2621
    %2718 = vrot.lane.b32.xlu0 %v2715, 64
    %v2719 = vpop.permute.xlu0 %2718
    %v2721 = vmul.f32 %v2714, %v2719
    %2723 = vrot.lane.b32.xlu0 %v2721, 32
    %v2724 = vpop.permute.xlu0 %2723
    %v2726 = vadd.f32 %v2716, %v2724
    %v2727 = vtanh.pop %v2726
    %2729 = vrot.lane.b32.xlu0 %v2727, 64
    %v2730 = vpop.permute.xlu0 %2729
    %v2732 = vmul.f32 %v2714, %v2730
    %2734 = vrot.lane.b32.xlu0 %v2732, 32
    %v2735 = vpop.permute.xlu0 %2734
    %s2737 = scalar_lea.vmem [#allocation7], 6
    %2738 = vst.msk [vmem:[%s2737] sm:$0x3] %vm2422, %v2735
    %s2739 = scalar_lea.vmem [#allocation6], 8
    %v2740 = vld [vmem:[%s2739] sm:$0x3]
    %v2741 = vsel %vm2320, %v2735, 0
    %2743 = vmatprep.subr.mxu0 0.0
    %2744 = vmatpush1.msra.mxu0 0.0
    %2745 = vmatprep.subr.mxu0 0.0
    %2746 = vmatpush1.msra.mxu0 0.0
    %2747 = vmatprep.subr.mxu0 0.0
    %2748 = vmatpush1.msra.mxu0 0.0
    %2749 = vmatprep.subr.mxu0 0.0
    %2750 = vmatpush1.msra.mxu0 0.0
    %2751 = vmatprep.subr.mxu0 0.0
    %2752 = vmatpush1.msra.mxu0 0.0
    %2753 = vmatprep.subr.mxu0 0.0
    %2754 = vmatpush1.msra.mxu0 0.0
    %2755 = vmatprep.subr.mxu0 0.0
    %2756 = vmatpush1.msra.mxu0 0.0
    %2757 = vmatprep.subr.mxu0 0.0
    %2758 = vmatpush1.msra.mxu0 0.0
    %2759 = vmatprep.subr.mxu0 0.0
    %2760 = vmatpush1.msra.mxu0 0.0
    %2761 = vmatprep.subr.mxu0 0.0
    %2762 = vmatpush1.msra.mxu0 0.0
    %2763 = vmatprep.subr.mxu0 0.0
    %2764 = vmatpush1.msra.mxu0 0.0
    %2765 = vmatprep.subr.mxu0 0.0
    %2766 = vmatpush1.msra.mxu0 0.0
    %2767 = vmatprep.subr.mxu0 0.0
    %2768 = vmatpush1.msra.mxu0 %v2318
    %2769 = vmatprep.subr.mxu0 0.0
    %2770 = vmatpush1.msra.mxu0 %v2317
    %2771 = vmatprep.subr.mxu0 0.0
    %2772 = vmatpush1.msra.mxu0 %v2316
    %2773 = vmatprep.subr.mxu0 0.0
    %2774 = vmatpush1.msra.mxu0 %v2315
    %2775 = vmatprep.subr.mxu0 0.0
    %2776 = vmatpush2.msra.mxu0 0.0
    %2777 = vmatprep.subr.mxu0 0.0
    %2778 = vmatpush2.msra.mxu0 0.0
    %2779 = vmatprep.subr.mxu0 0.0
    %2780 = vmatpush2.msra.mxu0 0.0
    %2781 = vmatprep.subr.mxu0 0.0
    %2782 = vmatpush2.msra.mxu0 0.0
    %2783 = vmatprep.subr.mxu0 0.0
    %2784 = vmatpush2.msra.mxu0 0.0
    %2785 = vmatprep.subr.mxu0 0.0
    %2786 = vmatpush2.msra.mxu0 0.0
    %2787 = vmatprep.subr.mxu0 0.0
    %2788 = vmatpush2.msra.mxu0 0.0
    %2789 = vmatprep.subr.mxu0 0.0
    %2790 = vmatpush2.msra.mxu0 0.0
    %2791 = vmatprep.subr.mxu0 0.0
    %2792 = vmatpush2.msra.mxu0 0.0
    %2793 = vmatprep.subr.mxu0 0.0
    %2794 = vmatpush2.msra.mxu0 0.0
    %2795 = vmatprep.subr.mxu0 0.0
    %2796 = vmatpush2.msra.mxu0 0.0
    %2797 = vmatprep.subr.mxu0 0.0
    %2798 = vmatpush2.msra.mxu0 0.0
    %2799 = vmatprep.subr.mxu0 0.0
    %2800 = vmatpush2.msra.mxu0 0.0
    %2801 = vmatprep.subr.mxu0 0.0
    %2802 = vmatpush2.msra.mxu0 0.0
    %2803 = vmatprep.subr.mxu0 0.0
    %2804 = vmatpush2.msra.mxu0 0.0
    %2805 = vmatprep.subr.mxu0 0.0
    %2806 = vmatpush2.msra.mxu0 0.0
    %2807 = vmatprep.mubr.f32.mxu0 0.0
    %2808 = vmatmul.mubr.f32.gmra.mxu0 %v2741
    %v2809 = vpop.f32.mrf.mxu0
    %v2810 = vadd.f32 0.0, %v2809
    %v2811 = vpop.f32.mrf.mxu0
    %2812 = vdwg.mxu0
    %v2813 = vadd.f32 %v2740, %v2810
    %v2814 = vxor.u32 %v2813, 2147483648
    %v2815 = vmul.f32 %v2814, 1.442695
    %v2816 = vpow.pop %v2815
    %v2817 = vadd.f32 %v2816, 1.0
    %v2818 = vrcp.pop %v2817
    %v2819 = vmul.f32 1.0, %v2818
    %v2820 = vtanh.pop %v2813
    %v2821 = vmul.f32 %v2819, %v2726
    %2823 = vrot.lane.b32.xlu0 %v2820, 64
    %v2824 = vpop.permute.xlu0 %2823
    %v2826 = vmul.f32 %v2819, %v2824
    %2828 = vrot.lane.b32.xlu0 %v2826, 32
    %v2829 = vpop.permute.xlu0 %2828
    %v2831 = vadd.f32 %v2821, %v2829
    %v2832 = vtanh.pop %v2831
    %2834 = vrot.lane.b32.xlu0 %v2832, 64
    %v2835 = vpop.permute.xlu0 %2834
    %v2837 = vmul.f32 %v2819, %v2835
    %2839 = vrot.lane.b32.xlu0 %v2837, 32
    %v2840 = vpop.permute.xlu0 %2839
    %s2842 = scalar_lea.vmem [#allocation7], 8
    %2843 = vst.msk [vmem:[%s2842] sm:$0x3] %vm2422, %v2840
    %s2844 = scalar_lea.vmem [#allocation6], 10
    %v2845 = vld [vmem:[%s2844] sm:$0x3]
    %v2846 = vsel %vm2320, %v2840, 0
    %2848 = vmatprep.subr.mxu0 0.0
    %2849 = vmatpush1.msra.mxu0 0.0
    %2850 = vmatprep.subr.mxu0 0.0
    %2851 = vmatpush1.msra.mxu0 0.0
    %2852 = vmatprep.subr.mxu0 0.0
    %2853 = vmatpush1.msra.mxu0 0.0
    %2854 = vmatprep.subr.mxu0 0.0
    %2855 = vmatpush1.msra.mxu0 0.0
    %2856 = vmatprep.subr.mxu0 0.0
    %2857 = vmatpush1.msra.mxu0 0.0
    %2858 = vmatprep.subr.mxu0 0.0
    %2859 = vmatpush1.msra.mxu0 0.0
    %2860 = vmatprep.subr.mxu0 0.0
    %2861 = vmatpush1.msra.mxu0 0.0
    %2862 = vmatprep.subr.mxu0 0.0
    %2863 = vmatpush1.msra.mxu0 0.0
    %2864 = vmatprep.subr.mxu0 0.0
    %2865 = vmatpush1.msra.mxu0 0.0
    %2866 = vmatprep.subr.mxu0 0.0
    %2867 = vmatpush1.msra.mxu0 0.0
    %2868 = vmatprep.subr.mxu0 0.0
    %2869 = vmatpush1.msra.mxu0 0.0
    %2870 = vmatprep.subr.mxu0 0.0
    %2871 = vmatpush1.msra.mxu0 0.0
    %2872 = vmatprep.subr.mxu0 0.0
    %2873 = vmatpush1.msra.mxu0 %v2318
    %2874 = vmatprep.subr.mxu0 0.0
    %2875 = vmatpush1.msra.mxu0 %v2317
    %2876 = vmatprep.subr.mxu0 0.0
    %2877 = vmatpush1.msra.mxu0 %v2316
    %2878 = vmatprep.subr.mxu0 0.0
    %2879 = vmatpush1.msra.mxu0 %v2315
    %2880 = vmatprep.subr.mxu0 0.0
    %2881 = vmatpush2.msra.mxu0 0.0
    %2882 = vmatprep.subr.mxu0 0.0
    %2883 = vmatpush2.msra.mxu0 0.0
    %2884 = vmatprep.subr.mxu0 0.0
    %2885 = vmatpush2.msra.mxu0 0.0
    %2886 = vmatprep.subr.mxu0 0.0
    %2887 = vmatpush2.msra.mxu0 0.0
    %2888 = vmatprep.subr.mxu0 0.0
    %2889 = vmatpush2.msra.mxu0 0.0
    %2890 = vmatprep.subr.mxu0 0.0
    %2891 = vmatpush2.msra.mxu0 0.0
    %2892 = vmatprep.subr.mxu0 0.0
    %2893 = vmatpush2.msra.mxu0 0.0
    %2894 = vmatprep.subr.mxu0 0.0
    %2895 = vmatpush2.msra.mxu0 0.0
    %2896 = vmatprep.subr.mxu0 0.0
    %2897 = vmatpush2.msra.mxu0 0.0
    %2898 = vmatprep.subr.mxu0 0.0
    %2899 = vmatpush2.msra.mxu0 0.0
    %2900 = vmatprep.subr.mxu0 0.0
    %2901 = vmatpush2.msra.mxu0 0.0
    %2902 = vmatprep.subr.mxu0 0.0
    %2903 = vmatpush2.msra.mxu0 0.0
    %2904 = vmatprep.subr.mxu0 0.0
    %2905 = vmatpush2.msra.mxu0 0.0
    %2906 = vmatprep.subr.mxu0 0.0
    %2907 = vmatpush2.msra.mxu0 0.0
    %2908 = vmatprep.subr.mxu0 0.0
    %2909 = vmatpush2.msra.mxu0 0.0
    %2910 = vmatprep.subr.mxu0 0.0
    %2911 = vmatpush2.msra.mxu0 0.0
    %2912 = vmatprep.mubr.f32.mxu0 0.0
    %2913 = vmatmul.mubr.f32.gmra.mxu0 %v2846
    %v2914 = vpop.f32.mrf.mxu0
    %v2915 = vadd.f32 0.0, %v2914
    %v2916 = vpop.f32.mrf.mxu0
    %2917 = vdwg.mxu0
    %v2918 = vadd.f32 %v2845, %v2915
    %v2919 = vxor.u32 %v2918, 2147483648
    %v2920 = vmul.f32 %v2919, 1.442695
    %v2921 = vpow.pop %v2920
    %v2922 = vadd.f32 %v2921, 1.0
    %v2923 = vrcp.pop %v2922
    %v2924 = vmul.f32 1.0, %v2923
    %v2925 = vtanh.pop %v2918
    %v2926 = vmul.f32 %v2924, %v2831
    %2928 = vrot.lane.b32.xlu0 %v2925, 64
    %v2929 = vpop.permute.xlu0 %2928
    %v2931 = vmul.f32 %v2924, %v2929
    %2933 = vrot.lane.b32.xlu0 %v2931, 32
    %v2934 = vpop.permute.xlu0 %2933
    %v2936 = vadd.f32 %v2926, %v2934
    %v2937 = vtanh.pop %v2936
    %2939 = vrot.lane.b32.xlu0 %v2937, 64
    %v2940 = vpop.permute.xlu0 %2939
    %v2942 = vmul.f32 %v2924, %v2940
    %2944 = vrot.lane.b32.xlu0 %v2942, 32
    %v2945 = vpop.permute.xlu0 %2944
    %s2947 = scalar_lea.vmem [#allocation7], 10
    %2948 = vst.msk [vmem:[%s2947] sm:$0x3] %vm2422, %v2945
    %s2949 = scalar_lea.vmem [#allocation6], 12
    %v2950 = vld [vmem:[%s2949] sm:$0x3]
    %v2951 = vsel %vm2320, %v2945, 0
    %2953 = vmatprep.subr.mxu0 0.0
    %2954 = vmatpush1.msra.mxu0 0.0
    %2955 = vmatprep.subr.mxu0 0.0
    %2956 = vmatpush1.msra.mxu0 0.0
    %2957 = vmatprep.subr.mxu0 0.0
    %2958 = vmatpush1.msra.mxu0 0.0
    %2959 = vmatprep.subr.mxu0 0.0
    %2960 = vmatpush1.msra.mxu0 0.0
    %2961 = vmatprep.subr.mxu0 0.0
    %2962 = vmatpush1.msra.mxu0 0.0
    %2963 = vmatprep.subr.mxu0 0.0
    %2964 = vmatpush1.msra.mxu0 0.0
    %2965 = vmatprep.subr.mxu0 0.0
    %2966 = vmatpush1.msra.mxu0 0.0
    %2967 = vmatprep.subr.mxu0 0.0
    %2968 = vmatpush1.msra.mxu0 0.0
    %2969 = vmatprep.subr.mxu0 0.0
    %2970 = vmatpush1.msra.mxu0 0.0
    %2971 = vmatprep.subr.mxu0 0.0
    %2972 = vmatpush1.msra.mxu0 0.0
    %2973 = vmatprep.subr.mxu0 0.0
    %2974 = vmatpush1.msra.mxu0 0.0
    %2975 = vmatprep.subr.mxu0 0.0
    %2976 = vmatpush1.msra.mxu0 0.0
    %2977 = vmatprep.subr.mxu0 0.0
    %2978 = vmatpush1.msra.mxu0 %v2318
    %2979 = vmatprep.subr.mxu0 0.0
    %2980 = vmatpush1.msra.mxu0 %v2317
    %2981 = vmatprep.subr.mxu0 0.0
    %2982 = vmatpush1.msra.mxu0 %v2316
    %2983 = vmatprep.subr.mxu0 0.0
    %2984 = vmatpush1.msra.mxu0 %v2315
    %2985 = vmatprep.subr.mxu0 0.0
    %2986 = vmatpush2.msra.mxu0 0.0
    %2987 = vmatprep.subr.mxu0 0.0
    %2988 = vmatpush2.msra.mxu0 0.0
    %2989 = vmatprep.subr.mxu0 0.0
    %2990 = vmatpush2.msra.mxu0 0.0
    %2991 = vmatprep.subr.mxu0 0.0
    %2992 = vmatpush2.msra.mxu0 0.0
    %2993 = vmatprep.subr.mxu0 0.0
    %2994 = vmatpush2.msra.mxu0 0.0
    %2995 = vmatprep.subr.mxu0 0.0
    %2996 = vmatpush2.msra.mxu0 0.0
    %2997 = vmatprep.subr.mxu0 0.0
    %2998 = vmatpush2.msra.mxu0 0.0
    %2999 = vmatprep.subr.mxu0 0.0
    %3000 = vmatpush2.msra.mxu0 0.0
    %3001 = vmatprep.subr.mxu0 0.0
    %3002 = vmatpush2.msra.mxu0 0.0
    %3003 = vmatprep.subr.mxu0 0.0
    %3004 = vmatpush2.msra.mxu0 0.0
    %3005 = vmatprep.subr.mxu0 0.0
    %3006 = vmatpush2.msra.mxu0 0.0
    %3007 = vmatprep.subr.mxu0 0.0
    %3008 = vmatpush2.msra.mxu0 0.0
    %3009 = vmatprep.subr.mxu0 0.0
    %3010 = vmatpush2.msra.mxu0 0.0
    %3011 = vmatprep.subr.mxu0 0.0
    %3012 = vmatpush2.msra.mxu0 0.0
    %3013 = vmatprep.subr.mxu0 0.0
    %3014 = vmatpush2.msra.mxu0 0.0
    %3015 = vmatprep.subr.mxu0 0.0
    %3016 = vmatpush2.msra.mxu0 0.0
    %3017 = vmatprep.mubr.f32.mxu0 0.0
    %3018 = vmatmul.mubr.f32.gmra.mxu0 %v2951
    %v3019 = vpop.f32.mrf.mxu0
    %v3020 = vadd.f32 0.0, %v3019
    %v3021 = vpop.f32.mrf.mxu0
    %3022 = vdwg.mxu0
    %v3023 = vadd.f32 %v2950, %v3020
    %v3024 = vxor.u32 %v3023, 2147483648
    %v3025 = vmul.f32 %v3024, 1.442695
    %v3026 = vpow.pop %v3025
    %v3027 = vadd.f32 %v3026, 1.0
    %v3028 = vrcp.pop %v3027
    %v3029 = vmul.f32 1.0, %v3028
    %v3030 = vtanh.pop %v3023
    %v3031 = vmul.f32 %v3029, %v2936
    %3033 = vrot.lane.b32.xlu0 %v3030, 64
    %v3034 = vpop.permute.xlu0 %3033
    %v3036 = vmul.f32 %v3029, %v3034
    %3038 = vrot.lane.b32.xlu0 %v3036, 32
    %v3039 = vpop.permute.xlu0 %3038
    %v3041 = vadd.f32 %v3031, %v3039
    %v3042 = vtanh.pop %v3041
    %3044 = vrot.lane.b32.xlu0 %v3042, 64
    %v3045 = vpop.permute.xlu0 %3044
    %v3047 = vmul.f32 %v3029, %v3045
    %3049 = vrot.lane.b32.xlu0 %v3047, 32
    %v3050 = vpop.permute.xlu0 %3049
    %s3052 = scalar_lea.vmem [#allocation7], 12
    %3053 = vst.msk [vmem:[%s3052] sm:$0x3] %vm2422, %v3050
    %s3054 = scalar_lea.vmem [#allocation6], 14
    %v3055 = vld [vmem:[%s3054] sm:$0x3]
    %v3056 = vsel %vm2320, %v3050, 0
    %3058 = vmatprep.subr.mxu0 0.0
    %3059 = vmatpush1.msra.mxu0 0.0
    %3060 = vmatprep.subr.mxu0 0.0
    %3061 = vmatpush1.msra.mxu0 0.0
    %3062 = vmatprep.subr.mxu0 0.0
    %3063 = vmatpush1.msra.mxu0 0.0
    %3064 = vmatprep.subr.mxu0 0.0
    %3065 = vmatpush1.msra.mxu0 0.0
    %3066 = vmatprep.subr.mxu0 0.0
    %3067 = vmatpush1.msra.mxu0 0.0
    %3068 = vmatprep.subr.mxu0 0.0
    %3069 = vmatpush1.msra.mxu0 0.0
    %3070 = vmatprep.subr.mxu0 0.0
    %3071 = vmatpush1.msra.mxu0 0.0
    %3072 = vmatprep.subr.mxu0 0.0
    %3073 = vmatpush1.msra.mxu0 0.0
    %3074 = vmatprep.subr.mxu0 0.0
    %3075 = vmatpush1.msra.mxu0 0.0
    %3076 = vmatprep.subr.mxu0 0.0
    %3077 = vmatpush1.msra.mxu0 0.0
    %3078 = vmatprep.subr.mxu0 0.0
    %3079 = vmatpush1.msra.mxu0 0.0
    %3080 = vmatprep.subr.mxu0 0.0
    %3081 = vmatpush1.msra.mxu0 0.0
    %3082 = vmatprep.subr.mxu0 0.0
    %3083 = vmatpush1.msra.mxu0 %v2318
    %3084 = vmatprep.subr.mxu0 0.0
    %3085 = vmatpush1.msra.mxu0 %v2317
    %3086 = vmatprep.subr.mxu0 0.0
    %3087 = vmatpush1.msra.mxu0 %v2316
    %3088 = vmatprep.subr.mxu0 0.0
    %3089 = vmatpush1.msra.mxu0 %v2315
    %3090 = vmatprep.subr.mxu0 0.0
    %3091 = vmatpush2.msra.mxu0 0.0
    %3092 = vmatprep.subr.mxu0 0.0
    %3093 = vmatpush2.msra.mxu0 0.0
    %3094 = vmatprep.subr.mxu0 0.0
    %3095 = vmatpush2.msra.mxu0 0.0
    %3096 = vmatprep.subr.mxu0 0.0
    %3097 = vmatpush2.msra.mxu0 0.0
    %3098 = vmatprep.subr.mxu0 0.0
    %3099 = vmatpush2.msra.mxu0 0.0
    %3100 = vmatprep.subr.mxu0 0.0
    %3101 = vmatpush2.msra.mxu0 0.0
    %3102 = vmatprep.subr.mxu0 0.0
    %3103 = vmatpush2.msra.mxu0 0.0
    %3104 = vmatprep.subr.mxu0 0.0
    %3105 = vmatpush2.msra.mxu0 0.0
    %3106 = vmatprep.subr.mxu0 0.0
    %3107 = vmatpush2.msra.mxu0 0.0
    %3108 = vmatprep.subr.mxu0 0.0
    %3109 = vmatpush2.msra.mxu0 0.0
    %3110 = vmatprep.subr.mxu0 0.0
    %3111 = vmatpush2.msra.mxu0 0.0
    %3112 = vmatprep.subr.mxu0 0.0
    %3113 = vmatpush2.msra.mxu0 0.0
    %3114 = vmatprep.subr.mxu0 0.0
    %3115 = vmatpush2.msra.mxu0 0.0
    %3116 = vmatprep.subr.mxu0 0.0
    %3117 = vmatpush2.msra.mxu0 0.0
    %3118 = vmatprep.subr.mxu0 0.0
    %3119 = vmatpush2.msra.mxu0 0.0
    %3120 = vmatprep.subr.mxu0 0.0
    %3121 = vmatpush2.msra.mxu0 0.0
    %3122 = vmatprep.mubr.f32.mxu0 0.0
    %3123 = vmatmul.mubr.f32.gmra.mxu0 %v3056
    %v3124 = vpop.f32.mrf.mxu0
    %v3125 = vadd.f32 0.0, %v3124
    %v3126 = vpop.f32.mrf.mxu0
    %3127 = vdwg.mxu0
    %v3128 = vadd.f32 %v3055, %v3125
    %v3129 = vxor.u32 %v3128, 2147483648
    %v3130 = vmul.f32 %v3129, 1.442695
    %v3131 = vpow.pop %v3130
    %v3132 = vadd.f32 %v3131, 1.0
    %v3133 = vrcp.pop %v3132
    %v3134 = vmul.f32 1.0, %v3133
    %v3135 = vtanh.pop %v3128
    %v3136 = vmul.f32 %v3134, %v3041
    %3138 = vrot.lane.b32.xlu0 %v3135, 64
    %v3139 = vpop.permute.xlu0 %3138
    %v3141 = vmul.f32 %v3134, %v3139
    %3143 = vrot.lane.b32.xlu0 %v3141, 32
    %v3144 = vpop.permute.xlu0 %3143
    %v3146 = vadd.f32 %v3136, %v3144
    %v3147 = vtanh.pop %v3146
    %3149 = vrot.lane.b32.xlu0 %v3147, 64
    %v3150 = vpop.permute.xlu0 %3149
    %v3152 = vmul.f32 %v3134, %v3150
    %3154 = vrot.lane.b32.xlu0 %v3152, 32
    %v3155 = vpop.permute.xlu0 %3154
    %s3157 = scalar_lea.vmem [#allocation7], 14
    %3158 = vst.msk [vmem:[%s3157] sm:$0x3] %vm2422, %v3155
    %v3159 = vld [vmem:[#allocation7] sm:$0xff]
    %v3160 = vld [vmem:[#allocation7 + $0x8] sm:$0xff]
    %v3161 = vld [vmem:[%s13] sm:$0xff]
    %v3162 = vld [vmem:[%s13 + $0x8] sm:$0xff]
    %v3163 = vld [vmem:[%s13 + $0x10] sm:$0xff]
    %v3164 = vld [vmem:[%s13 + $0x18] sm:$0xff]
    %v3165 = vld [vmem:[#allocation29] sm:$0x1]
    %v3167 = vlaneseq
    %v3168 = vshrl.u32 %v3167, 7
    %v3169 = vsub.s32 0, %v3168
    %v3170 = vrot.slane %v3165, %v3169
    %v3173 = vsel %vm2320, %v3159, 0
    %v3176 = vsel %vm2320, %v3160, 0
    %3178 = vmatprep.subr.mxu0 0.0
    %3179 = vmatpush1.msra.mxu0 0.0
    %3180 = vmatprep.subr.mxu0 0.0
    %3181 = vmatpush1.msra.mxu0 0.0
    %3182 = vmatprep.subr.mxu0 0.0
    %3183 = vmatpush1.msra.mxu0 0.0
    %3184 = vmatprep.subr.mxu0 0.0
    %3185 = vmatpush1.msra.mxu0 0.0
    %3186 = vmatprep.subr.mxu0 0.0
    %3187 = vmatpush1.msra.mxu0 0.0
    %3188 = vmatprep.subr.mxu0 0.0
    %3189 = vmatpush1.msra.mxu0 0.0
    %3190 = vmatprep.subr.mxu0 0.0
    %3191 = vmatpush1.msra.mxu0 0.0
    %3192 = vmatprep.subr.mxu0 0.0
    %3193 = vmatpush1.msra.mxu0 0.0
    %3194 = vmatprep.subr.mxu0 0.0
    %3195 = vmatpush1.msra.mxu0 0.0
    %3196 = vmatprep.subr.mxu0 0.0
    %3197 = vmatpush1.msra.mxu0 0.0
    %3198 = vmatprep.subr.mxu0 0.0
    %3199 = vmatpush1.msra.mxu0 0.0
    %3200 = vmatprep.subr.mxu0 0.0
    %3201 = vmatpush1.msra.mxu0 0.0
    %3202 = vmatprep.subr.mxu0 0.0
    %3203 = vmatpush1.msra.mxu0 %v3164
    %3204 = vmatprep.subr.mxu0 0.0
    %3205 = vmatpush1.msra.mxu0 %v3163
    %3206 = vmatprep.subr.mxu0 0.0
    %3207 = vmatpush1.msra.mxu0 %v3162
    %3208 = vmatprep.subr.mxu0 0.0
    %3209 = vmatpush1.msra.mxu0 %v3161
    %3210 = vmatprep.subr.mxu0 0.0
    %3211 = vmatpush2.msra.mxu0 0.0
    %3212 = vmatprep.subr.mxu0 0.0
    %3213 = vmatpush2.msra.mxu0 0.0
    %3214 = vmatprep.subr.mxu0 0.0
    %3215 = vmatpush2.msra.mxu0 0.0
    %3216 = vmatprep.subr.mxu0 0.0
    %3217 = vmatpush2.msra.mxu0 0.0
    %3218 = vmatprep.subr.mxu0 0.0
    %3219 = vmatpush2.msra.mxu0 0.0
    %3220 = vmatprep.subr.mxu0 0.0
    %3221 = vmatpush2.msra.mxu0 0.0
    %3222 = vmatprep.subr.mxu0 0.0
    %3223 = vmatpush2.msra.mxu0 0.0
    %3224 = vmatprep.subr.mxu0 0.0
    %3225 = vmatpush2.msra.mxu0 0.0
    %3226 = vmatprep.subr.mxu0 0.0
    %3227 = vmatpush2.msra.mxu0 0.0
    %3228 = vmatprep.subr.mxu0 0.0
    %3229 = vmatpush2.msra.mxu0 0.0
    %3230 = vmatprep.subr.mxu0 0.0
    %3231 = vmatpush2.msra.mxu0 0.0
    %3232 = vmatprep.subr.mxu0 0.0
    %3233 = vmatpush2.msra.mxu0 0.0
    %3234 = vmatprep.subr.mxu0 0.0
    %3235 = vmatpush2.msra.mxu0 0.0
    %3236 = vmatprep.subr.mxu0 0.0
    %3237 = vmatpush2.msra.mxu0 0.0
    %3238 = vmatprep.subr.mxu0 0.0
    %3239 = vmatpush2.msra.mxu0 0.0
    %3240 = vmatprep.subr.mxu0 0.0
    %3241 = vmatpush2.msra.mxu0 0.0
    %3242 = vmatprep.mubr.f32.mxu0 0.0
    %3243 = vmatmul.mubr.f32.gmra.mxu0 %v3173
    %v3244 = vpop.f32.mrf.mxu0
    %v3245 = vadd.f32 %v3170, %v3244
    %v3246 = vpop.f32.mrf.mxu0
    %3247 = vmatprep.mubr.f32.mxu0 0.0
    %3248 = vmatmul.mubr.f32.gmra.mxu0 %v3176
    %v3249 = vpop.f32.mrf.mxu0
    %v3250 = vadd.f32 %v3170, %v3249
    %v3251 = vpop.f32.mrf.mxu0
    %3252 = vdwg.mxu0
    %vm3253 = vcmask 523264
    %3254 = vst.msk [vmem:[#allocation8] sm:$0xff] %vm3253, %v3245
    %3255 = vst.msk [vmem:[#allocation8 + $0x8] sm:$0xff] %vm3253, %v3250
    %v3256 = vld [vmem:[%s14] sm:$0xff]
    %v3257 = vld [vmem:[%s14 + $0x8] sm:$0xff]
    %v3258 = vld [vmem:[#allocation8] sm:$0x3]
    %3259 = vmatprep.subr.mxu0 0.0
    %3260 = vmatpush1.msra.mxu0 0.0
    %3261 = vmatprep.subr.mxu0 0.0
    %3262 = vmatpush1.msra.mxu0 0.0
    %3263 = vmatprep.subr.mxu0 0.0
    %3264 = vmatpush1.msra.mxu0 0.0
    %3265 = vmatprep.subr.mxu0 0.0
    %3266 = vmatpush1.msra.mxu0 0.0
    %3267 = vmatprep.subr.mxu0 0.0
    %3268 = vmatpush1.msra.mxu0 0.0
    %3269 = vmatprep.subr.mxu0 0.0
    %3270 = vmatpush1.msra.mxu0 0.0
    %3271 = vmatprep.subr.mxu0 0.0
    %3272 = vmatpush1.msra.mxu0 0.0
    %3273 = vmatprep.subr.mxu0 0.0
    %3274 = vmatpush1.msra.mxu0 0.0
    %3275 = vmatprep.subr.mxu0 0.0
    %3276 = vmatpush1.msra.mxu0 0.0
    %3277 = vmatprep.subr.mxu0 0.0
    %3278 = vmatpush1.msra.mxu0 0.0
    %3279 = vmatprep.subr.mxu0 0.0
    %3280 = vmatpush1.msra.mxu0 0.0
    %3281 = vmatprep.subr.mxu0 0.0
    %3282 = vmatpush1.msra.mxu0 0.0
    %3283 = vmatprep.subr.mxu0 0.0
    %3284 = vmatpush1.msra.mxu0 0.0
    %3285 = vmatprep.subr.mxu0 0.0
    %3286 = vmatpush1.msra.mxu0 0.0
    %3287 = vmatprep.subr.mxu0 0.0
    %3288 = vmatpush1.msra.mxu0 %v3257
    %3289 = vmatprep.subr.mxu0 0.0
    %3290 = vmatpush1.msra.mxu0 %v3256
    %3291 = vmatprep.subr.mxu0 0.0
    %3292 = vmatpush2.msra.mxu0 0.0
    %3293 = vmatprep.subr.mxu0 0.0
    %3294 = vmatpush2.msra.mxu0 0.0
    %3295 = vmatprep.subr.mxu0 0.0
    %3296 = vmatpush2.msra.mxu0 0.0
    %3297 = vmatprep.subr.mxu0 0.0
    %3298 = vmatpush2.msra.mxu0 0.0
    %3299 = vmatprep.subr.mxu0 0.0
    %3300 = vmatpush2.msra.mxu0 0.0
    %3301 = vmatprep.subr.mxu0 0.0
    %3302 = vmatpush2.msra.mxu0 0.0
    %3303 = vmatprep.subr.mxu0 0.0
    %3304 = vmatpush2.msra.mxu0 0.0
    %3305 = vmatprep.subr.mxu0 0.0
    %3306 = vmatpush2.msra.mxu0 0.0
    %3307 = vmatprep.subr.mxu0 0.0
    %3308 = vmatpush2.msra.mxu0 0.0
    %3309 = vmatprep.subr.mxu0 0.0
    %3310 = vmatpush2.msra.mxu0 0.0
    %3311 = vmatprep.subr.mxu0 0.0
    %3312 = vmatpush2.msra.mxu0 0.0
    %3313 = vmatprep.subr.mxu0 0.0
    %3314 = vmatpush2.msra.mxu0 0.0
    %3315 = vmatprep.subr.mxu0 0.0
    %3316 = vmatpush2.msra.mxu0 0.0
    %3317 = vmatprep.subr.mxu0 0.0
    %3318 = vmatpush2.msra.mxu0 0.0
    %3319 = vmatprep.subr.mxu0 0.0
    %3320 = vmatpush2.msra.mxu0 0.0
    %3321 = vmatprep.subr.mxu0 0.0
    %3322 = vmatpush2.msra.mxu0 0.0
    %3323 = vmatprep.mubr.f32.mxu0 0.0
    %3324 = vmatmul.mubr.f32.gmra.mxu0 %v435
    %v3325 = vpop.f32.mrf.mxu0
    %v3326 = vadd.f32 0.0, %v3325
    %v3327 = vpop.f32.mrf.mxu0
    %3328 = vdwg.mxu0
    %v3329 = vadd.f32 %v3258, %v3326
    %v3330 = vxor.u32 %v3329, 2147483648
    %v3331 = vmul.f32 %v3330, 1.442695
    %v3332 = vpow.pop %v3331
    %v3333 = vadd.f32 %v3332, 1.0
    %v3334 = vrcp.pop %v3333
    %v3335 = vmul.f32 1.0, %v3334
    %v3336 = vtanh.pop %v3329
    %v3337 = vmul.f32 %v3335, 0.0
    %3339 = vrot.lane.b32.xlu0 %v3336, 96
    %v3340 = vpop.permute.xlu0 %3339
    %v3342 = vmul.f32 %v3335, %v3340
    %3344 = vrot.lane.b32.xlu0 %v3342, 16
    %v3345 = vpop.permute.xlu0 %3344
    %v3347 = vadd.f32 %v3337, %v3345
    %v3348 = vtanh.pop %v3347
    %3350 = vrot.lane.b32.xlu0 %v3348, 32
    %v3351 = vpop.permute.xlu0 %3350
    %v3353 = vmul.f32 %v3335, %v3351
    %3355 = vrot.lane.b32.xlu0 %v3353, 80
    %v3356 = vpop.permute.xlu0 %3355
    %3358 = vst.msk [vmem:[#allocation9] sm:$0x3] %vm537, %v3356
    %s3359 = scalar_lea.vmem [#allocation8], 2
    %v3360 = vld [vmem:[%s3359] sm:$0x3]
    %v3361 = vsel %vm433, %v3356, 0
    %3363 = vmatprep.subr.mxu0 0.0
    %3364 = vmatpush1.msra.mxu0 0.0
    %3365 = vmatprep.subr.mxu0 0.0
    %3366 = vmatpush1.msra.mxu0 0.0
    %3367 = vmatprep.subr.mxu0 0.0
    %3368 = vmatpush1.msra.mxu0 0.0
    %3369 = vmatprep.subr.mxu0 0.0
    %3370 = vmatpush1.msra.mxu0 0.0
    %3371 = vmatprep.subr.mxu0 0.0
    %3372 = vmatpush1.msra.mxu0 0.0
    %3373 = vmatprep.subr.mxu0 0.0
    %3374 = vmatpush1.msra.mxu0 0.0
    %3375 = vmatprep.subr.mxu0 0.0
    %3376 = vmatpush1.msra.mxu0 0.0
    %3377 = vmatprep.subr.mxu0 0.0
    %3378 = vmatpush1.msra.mxu0 0.0
    %3379 = vmatprep.subr.mxu0 0.0
    %3380 = vmatpush1.msra.mxu0 0.0
    %3381 = vmatprep.subr.mxu0 0.0
    %3382 = vmatpush1.msra.mxu0 0.0
    %3383 = vmatprep.subr.mxu0 0.0
    %3384 = vmatpush1.msra.mxu0 0.0
    %3385 = vmatprep.subr.mxu0 0.0
    %3386 = vmatpush1.msra.mxu0 0.0
    %3387 = vmatprep.subr.mxu0 0.0
    %3388 = vmatpush1.msra.mxu0 0.0
    %3389 = vmatprep.subr.mxu0 0.0
    %3390 = vmatpush1.msra.mxu0 0.0
    %3391 = vmatprep.subr.mxu0 0.0
    %3392 = vmatpush1.msra.mxu0 %v3257
    %3393 = vmatprep.subr.mxu0 0.0
    %3394 = vmatpush1.msra.mxu0 %v3256
    %3395 = vmatprep.subr.mxu0 0.0
    %3396 = vmatpush2.msra.mxu0 0.0
    %3397 = vmatprep.subr.mxu0 0.0
    %3398 = vmatpush2.msra.mxu0 0.0
    %3399 = vmatprep.subr.mxu0 0.0
    %3400 = vmatpush2.msra.mxu0 0.0
    %3401 = vmatprep.subr.mxu0 0.0
    %3402 = vmatpush2.msra.mxu0 0.0
    %3403 = vmatprep.subr.mxu0 0.0
    %3404 = vmatpush2.msra.mxu0 0.0
    %3405 = vmatprep.subr.mxu0 0.0
    %3406 = vmatpush2.msra.mxu0 0.0
    %3407 = vmatprep.subr.mxu0 0.0
    %3408 = vmatpush2.msra.mxu0 0.0
    %3409 = vmatprep.subr.mxu0 0.0
    %3410 = vmatpush2.msra.mxu0 0.0
    %3411 = vmatprep.subr.mxu0 0.0
    %3412 = vmatpush2.msra.mxu0 0.0
    %3413 = vmatprep.subr.mxu0 0.0
    %3414 = vmatpush2.msra.mxu0 0.0
    %3415 = vmatprep.subr.mxu0 0.0
    %3416 = vmatpush2.msra.mxu0 0.0
    %3417 = vmatprep.subr.mxu0 0.0
    %3418 = vmatpush2.msra.mxu0 0.0
    %3419 = vmatprep.subr.mxu0 0.0
    %3420 = vmatpush2.msra.mxu0 0.0
    %3421 = vmatprep.subr.mxu0 0.0
    %3422 = vmatpush2.msra.mxu0 0.0
    %3423 = vmatprep.subr.mxu0 0.0
    %3424 = vmatpush2.msra.mxu0 0.0
    %3425 = vmatprep.subr.mxu0 0.0
    %3426 = vmatpush2.msra.mxu0 0.0
    %3427 = vmatprep.mubr.f32.mxu0 0.0
    %3428 = vmatmul.mubr.f32.gmra.mxu0 %v3361
    %v3429 = vpop.f32.mrf.mxu0
    %v3430 = vadd.f32 0.0, %v3429
    %v3431 = vpop.f32.mrf.mxu0
    %3432 = vdwg.mxu0
    %v3433 = vadd.f32 %v3360, %v3430
    %v3434 = vxor.u32 %v3433, 2147483648
    %v3435 = vmul.f32 %v3434, 1.442695
    %v3436 = vpow.pop %v3435
    %v3437 = vadd.f32 %v3436, 1.0
    %v3438 = vrcp.pop %v3437
    %v3439 = vmul.f32 1.0, %v3438
    %v3440 = vtanh.pop %v3433
    %v3441 = vmul.f32 %v3439, %v3347
    %3443 = vrot.lane.b32.xlu0 %v3440, 96
    %v3444 = vpop.permute.xlu0 %3443
    %v3446 = vmul.f32 %v3439, %v3444
    %3448 = vrot.lane.b32.xlu0 %v3446, 16
    %v3449 = vpop.permute.xlu0 %3448
    %v3451 = vadd.f32 %v3441, %v3449
    %v3452 = vtanh.pop %v3451
    %3454 = vrot.lane.b32.xlu0 %v3452, 32
    %v3455 = vpop.permute.xlu0 %3454
    %v3457 = vmul.f32 %v3439, %v3455
    %3459 = vrot.lane.b32.xlu0 %v3457, 80
    %v3460 = vpop.permute.xlu0 %3459
    %s3462 = scalar_lea.vmem [#allocation9], 2
    %3463 = vst.msk [vmem:[%s3462] sm:$0x3] %vm537, %v3460
    %s3464 = scalar_lea.vmem [#allocation8], 4
    %v3465 = vld [vmem:[%s3464] sm:$0x3]
    %v3466 = vsel %vm433, %v3460, 0
    %3468 = vmatprep.subr.mxu0 0.0
    %3469 = vmatpush1.msra.mxu0 0.0
    %3470 = vmatprep.subr.mxu0 0.0
    %3471 = vmatpush1.msra.mxu0 0.0
    %3472 = vmatprep.subr.mxu0 0.0
    %3473 = vmatpush1.msra.mxu0 0.0
    %3474 = vmatprep.subr.mxu0 0.0
    %3475 = vmatpush1.msra.mxu0 0.0
    %3476 = vmatprep.subr.mxu0 0.0
    %3477 = vmatpush1.msra.mxu0 0.0
    %3478 = vmatprep.subr.mxu0 0.0
    %3479 = vmatpush1.msra.mxu0 0.0
    %3480 = vmatprep.subr.mxu0 0.0
    %3481 = vmatpush1.msra.mxu0 0.0
    %3482 = vmatprep.subr.mxu0 0.0
    %3483 = vmatpush1.msra.mxu0 0.0
    %3484 = vmatprep.subr.mxu0 0.0
    %3485 = vmatpush1.msra.mxu0 0.0
    %3486 = vmatprep.subr.mxu0 0.0
    %3487 = vmatpush1.msra.mxu0 0.0
    %3488 = vmatprep.subr.mxu0 0.0
    %3489 = vmatpush1.msra.mxu0 0.0
    %3490 = vmatprep.subr.mxu0 0.0
    %3491 = vmatpush1.msra.mxu0 0.0
    %3492 = vmatprep.subr.mxu0 0.0
    %3493 = vmatpush1.msra.mxu0 0.0
    %3494 = vmatprep.subr.mxu0 0.0
    %3495 = vmatpush1.msra.mxu0 0.0
    %3496 = vmatprep.subr.mxu0 0.0
    %3497 = vmatpush1.msra.mxu0 %v3257
    %3498 = vmatprep.subr.mxu0 0.0
    %3499 = vmatpush1.msra.mxu0 %v3256
    %3500 = vmatprep.subr.mxu0 0.0
    %3501 = vmatpush2.msra.mxu0 0.0
    %3502 = vmatprep.subr.mxu0 0.0
    %3503 = vmatpush2.msra.mxu0 0.0
    %3504 = vmatprep.subr.mxu0 0.0
    %3505 = vmatpush2.msra.mxu0 0.0
    %3506 = vmatprep.subr.mxu0 0.0
    %3507 = vmatpush2.msra.mxu0 0.0
    %3508 = vmatprep.subr.mxu0 0.0
    %3509 = vmatpush2.msra.mxu0 0.0
    %3510 = vmatprep.subr.mxu0 0.0
    %3511 = vmatpush2.msra.mxu0 0.0
    %3512 = vmatprep.subr.mxu0 0.0
    %3513 = vmatpush2.msra.mxu0 0.0
    %3514 = vmatprep.subr.mxu0 0.0
    %3515 = vmatpush2.msra.mxu0 0.0
    %3516 = vmatprep.subr.mxu0 0.0
    %3517 = vmatpush2.msra.mxu0 0.0
    %3518 = vmatprep.subr.mxu0 0.0
    %3519 = vmatpush2.msra.mxu0 0.0
    %3520 = vmatprep.subr.mxu0 0.0
    %3521 = vmatpush2.msra.mxu0 0.0
    %3522 = vmatprep.subr.mxu0 0.0
    %3523 = vmatpush2.msra.mxu0 0.0
    %3524 = vmatprep.subr.mxu0 0.0
    %3525 = vmatpush2.msra.mxu0 0.0
    %3526 = vmatprep.subr.mxu0 0.0
    %3527 = vmatpush2.msra.mxu0 0.0
    %3528 = vmatprep.subr.mxu0 0.0
    %3529 = vmatpush2.msra.mxu0 0.0
    %3530 = vmatprep.subr.mxu0 0.0
    %3531 = vmatpush2.msra.mxu0 0.0
    %3532 = vmatprep.mubr.f32.mxu0 0.0
    %3533 = vmatmul.mubr.f32.gmra.mxu0 %v3466
    %v3534 = vpop.f32.mrf.mxu0
    %v3535 = vadd.f32 0.0, %v3534
    %v3536 = vpop.f32.mrf.mxu0
    %3537 = vdwg.mxu0
    %v3538 = vadd.f32 %v3465, %v3535
    %v3539 = vxor.u32 %v3538, 2147483648
    %v3540 = vmul.f32 %v3539, 1.442695
    %v3541 = vpow.pop %v3540
    %v3542 = vadd.f32 %v3541, 1.0
    %v3543 = vrcp.pop %v3542
    %v3544 = vmul.f32 1.0, %v3543
    %v3545 = vtanh.pop %v3538
    %v3546 = vmul.f32 %v3544, %v3451
    %3548 = vrot.lane.b32.xlu0 %v3545, 96
    %v3549 = vpop.permute.xlu0 %3548
    %v3551 = vmul.f32 %v3544, %v3549
    %3553 = vrot.lane.b32.xlu0 %v3551, 16
    %v3554 = vpop.permute.xlu0 %3553
    %v3556 = vadd.f32 %v3546, %v3554
    %v3557 = vtanh.pop %v3556
    %3559 = vrot.lane.b32.xlu0 %v3557, 32
    %v3560 = vpop.permute.xlu0 %3559
    %v3562 = vmul.f32 %v3544, %v3560
    %3564 = vrot.lane.b32.xlu0 %v3562, 80
    %v3565 = vpop.permute.xlu0 %3564
    %s3567 = scalar_lea.vmem [#allocation9], 4
    %3568 = vst.msk [vmem:[%s3567] sm:$0x3] %vm537, %v3565
    %s3569 = scalar_lea.vmem [#allocation8], 6
    %v3570 = vld [vmem:[%s3569] sm:$0x3]
    %v3571 = vsel %vm433, %v3565, 0
    %3573 = vmatprep.subr.mxu0 0.0
    %3574 = vmatpush1.msra.mxu0 0.0
    %3575 = vmatprep.subr.mxu0 0.0
    %3576 = vmatpush1.msra.mxu0 0.0
    %3577 = vmatprep.subr.mxu0 0.0
    %3578 = vmatpush1.msra.mxu0 0.0
    %3579 = vmatprep.subr.mxu0 0.0
    %3580 = vmatpush1.msra.mxu0 0.0
    %3581 = vmatprep.subr.mxu0 0.0
    %3582 = vmatpush1.msra.mxu0 0.0
    %3583 = vmatprep.subr.mxu0 0.0
    %3584 = vmatpush1.msra.mxu0 0.0
    %3585 = vmatprep.subr.mxu0 0.0
    %3586 = vmatpush1.msra.mxu0 0.0
    %3587 = vmatprep.subr.mxu0 0.0
    %3588 = vmatpush1.msra.mxu0 0.0
    %3589 = vmatprep.subr.mxu0 0.0
    %3590 = vmatpush1.msra.mxu0 0.0
    %3591 = vmatprep.subr.mxu0 0.0
    %3592 = vmatpush1.msra.mxu0 0.0
    %3593 = vmatprep.subr.mxu0 0.0
    %3594 = vmatpush1.msra.mxu0 0.0
    %3595 = vmatprep.subr.mxu0 0.0
    %3596 = vmatpush1.msra.mxu0 0.0
    %3597 = vmatprep.subr.mxu0 0.0
    %3598 = vmatpush1.msra.mxu0 0.0
    %3599 = vmatprep.subr.mxu0 0.0
    %3600 = vmatpush1.msra.mxu0 0.0
    %3601 = vmatprep.subr.mxu0 0.0
    %3602 = vmatpush1.msra.mxu0 %v3257
    %3603 = vmatprep.subr.mxu0 0.0
    %3604 = vmatpush1.msra.mxu0 %v3256
    %3605 = vmatprep.subr.mxu0 0.0
    %3606 = vmatpush2.msra.mxu0 0.0
    %3607 = vmatprep.subr.mxu0 0.0
    %3608 = vmatpush2.msra.mxu0 0.0
    %3609 = vmatprep.subr.mxu0 0.0
    %3610 = vmatpush2.msra.mxu0 0.0
    %3611 = vmatprep.subr.mxu0 0.0
    %3612 = vmatpush2.msra.mxu0 0.0
    %3613 = vmatprep.subr.mxu0 0.0
    %3614 = vmatpush2.msra.mxu0 0.0
    %3615 = vmatprep.subr.mxu0 0.0
    %3616 = vmatpush2.msra.mxu0 0.0
    %3617 = vmatprep.subr.mxu0 0.0
    %3618 = vmatpush2.msra.mxu0 0.0
    %3619 = vmatprep.subr.mxu0 0.0
    %3620 = vmatpush2.msra.mxu0 0.0
    %3621 = vmatprep.subr.mxu0 0.0
    %3622 = vmatpush2.msra.mxu0 0.0
    %3623 = vmatprep.subr.mxu0 0.0
    %3624 = vmatpush2.msra.mxu0 0.0
    %3625 = vmatprep.subr.mxu0 0.0
    %3626 = vmatpush2.msra.mxu0 0.0
    %3627 = vmatprep.subr.mxu0 0.0
    %3628 = vmatpush2.msra.mxu0 0.0
    %3629 = vmatprep.subr.mxu0 0.0
    %3630 = vmatpush2.msra.mxu0 0.0
    %3631 = vmatprep.subr.mxu0 0.0
    %3632 = vmatpush2.msra.mxu0 0.0
    %3633 = vmatprep.subr.mxu0 0.0
    %3634 = vmatpush2.msra.mxu0 0.0
    %3635 = vmatprep.subr.mxu0 0.0
    %3636 = vmatpush2.msra.mxu0 0.0
    %3637 = vmatprep.mubr.f32.mxu0 0.0
    %3638 = vmatmul.mubr.f32.gmra.mxu0 %v3571
    %v3639 = vpop.f32.mrf.mxu0
    %v3640 = vadd.f32 0.0, %v3639
    %v3641 = vpop.f32.mrf.mxu0
    %3642 = vdwg.mxu0
    %v3643 = vadd.f32 %v3570, %v3640
    %v3644 = vxor.u32 %v3643, 2147483648
    %v3645 = vmul.f32 %v3644, 1.442695
    %v3646 = vpow.pop %v3645
    %v3647 = vadd.f32 %v3646, 1.0
    %v3648 = vrcp.pop %v3647
    %v3649 = vmul.f32 1.0, %v3648
    %v3650 = vtanh.pop %v3643
    %v3651 = vmul.f32 %v3649, %v3556
    %3653 = vrot.lane.b32.xlu0 %v3650, 96
    %v3654 = vpop.permute.xlu0 %3653
    %v3656 = vmul.f32 %v3649, %v3654
    %3658 = vrot.lane.b32.xlu0 %v3656, 16
    %v3659 = vpop.permute.xlu0 %3658
    %v3661 = vadd.f32 %v3651, %v3659
    %v3662 = vtanh.pop %v3661
    %3664 = vrot.lane.b32.xlu0 %v3662, 32
    %v3665 = vpop.permute.xlu0 %3664
    %v3667 = vmul.f32 %v3649, %v3665
    %3669 = vrot.lane.b32.xlu0 %v3667, 80
    %v3670 = vpop.permute.xlu0 %3669
    %s3672 = scalar_lea.vmem [#allocation9], 6
    %3673 = vst.msk [vmem:[%s3672] sm:$0x3] %vm537, %v3670
    %s3674 = scalar_lea.vmem [#allocation8], 8
    %v3675 = vld [vmem:[%s3674] sm:$0x3]
    %v3676 = vsel %vm433, %v3670, 0
    %3678 = vmatprep.subr.mxu0 0.0
    %3679 = vmatpush1.msra.mxu0 0.0
    %3680 = vmatprep.subr.mxu0 0.0
    %3681 = vmatpush1.msra.mxu0 0.0
    %3682 = vmatprep.subr.mxu0 0.0
    %3683 = vmatpush1.msra.mxu0 0.0
    %3684 = vmatprep.subr.mxu0 0.0
    %3685 = vmatpush1.msra.mxu0 0.0
    %3686 = vmatprep.subr.mxu0 0.0
    %3687 = vmatpush1.msra.mxu0 0.0
    %3688 = vmatprep.subr.mxu0 0.0
    %3689 = vmatpush1.msra.mxu0 0.0
    %3690 = vmatprep.subr.mxu0 0.0
    %3691 = vmatpush1.msra.mxu0 0.0
    %3692 = vmatprep.subr.mxu0 0.0
    %3693 = vmatpush1.msra.mxu0 0.0
    %3694 = vmatprep.subr.mxu0 0.0
    %3695 = vmatpush1.msra.mxu0 0.0
    %3696 = vmatprep.subr.mxu0 0.0
    %3697 = vmatpush1.msra.mxu0 0.0
    %3698 = vmatprep.subr.mxu0 0.0
    %3699 = vmatpush1.msra.mxu0 0.0
    %3700 = vmatprep.subr.mxu0 0.0
    %3701 = vmatpush1.msra.mxu0 0.0
    %3702 = vmatprep.subr.mxu0 0.0
    %3703 = vmatpush1.msra.mxu0 0.0
    %3704 = vmatprep.subr.mxu0 0.0
    %3705 = vmatpush1.msra.mxu0 0.0
    %3706 = vmatprep.subr.mxu0 0.0
    %3707 = vmatpush1.msra.mxu0 %v3257
    %3708 = vmatprep.subr.mxu0 0.0
    %3709 = vmatpush1.msra.mxu0 %v3256
    %3710 = vmatprep.subr.mxu0 0.0
    %3711 = vmatpush2.msra.mxu0 0.0
    %3712 = vmatprep.subr.mxu0 0.0
    %3713 = vmatpush2.msra.mxu0 0.0
    %3714 = vmatprep.subr.mxu0 0.0
    %3715 = vmatpush2.msra.mxu0 0.0
    %3716 = vmatprep.subr.mxu0 0.0
    %3717 = vmatpush2.msra.mxu0 0.0
    %3718 = vmatprep.subr.mxu0 0.0
    %3719 = vmatpush2.msra.mxu0 0.0
    %3720 = vmatprep.subr.mxu0 0.0
    %3721 = vmatpush2.msra.mxu0 0.0
    %3722 = vmatprep.subr.mxu0 0.0
    %3723 = vmatpush2.msra.mxu0 0.0
    %3724 = vmatprep.subr.mxu0 0.0
    %3725 = vmatpush2.msra.mxu0 0.0
    %3726 = vmatprep.subr.mxu0 0.0
    %3727 = vmatpush2.msra.mxu0 0.0
    %3728 = vmatprep.subr.mxu0 0.0
    %3729 = vmatpush2.msra.mxu0 0.0
    %3730 = vmatprep.subr.mxu0 0.0
    %3731 = vmatpush2.msra.mxu0 0.0
    %3732 = vmatprep.subr.mxu0 0.0
    %3733 = vmatpush2.msra.mxu0 0.0
    %3734 = vmatprep.subr.mxu0 0.0
    %3735 = vmatpush2.msra.mxu0 0.0
    %3736 = vmatprep.subr.mxu0 0.0
    %3737 = vmatpush2.msra.mxu0 0.0
    %3738 = vmatprep.subr.mxu0 0.0
    %3739 = vmatpush2.msra.mxu0 0.0
    %3740 = vmatprep.subr.mxu0 0.0
    %3741 = vmatpush2.msra.mxu0 0.0
    %3742 = vmatprep.mubr.f32.mxu0 0.0
    %3743 = vmatmul.mubr.f32.gmra.mxu0 %v3676
    %v3744 = vpop.f32.mrf.mxu0
    %v3745 = vadd.f32 0.0, %v3744
    %v3746 = vpop.f32.mrf.mxu0
    %3747 = vdwg.mxu0
    %v3748 = vadd.f32 %v3675, %v3745
    %v3749 = vxor.u32 %v3748, 2147483648
    %v3750 = vmul.f32 %v3749, 1.442695
    %v3751 = vpow.pop %v3750
    %v3752 = vadd.f32 %v3751, 1.0
    %v3753 = vrcp.pop %v3752
    %v3754 = vmul.f32 1.0, %v3753
    %v3755 = vtanh.pop %v3748
    %v3756 = vmul.f32 %v3754, %v3661
    %3758 = vrot.lane.b32.xlu0 %v3755, 96
    %v3759 = vpop.permute.xlu0 %3758
    %v3761 = vmul.f32 %v3754, %v3759
    %3763 = vrot.lane.b32.xlu0 %v3761, 16
    %v3764 = vpop.permute.xlu0 %3763
    %v3766 = vadd.f32 %v3756, %v3764
    %v3767 = vtanh.pop %v3766
    %3769 = vrot.lane.b32.xlu0 %v3767, 32
    %v3770 = vpop.permute.xlu0 %3769
    %v3772 = vmul.f32 %v3754, %v3770
    %3774 = vrot.lane.b32.xlu0 %v3772, 80
    %v3775 = vpop.permute.xlu0 %3774
    %s3777 = scalar_lea.vmem [#allocation9], 8
    %3778 = vst.msk [vmem:[%s3777] sm:$0x3] %vm537, %v3775
    %s3779 = scalar_lea.vmem [#allocation8], 10
    %v3780 = vld [vmem:[%s3779] sm:$0x3]
    %v3781 = vsel %vm433, %v3775, 0
    %3783 = vmatprep.subr.mxu0 0.0
    %3784 = vmatpush1.msra.mxu0 0.0
    %3785 = vmatprep.subr.mxu0 0.0
    %3786 = vmatpush1.msra.mxu0 0.0
    %3787 = vmatprep.subr.mxu0 0.0
    %3788 = vmatpush1.msra.mxu0 0.0
    %3789 = vmatprep.subr.mxu0 0.0
    %3790 = vmatpush1.msra.mxu0 0.0
    %3791 = vmatprep.subr.mxu0 0.0
    %3792 = vmatpush1.msra.mxu0 0.0
    %3793 = vmatprep.subr.mxu0 0.0
    %3794 = vmatpush1.msra.mxu0 0.0
    %3795 = vmatprep.subr.mxu0 0.0
    %3796 = vmatpush1.msra.mxu0 0.0
    %3797 = vmatprep.subr.mxu0 0.0
    %3798 = vmatpush1.msra.mxu0 0.0
    %3799 = vmatprep.subr.mxu0 0.0
    %3800 = vmatpush1.msra.mxu0 0.0
    %3801 = vmatprep.subr.mxu0 0.0
    %3802 = vmatpush1.msra.mxu0 0.0
    %3803 = vmatprep.subr.mxu0 0.0
    %3804 = vmatpush1.msra.mxu0 0.0
    %3805 = vmatprep.subr.mxu0 0.0
    %3806 = vmatpush1.msra.mxu0 0.0
    %3807 = vmatprep.subr.mxu0 0.0
    %3808 = vmatpush1.msra.mxu0 0.0
    %3809 = vmatprep.subr.mxu0 0.0
    %3810 = vmatpush1.msra.mxu0 0.0
    %3811 = vmatprep.subr.mxu0 0.0
    %3812 = vmatpush1.msra.mxu0 %v3257
    %3813 = vmatprep.subr.mxu0 0.0
    %3814 = vmatpush1.msra.mxu0 %v3256
    %3815 = vmatprep.subr.mxu0 0.0
    %3816 = vmatpush2.msra.mxu0 0.0
    %3817 = vmatprep.subr.mxu0 0.0
    %3818 = vmatpush2.msra.mxu0 0.0
    %3819 = vmatprep.subr.mxu0 0.0
    %3820 = vmatpush2.msra.mxu0 0.0
    %3821 = vmatprep.subr.mxu0 0.0
    %3822 = vmatpush2.msra.mxu0 0.0
    %3823 = vmatprep.subr.mxu0 0.0
    %3824 = vmatpush2.msra.mxu0 0.0
    %3825 = vmatprep.subr.mxu0 0.0
    %3826 = vmatpush2.msra.mxu0 0.0
    %3827 = vmatprep.subr.mxu0 0.0
    %3828 = vmatpush2.msra.mxu0 0.0
    %3829 = vmatprep.subr.mxu0 0.0
    %3830 = vmatpush2.msra.mxu0 0.0
    %3831 = vmatprep.subr.mxu0 0.0
    %3832 = vmatpush2.msra.mxu0 0.0
    %3833 = vmatprep.subr.mxu0 0.0
    %3834 = vmatpush2.msra.mxu0 0.0
    %3835 = vmatprep.subr.mxu0 0.0
    %3836 = vmatpush2.msra.mxu0 0.0
    %3837 = vmatprep.subr.mxu0 0.0
    %3838 = vmatpush2.msra.mxu0 0.0
    %3839 = vmatprep.subr.mxu0 0.0
    %3840 = vmatpush2.msra.mxu0 0.0
    %3841 = vmatprep.subr.mxu0 0.0
    %3842 = vmatpush2.msra.mxu0 0.0
    %3843 = vmatprep.subr.mxu0 0.0
    %3844 = vmatpush2.msra.mxu0 0.0
    %3845 = vmatprep.subr.mxu0 0.0
    %3846 = vmatpush2.msra.mxu0 0.0
    %3847 = vmatprep.mubr.f32.mxu0 0.0
    %3848 = vmatmul.mubr.f32.gmra.mxu0 %v3781
    %v3849 = vpop.f32.mrf.mxu0
    %v3850 = vadd.f32 0.0, %v3849
    %v3851 = vpop.f32.mrf.mxu0
    %3852 = vdwg.mxu0
    %v3853 = vadd.f32 %v3780, %v3850
    %v3854 = vxor.u32 %v3853, 2147483648
    %v3855 = vmul.f32 %v3854, 1.442695
    %v3856 = vpow.pop %v3855
    %v3857 = vadd.f32 %v3856, 1.0
    %v3858 = vrcp.pop %v3857
    %v3859 = vmul.f32 1.0, %v3858
    %v3860 = vtanh.pop %v3853
    %v3861 = vmul.f32 %v3859, %v3766
    %3863 = vrot.lane.b32.xlu0 %v3860, 96
    %v3864 = vpop.permute.xlu0 %3863
    %v3866 = vmul.f32 %v3859, %v3864
    %3868 = vrot.lane.b32.xlu0 %v3866, 16
    %v3869 = vpop.permute.xlu0 %3868
    %v3871 = vadd.f32 %v3861, %v3869
    %v3872 = vtanh.pop %v3871
    %3874 = vrot.lane.b32.xlu0 %v3872, 32
    %v3875 = vpop.permute.xlu0 %3874
    %v3877 = vmul.f32 %v3859, %v3875
    %3879 = vrot.lane.b32.xlu0 %v3877, 80
    %v3880 = vpop.permute.xlu0 %3879
    %s3882 = scalar_lea.vmem [#allocation9], 10
    %3883 = vst.msk [vmem:[%s3882] sm:$0x3] %vm537, %v3880
    %s3884 = scalar_lea.vmem [#allocation8], 12
    %v3885 = vld [vmem:[%s3884] sm:$0x3]
    %v3886 = vsel %vm433, %v3880, 0
    %3888 = vmatprep.subr.mxu0 0.0
    %3889 = vmatpush1.msra.mxu0 0.0
    %3890 = vmatprep.subr.mxu0 0.0
    %3891 = vmatpush1.msra.mxu0 0.0
    %3892 = vmatprep.subr.mxu0 0.0
    %3893 = vmatpush1.msra.mxu0 0.0
    %3894 = vmatprep.subr.mxu0 0.0
    %3895 = vmatpush1.msra.mxu0 0.0
    %3896 = vmatprep.subr.mxu0 0.0
    %3897 = vmatpush1.msra.mxu0 0.0
    %3898 = vmatprep.subr.mxu0 0.0
    %3899 = vmatpush1.msra.mxu0 0.0
    %3900 = vmatprep.subr.mxu0 0.0
    %3901 = vmatpush1.msra.mxu0 0.0
    %3902 = vmatprep.subr.mxu0 0.0
    %3903 = vmatpush1.msra.mxu0 0.0
    %3904 = vmatprep.subr.mxu0 0.0
    %3905 = vmatpush1.msra.mxu0 0.0
    %3906 = vmatprep.subr.mxu0 0.0
    %3907 = vmatpush1.msra.mxu0 0.0
    %3908 = vmatprep.subr.mxu0 0.0
    %3909 = vmatpush1.msra.mxu0 0.0
    %3910 = vmatprep.subr.mxu0 0.0
    %3911 = vmatpush1.msra.mxu0 0.0
    %3912 = vmatprep.subr.mxu0 0.0
    %3913 = vmatpush1.msra.mxu0 0.0
    %3914 = vmatprep.subr.mxu0 0.0
    %3915 = vmatpush1.msra.mxu0 0.0
    %3916 = vmatprep.subr.mxu0 0.0
    %3917 = vmatpush1.msra.mxu0 %v3257
    %3918 = vmatprep.subr.mxu0 0.0
    %3919 = vmatpush1.msra.mxu0 %v3256
    %3920 = vmatprep.subr.mxu0 0.0
    %3921 = vmatpush2.msra.mxu0 0.0
    %3922 = vmatprep.subr.mxu0 0.0
    %3923 = vmatpush2.msra.mxu0 0.0
    %3924 = vmatprep.subr.mxu0 0.0
    %3925 = vmatpush2.msra.mxu0 0.0
    %3926 = vmatprep.subr.mxu0 0.0
    %3927 = vmatpush2.msra.mxu0 0.0
    %3928 = vmatprep.subr.mxu0 0.0
    %3929 = vmatpush2.msra.mxu0 0.0
    %3930 = vmatprep.subr.mxu0 0.0
    %3931 = vmatpush2.msra.mxu0 0.0
    %3932 = vmatprep.subr.mxu0 0.0
    %3933 = vmatpush2.msra.mxu0 0.0
    %3934 = vmatprep.subr.mxu0 0.0
    %3935 = vmatpush2.msra.mxu0 0.0
    %3936 = vmatprep.subr.mxu0 0.0
    %3937 = vmatpush2.msra.mxu0 0.0
    %3938 = vmatprep.subr.mxu0 0.0
    %3939 = vmatpush2.msra.mxu0 0.0
    %3940 = vmatprep.subr.mxu0 0.0
    %3941 = vmatpush2.msra.mxu0 0.0
    %3942 = vmatprep.subr.mxu0 0.0
    %3943 = vmatpush2.msra.mxu0 0.0
    %3944 = vmatprep.subr.mxu0 0.0
    %3945 = vmatpush2.msra.mxu0 0.0
    %3946 = vmatprep.subr.mxu0 0.0
    %3947 = vmatpush2.msra.mxu0 0.0
    %3948 = vmatprep.subr.mxu0 0.0
    %3949 = vmatpush2.msra.mxu0 0.0
    %3950 = vmatprep.subr.mxu0 0.0
    %3951 = vmatpush2.msra.mxu0 0.0
    %3952 = vmatprep.mubr.f32.mxu0 0.0
    %3953 = vmatmul.mubr.f32.gmra.mxu0 %v3886
    %v3954 = vpop.f32.mrf.mxu0
    %v3955 = vadd.f32 0.0, %v3954
    %v3956 = vpop.f32.mrf.mxu0
    %3957 = vdwg.mxu0
    %v3958 = vadd.f32 %v3885, %v3955
    %v3959 = vxor.u32 %v3958, 2147483648
    %v3960 = vmul.f32 %v3959, 1.442695
    %v3961 = vpow.pop %v3960
    %v3962 = vadd.f32 %v3961, 1.0
    %v3963 = vrcp.pop %v3962
    %v3964 = vmul.f32 1.0, %v3963
    %v3965 = vtanh.pop %v3958
    %v3966 = vmul.f32 %v3964, %v3871
    %3968 = vrot.lane.b32.xlu0 %v3965, 96
    %v3969 = vpop.permute.xlu0 %3968
    %v3971 = vmul.f32 %v3964, %v3969
    %3973 = vrot.lane.b32.xlu0 %v3971, 16
    %v3974 = vpop.permute.xlu0 %3973
    %v3976 = vadd.f32 %v3966, %v3974
    %v3977 = vtanh.pop %v3976
    %3979 = vrot.lane.b32.xlu0 %v3977, 32
    %v3980 = vpop.permute.xlu0 %3979
    %v3982 = vmul.f32 %v3964, %v3980
    %3984 = vrot.lane.b32.xlu0 %v3982, 80
    %v3985 = vpop.permute.xlu0 %3984
    %s3987 = scalar_lea.vmem [#allocation9], 12
    %3988 = vst.msk [vmem:[%s3987] sm:$0x3] %vm537, %v3985
    %s3989 = scalar_lea.vmem [#allocation8], 14
    %v3990 = vld [vmem:[%s3989] sm:$0x3]
    %v3991 = vsel %vm433, %v3985, 0
    %3993 = vmatprep.subr.mxu0 0.0
    %3994 = vmatpush1.msra.mxu0 0.0
    %3995 = vmatprep.subr.mxu0 0.0
    %3996 = vmatpush1.msra.mxu0 0.0
    %3997 = vmatprep.subr.mxu0 0.0
    %3998 = vmatpush1.msra.mxu0 0.0
    %3999 = vmatprep.subr.mxu0 0.0
    %4000 = vmatpush1.msra.mxu0 0.0
    %4001 = vmatprep.subr.mxu0 0.0
    %4002 = vmatpush1.msra.mxu0 0.0
    %4003 = vmatprep.subr.mxu0 0.0
    %4004 = vmatpush1.msra.mxu0 0.0
    %4005 = vmatprep.subr.mxu0 0.0
    %4006 = vmatpush1.msra.mxu0 0.0
    %4007 = vmatprep.subr.mxu0 0.0
    %4008 = vmatpush1.msra.mxu0 0.0
    %4009 = vmatprep.subr.mxu0 0.0
    %4010 = vmatpush1.msra.mxu0 0.0
    %4011 = vmatprep.subr.mxu0 0.0
    %4012 = vmatpush1.msra.mxu0 0.0
    %4013 = vmatprep.subr.mxu0 0.0
    %4014 = vmatpush1.msra.mxu0 0.0
    %4015 = vmatprep.subr.mxu0 0.0
    %4016 = vmatpush1.msra.mxu0 0.0
    %4017 = vmatprep.subr.mxu0 0.0
    %4018 = vmatpush1.msra.mxu0 0.0
    %4019 = vmatprep.subr.mxu0 0.0
    %4020 = vmatpush1.msra.mxu0 0.0
    %4021 = vmatprep.subr.mxu0 0.0
    %4022 = vmatpush1.msra.mxu0 %v3257
    %4023 = vmatprep.subr.mxu0 0.0
    %4024 = vmatpush1.msra.mxu0 %v3256
    %4025 = vmatprep.subr.mxu0 0.0
    %4026 = vmatpush2.msra.mxu0 0.0
    %4027 = vmatprep.subr.mxu0 0.0
    %4028 = vmatpush2.msra.mxu0 0.0
    %4029 = vmatprep.subr.mxu0 0.0
    %4030 = vmatpush2.msra.mxu0 0.0
    %4031 = vmatprep.subr.mxu0 0.0
    %4032 = vmatpush2.msra.mxu0 0.0
    %4033 = vmatprep.subr.mxu0 0.0
    %4034 = vmatpush2.msra.mxu0 0.0
    %4035 = vmatprep.subr.mxu0 0.0
    %4036 = vmatpush2.msra.mxu0 0.0
    %4037 = vmatprep.subr.mxu0 0.0
    %4038 = vmatpush2.msra.mxu0 0.0
    %4039 = vmatprep.subr.mxu0 0.0
    %4040 = vmatpush2.msra.mxu0 0.0
    %4041 = vmatprep.subr.mxu0 0.0
    %4042 = vmatpush2.msra.mxu0 0.0
    %4043 = vmatprep.subr.mxu0 0.0
    %4044 = vmatpush2.msra.mxu0 0.0
    %4045 = vmatprep.subr.mxu0 0.0
    %4046 = vmatpush2.msra.mxu0 0.0
    %4047 = vmatprep.subr.mxu0 0.0
    %4048 = vmatpush2.msra.mxu0 0.0
    %4049 = vmatprep.subr.mxu0 0.0
    %4050 = vmatpush2.msra.mxu0 0.0
    %4051 = vmatprep.subr.mxu0 0.0
    %4052 = vmatpush2.msra.mxu0 0.0
    %4053 = vmatprep.subr.mxu0 0.0
    %4054 = vmatpush2.msra.mxu0 0.0
    %4055 = vmatprep.subr.mxu0 0.0
    %4056 = vmatpush2.msra.mxu0 0.0
    %4057 = vmatprep.mubr.f32.mxu0 0.0
    %4058 = vmatmul.mubr.f32.gmra.mxu0 %v3991
    %v4059 = vpop.f32.mrf.mxu0
    %v4060 = vadd.f32 0.0, %v4059
    %v4061 = vpop.f32.mrf.mxu0
    %4062 = vdwg.mxu0
    %v4063 = vadd.f32 %v3990, %v4060
    %v4064 = vxor.u32 %v4063, 2147483648
    %v4065 = vmul.f32 %v4064, 1.442695
    %v4066 = vpow.pop %v4065
    %v4067 = vadd.f32 %v4066, 1.0
    %v4068 = vrcp.pop %v4067
    %v4069 = vmul.f32 1.0, %v4068
    %v4070 = vtanh.pop %v4063
    %v4071 = vmul.f32 %v4069, %v3976
    %4073 = vrot.lane.b32.xlu0 %v4070, 96
    %v4074 = vpop.permute.xlu0 %4073
    %v4076 = vmul.f32 %v4069, %v4074
    %4078 = vrot.lane.b32.xlu0 %v4076, 16
    %v4079 = vpop.permute.xlu0 %4078
    %v4081 = vadd.f32 %v4071, %v4079
    %v4082 = vtanh.pop %v4081
    %4084 = vrot.lane.b32.xlu0 %v4082, 32
    %v4085 = vpop.permute.xlu0 %4084
    %v4087 = vmul.f32 %v4069, %v4085
    %4089 = vrot.lane.b32.xlu0 %v4087, 80
    %v4090 = vpop.permute.xlu0 %4089
    %s4092 = scalar_lea.vmem [#allocation9], 14
    %4093 = vst.msk [vmem:[%s4092] sm:$0x3] %vm537, %v4090
    %v4094 = vld [vmem:[#allocation9] sm:$0xff]
    %v4095 = vld [vmem:[#allocation9 + $0x8] sm:$0xff]
    %v4096 = vld [vmem:[#allocation31] sm:$0xff]
    %v4097 = vld [vmem:[#allocation31 + $0x8] sm:$0xff]
    %v4098 = vld [vmem:[%s18] sm:$0x1]
    %v4100 = vlaneseq
    %v4101 = vshrl.u32 %v4100, 7
    %v4102 = vsub.s32 0, %v4101
    %v4103 = vrot.slane %v4098, %v4102
    %v4106 = vsel %vm433, %v4094, 0
    %v4109 = vsel %vm433, %v4095, 0
    %4111 = vmatprep.subr.mxu0 0.0
    %4112 = vmatpush1.msra.mxu0 0.0
    %4113 = vmatprep.subr.mxu0 0.0
    %4114 = vmatpush1.msra.mxu0 0.0
    %4115 = vmatprep.subr.mxu0 0.0
    %4116 = vmatpush1.msra.mxu0 0.0
    %4117 = vmatprep.subr.mxu0 0.0
    %4118 = vmatpush1.msra.mxu0 0.0
    %4119 = vmatprep.subr.mxu0 0.0
    %4120 = vmatpush1.msra.mxu0 0.0
    %4121 = vmatprep.subr.mxu0 0.0
    %4122 = vmatpush1.msra.mxu0 0.0
    %4123 = vmatprep.subr.mxu0 0.0
    %4124 = vmatpush1.msra.mxu0 0.0
    %4125 = vmatprep.subr.mxu0 0.0
    %4126 = vmatpush1.msra.mxu0 0.0
    %4127 = vmatprep.subr.mxu0 0.0
    %4128 = vmatpush1.msra.mxu0 0.0
    %4129 = vmatprep.subr.mxu0 0.0
    %4130 = vmatpush1.msra.mxu0 0.0
    %4131 = vmatprep.subr.mxu0 0.0
    %4132 = vmatpush1.msra.mxu0 0.0
    %4133 = vmatprep.subr.mxu0 0.0
    %4134 = vmatpush1.msra.mxu0 0.0
    %4135 = vmatprep.subr.mxu0 0.0
    %4136 = vmatpush1.msra.mxu0 0.0
    %4137 = vmatprep.subr.mxu0 0.0
    %4138 = vmatpush1.msra.mxu0 0.0
    %4139 = vmatprep.subr.mxu0 0.0
    %4140 = vmatpush1.msra.mxu0 %v4097
    %4141 = vmatprep.subr.mxu0 0.0
    %4142 = vmatpush1.msra.mxu0 %v4096
    %4143 = vmatprep.subr.mxu0 0.0
    %4144 = vmatpush2.msra.mxu0 0.0
    %4145 = vmatprep.subr.mxu0 0.0
    %4146 = vmatpush2.msra.mxu0 0.0
    %4147 = vmatprep.subr.mxu0 0.0
    %4148 = vmatpush2.msra.mxu0 0.0
    %4149 = vmatprep.subr.mxu0 0.0
    %4150 = vmatpush2.msra.mxu0 0.0
    %4151 = vmatprep.subr.mxu0 0.0
    %4152 = vmatpush2.msra.mxu0 0.0
    %4153 = vmatprep.subr.mxu0 0.0
    %4154 = vmatpush2.msra.mxu0 0.0
    %4155 = vmatprep.subr.mxu0 0.0
    %4156 = vmatpush2.msra.mxu0 0.0
    %4157 = vmatprep.subr.mxu0 0.0
    %4158 = vmatpush2.msra.mxu0 0.0
    %4159 = vmatprep.subr.mxu0 0.0
    %4160 = vmatpush2.msra.mxu0 0.0
    %4161 = vmatprep.subr.mxu0 0.0
    %4162 = vmatpush2.msra.mxu0 0.0
    %4163 = vmatprep.subr.mxu0 0.0
    %4164 = vmatpush2.msra.mxu0 0.0
    %4165 = vmatprep.subr.mxu0 0.0
    %4166 = vmatpush2.msra.mxu0 0.0
    %4167 = vmatprep.subr.mxu0 0.0
    %4168 = vmatpush2.msra.mxu0 0.0
    %4169 = vmatprep.subr.mxu0 0.0
    %4170 = vmatpush2.msra.mxu0 0.0
    %4171 = vmatprep.subr.mxu0 0.0
    %4172 = vmatpush2.msra.mxu0 0.0
    %4173 = vmatprep.subr.mxu0 0.0
    %4174 = vmatpush2.msra.mxu0 0.0
    %4175 = vmatprep.mubr.f32.mxu0 0.0
    %4176 = vmatmul.mubr.f32.gmra.mxu0 %v4106
    %v4177 = vpop.f32.mrf.mxu0
    %v4178 = vadd.f32 %v4103, %v4177
    %v4179 = vpop.f32.mrf.mxu0
    %4180 = vmatprep.mubr.f32.mxu0 0.0
    %4181 = vmatmul.mubr.f32.gmra.mxu0 %v4109
    %v4182 = vpop.f32.mrf.mxu0
    %v4183 = vadd.f32 %v4103, %v4182
    %v4184 = vpop.f32.mrf.mxu0
    %4185 = vdwg.mxu0
    %4186 = vst.msk [vmem:[#allocation10] sm:$0xff] %vm3253, %v4178
    %4187 = vst.msk [vmem:[#allocation10 + $0x8] sm:$0xff] %vm3253, %v4183
    %v4188 = vld [vmem:[#allocation32] sm:$0xff]
    %v4189 = vld [vmem:[#allocation32 + $0x8] sm:$0xff]
    %v4190 = vld [vmem:[#allocation10] sm:$0x3]
    %4191 = vmatprep.subr.mxu0 0.0
    %4192 = vmatpush1.msra.mxu0 0.0
    %4193 = vmatprep.subr.mxu0 0.0
    %4194 = vmatpush1.msra.mxu0 0.0
    %4195 = vmatprep.subr.mxu0 0.0
    %4196 = vmatpush1.msra.mxu0 0.0
    %4197 = vmatprep.subr.mxu0 0.0
    %4198 = vmatpush1.msra.mxu0 0.0
    %4199 = vmatprep.subr.mxu0 0.0
    %4200 = vmatpush1.msra.mxu0 0.0
    %4201 = vmatprep.subr.mxu0 0.0
    %4202 = vmatpush1.msra.mxu0 0.0
    %4203 = vmatprep.subr.mxu0 0.0
    %4204 = vmatpush1.msra.mxu0 0.0
    %4205 = vmatprep.subr.mxu0 0.0
    %4206 = vmatpush1.msra.mxu0 0.0
    %4207 = vmatprep.subr.mxu0 0.0
    %4208 = vmatpush1.msra.mxu0 0.0
    %4209 = vmatprep.subr.mxu0 0.0
    %4210 = vmatpush1.msra.mxu0 0.0
    %4211 = vmatprep.subr.mxu0 0.0
    %4212 = vmatpush1.msra.mxu0 0.0
    %4213 = vmatprep.subr.mxu0 0.0
    %4214 = vmatpush1.msra.mxu0 0.0
    %4215 = vmatprep.subr.mxu0 0.0
    %4216 = vmatpush1.msra.mxu0 0.0
    %4217 = vmatprep.subr.mxu0 0.0
    %4218 = vmatpush1.msra.mxu0 0.0
    %4219 = vmatprep.subr.mxu0 0.0
    %4220 = vmatpush1.msra.mxu0 %v4189
    %4221 = vmatprep.subr.mxu0 0.0
    %4222 = vmatpush1.msra.mxu0 %v4188
    %4223 = vmatprep.subr.mxu0 0.0
    %4224 = vmatpush2.msra.mxu0 0.0
    %4225 = vmatprep.subr.mxu0 0.0
    %4226 = vmatpush2.msra.mxu0 0.0
    %4227 = vmatprep.subr.mxu0 0.0
    %4228 = vmatpush2.msra.mxu0 0.0
    %4229 = vmatprep.subr.mxu0 0.0
    %4230 = vmatpush2.msra.mxu0 0.0
    %4231 = vmatprep.subr.mxu0 0.0
    %4232 = vmatpush2.msra.mxu0 0.0
    %4233 = vmatprep.subr.mxu0 0.0
    %4234 = vmatpush2.msra.mxu0 0.0
    %4235 = vmatprep.subr.mxu0 0.0
    %4236 = vmatpush2.msra.mxu0 0.0
    %4237 = vmatprep.subr.mxu0 0.0
    %4238 = vmatpush2.msra.mxu0 0.0
    %4239 = vmatprep.subr.mxu0 0.0
    %4240 = vmatpush2.msra.mxu0 0.0
    %4241 = vmatprep.subr.mxu0 0.0
    %4242 = vmatpush2.msra.mxu0 0.0
    %4243 = vmatprep.subr.mxu0 0.0
    %4244 = vmatpush2.msra.mxu0 0.0
    %4245 = vmatprep.subr.mxu0 0.0
    %4246 = vmatpush2.msra.mxu0 0.0
    %4247 = vmatprep.subr.mxu0 0.0
    %4248 = vmatpush2.msra.mxu0 0.0
    %4249 = vmatprep.subr.mxu0 0.0
    %4250 = vmatpush2.msra.mxu0 0.0
    %4251 = vmatprep.subr.mxu0 0.0
    %4252 = vmatpush2.msra.mxu0 0.0
    %4253 = vmatprep.subr.mxu0 0.0
    %4254 = vmatpush2.msra.mxu0 0.0
    %4255 = vmatprep.mubr.f32.mxu0 0.0
    %4256 = vmatmul.mubr.f32.gmra.mxu0 %v435
    %v4257 = vpop.f32.mrf.mxu0
    %v4258 = vadd.f32 0.0, %v4257
    %v4259 = vpop.f32.mrf.mxu0
    %4260 = vdwg.mxu0
    %v4261 = vadd.f32 %v4190, %v4258
    %v4262 = vxor.u32 %v4261, 2147483648
    %v4263 = vmul.f32 %v4262, 1.442695
    %v4264 = vpow.pop %v4263
    %v4265 = vadd.f32 %v4264, 1.0
    %v4266 = vrcp.pop %v4265
    %v4267 = vmul.f32 1.0, %v4266
    %v4268 = vtanh.pop %v4261
    %v4269 = vmul.f32 %v4267, 0.0
    %4271 = vrot.lane.b32.xlu0 %v4268, 96
    %v4272 = vpop.permute.xlu0 %4271
    %v4274 = vmul.f32 %v4267, %v4272
    %4276 = vrot.lane.b32.xlu0 %v4274, 16
    %v4277 = vpop.permute.xlu0 %4276
    %v4279 = vadd.f32 %v4269, %v4277
    %v4280 = vtanh.pop %v4279
    %4282 = vrot.lane.b32.xlu0 %v4280, 32
    %v4283 = vpop.permute.xlu0 %4282
    %v4285 = vmul.f32 %v4267, %v4283
    %s4286 = scalar_lea.vmem [#allocation10], 2
    %v4287 = vld [vmem:[%s4286] sm:$0x3]
    %4289 = vrot.lane.b32.xlu0 %v4285, 80
    %v4290 = vpop.permute.xlu0 %4289
    %v4291 = vsel %vm433, %v4290, 0
    %4293 = vmatprep.subr.mxu0 0.0
    %4294 = vmatpush1.msra.mxu0 0.0
    %4295 = vmatprep.subr.mxu0 0.0
    %4296 = vmatpush1.msra.mxu0 0.0
    %4297 = vmatprep.subr.mxu0 0.0
    %4298 = vmatpush1.msra.mxu0 0.0
    %4299 = vmatprep.subr.mxu0 0.0
    %4300 = vmatpush1.msra.mxu0 0.0
    %4301 = vmatprep.subr.mxu0 0.0
    %4302 = vmatpush1.msra.mxu0 0.0
    %4303 = vmatprep.subr.mxu0 0.0
    %4304 = vmatpush1.msra.mxu0 0.0
    %4305 = vmatprep.subr.mxu0 0.0
    %4306 = vmatpush1.msra.mxu0 0.0
    %4307 = vmatprep.subr.mxu0 0.0
    %4308 = vmatpush1.msra.mxu0 0.0
    %4309 = vmatprep.subr.mxu0 0.0
    %4310 = vmatpush1.msra.mxu0 0.0
    %4311 = vmatprep.subr.mxu0 0.0
    %4312 = vmatpush1.msra.mxu0 0.0
    %4313 = vmatprep.subr.mxu0 0.0
    %4314 = vmatpush1.msra.mxu0 0.0
    %4315 = vmatprep.subr.mxu0 0.0
    %4316 = vmatpush1.msra.mxu0 0.0
    %4317 = vmatprep.subr.mxu0 0.0
    %4318 = vmatpush1.msra.mxu0 0.0
    %4319 = vmatprep.subr.mxu0 0.0
    %4320 = vmatpush1.msra.mxu0 0.0
    %4321 = vmatprep.subr.mxu0 0.0
    %4322 = vmatpush1.msra.mxu0 %v4189
    %4323 = vmatprep.subr.mxu0 0.0
    %4324 = vmatpush1.msra.mxu0 %v4188
    %4325 = vmatprep.subr.mxu0 0.0
    %4326 = vmatpush2.msra.mxu0 0.0
    %4327 = vmatprep.subr.mxu0 0.0
    %4328 = vmatpush2.msra.mxu0 0.0
    %4329 = vmatprep.subr.mxu0 0.0
    %4330 = vmatpush2.msra.mxu0 0.0
    %4331 = vmatprep.subr.mxu0 0.0
    %4332 = vmatpush2.msra.mxu0 0.0
    %4333 = vmatprep.subr.mxu0 0.0
    %4334 = vmatpush2.msra.mxu0 0.0
    %4335 = vmatprep.subr.mxu0 0.0
    %4336 = vmatpush2.msra.mxu0 0.0
    %4337 = vmatprep.subr.mxu0 0.0
    %4338 = vmatpush2.msra.mxu0 0.0
    %4339 = vmatprep.subr.mxu0 0.0
    %4340 = vmatpush2.msra.mxu0 0.0
    %4341 = vmatprep.subr.mxu0 0.0
    %4342 = vmatpush2.msra.mxu0 0.0
    %4343 = vmatprep.subr.mxu0 0.0
    %4344 = vmatpush2.msra.mxu0 0.0
    %4345 = vmatprep.subr.mxu0 0.0
    %4346 = vmatpush2.msra.mxu0 0.0
    %4347 = vmatprep.subr.mxu0 0.0
    %4348 = vmatpush2.msra.mxu0 0.0
    %4349 = vmatprep.subr.mxu0 0.0
    %4350 = vmatpush2.msra.mxu0 0.0
    %4351 = vmatprep.subr.mxu0 0.0
    %4352 = vmatpush2.msra.mxu0 0.0
    %4353 = vmatprep.subr.mxu0 0.0
    %4354 = vmatpush2.msra.mxu0 0.0
    %4355 = vmatprep.subr.mxu0 0.0
    %4356 = vmatpush2.msra.mxu0 0.0
    %4357 = vmatprep.mubr.f32.mxu0 0.0
    %4358 = vmatmul.mubr.f32.gmra.mxu0 %v4291
    %v4359 = vpop.f32.mrf.mxu0
    %v4360 = vadd.f32 0.0, %v4359
    %v4361 = vpop.f32.mrf.mxu0
    %4362 = vdwg.mxu0
    %v4363 = vadd.f32 %v4287, %v4360
    %v4364 = vxor.u32 %v4363, 2147483648
    %v4365 = vmul.f32 %v4364, 1.442695
    %v4366 = vpow.pop %v4365
    %v4367 = vadd.f32 %v4366, 1.0
    %v4368 = vrcp.pop %v4367
    %v4369 = vmul.f32 1.0, %v4368
    %v4370 = vtanh.pop %v4363
    %v4371 = vmul.f32 %v4369, %v4279
    %4373 = vrot.lane.b32.xlu0 %v4370, 96
    %v4374 = vpop.permute.xlu0 %4373
    %v4376 = vmul.f32 %v4369, %v4374
    %4378 = vrot.lane.b32.xlu0 %v4376, 16
    %v4379 = vpop.permute.xlu0 %4378
    %v4381 = vadd.f32 %v4371, %v4379
    %v4382 = vtanh.pop %v4381
    %4384 = vrot.lane.b32.xlu0 %v4382, 32
    %v4385 = vpop.permute.xlu0 %4384
    %v4387 = vmul.f32 %v4369, %v4385
    %s4388 = scalar_lea.vmem [#allocation10], 4
    %v4389 = vld [vmem:[%s4388] sm:$0x3]
    %4391 = vrot.lane.b32.xlu0 %v4387, 80
    %v4392 = vpop.permute.xlu0 %4391
    %v4393 = vsel %vm433, %v4392, 0
    %4395 = vmatprep.subr.mxu0 0.0
    %4396 = vmatpush1.msra.mxu0 0.0
    %4397 = vmatprep.subr.mxu0 0.0
    %4398 = vmatpush1.msra.mxu0 0.0
    %4399 = vmatprep.subr.mxu0 0.0
    %4400 = vmatpush1.msra.mxu0 0.0
    %4401 = vmatprep.subr.mxu0 0.0
    %4402 = vmatpush1.msra.mxu0 0.0
    %4403 = vmatprep.subr.mxu0 0.0
    %4404 = vmatpush1.msra.mxu0 0.0
    %4405 = vmatprep.subr.mxu0 0.0
    %4406 = vmatpush1.msra.mxu0 0.0
    %4407 = vmatprep.subr.mxu0 0.0
    %4408 = vmatpush1.msra.mxu0 0.0
    %4409 = vmatprep.subr.mxu0 0.0
    %4410 = vmatpush1.msra.mxu0 0.0
    %4411 = vmatprep.subr.mxu0 0.0
    %4412 = vmatpush1.msra.mxu0 0.0
    %4413 = vmatprep.subr.mxu0 0.0
    %4414 = vmatpush1.msra.mxu0 0.0
    %4415 = vmatprep.subr.mxu0 0.0
    %4416 = vmatpush1.msra.mxu0 0.0
    %4417 = vmatprep.subr.mxu0 0.0
    %4418 = vmatpush1.msra.mxu0 0.0
    %4419 = vmatprep.subr.mxu0 0.0
    %4420 = vmatpush1.msra.mxu0 0.0
    %4421 = vmatprep.subr.mxu0 0.0
    %4422 = vmatpush1.msra.mxu0 0.0
    %4423 = vmatprep.subr.mxu0 0.0
    %4424 = vmatpush1.msra.mxu0 %v4189
    %4425 = vmatprep.subr.mxu0 0.0
    %4426 = vmatpush1.msra.mxu0 %v4188
    %4427 = vmatprep.subr.mxu0 0.0
    %4428 = vmatpush2.msra.mxu0 0.0
    %4429 = vmatprep.subr.mxu0 0.0
    %4430 = vmatpush2.msra.mxu0 0.0
    %4431 = vmatprep.subr.mxu0 0.0
    %4432 = vmatpush2.msra.mxu0 0.0
    %4433 = vmatprep.subr.mxu0 0.0
    %4434 = vmatpush2.msra.mxu0 0.0
    %4435 = vmatprep.subr.mxu0 0.0
    %4436 = vmatpush2.msra.mxu0 0.0
    %4437 = vmatprep.subr.mxu0 0.0
    %4438 = vmatpush2.msra.mxu0 0.0
    %4439 = vmatprep.subr.mxu0 0.0
    %4440 = vmatpush2.msra.mxu0 0.0
    %4441 = vmatprep.subr.mxu0 0.0
    %4442 = vmatpush2.msra.mxu0 0.0
    %4443 = vmatprep.subr.mxu0 0.0
    %4444 = vmatpush2.msra.mxu0 0.0
    %4445 = vmatprep.subr.mxu0 0.0
    %4446 = vmatpush2.msra.mxu0 0.0
    %4447 = vmatprep.subr.mxu0 0.0
    %4448 = vmatpush2.msra.mxu0 0.0
    %4449 = vmatprep.subr.mxu0 0.0
    %4450 = vmatpush2.msra.mxu0 0.0
    %4451 = vmatprep.subr.mxu0 0.0
    %4452 = vmatpush2.msra.mxu0 0.0
    %4453 = vmatprep.subr.mxu0 0.0
    %4454 = vmatpush2.msra.mxu0 0.0
    %4455 = vmatprep.subr.mxu0 0.0
    %4456 = vmatpush2.msra.mxu0 0.0
    %4457 = vmatprep.subr.mxu0 0.0
    %4458 = vmatpush2.msra.mxu0 0.0
    %4459 = vmatprep.mubr.f32.mxu0 0.0
    %4460 = vmatmul.mubr.f32.gmra.mxu0 %v4393
    %v4461 = vpop.f32.mrf.mxu0
    %v4462 = vadd.f32 0.0, %v4461
    %v4463 = vpop.f32.mrf.mxu0
    %4464 = vdwg.mxu0
    %v4465 = vadd.f32 %v4389, %v4462
    %v4466 = vxor.u32 %v4465, 2147483648
    %v4467 = vmul.f32 %v4466, 1.442695
    %v4468 = vpow.pop %v4467
    %v4469 = vadd.f32 %v4468, 1.0
    %v4470 = vrcp.pop %v4469
    %v4471 = vmul.f32 1.0, %v4470
    %v4472 = vtanh.pop %v4465
    %v4473 = vmul.f32 %v4471, %v4381
    %4475 = vrot.lane.b32.xlu0 %v4472, 96
    %v4476 = vpop.permute.xlu0 %4475
    %v4478 = vmul.f32 %v4471, %v4476
    %4480 = vrot.lane.b32.xlu0 %v4478, 16
    %v4481 = vpop.permute.xlu0 %4480
    %v4483 = vadd.f32 %v4473, %v4481
    %v4484 = vtanh.pop %v4483
    %4486 = vrot.lane.b32.xlu0 %v4484, 32
    %v4487 = vpop.permute.xlu0 %4486
    %v4489 = vmul.f32 %v4471, %v4487
    %s4490 = scalar_lea.vmem [#allocation10], 6
    %v4491 = vld [vmem:[%s4490] sm:$0x3]
    %4493 = vrot.lane.b32.xlu0 %v4489, 80
    %v4494 = vpop.permute.xlu0 %4493
    %v4495 = vsel %vm433, %v4494, 0
    %4497 = vmatprep.subr.mxu0 0.0
    %4498 = vmatpush1.msra.mxu0 0.0
    %4499 = vmatprep.subr.mxu0 0.0
    %4500 = vmatpush1.msra.mxu0 0.0
    %4501 = vmatprep.subr.mxu0 0.0
    %4502 = vmatpush1.msra.mxu0 0.0
    %4503 = vmatprep.subr.mxu0 0.0
    %4504 = vmatpush1.msra.mxu0 0.0
    %4505 = vmatprep.subr.mxu0 0.0
    %4506 = vmatpush1.msra.mxu0 0.0
    %4507 = vmatprep.subr.mxu0 0.0
    %4508 = vmatpush1.msra.mxu0 0.0
    %4509 = vmatprep.subr.mxu0 0.0
    %4510 = vmatpush1.msra.mxu0 0.0
    %4511 = vmatprep.subr.mxu0 0.0
    %4512 = vmatpush1.msra.mxu0 0.0
    %4513 = vmatprep.subr.mxu0 0.0
    %4514 = vmatpush1.msra.mxu0 0.0
    %4515 = vmatprep.subr.mxu0 0.0
    %4516 = vmatpush1.msra.mxu0 0.0
    %4517 = vmatprep.subr.mxu0 0.0
    %4518 = vmatpush1.msra.mxu0 0.0
    %4519 = vmatprep.subr.mxu0 0.0
    %4520 = vmatpush1.msra.mxu0 0.0
    %4521 = vmatprep.subr.mxu0 0.0
    %4522 = vmatpush1.msra.mxu0 0.0
    %4523 = vmatprep.subr.mxu0 0.0
    %4524 = vmatpush1.msra.mxu0 0.0
    %4525 = vmatprep.subr.mxu0 0.0
    %4526 = vmatpush1.msra.mxu0 %v4189
    %4527 = vmatprep.subr.mxu0 0.0
    %4528 = vmatpush1.msra.mxu0 %v4188
    %4529 = vmatprep.subr.mxu0 0.0
    %4530 = vmatpush2.msra.mxu0 0.0
    %4531 = vmatprep.subr.mxu0 0.0
    %4532 = vmatpush2.msra.mxu0 0.0
    %4533 = vmatprep.subr.mxu0 0.0
    %4534 = vmatpush2.msra.mxu0 0.0
    %4535 = vmatprep.subr.mxu0 0.0
    %4536 = vmatpush2.msra.mxu0 0.0
    %4537 = vmatprep.subr.mxu0 0.0
    %4538 = vmatpush2.msra.mxu0 0.0
    %4539 = vmatprep.subr.mxu0 0.0
    %4540 = vmatpush2.msra.mxu0 0.0
    %4541 = vmatprep.subr.mxu0 0.0
    %4542 = vmatpush2.msra.mxu0 0.0
    %4543 = vmatprep.subr.mxu0 0.0
    %4544 = vmatpush2.msra.mxu0 0.0
    %4545 = vmatprep.subr.mxu0 0.0
    %4546 = vmatpush2.msra.mxu0 0.0
    %4547 = vmatprep.subr.mxu0 0.0
    %4548 = vmatpush2.msra.mxu0 0.0
    %4549 = vmatprep.subr.mxu0 0.0
    %4550 = vmatpush2.msra.mxu0 0.0
    %4551 = vmatprep.subr.mxu0 0.0
    %4552 = vmatpush2.msra.mxu0 0.0
    %4553 = vmatprep.subr.mxu0 0.0
    %4554 = vmatpush2.msra.mxu0 0.0
    %4555 = vmatprep.subr.mxu0 0.0
    %4556 = vmatpush2.msra.mxu0 0.0
    %4557 = vmatprep.subr.mxu0 0.0
    %4558 = vmatpush2.msra.mxu0 0.0
    %4559 = vmatprep.subr.mxu0 0.0
    %4560 = vmatpush2.msra.mxu0 0.0
    %4561 = vmatprep.mubr.f32.mxu0 0.0
    %4562 = vmatmul.mubr.f32.gmra.mxu0 %v4495
    %v4563 = vpop.f32.mrf.mxu0
    %v4564 = vadd.f32 0.0, %v4563
    %v4565 = vpop.f32.mrf.mxu0
    %4566 = vdwg.mxu0
    %v4567 = vadd.f32 %v4491, %v4564
    %v4568 = vxor.u32 %v4567, 2147483648
    %v4569 = vmul.f32 %v4568, 1.442695
    %v4570 = vpow.pop %v4569
    %v4571 = vadd.f32 %v4570, 1.0
    %v4572 = vrcp.pop %v4571
    %v4573 = vmul.f32 1.0, %v4572
    %v4574 = vtanh.pop %v4567
    %v4575 = vmul.f32 %v4573, %v4483
    %4577 = vrot.lane.b32.xlu0 %v4574, 96
    %v4578 = vpop.permute.xlu0 %4577
    %v4580 = vmul.f32 %v4573, %v4578
    %4582 = vrot.lane.b32.xlu0 %v4580, 16
    %v4583 = vpop.permute.xlu0 %4582
    %v4585 = vadd.f32 %v4575, %v4583
    %v4586 = vtanh.pop %v4585
    %4588 = vrot.lane.b32.xlu0 %v4586, 32
    %v4589 = vpop.permute.xlu0 %4588
    %v4591 = vmul.f32 %v4573, %v4589
    %s4592 = scalar_lea.vmem [#allocation10], 8
    %v4593 = vld [vmem:[%s4592] sm:$0x3]
    %4595 = vrot.lane.b32.xlu0 %v4591, 80
    %v4596 = vpop.permute.xlu0 %4595
    %v4597 = vsel %vm433, %v4596, 0
    %4599 = vmatprep.subr.mxu0 0.0
    %4600 = vmatpush1.msra.mxu0 0.0
    %4601 = vmatprep.subr.mxu0 0.0
    %4602 = vmatpush1.msra.mxu0 0.0
    %4603 = vmatprep.subr.mxu0 0.0
    %4604 = vmatpush1.msra.mxu0 0.0
    %4605 = vmatprep.subr.mxu0 0.0
    %4606 = vmatpush1.msra.mxu0 0.0
    %4607 = vmatprep.subr.mxu0 0.0
    %4608 = vmatpush1.msra.mxu0 0.0
    %4609 = vmatprep.subr.mxu0 0.0
    %4610 = vmatpush1.msra.mxu0 0.0
    %4611 = vmatprep.subr.mxu0 0.0
    %4612 = vmatpush1.msra.mxu0 0.0
    %4613 = vmatprep.subr.mxu0 0.0
    %4614 = vmatpush1.msra.mxu0 0.0
    %4615 = vmatprep.subr.mxu0 0.0
    %4616 = vmatpush1.msra.mxu0 0.0
    %4617 = vmatprep.subr.mxu0 0.0
    %4618 = vmatpush1.msra.mxu0 0.0
    %4619 = vmatprep.subr.mxu0 0.0
    %4620 = vmatpush1.msra.mxu0 0.0
    %4621 = vmatprep.subr.mxu0 0.0
    %4622 = vmatpush1.msra.mxu0 0.0
    %4623 = vmatprep.subr.mxu0 0.0
    %4624 = vmatpush1.msra.mxu0 0.0
    %4625 = vmatprep.subr.mxu0 0.0
    %4626 = vmatpush1.msra.mxu0 0.0
    %4627 = vmatprep.subr.mxu0 0.0
    %4628 = vmatpush1.msra.mxu0 %v4189
    %4629 = vmatprep.subr.mxu0 0.0
    %4630 = vmatpush1.msra.mxu0 %v4188
    %4631 = vmatprep.subr.mxu0 0.0
    %4632 = vmatpush2.msra.mxu0 0.0
    %4633 = vmatprep.subr.mxu0 0.0
    %4634 = vmatpush2.msra.mxu0 0.0
    %4635 = vmatprep.subr.mxu0 0.0
    %4636 = vmatpush2.msra.mxu0 0.0
    %4637 = vmatprep.subr.mxu0 0.0
    %4638 = vmatpush2.msra.mxu0 0.0
    %4639 = vmatprep.subr.mxu0 0.0
    %4640 = vmatpush2.msra.mxu0 0.0
    %4641 = vmatprep.subr.mxu0 0.0
    %4642 = vmatpush2.msra.mxu0 0.0
    %4643 = vmatprep.subr.mxu0 0.0
    %4644 = vmatpush2.msra.mxu0 0.0
    %4645 = vmatprep.subr.mxu0 0.0
    %4646 = vmatpush2.msra.mxu0 0.0
    %4647 = vmatprep.subr.mxu0 0.0
    %4648 = vmatpush2.msra.mxu0 0.0
    %4649 = vmatprep.subr.mxu0 0.0
    %4650 = vmatpush2.msra.mxu0 0.0
    %4651 = vmatprep.subr.mxu0 0.0
    %4652 = vmatpush2.msra.mxu0 0.0
    %4653 = vmatprep.subr.mxu0 0.0
    %4654 = vmatpush2.msra.mxu0 0.0
    %4655 = vmatprep.subr.mxu0 0.0
    %4656 = vmatpush2.msra.mxu0 0.0
    %4657 = vmatprep.subr.mxu0 0.0
    %4658 = vmatpush2.msra.mxu0 0.0
    %4659 = vmatprep.subr.mxu0 0.0
    %4660 = vmatpush2.msra.mxu0 0.0
    %4661 = vmatprep.subr.mxu0 0.0
    %4662 = vmatpush2.msra.mxu0 0.0
    %4663 = vmatprep.mubr.f32.mxu0 0.0
    %4664 = vmatmul.mubr.f32.gmra.mxu0 %v4597
    %v4665 = vpop.f32.mrf.mxu0
    %v4666 = vadd.f32 0.0, %v4665
    %v4667 = vpop.f32.mrf.mxu0
    %4668 = vdwg.mxu0
    %v4669 = vadd.f32 %v4593, %v4666
    %v4670 = vxor.u32 %v4669, 2147483648
    %v4671 = vmul.f32 %v4670, 1.442695
    %v4672 = vpow.pop %v4671
    %v4673 = vadd.f32 %v4672, 1.0
    %v4674 = vrcp.pop %v4673
    %v4675 = vmul.f32 1.0, %v4674
    %v4676 = vtanh.pop %v4669
    %v4677 = vmul.f32 %v4675, %v4585
    %4679 = vrot.lane.b32.xlu0 %v4676, 96
    %v4680 = vpop.permute.xlu0 %4679
    %v4682 = vmul.f32 %v4675, %v4680
    %4684 = vrot.lane.b32.xlu0 %v4682, 16
    %v4685 = vpop.permute.xlu0 %4684
    %v4687 = vadd.f32 %v4677, %v4685
    %v4688 = vtanh.pop %v4687
    %4690 = vrot.lane.b32.xlu0 %v4688, 32
    %v4691 = vpop.permute.xlu0 %4690
    %v4693 = vmul.f32 %v4675, %v4691
    %s4694 = scalar_lea.vmem [#allocation10], 10
    %v4695 = vld [vmem:[%s4694] sm:$0x3]
    %4697 = vrot.lane.b32.xlu0 %v4693, 80
    %v4698 = vpop.permute.xlu0 %4697
    %v4699 = vsel %vm433, %v4698, 0
    %4701 = vmatprep.subr.mxu0 0.0
    %4702 = vmatpush1.msra.mxu0 0.0
    %4703 = vmatprep.subr.mxu0 0.0
    %4704 = vmatpush1.msra.mxu0 0.0
    %4705 = vmatprep.subr.mxu0 0.0
    %4706 = vmatpush1.msra.mxu0 0.0
    %4707 = vmatprep.subr.mxu0 0.0
    %4708 = vmatpush1.msra.mxu0 0.0
    %4709 = vmatprep.subr.mxu0 0.0
    %4710 = vmatpush1.msra.mxu0 0.0
    %4711 = vmatprep.subr.mxu0 0.0
    %4712 = vmatpush1.msra.mxu0 0.0
    %4713 = vmatprep.subr.mxu0 0.0
    %4714 = vmatpush1.msra.mxu0 0.0
    %4715 = vmatprep.subr.mxu0 0.0
    %4716 = vmatpush1.msra.mxu0 0.0
    %4717 = vmatprep.subr.mxu0 0.0
    %4718 = vmatpush1.msra.mxu0 0.0
    %4719 = vmatprep.subr.mxu0 0.0
    %4720 = vmatpush1.msra.mxu0 0.0
    %4721 = vmatprep.subr.mxu0 0.0
    %4722 = vmatpush1.msra.mxu0 0.0
    %4723 = vmatprep.subr.mxu0 0.0
    %4724 = vmatpush1.msra.mxu0 0.0
    %4725 = vmatprep.subr.mxu0 0.0
    %4726 = vmatpush1.msra.mxu0 0.0
    %4727 = vmatprep.subr.mxu0 0.0
    %4728 = vmatpush1.msra.mxu0 0.0
    %4729 = vmatprep.subr.mxu0 0.0
    %4730 = vmatpush1.msra.mxu0 %v4189
    %4731 = vmatprep.subr.mxu0 0.0
    %4732 = vmatpush1.msra.mxu0 %v4188
    %4733 = vmatprep.subr.mxu0 0.0
    %4734 = vmatpush2.msra.mxu0 0.0
    %4735 = vmatprep.subr.mxu0 0.0
    %4736 = vmatpush2.msra.mxu0 0.0
    %4737 = vmatprep.subr.mxu0 0.0
    %4738 = vmatpush2.msra.mxu0 0.0
    %4739 = vmatprep.subr.mxu0 0.0
    %4740 = vmatpush2.msra.mxu0 0.0
    %4741 = vmatprep.subr.mxu0 0.0
    %4742 = vmatpush2.msra.mxu0 0.0
    %4743 = vmatprep.subr.mxu0 0.0
    %4744 = vmatpush2.msra.mxu0 0.0
    %4745 = vmatprep.subr.mxu0 0.0
    %4746 = vmatpush2.msra.mxu0 0.0
    %4747 = vmatprep.subr.mxu0 0.0
    %4748 = vmatpush2.msra.mxu0 0.0
    %4749 = vmatprep.subr.mxu0 0.0
    %4750 = vmatpush2.msra.mxu0 0.0
    %4751 = vmatprep.subr.mxu0 0.0
    %4752 = vmatpush2.msra.mxu0 0.0
    %4753 = vmatprep.subr.mxu0 0.0
    %4754 = vmatpush2.msra.mxu0 0.0
    %4755 = vmatprep.subr.mxu0 0.0
    %4756 = vmatpush2.msra.mxu0 0.0
    %4757 = vmatprep.subr.mxu0 0.0
    %4758 = vmatpush2.msra.mxu0 0.0
    %4759 = vmatprep.subr.mxu0 0.0
    %4760 = vmatpush2.msra.mxu0 0.0
    %4761 = vmatprep.subr.mxu0 0.0
    %4762 = vmatpush2.msra.mxu0 0.0
    %4763 = vmatprep.subr.mxu0 0.0
    %4764 = vmatpush2.msra.mxu0 0.0
    %4765 = vmatprep.mubr.f32.mxu0 0.0
    %4766 = vmatmul.mubr.f32.gmra.mxu0 %v4699
    %v4767 = vpop.f32.mrf.mxu0
    %v4768 = vadd.f32 0.0, %v4767
    %v4769 = vpop.f32.mrf.mxu0
    %4770 = vdwg.mxu0
    %v4771 = vadd.f32 %v4695, %v4768
    %v4772 = vxor.u32 %v4771, 2147483648
    %v4773 = vmul.f32 %v4772, 1.442695
    %v4774 = vpow.pop %v4773
    %v4775 = vadd.f32 %v4774, 1.0
    %v4776 = vrcp.pop %v4775
    %v4777 = vmul.f32 1.0, %v4776
    %v4778 = vtanh.pop %v4771
    %v4779 = vmul.f32 %v4777, %v4687
    %4781 = vrot.lane.b32.xlu0 %v4778, 96
    %v4782 = vpop.permute.xlu0 %4781
    %v4784 = vmul.f32 %v4777, %v4782
    %4786 = vrot.lane.b32.xlu0 %v4784, 16
    %v4787 = vpop.permute.xlu0 %4786
    %v4789 = vadd.f32 %v4779, %v4787
    %v4790 = vtanh.pop %v4789
    %4792 = vrot.lane.b32.xlu0 %v4790, 32
    %v4793 = vpop.permute.xlu0 %4792
    %v4795 = vmul.f32 %v4777, %v4793
    %s4796 = scalar_lea.vmem [#allocation10], 12
    %v4797 = vld [vmem:[%s4796] sm:$0x3]
    %4799 = vrot.lane.b32.xlu0 %v4795, 80
    %v4800 = vpop.permute.xlu0 %4799
    %v4801 = vsel %vm433, %v4800, 0
    %4803 = vmatprep.subr.mxu0 0.0
    %4804 = vmatpush1.msra.mxu0 0.0
    %4805 = vmatprep.subr.mxu0 0.0
    %4806 = vmatpush1.msra.mxu0 0.0
    %4807 = vmatprep.subr.mxu0 0.0
    %4808 = vmatpush1.msra.mxu0 0.0
    %4809 = vmatprep.subr.mxu0 0.0
    %4810 = vmatpush1.msra.mxu0 0.0
    %4811 = vmatprep.subr.mxu0 0.0
    %4812 = vmatpush1.msra.mxu0 0.0
    %4813 = vmatprep.subr.mxu0 0.0
    %4814 = vmatpush1.msra.mxu0 0.0
    %4815 = vmatprep.subr.mxu0 0.0
    %4816 = vmatpush1.msra.mxu0 0.0
    %4817 = vmatprep.subr.mxu0 0.0
    %4818 = vmatpush1.msra.mxu0 0.0
    %4819 = vmatprep.subr.mxu0 0.0
    %4820 = vmatpush1.msra.mxu0 0.0
    %4821 = vmatprep.subr.mxu0 0.0
    %4822 = vmatpush1.msra.mxu0 0.0
    %4823 = vmatprep.subr.mxu0 0.0
    %4824 = vmatpush1.msra.mxu0 0.0
    %4825 = vmatprep.subr.mxu0 0.0
    %4826 = vmatpush1.msra.mxu0 0.0
    %4827 = vmatprep.subr.mxu0 0.0
    %4828 = vmatpush1.msra.mxu0 0.0
    %4829 = vmatprep.subr.mxu0 0.0
    %4830 = vmatpush1.msra.mxu0 0.0
    %4831 = vmatprep.subr.mxu0 0.0
    %4832 = vmatpush1.msra.mxu0 %v4189
    %4833 = vmatprep.subr.mxu0 0.0
    %4834 = vmatpush1.msra.mxu0 %v4188
    %4835 = vmatprep.subr.mxu0 0.0
    %4836 = vmatpush2.msra.mxu0 0.0
    %4837 = vmatprep.subr.mxu0 0.0
    %4838 = vmatpush2.msra.mxu0 0.0
    %4839 = vmatprep.subr.mxu0 0.0
    %4840 = vmatpush2.msra.mxu0 0.0
    %4841 = vmatprep.subr.mxu0 0.0
    %4842 = vmatpush2.msra.mxu0 0.0
    %4843 = vmatprep.subr.mxu0 0.0
    %4844 = vmatpush2.msra.mxu0 0.0
    %4845 = vmatprep.subr.mxu0 0.0
    %4846 = vmatpush2.msra.mxu0 0.0
    %4847 = vmatprep.subr.mxu0 0.0
    %4848 = vmatpush2.msra.mxu0 0.0
    %4849 = vmatprep.subr.mxu0 0.0
    %4850 = vmatpush2.msra.mxu0 0.0
    %4851 = vmatprep.subr.mxu0 0.0
    %4852 = vmatpush2.msra.mxu0 0.0
    %4853 = vmatprep.subr.mxu0 0.0
    %4854 = vmatpush2.msra.mxu0 0.0
    %4855 = vmatprep.subr.mxu0 0.0
    %4856 = vmatpush2.msra.mxu0 0.0
    %4857 = vmatprep.subr.mxu0 0.0
    %4858 = vmatpush2.msra.mxu0 0.0
    %4859 = vmatprep.subr.mxu0 0.0
    %4860 = vmatpush2.msra.mxu0 0.0
    %4861 = vmatprep.subr.mxu0 0.0
    %4862 = vmatpush2.msra.mxu0 0.0
    %4863 = vmatprep.subr.mxu0 0.0
    %4864 = vmatpush2.msra.mxu0 0.0
    %4865 = vmatprep.subr.mxu0 0.0
    %4866 = vmatpush2.msra.mxu0 0.0
    %4867 = vmatprep.mubr.f32.mxu0 0.0
    %4868 = vmatmul.mubr.f32.gmra.mxu0 %v4801
    %v4869 = vpop.f32.mrf.mxu0
    %v4870 = vadd.f32 0.0, %v4869
    %v4871 = vpop.f32.mrf.mxu0
    %4872 = vdwg.mxu0
    %v4873 = vadd.f32 %v4797, %v4870
    %v4874 = vxor.u32 %v4873, 2147483648
    %v4875 = vmul.f32 %v4874, 1.442695
    %v4876 = vpow.pop %v4875
    %v4877 = vadd.f32 %v4876, 1.0
    %v4878 = vrcp.pop %v4877
    %v4879 = vmul.f32 1.0, %v4878
    %v4880 = vtanh.pop %v4873
    %v4881 = vmul.f32 %v4879, %v4789
    %4883 = vrot.lane.b32.xlu0 %v4880, 96
    %v4884 = vpop.permute.xlu0 %4883
    %v4886 = vmul.f32 %v4879, %v4884
    %4888 = vrot.lane.b32.xlu0 %v4886, 16
    %v4889 = vpop.permute.xlu0 %4888
    %v4891 = vadd.f32 %v4881, %v4889
    %v4892 = vtanh.pop %v4891
    %4894 = vrot.lane.b32.xlu0 %v4892, 32
    %v4895 = vpop.permute.xlu0 %4894
    %v4897 = vmul.f32 %v4879, %v4895
    %s4898 = scalar_lea.vmem [#allocation10], 14
    %v4899 = vld [vmem:[%s4898] sm:$0x3]
    %4901 = vrot.lane.b32.xlu0 %v4897, 80
    %v4902 = vpop.permute.xlu0 %4901
    %v4903 = vsel %vm433, %v4902, 0
    %4905 = vmatprep.subr.mxu0 0.0
    %4906 = vmatpush1.msra.mxu0 0.0
    %4907 = vmatprep.subr.mxu0 0.0
    %4908 = vmatpush1.msra.mxu0 0.0
    %4909 = vmatprep.subr.mxu0 0.0
    %4910 = vmatpush1.msra.mxu0 0.0
    %4911 = vmatprep.subr.mxu0 0.0
    %4912 = vmatpush1.msra.mxu0 0.0
    %4913 = vmatprep.subr.mxu0 0.0
    %4914 = vmatpush1.msra.mxu0 0.0
    %4915 = vmatprep.subr.mxu0 0.0
    %4916 = vmatpush1.msra.mxu0 0.0
    %4917 = vmatprep.subr.mxu0 0.0
    %4918 = vmatpush1.msra.mxu0 0.0
    %4919 = vmatprep.subr.mxu0 0.0
    %4920 = vmatpush1.msra.mxu0 0.0
    %4921 = vmatprep.subr.mxu0 0.0
    %4922 = vmatpush1.msra.mxu0 0.0
    %4923 = vmatprep.subr.mxu0 0.0
    %4924 = vmatpush1.msra.mxu0 0.0
    %4925 = vmatprep.subr.mxu0 0.0
    %4926 = vmatpush1.msra.mxu0 0.0
    %4927 = vmatprep.subr.mxu0 0.0
    %4928 = vmatpush1.msra.mxu0 0.0
    %4929 = vmatprep.subr.mxu0 0.0
    %4930 = vmatpush1.msra.mxu0 0.0
    %4931 = vmatprep.subr.mxu0 0.0
    %4932 = vmatpush1.msra.mxu0 0.0
    %4933 = vmatprep.subr.mxu0 0.0
    %4934 = vmatpush1.msra.mxu0 %v4189
    %4935 = vmatprep.subr.mxu0 0.0
    %4936 = vmatpush1.msra.mxu0 %v4188
    %4937 = vmatprep.subr.mxu0 0.0
    %4938 = vmatpush2.msra.mxu0 0.0
    %4939 = vmatprep.subr.mxu0 0.0
    %4940 = vmatpush2.msra.mxu0 0.0
    %4941 = vmatprep.subr.mxu0 0.0
    %4942 = vmatpush2.msra.mxu0 0.0
    %4943 = vmatprep.subr.mxu0 0.0
    %4944 = vmatpush2.msra.mxu0 0.0
    %4945 = vmatprep.subr.mxu0 0.0
    %4946 = vmatpush2.msra.mxu0 0.0
    %4947 = vmatprep.subr.mxu0 0.0
    %4948 = vmatpush2.msra.mxu0 0.0
    %4949 = vmatprep.subr.mxu0 0.0
    %4950 = vmatpush2.msra.mxu0 0.0
    %4951 = vmatprep.subr.mxu0 0.0
    %4952 = vmatpush2.msra.mxu0 0.0
    %4953 = vmatprep.subr.mxu0 0.0
    %4954 = vmatpush2.msra.mxu0 0.0
    %4955 = vmatprep.subr.mxu0 0.0
    %4956 = vmatpush2.msra.mxu0 0.0
    %4957 = vmatprep.subr.mxu0 0.0
    %4958 = vmatpush2.msra.mxu0 0.0
    %4959 = vmatprep.subr.mxu0 0.0
    %4960 = vmatpush2.msra.mxu0 0.0
    %4961 = vmatprep.subr.mxu0 0.0
    %4962 = vmatpush2.msra.mxu0 0.0
    %4963 = vmatprep.subr.mxu0 0.0
    %4964 = vmatpush2.msra.mxu0 0.0
    %4965 = vmatprep.subr.mxu0 0.0
    %4966 = vmatpush2.msra.mxu0 0.0
    %4967 = vmatprep.subr.mxu0 0.0
    %4968 = vmatpush2.msra.mxu0 0.0
    %4969 = vmatprep.mubr.f32.mxu0 0.0
    %4970 = vmatmul.mubr.f32.gmra.mxu0 %v4903
    %v4971 = vpop.f32.mrf.mxu0
    %v4972 = vadd.f32 0.0, %v4971
    %v4973 = vpop.f32.mrf.mxu0
    %4974 = vdwg.mxu0
    %v4975 = vadd.f32 %v4899, %v4972
    %v4976 = vxor.u32 %v4975, 2147483648
    %v4977 = vmul.f32 %v4976, 1.442695
    %v4978 = vpow.pop %v4977
    %v4979 = vadd.f32 %v4978, 1.0
    %v4980 = vrcp.pop %v4979
    %v4981 = vmul.f32 1.0, %v4980
    %v4982 = vtanh.pop %v4975
    %v4983 = vmul.f32 %v4981, %v4891
    %4985 = vrot.lane.b32.xlu0 %v4982, 96
    %v4986 = vpop.permute.xlu0 %4985
    %v4988 = vmul.f32 %v4981, %v4986
    %4990 = vrot.lane.b32.xlu0 %v4988, 16
    %v4991 = vpop.permute.xlu0 %4990
    %v4993 = vadd.f32 %v4983, %v4991
    %v4994 = vtanh.pop %v4993
    %4996 = vrot.lane.b32.xlu0 %v4994, 32
    %v4997 = vpop.permute.xlu0 %4996
    %v4999 = vmul.f32 %v4981, %v4997
    %v5000 = vld [vmem:[%s19] sm:$0xff]
    %v5001 = vld [vmem:[%s19 + $0x8] sm:$0xff]
    %v5002 = vld [vmem:[%s20] sm:$0x1]
    %v5004 = vlaneseq
    %v5005 = vshrl.u32 %v5004, 7
    %v5006 = vsub.s32 0, %v5005
    %v5007 = vrot.slane %v5002, %v5006
    %5010 = vrot.lane.b32.xlu0 %v4999, 80
    %v5011 = vpop.permute.xlu0 %5010
    %v5012 = vsel %vm433, %v5011, 0
    %5014 = vmatprep.subr.mxu0 0.0
    %5015 = vmatpush1.msra.mxu0 0.0
    %5016 = vmatprep.subr.mxu0 0.0
    %5017 = vmatpush1.msra.mxu0 0.0
    %5018 = vmatprep.subr.mxu0 0.0
    %5019 = vmatpush1.msra.mxu0 0.0
    %5020 = vmatprep.subr.mxu0 0.0
    %5021 = vmatpush1.msra.mxu0 0.0
    %5022 = vmatprep.subr.mxu0 0.0
    %5023 = vmatpush1.msra.mxu0 0.0
    %5024 = vmatprep.subr.mxu0 0.0
    %5025 = vmatpush1.msra.mxu0 0.0
    %5026 = vmatprep.subr.mxu0 0.0
    %5027 = vmatpush1.msra.mxu0 0.0
    %5028 = vmatprep.subr.mxu0 0.0
    %5029 = vmatpush1.msra.mxu0 0.0
    %5030 = vmatprep.subr.mxu0 0.0
    %5031 = vmatpush1.msra.mxu0 0.0
    %5032 = vmatprep.subr.mxu0 0.0
    %5033 = vmatpush1.msra.mxu0 0.0
    %5034 = vmatprep.subr.mxu0 0.0
    %5035 = vmatpush1.msra.mxu0 0.0
    %5036 = vmatprep.subr.mxu0 0.0
    %5037 = vmatpush1.msra.mxu0 0.0
    %5038 = vmatprep.subr.mxu0 0.0
    %5039 = vmatpush1.msra.mxu0 0.0
    %5040 = vmatprep.subr.mxu0 0.0
    %5041 = vmatpush1.msra.mxu0 0.0
    %5042 = vmatprep.subr.mxu0 0.0
    %5043 = vmatpush1.msra.mxu0 %v5001
    %5044 = vmatprep.subr.mxu0 0.0
    %5045 = vmatpush1.msra.mxu0 %v5000
    %5046 = vmatprep.subr.mxu0 0.0
    %5047 = vmatpush2.msra.mxu0 0.0
    %5048 = vmatprep.subr.mxu0 0.0
    %5049 = vmatpush2.msra.mxu0 0.0
    %5050 = vmatprep.subr.mxu0 0.0
    %5051 = vmatpush2.msra.mxu0 0.0
    %5052 = vmatprep.subr.mxu0 0.0
    %5053 = vmatpush2.msra.mxu0 0.0
    %5054 = vmatprep.subr.mxu0 0.0
    %5055 = vmatpush2.msra.mxu0 0.0
    %5056 = vmatprep.subr.mxu0 0.0
    %5057 = vmatpush2.msra.mxu0 0.0
    %5058 = vmatprep.subr.mxu0 0.0
    %5059 = vmatpush2.msra.mxu0 0.0
    %5060 = vmatprep.subr.mxu0 0.0
    %5061 = vmatpush2.msra.mxu0 0.0
    %5062 = vmatprep.subr.mxu0 0.0
    %5063 = vmatpush2.msra.mxu0 0.0
    %5064 = vmatprep.subr.mxu0 0.0
    %5065 = vmatpush2.msra.mxu0 0.0
    %5066 = vmatprep.subr.mxu0 0.0
    %5067 = vmatpush2.msra.mxu0 0.0
    %5068 = vmatprep.subr.mxu0 0.0
    %5069 = vmatpush2.msra.mxu0 0.0
    %5070 = vmatprep.subr.mxu0 0.0
    %5071 = vmatpush2.msra.mxu0 0.0
    %5072 = vmatprep.subr.mxu0 0.0
    %5073 = vmatpush2.msra.mxu0 0.0
    %5074 = vmatprep.subr.mxu0 0.0
    %5075 = vmatpush2.msra.mxu0 0.0
    %5076 = vmatprep.subr.mxu0 0.0
    %5077 = vmatpush2.msra.mxu0 0.0
    %5078 = vmatprep.mubr.f32.mxu0 0.0
    %5079 = vmatmul.mubr.f32.gmra.mxu0 %v5012
    %v5080 = vpop.f32.mrf.mxu0
    %v5081 = vadd.f32 %v5007, %v5080
    %v5082 = vpop.f32.mrf.mxu0
    %5083 = vdwg.mxu0
    %vm5084 = vcmask 58368
    %5085 = vst.msk [vmem:[#allocation34] sm:$0x3] %vm5084, %v5081
    // Predicated region
    $region142: #{hybrid_forward.1} parent=1 // pred_check
      _
    $region143: #{hybrid_forward.1} parent=1 // pred_check_branch
      %5087 = sbr.rel (0) target = $region145
    $region144: #{hybrid_forward.1} parent=1 // pred_region
      %s5089 = ssub.s32 32, 32
      %5090 = vsyncadd [#allocation13], %s5089
      %s5092 = sshll.u32 [#allocation34], 4
      %s5093 = int_to_ptr.vmem [resolvable:$true] %s5092
      %5095 = dma.vmem_to_hbm [thread:$0]  %s5093, 32, %s21, [#allocation13]
    $region145: #{hybrid_forward.1} parent=1 // pred_fallthru
      _
    // Predicated region
    $region146: #{hybrid_forward.1} parent=1 // pred_check
      _
    $region147: #{hybrid_forward.1} parent=1 // pred_check_branch
      %5097 = sbr.rel (0) target = $region149
    $region148: #{hybrid_forward.1} parent=1 // pred_region
      %5098 = dma.done [#allocation13], 32
    $region149: #{hybrid_forward.1} parent=1 // pred_fallthru
      _
    %5099 = vsyncpa [#allocation12], 1
    %5100 = vsyncpa [#allocation15], 1
    %5101 = vsyncpa [#allocation18], 1
    %5102 = vsyncpa [#allocation21], 1
    %5103 = vsyncpa [#allocation24], 1
    %5104 = vsyncpa [#allocation27], 1
    %5105 = vsyncpa [#allocation30], 1
    %5106 = vsyncpa [#allocation33], 1
    %5107 = vsyncpa [#allocation13], 1

</llo_original>
